<compile_context>
chip_gen: v6e
topology: v6e:2x2x1
jax: 0.10.0
libtpu: 0.0.40
codegen_flags: <defaults>
</compile_context>

<pallas_src>
import functools

import jax
import jax.numpy as jnp
from jax.experimental import pallas as pl
from jax.experimental.pallas import tpu as pltpu

_EPS = 1e-6
_LANE = 128
_SUBLANE = 8


@functools.lru_cache(maxsize=1)
def _chip_config():
    """Returns (base f32 tile rows, parallel splits) tuned per TPU generation."""
    try:
        kind = jax.devices()[0].device_kind.lower()
    except Exception:  # pragma: no cover - defensive
        kind = ""
    if "7" in kind:                         # v7x: 2 TCs/chip, 3.2 TB/s, 64 MiB VMEM/TC
        return 8192, 2
    if "v6" in kind:                        # v6e: 1 TC, 1.4 TB/s
        return 8192, 1
    if "v5" in kind and ("lite" in kind or "5e" in kind):
        return 4096, 1                      # v5e: 1 TC, 0.82 TB/s, 16 MiB default scoped VMEM
    if "v5" in kind or "v4" in kind:        # v5p / v4 megacore (2 TCs)
        return 8192, 2
    return 4096, 1


def _sse_partial_kernel(x_ref, y_ref, acc_ref, *, n_elems):
    """Accumulate sum((x - y)^2) for this split into an (8, 128) f32 block."""
    c = pl.program_id(0)          # parallel split (maps to TensorCores)
    i = pl.program_id(1)          # sequential step within the split
    steps = pl.num_programs(1)

    @pl.when(i == 0)
    def _init():
        acc_ref[...] = jnp.zeros_like(acc_ref)

    tile_rows, lane = x_ref.shape
    tile_elems = tile_rows * lane
    blk = c * steps + i                       # logical (unclamped) block index
    remaining = n_elems - blk * tile_elems    # may be <= 0 on overhang steps

    def _sq():
        d = x_ref[...].astype(jnp.float32) - y_ref[...].astype(jnp.float32)
        return d * d

    # Fast path: full interior block -> only sub, mul and the sublane adds.
    @pl.when(remaining >= tile_elems)
    def _full_block():
        acc_ref[...] += jnp.sum(_sq().reshape(-1, _SUBLANE, lane), axis=0)

    # Slow path (at most one ragged block + overhang steps per split): mask
    # everything past the true element count so garbage / duplicate data
    # contributes exactly zero.
    @pl.when(remaining < tile_elems)
    def _edge_block():
        sq = _sq()
        local = (jax.lax.broadcasted_iota(jnp.int32, sq.shape, 0) * lane
                 + jax.lax.broadcasted_iota(jnp.int32, sq.shape, 1))
        sq = jnp.where(local < remaining, sq, 0.0)
        acc_ref[...] += jnp.sum(sq.reshape(-1, _SUBLANE, lane), axis=0)


def rmse_loss(x, y, *, eps=_EPS, tile_rows=None, num_splits=None,
              min_pallas_elems=128 * 1024):
    """sqrt(mean((x - y)^2) + eps) — matches the torch RMSELoss forward."""
    assert x.shape == y.shape, "MSELoss (default) requires matching shapes"
    n = int(x.size)
    if n == 0:
        return jnp.float32(jnp.nan)

    itemsize = jnp.dtype(x.dtype).itemsize
    packing = max(1, 4 // itemsize)           # 1 for f32, 2 for bf16, 4 for int8/fp8
    row_align = _SUBLANE * packing            # packed-sublane tiling requirement
    rows = n // _LANE                         # lane-aligned rows fed to the kernel
    base_rows, auto_splits = _chip_config()

    # Small-n fast path: the fixed pallas_call launch would dominate; a fused
    # XLA reduction is faster and avoids all reshape plumbing.
    if n < min_pallas_elems or rows < row_align:
        d = x.astype(jnp.float32) - y.astype(jnp.float32)
        return jnp.sqrt(jnp.sum(d * d) / jnp.float32(n) + jnp.float32(eps))

    # Generation-aware block rows, scaled so per-step DMA bytes are constant
    # across dtypes, rounded to the packed-sublane alignment, capped at rows.
    if tile_rows is None:
        tile_rows = base_rows * packing
    tile_rows = max(row_align, (int(tile_rows) // row_align) * row_align)
    tile_rows = min(tile_rows, (rows // row_align) * row_align)

    n_aligned = rows * _LANE
    xf = x.reshape(-1)                        # free reshape, no copy
    yf = y.reshape(-1)
    if n_aligned != n:
        # Rare n % 128 != 0 path: reduce the <128-element tail with plain jnp
        # and feed the kernel only the lane-aligned prefix (no full jnp.pad
        # copies of both inputs).
        dt = (xf[n_aligned:].astype(jnp.float32)
              - yf[n_aligned:].astype(jnp.float32))
        tail_sse = jnp.sum(dt * dt)
        xf = xf[:n_aligned]
        yf = yf[:n_aligned]
    else:
        tail_sse = jnp.float32(0.0)
    x2 = xf.reshape(rows, _LANE)
    y2 = yf.reshape(rows, _LANE)

    blocks = pl.cdiv(rows, tile_rows)
    if num_splits is None:
        num_splits = auto_splits
    num_splits = max(1, min(int(num_splits), blocks))
    steps = pl.cdiv(blocks, num_splits)

    # In-kernel mask math is int32; guarantee it cannot wrap.
    if num_splits * steps * tile_rows * _LANE >= 2 ** 31:
        raise ValueError("rmse_loss: input too large for int32 block indexing")

    def in_map(c, i):
        # Clamp so a split's overhang step re-reads a valid (already resident)
        # block; its contribution is masked to zero inside the kernel.
        return (jnp.minimum(c * steps + i, blocks - 1), 0)

    block_bytes = tile_rows * _LANE * itemsize
    out_bytes = num_splits * _SUBLANE * _LANE * 4
    # 2 inputs x 2 pipeline buffers + accumulator blocks + slack; raises v5e's
    # 16 MiB default scoped VMEM, no-op on v6e/v7x (32 MiB default).
    vmem_limit = int(min(max(4 * block_bytes + 2 * out_bytes + (8 << 20),
                             32 << 20), 64 << 20))

    cost = pl.CostEstimate(
        flops=3 * n_aligned,
        transcendentals=0,
        bytes_accessed=2 * n_aligned * itemsize + out_bytes)

    partials = pl.pallas_call(
        functools.partial(_sse_partial_kernel, n_elems=n_aligned),
        out_shape=jax.ShapeDtypeStruct((num_splits * _SUBLANE, _LANE),
                                       jnp.float32),
        grid_spec=pltpu.PrefetchScalarGridSpec(
            num_scalar_prefetch=0,
            grid=(num_splits, steps),
            in_specs=[
                pl.BlockSpec((tile_rows, _LANE), in_map),
                pl.BlockSpec((tile_rows, _LANE), in_map),
            ],
            out_specs=pl.BlockSpec((_SUBLANE, _LANE), lambda c, i: (c, 0)),
        ),
        compiler_params=pltpu.CompilerParams(
            dimension_semantics=("parallel", "arbitrary"),
            vmem_limit_bytes=vmem_limit),
        cost_estimate=cost,
    )(x2, y2)

    # Tiny final reduction (a few KB) + sqrt in plain JAX.
    sse = jnp.sum(partials) + tail_sse
    return jnp.sqrt(sse / jnp.float32(n) + jnp.float32(eps))


if __name__ == "__main__":
    key = jax.random.PRNGKey(0)
    kx, ky = jax.random.split(key)

    def _ref(a, b):
        return jnp.sqrt(
            jnp.mean((a.astype(jnp.float32) - b.astype(jnp.float32)) ** 2)
            + _EPS)

    # 1) Canonical small NCHW input -> small-n fast path.
    x1 = jax.random.normal(kx, (2, 4, 16, 16), dtype=jnp.float32)
    y1 = jax.random.normal(ky, (2, 4, 16, 16), dtype=jnp.float32)
    l1 = rmse_loss(x1, y1)
    jax.block_until_ready(l1)
    assert jnp.allclose(l1, _ref(x1, y1), rtol=1e-5, atol=1e-6), (l1, _ref(x1, y1))

    # 2) Larger aligned input -> Pallas path with big generation-aware blocks.
    x2 = jax.random.normal(kx, (16, 8, 128, 128), dtype=jnp.float32)
    y2 = jax.random.normal(ky, (16, 8, 128, 128), dtype=jnp.float32)
    l2 = rmse_loss(x2, y2)
    jax.block_until_ready(l2)
    assert jnp.allclose(l2, _ref(x2, y2), rtol=1e-4, atol=1e-6), (l2, _ref(x2, y2))

    # 3) Forced Pallas path: multi-block + 2-way split + clamped overhang step.
    x3 = jax.random.normal(kx, (2, 4, 16, 20), dtype=jnp.float32)   # 2560 elems
    y3 = jax.random.normal(ky, (2, 4, 16, 20), dtype=jnp.float32)
    l3 = rmse_loss(x3, y3, min_pallas_elems=0, tile_rows=8, num_splits=2)
    assert jnp.allclose(l3, _ref(x3, y3), rtol=1e-5, atol=1e-6), (l3, _ref(x3, y3))

    # 4) Forced Pallas path: ragged n % 128 != 0 (jnp tail + masked edge block).
    x4 = jax.random.normal(kx, (3, 5, 7, 11), dtype=jnp.float32)    # 1155 elems
    y4 = jax.random.normal(ky, (3, 5, 7, 11), dtype=jnp.float32)
    l4 = rmse_loss(x4, y4, min_pallas_elems=0, tile_rows=8)
    assert jnp.allclose(l4, _ref(x4, y4), rtol=1e-5, atol=1e-6), (l4, _ref(x4, y4))

    # 5) bf16 inputs: in-kernel cast, packed-sublane (16-row) tile alignment.
    xb = x2.astype(jnp.bfloat16)
    yb = y2.astype(jnp.bfloat16)
    l5 = rmse_loss(xb, yb)
    assert jnp.allclose(l5, _ref(xb, yb), rtol=1e-4, atol=1e-5), (l5, _ref(xb, yb))

    jax.block_until_ready((l2, l3, l4, l5))
    print("KERNEL_OK")
</pallas_src>

<mosaic_0001>
module attributes {stable_mosaic.version = 11 : i64} {
  func.func @_sse_partial_kernel(%arg0: i32, %arg1: i32, %arg2: memref<4096x128xf32, #tpu.memory_space<vmem>>, %arg3: memref<4096x128xf32, #tpu.memory_space<vmem>>, %arg4: memref<8x128xf32, #tpu.memory_space<vmem>>) attributes {dimension_semantics = [#tpu.dimension_semantics<parallel>, #tpu.dimension_semantics<arbitrary>], iteration_bounds = array<i64: 1, 4>, scalar_prefetch = 0 : i64, scratch_operands = 0 : i64, tpu.core_type = #tpu.core_type<tc>, window_params = [{transform_indices = @transform_0, window_bounds = array<i64: 4096, 128>}, {transform_indices = @transform_1, window_bounds = array<i64: 4096, 128>}, {transform_indices = @transform_2, window_bounds = array<i64: 8, 128>}]} {
    %c0_i32 = arith.constant 0 : i32
    %0 = arith.cmpi eq, %arg1, %c0_i32 : i32
    %1 = arith.extui %0 : i1 to i32
    %c0_i32_0 = arith.constant 0 : i32
    %2 = arith.cmpi ne, %1, %c0_i32_0 : i32
    scf.if %2 {
      %cst = arith.constant 0.000000e+00 : f32
      %13 = vector.broadcast %cst : f32 to vector<8x128xf32>
      %c0 = arith.constant 0 : index
      %c0_5 = arith.constant 0 : index
      %14 = vector.load %arg4[%c0, %c0_5] : memref<8x128xf32, #tpu.memory_space<vmem>>, vector<8x128xf32>
      tpu.vector_store %arg4[%c0, %c0_5], %13 {strides = array<i32>} : memref<8x128xf32, #tpu.memory_space<vmem>>, vector<8x128xf32>,
    } else {
    }
    %c4_i32 = arith.constant 4 : i32
    %3 = arith.muli %arg0, %c4_i32 : i32
    %4 = arith.addi %3, %arg1 : i32
    %c524288_i32 = arith.constant 524288 : i32
    %5 = arith.muli %4, %c524288_i32 : i32
    %c2097152_i32 = arith.constant 2097152 : i32
    %6 = arith.subi %c2097152_i32, %5 : i32
    %c524288_i32_1 = arith.constant 524288 : i32
    %7 = arith.cmpi sge, %6, %c524288_i32_1 : i32
    %8 = arith.extui %7 : i1 to i32
    %c0_i32_2 = arith.constant 0 : i32
    %9 = arith.cmpi ne, %8, %c0_i32_2 : i32
    scf.if %9 {
      %c0 = arith.constant 0 : index
      %c0_5 = arith.constant 0 : index
      %13 = vector.load %arg4[%c0, %c0_5] : memref<8x128xf32, #tpu.memory_space<vmem>>, vector<8x128xf32>
      %c0_6 = arith.constant 0 : index
      %c0_7 = arith.constant 0 : index
      %14 = vector.load %arg2[%c0_6, %c0_7] : memref<4096x128xf32, #tpu.memory_space<vmem>>, vector<4096x128xf32>
      %c0_8 = arith.constant 0 : index
      %c0_9 = arith.constant 0 : index
      %15 = vector.load %arg3[%c0_8, %c0_9] : memref<4096x128xf32, #tpu.memory_space<vmem>>, vector<4096x128xf32>
      %16 = arith.subf %14, %15 : vector<4096x128xf32>
      %17 = arith.mulf %16, %16 : vector<4096x128xf32>
      %18 = vector.shape_cast %17 : vector<4096x128xf32> to vector<512x8x128xf32>
      %cst = arith.constant dense<0.000000e+00> : vector<8x128xf32>
      %19 = vector.multi_reduction <add>, %18, %cst [0] : vector<512x8x128xf32> to vector<8x128xf32>
      %20 = arith.addf %13, %19 : vector<8x128xf32>
      %c0_10 = arith.constant 0 : index
      %c0_11 = arith.constant 0 : index
      %21 = vector.load %arg4[%c0_10, %c0_11] : memref<8x128xf32, #tpu.memory_space<vmem>>, vector<8x128xf32>
      tpu.vector_store %arg4[%c0_10, %c0_11], %20 {strides = array<i32>} : memref<8x128xf32, #tpu.memory_space<vmem>>, vector<8x128xf32>,
    } else {
    }
    %c524288_i32_3 = arith.constant 524288 : i32
    %10 = arith.cmpi slt, %6, %c524288_i32_3 : i32
    %11 = arith.extui %10 : i1 to i32
    %c0_i32_4 = arith.constant 0 : i32
    %12 = arith.cmpi ne, %11, %c0_i32_4 : i32
    scf.if %12 {
      %c0 = arith.constant 0 : index
      %c0_5 = arith.constant 0 : index
      %13 = vector.load %arg2[%c0, %c0_5] : memref<4096x128xf32, #tpu.memory_space<vmem>>, vector<4096x128xf32>
      %c0_6 = arith.constant 0 : index
      %c0_7 = arith.constant 0 : index
      %14 = vector.load %arg3[%c0_6, %c0_7] : memref<4096x128xf32, #tpu.memory_space<vmem>>, vector<4096x128xf32>
      %15 = arith.subf %13, %14 : vector<4096x128xf32>
      %16 = arith.mulf %15, %15 : vector<4096x128xf32>
      %17 = tpu.iota {dimensions = array<i32: 0>} : vector<4096x128xi32>
      %c128_i32 = arith.constant 128 : i32
      %18 = vector.broadcast %c128_i32 : i32 to vector<4096x128xi32>
      %19 = arith.muli %17, %18 : vector<4096x128xi32>
      %20 = tpu.iota {dimensions = array<i32: 1>} : vector<4096x128xi32>
      %21 = arith.addi %19, %20 : vector<4096x128xi32>
      %22 = vector.broadcast %6 : i32 to vector<4096x128xi32>
      %23 = arith.cmpi slt, %21, %22 : vector<4096x128xi32>
      %cst = arith.constant 0.000000e+00 : f32
      %24 = vector.broadcast %cst : f32 to vector<4096x128xf32>
      %25 = arith.select %23, %16, %24 : vector<4096x128xi1>, vector<4096x128xf32>
      %c0_8 = arith.constant 0 : index
      %c0_9 = arith.constant 0 : index
      %26 = vector.load %arg4[%c0_8, %c0_9] : memref<8x128xf32, #tpu.memory_space<vmem>>, vector<8x128xf32>
      %27 = vector.shape_cast %25 : vector<4096x128xf32> to vector<512x8x128xf32>
      %cst_10 = arith.constant dense<0.000000e+00> : vector<8x128xf32>
      %28 = vector.multi_reduction <add>, %27, %cst_10 [0] : vector<512x8x128xf32> to vector<8x128xf32>
      %29 = arith.addf %26, %28 : vector<8x128xf32>
      %c0_11 = arith.constant 0 : index
      %c0_12 = arith.constant 0 : index
      %30 = vector.load %arg4[%c0_11, %c0_12] : memref<8x128xf32, #tpu.memory_space<vmem>>, vector<8x128xf32>
      tpu.vector_store %arg4[%c0_11, %c0_12], %29 {strides = array<i32>} : memref<8x128xf32, #tpu.memory_space<vmem>>, vector<8x128xf32>,
    } else {
    }
    return
  }
  func.func @transform_0(%arg0: i32, %arg1: i32) -> (i32, i32) {
    %c4_i32 = arith.constant 4 : i32
    %0 = arith.muli %arg0, %c4_i32 : i32
    %1 = arith.addi %0, %arg1 : i32
    %c3_i32 = arith.constant 3 : i32
    %2 = arith.minsi %1, %c3_i32 : i32
    %c0_i32 = arith.constant 0 : i32
    %c0_i32_0 = arith.constant 0 : i32
    return %2, %c0_i32 : i32, i32
  }
  func.func @transform_1(%arg0: i32, %arg1: i32) -> (i32, i32) {
    %c4_i32 = arith.constant 4 : i32
    %0 = arith.muli %arg0, %c4_i32 : i32
    %1 = arith.addi %0, %arg1 : i32
    %c3_i32 = arith.constant 3 : i32
    %2 = arith.minsi %1, %c3_i32 : i32
    %c0_i32 = arith.constant 0 : i32
    %c0_i32_0 = arith.constant 0 : i32
    return %2, %c0_i32 : i32, i32
  }
  func.func @transform_2(%arg0: i32, %arg1: i32) -> (i32, i32) {
    %c0_i32 = arith.constant 0 : i32
    %c0_i32_0 = arith.constant 0 : i32
    return %arg0, %c0_i32 : i32, i32
  }
}

</mosaic_0001>

<llo_original>
// kernel: tpu_custom_call.1
$region0: #{tpu_custom_call.1}
  #allocation0 [shape = 'u32[]', space=smem, size = 0x4, offset = 0x4, fixed_abs, tag = 'smem constant byte address 0x4 - core index']
  #allocation1 [shape = 'u32[144,128]{1,0:T(1,128)}', space=vmem, size = 0x12000, scoped, tag = 'internal scratch']
  %s0 = inlined_call_operand.hbm [shape: f32[16384,128], index: 0, kind: input, shape index: {}]
  %s1 = inlined_call_operand.hbm [shape: f32[16384,128], index: 1, kind: input, shape index: {}]
  %s2 = inlined_call_operand.hbm [shape: f32[8,128], index: 2, kind: output, shape index: {}]
  %s3 = sld [smem:[#allocation0]]
  $region61: #{tpu_custom_call.1} parent=0
    _
  %s5 = ssub.s32 1, %s3
  %s6 = scalar_select 0, %s5, %s3
  $region1: #{tpu_custom_call.1} parent=0
    #allocation2 [shape = 'u8[4194304]{0}', space=vmem, size = 0x400000, scoped, tag = 'input window, operand 0']
    #allocation3 [shape = 's32[2]{0}', space=sflag, size = 0x8, scoped, tag = 'scoped memory for tpu_custom_call.1']
    #allocation4 [shape = 's32[2]{0}', space=sflag, size = 0x8, scoped, tag = 'scoped memory for tpu_custom_call.1']
    #allocation5 [shape = 'u8[4194304]{0}', space=vmem, size = 0x400000, scoped, tag = 'input window, operand 1']
    #allocation6 [shape = 's32[2]{0}', space=sflag, size = 0x8, scoped, tag = 'scoped memory for tpu_custom_call.1']
    #allocation7 [shape = 'u8[4096]{0}', space=vmem, size = 0x1000, scoped, tag = 'output window, operand 0, single buffered']
    %7 = vsyncpa [#allocation3], 0
    %s8 = scalar_lea.sflag [#allocation3], 1
    %9 = vsyncpa %s8, 0
    %10 = vsyncpa [#allocation6], 0
    %s11 = scalar_lea.sflag [#allocation6], 1
    %12 = vsyncpa %s11, 0
    %13 = vsyncpa [#allocation4], 0
    loop: start=0, step=1, limit=6
    $region2: #{tpu_custom_call.1} parent=1 // loop_pre_header
      _
    $region3: #{tpu_custom_call.1} parent=1 // loop_header
      %s15 = sphi 0, %s19
      %p16 = scmp.ge.s32.totalorder %s15, 6
      %s22 = sphi 0, %s34
      %s23 = sphi 0, %s30
      %s24 = sphi 0, %s22
      %s25 = sphi 0, %s23
      %s26 = sphi 0, %s24
      %s27 = sphi 0, %s25
      %s45 = sphi 0, %s47
      %s48 = sphi 0, %s45
      %s49 = sphi 0, %s48
      %s65 = sphi 0, %s49
      %s79 = sphi 0, %s81
      %s82 = sphi 0, %s79
      %s83 = sphi 0, %s82
      %s99 = sphi 0, %s83
      %s105 = sphi 0, %s107
      %s108 = sphi 0, %s105
      %s109 = sphi 0, %s108
      %s125 = sphi 0, %s109
    $region4: #{tpu_custom_call.1} parent=1 // loop_header_branch
      %18 = sbr.rel (%p16) target = $region8
    $region5: #{tpu_custom_call.1} parent=1 // loop_body
      %s20 = ssub.s32 %s15, 1
      %s21 = ssub.s32 %s15, 2
      %s28 = sadd.s32 1, %s23
      %p29 = scmp.ge.s32.totalorder %s28, 4
      %s30 = scalar_select %p29, 0, %s28
      %s31 = sadd.s32 1, %s22
      %s32 = scalar_select %p29, %s31, %s22
      %p33 = scmp.ge.s32.totalorder %s32, 1
      %s34 = scalar_select %p33, 0, %s32
      %s35 = smul.u32 %s22, 4
      %s36 = sadd.s32 %s35, %s23
      %p37 = scmp.lt.s32.totalorder %s36, 3
      %s38 = scalar_select %p37, %s36, 3
      %s39 = smul.u32 %s34, 4
      %s40 = sadd.s32 %s39, %s30
      %p41 = scmp.lt.s32.totalorder %s40, 3
      %s42 = scalar_select %p41, %s40, 3
      %s43 = ssub.s32 %s38, %s42
      %p44 = scmp.eq.s32.totalorder %s43, 0
      %s46 = sadd.s32 %s45, 1
      %s47 = scalar_select %p44, %s45, %s46
      %p50 = pneg %p44
      %p51 = scmp.eq.s32.totalorder %s15, 3
      %p52 = por %p50, %p51
      %p53 = scmp.ne.s32.totalorder %s45, %s48
      %p54 = scmp.eq.s32.totalorder %s15, 0
      %p55 = por %p53, %p54
      %p56 = scmp.ne.s32.totalorder %s45, %s48
      %p57 = scmp.eq.s32.totalorder %s20, 3
      %p58 = por %p56, %p57
      %p59 = scmp.ne.s32.totalorder %s48, %s49
      %p60 = scmp.eq.s32.totalorder %s20, 0
      %p61 = por %p59, %p60
      %p62 = scmp.ne.s32.totalorder %s48, %s49
      %p63 = scmp.eq.s32.totalorder %s21, 3
      %p64 = por %p62, %p63
      %p66 = scmp.ne.s32.totalorder %s49, %s65
      %p67 = scmp.eq.s32.totalorder %s21, 0
      %p68 = por %p66, %p67
      %s69 = smul.u32 %s22, 4
      %s70 = sadd.s32 %s69, %s23
      %p71 = scmp.lt.s32.totalorder %s70, 3
      %s72 = scalar_select %p71, %s70, 3
      %s73 = smul.u32 %s34, 4
      %s74 = sadd.s32 %s73, %s30
      %p75 = scmp.lt.s32.totalorder %s74, 3
      %s76 = scalar_select %p75, %s74, 3
      %s77 = ssub.s32 %s72, %s76
      %p78 = scmp.eq.s32.totalorder %s77, 0
      %s80 = sadd.s32 %s79, 1
      %s81 = scalar_select %p78, %s79, %s80
      %p84 = pneg %p78
      %p85 = scmp.eq.s32.totalorder %s15, 3
      %p86 = por %p84, %p85
      %p87 = scmp.ne.s32.totalorder %s79, %s82
      %p88 = scmp.eq.s32.totalorder %s15, 0
      %p89 = por %p87, %p88
      %p90 = scmp.ne.s32.totalorder %s79, %s82
      %p91 = scmp.eq.s32.totalorder %s20, 3
      %p92 = por %p90, %p91
      %p93 = scmp.ne.s32.totalorder %s82, %s83
      %p94 = scmp.eq.s32.totalorder %s20, 0
      %p95 = por %p93, %p94
      %p96 = scmp.ne.s32.totalorder %s82, %s83
      %p97 = scmp.eq.s32.totalorder %s21, 3
      %p98 = por %p96, %p97
      %p100 = scmp.ne.s32.totalorder %s83, %s99
      %p101 = scmp.eq.s32.totalorder %s21, 0
      %p102 = por %p100, %p101
      %s103 = ssub.s32 %s22, %s34
      %p104 = scmp.eq.s32.totalorder %s103, 0
      %s106 = sadd.s32 %s105, 1
      %s107 = scalar_select %p104, %s105, %s106
      %p110 = pneg %p104
      %p111 = scmp.eq.s32.totalorder %s15, 3
      %p112 = por %p110, %p111
      %p113 = scmp.ne.s32.totalorder %s105, %s108
      %p114 = scmp.eq.s32.totalorder %s15, 0
      %p115 = por %p113, %p114
      %p116 = scmp.ne.s32.totalorder %s105, %s108
      %p117 = scmp.eq.s32.totalorder %s20, 3
      %p118 = por %p116, %p117
      %p119 = scmp.ne.s32.totalorder %s108, %s109
      %p120 = scmp.eq.s32.totalorder %s20, 0
      %p121 = por %p119, %p120
      %p122 = scmp.ne.s32.totalorder %s108, %s109
      %p123 = scmp.eq.s32.totalorder %s21, 3
      %p124 = por %p122, %p123
      %p126 = scmp.ne.s32.totalorder %s109, %s125
      %p127 = scmp.eq.s32.totalorder %s21, 0
      %p128 = por %p126, %p127
      %p129 = scmp.le.s32.totalorder 1, %s15
      %p130 = scmp.lt.s32.totalorder %s15, 5
      %p131 = pnand %p129, %p130
      %p132 = pneg %p131
      // Predicated region
      $region9: #{tpu_custom_call.1} parent=5 // pred_check
        _
      $region10: #{tpu_custom_call.1} parent=5 // pred_check_branch
        %134 = sbr.rel (%p131) target = $region12
      $region11: #{tpu_custom_call.1} parent=5 // pred_region
        %s135 = ssub.s32 %s15, 1
      $region12: #{tpu_custom_call.1} parent=5 // pred_fallthru
        _
      %p136 = scmp.lt.s32.totalorder %s15, 4
      // Predicated region
      $region13: #{tpu_custom_call.1} parent=5 // pred_check
        %p137 = pneg %p136
      $region14: #{tpu_custom_call.1} parent=5 // pred_check_branch
        %139 = sbr.rel (%p137) target = $region16
      $region15: #{tpu_custom_call.1} parent=5 // pred_region
        // Predicated region
        $region17: #{tpu_custom_call.1} parent=15 // pred_check
          %p140 = pneg %p55
        $region18: #{tpu_custom_call.1} parent=15 // pred_check_branch
          %142 = sbr.rel (%p140) target = $region20
        $region19: #{tpu_custom_call.1} parent=15 // pred_region
          %s143 = sand.u32 %s45, 1
          %s144 = scalar_lea.sflag [#allocation3], %s143
          %s145 = sand.u32 %s45, 1
          %s146 = smul.addr %s145, 4096
          %s147 = scalar_lea.vmem [#allocation2], %s146
          %s148 = smul.u32 %s22, 4
          %s149 = sadd.s32 %s148, %s23
          %p150 = scmp.lt.s32.totalorder %s149, 3
          %s151 = scalar_select %p150, %s149, 3
          %s152 = smul.u32 512, %s151
          %s154 = ssub.s32 65536, 65536
          %155 = vsyncadd %s144, %s154
          %s156 = smul.addr %s152, 128
          %s157 = scalar_lea.hbm %s0, %s156
          %s158 = sshll.u32 %s147, 4
          %s159 = int_to_ptr.vmem [resolvable:$true] %s158
          %164 = dma.hbm_to_vmem [thread:$0]  %s157, 65536, %s159, %s144, 128, 128, 8
        $region20: #{tpu_custom_call.1} parent=15 // pred_fallthru
          _
        // Predicated region
        $region21: #{tpu_custom_call.1} parent=15 // pred_check
          %p165 = pneg %p89
        $region22: #{tpu_custom_call.1} parent=15 // pred_check_branch
          %167 = sbr.rel (%p165) target = $region24
        $region23: #{tpu_custom_call.1} parent=15 // pred_region
          %s168 = sand.u32 %s79, 1
          %s169 = scalar_lea.sflag [#allocation6], %s168
          %s170 = sand.u32 %s79, 1
          %s171 = smul.addr %s170, 4096
          %s172 = scalar_lea.vmem [#allocation5], %s171
          %s173 = smul.u32 %s22, 4
          %s174 = sadd.s32 %s173, %s23
          %p175 = scmp.lt.s32.totalorder %s174, 3
          %s176 = scalar_select %p175, %s174, 3
          %s177 = smul.u32 512, %s176
          %s179 = ssub.s32 65536, 65536
          %180 = vsyncadd %s169, %s179
          %s181 = smul.addr %s177, 128
          %s182 = scalar_lea.hbm %s1, %s181
          %s183 = sshll.u32 %s172, 4
          %s184 = int_to_ptr.vmem [resolvable:$true] %s183
          %189 = dma.hbm_to_vmem [thread:$0]  %s182, 65536, %s184, %s169, 128, 128, 8
        $region24: #{tpu_custom_call.1} parent=15 // pred_fallthru
          _
      $region16: #{tpu_custom_call.1} parent=5 // pred_fallthru
        _
      %p190 = scmp.le.s32.totalorder 1, %s15
      %p191 = scmp.lt.s32.totalorder %s15, 5
      %p192 = pnand %p190, %p191
      %p193 = pneg %p192
      // Predicated region
      $region25: #{tpu_custom_call.1} parent=5 // pred_check
        _
      $region26: #{tpu_custom_call.1} parent=5 // pred_check_branch
        %195 = sbr.rel (%p192) target = $region28
      $region27: #{tpu_custom_call.1} parent=5 // pred_region
        %s196 = ssub.s32 %s15, 1
        %s197 = sand.u32 %s48, 1
        %s198 = scalar_lea.sflag [#allocation3], %s197
        %s199 = sand.u32 %s48, 1
        %s200 = smul.addr %s199, 4096
        %s201 = scalar_lea.vmem [#allocation2], %s200
        // Predicated region
        $region29: #{tpu_custom_call.1} parent=27 // pred_check
          %p202 = pneg %p61
        $region30: #{tpu_custom_call.1} parent=27 // pred_check_branch
          %204 = sbr.rel (%p202) target = $region32
        $region31: #{tpu_custom_call.1} parent=27 // pred_region
          %205 = dma.done %s198, 65536
        $region32: #{tpu_custom_call.1} parent=27 // pred_fallthru
          _
        %s206 = sand.u32 %s82, 1
        %s207 = scalar_lea.sflag [#allocation6], %s206
        %s208 = sand.u32 %s82, 1
        %s209 = smul.addr %s208, 4096
        %s210 = scalar_lea.vmem [#allocation5], %s209
        // Predicated region
        $region33: #{tpu_custom_call.1} parent=27 // pred_check
          %p211 = pneg %p95
        $region34: #{tpu_custom_call.1} parent=27 // pred_check_branch
          %213 = sbr.rel (%p211) target = $region36
        $region35: #{tpu_custom_call.1} parent=27 // pred_region
          %214 = dma.done %s207, 65536
        $region36: #{tpu_custom_call.1} parent=27 // pred_fallthru
          _
        %s215 = sand.u32 %s48, 1
        %s216 = scalar_lea.sflag [#allocation3], %s215
        %s217 = sand.u32 %s48, 1
        %s218 = smul.addr %s217, 4096
        %s219 = scalar_lea.vmem [#allocation2], %s218
        %p220 = pneg %p61
        %p221 = pneg %p58
        %s222 = sand.u32 %s82, 1
        %s223 = scalar_lea.sflag [#allocation6], %s222
        %s224 = sand.u32 %s82, 1
        %s225 = smul.addr %s224, 4096
        %s226 = scalar_lea.vmem [#allocation5], %s225
        %p227 = pneg %p95
        %p228 = pneg %p92
        %p229 = pneg %p121
        %p230 = pneg %p118
        %s231 = smul.u32 %s24, 4
        %s232 = sadd.s32 %s231, %s25
        %p233 = scmp.lt.s32.totalorder %s232, 3
        %s234 = scalar_select %p233, %s232, 3
        %s235 = smul.u32 512, %s234
        %s236 = smul.u32 %s24, 4
        %s237 = sadd.s32 %s236, %s25
        %p238 = scmp.lt.s32.totalorder %s237, 3
        %s239 = scalar_select %p238, %s237, 3
        %s240 = smul.u32 512, %s239
        %p241 = scmp.eq.s32.totalorder %s25, 0
        // Predicated region
        $region37: #{tpu_custom_call.1} parent=27 // pred_check
          %p242 = pneg %p241
        $region38: #{tpu_custom_call.1} parent=27 // pred_check_branch
          %244 = sbr.rel (%p242) target = $region40
        $region39: #{tpu_custom_call.1} parent=27 // pred_region
          %245 = vst [vmem:[#allocation7] sm:$0xff] 0.0
        $region40: #{tpu_custom_call.1} parent=27 // pred_fallthru
          _
        %s246 = smul.u32 %s24, 4
        %s247 = sadd.s32 %s246, %s25
        %s248 = smul.u32 %s247, 524288
        %s249 = ssub.s32 2097152, %s248
        %p250 = scmp.ge.s32.totalorder %s249, 524288
        // Predicated region
        $region41: #{tpu_custom_call.1} parent=27 // pred_check
          %p251 = pneg %p250
        $region42: #{tpu_custom_call.1} parent=27 // pred_check_branch
          %253 = sbr.rel (%p251) target = $region44
        $region43: #{tpu_custom_call.1} parent=27 // pred_region
          %v254 = vld [vmem:[#allocation7] sm:$0xff]
          %v255 = vld [vmem:[%s201] sm:$0xff]
          %v256 = vld [vmem:[%s201 + $0x8] sm:$0xff]
          %v257 = vld [vmem:[%s201 + $0x10] sm:$0xff]
          %v258 = vld [vmem:[%s201 + $0x18] sm:$0xff]
          %v259 = vld [vmem:[%s201 + $0x20] sm:$0xff]
          %v260 = vld [vmem:[%s201 + $0x28] sm:$0xff]
          %v261 = vld [vmem:[%s201 + $0x30] sm:$0xff]
          %v262 = vld [vmem:[%s201 + $0x38] sm:$0xff]
          %v263 = vld [vmem:[%s201 + $0x40] sm:$0xff]
          %v264 = vld [vmem:[%s201 + $0x48] sm:$0xff]
          %v265 = vld [vmem:[%s201 + $0x50] sm:$0xff]
          %v266 = vld [vmem:[%s201 + $0x58] sm:$0xff]
          %v267 = vld [vmem:[%s201 + $0x60] sm:$0xff]
          %v268 = vld [vmem:[%s201 + $0x68] sm:$0xff]
          %v269 = vld [vmem:[%s201 + $0x70] sm:$0xff]
          %v270 = vld [vmem:[%s201 + $0x78] sm:$0xff]
          %v271 = vld [vmem:[%s201 + $0x80] sm:$0xff]
          %v272 = vld [vmem:[%s201 + $0x88] sm:$0xff]
          %v273 = vld [vmem:[%s201 + $0x90] sm:$0xff]
          %v274 = vld [vmem:[%s201 + $0x98] sm:$0xff]
          %v275 = vld [vmem:[%s201 + $0xa0] sm:$0xff]
          %v276 = vld [vmem:[%s201 + $0xa8] sm:$0xff]
          %v277 = vld [vmem:[%s201 + $0xb0] sm:$0xff]
          %v278 = vld [vmem:[%s201 + $0xb8] sm:$0xff]
          %v279 = vld [vmem:[%s201 + $0xc0] sm:$0xff]
          %v280 = vld [vmem:[%s201 + $0xc8] sm:$0xff]
          %v281 = vld [vmem:[%s201 + $0xd0] sm:$0xff]
          %v282 = vld [vmem:[%s201 + $0xd8] sm:$0xff]
          %v283 = vld [vmem:[%s201 + $0xe0] sm:$0xff]
          %v284 = vld [vmem:[%s201 + $0xe8] sm:$0xff]
          %v285 = vld [vmem:[%s201 + $0xf0] sm:$0xff]
          %v286 = vld [vmem:[%s201 + $0xf8] sm:$0xff]
          %v287 = vld [vmem:[%s201 + $0x100] sm:$0xff]
          %v288 = vld [vmem:[%s201 + $0x108] sm:$0xff]
          %v289 = vld [vmem:[%s201 + $0x110] sm:$0xff]
          %v290 = vld [vmem:[%s201 + $0x118] sm:$0xff]
          %v291 = vld [vmem:[%s201 + $0x120] sm:$0xff]
          %v292 = vld [vmem:[%s201 + $0x128] sm:$0xff]
          %v293 = vld [vmem:[%s201 + $0x130] sm:$0xff]
          %v294 = vld [vmem:[%s201 + $0x138] sm:$0xff]
          %v295 = vld [vmem:[%s201 + $0x140] sm:$0xff]
          %v296 = vld [vmem:[%s201 + $0x148] sm:$0xff]
          %v297 = vld [vmem:[%s201 + $0x150] sm:$0xff]
          %v298 = vld [vmem:[%s201 + $0x158] sm:$0xff]
          %v299 = vld [vmem:[%s201 + $0x160] sm:$0xff]
          %v300 = vld [vmem:[%s201 + $0x168] sm:$0xff]
          %v301 = vld [vmem:[%s201 + $0x170] sm:$0xff]
          %v302 = vld [vmem:[%s201 + $0x178] sm:$0xff]
          %v303 = vld [vmem:[%s201 + $0x180] sm:$0xff]
          %v304 = vld [vmem:[%s201 + $0x188] sm:$0xff]
          %v305 = vld [vmem:[%s201 + $0x190] sm:$0xff]
          %v306 = vld [vmem:[%s201 + $0x198] sm:$0xff]
          %v307 = vld [vmem:[%s201 + $0x1a0] sm:$0xff]
          %v308 = vld [vmem:[%s201 + $0x1a8] sm:$0xff]
          %v309 = vld [vmem:[%s201 + $0x1b0] sm:$0xff]
          %v310 = vld [vmem:[%s201 + $0x1b8] sm:$0xff]
          %v311 = vld [vmem:[%s201 + $0x1c0] sm:$0xff]
          %v312 = vld [vmem:[%s201 + $0x1c8] sm:$0xff]
          %v313 = vld [vmem:[%s201 + $0x1d0] sm:$0xff]
          %v314 = vld [vmem:[%s201 + $0x1d8] sm:$0xff]
          %v315 = vld [vmem:[%s201 + $0x1e0] sm:$0xff]
          %v316 = vld [vmem:[%s201 + $0x1e8] sm:$0xff]
          %v317 = vld [vmem:[%s201 + $0x1f0] sm:$0xff]
          %v318 = vld [vmem:[%s201 + $0x1f8] sm:$0xff]
          %v319 = vld [vmem:[%s201 + $0x200] sm:$0xff]
          %v320 = vld [vmem:[%s201 + $0x208] sm:$0xff]
          %v321 = vld [vmem:[%s201 + $0x210] sm:$0xff]
          %v322 = vld [vmem:[%s201 + $0x218] sm:$0xff]
          %v323 = vld [vmem:[%s201 + $0x220] sm:$0xff]
          %v324 = vld [vmem:[%s201 + $0x228] sm:$0xff]
          %v325 = vld [vmem:[%s201 + $0x230] sm:$0xff]
          %v326 = vld [vmem:[%s201 + $0x238] sm:$0xff]
          %v327 = vld [vmem:[%s201 + $0x240] sm:$0xff]
          %v328 = vld [vmem:[%s201 + $0x248] sm:$0xff]
          %v329 = vld [vmem:[%s201 + $0x250] sm:$0xff]
          %v330 = vld [vmem:[%s201 + $0x258] sm:$0xff]
          %v331 = vld [vmem:[%s201 + $0x260] sm:$0xff]
          %v332 = vld [vmem:[%s201 + $0x268] sm:$0xff]
          %v333 = vld [vmem:[%s201 + $0x270] sm:$0xff]
          %v334 = vld [vmem:[%s201 + $0x278] sm:$0xff]
          %v335 = vld [vmem:[%s201 + $0x280] sm:$0xff]
          %v336 = vld [vmem:[%s201 + $0x288] sm:$0xff]
          %v337 = vld [vmem:[%s201 + $0x290] sm:$0xff]
          %v338 = vld [vmem:[%s201 + $0x298] sm:$0xff]
          %v339 = vld [vmem:[%s201 + $0x2a0] sm:$0xff]
          %v340 = vld [vmem:[%s201 + $0x2a8] sm:$0xff]
          %v341 = vld [vmem:[%s201 + $0x2b0] sm:$0xff]
          %v342 = vld [vmem:[%s201 + $0x2b8] sm:$0xff]
          %v343 = vld [vmem:[%s201 + $0x2c0] sm:$0xff]
          %v344 = vld [vmem:[%s201 + $0x2c8] sm:$0xff]
          %v345 = vld [vmem:[%s201 + $0x2d0] sm:$0xff]
          %v346 = vld [vmem:[%s201 + $0x2d8] sm:$0xff]
          %v347 = vld [vmem:[%s201 + $0x2e0] sm:$0xff]
          %v348 = vld [vmem:[%s201 + $0x2e8] sm:$0xff]
          %v349 = vld [vmem:[%s201 + $0x2f0] sm:$0xff]
          %v350 = vld [vmem:[%s201 + $0x2f8] sm:$0xff]
          %v351 = vld [vmem:[%s201 + $0x300] sm:$0xff]
          %v352 = vld [vmem:[%s201 + $0x308] sm:$0xff]
          %v353 = vld [vmem:[%s201 + $0x310] sm:$0xff]
          %v354 = vld [vmem:[%s201 + $0x318] sm:$0xff]
          %v355 = vld [vmem:[%s201 + $0x320] sm:$0xff]
          %v356 = vld [vmem:[%s201 + $0x328] sm:$0xff]
          %v357 = vld [vmem:[%s201 + $0x330] sm:$0xff]
          %v358 = vld [vmem:[%s201 + $0x338] sm:$0xff]
          %v359 = vld [vmem:[%s201 + $0x340] sm:$0xff]
          %v360 = vld [vmem:[%s201 + $0x348] sm:$0xff]
          %v361 = vld [vmem:[%s201 + $0x350] sm:$0xff]
          %v362 = vld [vmem:[%s201 + $0x358] sm:$0xff]
          %v363 = vld [vmem:[%s201 + $0x360] sm:$0xff]
          %v364 = vld [vmem:[%s201 + $0x368] sm:$0xff]
          %v365 = vld [vmem:[%s201 + $0x370] sm:$0xff]
          %v366 = vld [vmem:[%s201 + $0x378] sm:$0xff]
          %v367 = vld [vmem:[%s201 + $0x380] sm:$0xff]
          %v368 = vld [vmem:[%s201 + $0x388] sm:$0xff]
          %v369 = vld [vmem:[%s201 + $0x390] sm:$0xff]
          %v370 = vld [vmem:[%s201 + $0x398] sm:$0xff]
          %v371 = vld [vmem:[%s201 + $0x3a0] sm:$0xff]
          %v372 = vld [vmem:[%s201 + $0x3a8] sm:$0xff]
          %v373 = vld [vmem:[%s201 + $0x3b0] sm:$0xff]
          %v374 = vld [vmem:[%s201 + $0x3b8] sm:$0xff]
          %v375 = vld [vmem:[%s201 + $0x3c0] sm:$0xff]
          %v376 = vld [vmem:[%s201 + $0x3c8] sm:$0xff]
          %v377 = vld [vmem:[%s201 + $0x3d0] sm:$0xff]
          %v378 = vld [vmem:[%s201 + $0x3d8] sm:$0xff]
          %v379 = vld [vmem:[%s201 + $0x3e0] sm:$0xff]
          %v380 = vld [vmem:[%s201 + $0x3e8] sm:$0xff]
          %v381 = vld [vmem:[%s201 + $0x3f0] sm:$0xff]
          %v382 = vld [vmem:[%s201 + $0x3f8] sm:$0xff]
          %v383 = vld [vmem:[%s201 + $0x400] sm:$0xff]
          %v384 = vld [vmem:[%s201 + $0x408] sm:$0xff]
          %v385 = vld [vmem:[%s201 + $0x410] sm:$0xff]
          %v386 = vld [vmem:[%s201 + $0x418] sm:$0xff]
          %v387 = vld [vmem:[%s201 + $0x420] sm:$0xff]
          %v388 = vld [vmem:[%s201 + $0x428] sm:$0xff]
          %v389 = vld [vmem:[%s201 + $0x430] sm:$0xff]
          %v390 = vld [vmem:[%s201 + $0x438] sm:$0xff]
          %v391 = vld [vmem:[%s201 + $0x440] sm:$0xff]
          %v392 = vld [vmem:[%s201 + $0x448] sm:$0xff]
          %v393 = vld [vmem:[%s201 + $0x450] sm:$0xff]
          %v394 = vld [vmem:[%s201 + $0x458] sm:$0xff]
          %v395 = vld [vmem:[%s201 + $0x460] sm:$0xff]
          %v396 = vld [vmem:[%s201 + $0x468] sm:$0xff]
          %v397 = vld [vmem:[%s201 + $0x470] sm:$0xff]
          %v398 = vld [vmem:[%s201 + $0x478] sm:$0xff]
          %v399 = vld [vmem:[%s201 + $0x480] sm:$0xff]
          %v400 = vld [vmem:[%s201 + $0x488] sm:$0xff]
          %v401 = vld [vmem:[%s201 + $0x490] sm:$0xff]
          %v402 = vld [vmem:[%s201 + $0x498] sm:$0xff]
          %v403 = vld [vmem:[%s201 + $0x4a0] sm:$0xff]
          %v404 = vld [vmem:[%s201 + $0x4a8] sm:$0xff]
          %v405 = vld [vmem:[%s201 + $0x4b0] sm:$0xff]
          %v406 = vld [vmem:[%s201 + $0x4b8] sm:$0xff]
          %v407 = vld [vmem:[%s201 + $0x4c0] sm:$0xff]
          %v408 = vld [vmem:[%s201 + $0x4c8] sm:$0xff]
          %v409 = vld [vmem:[%s201 + $0x4d0] sm:$0xff]
          %v410 = vld [vmem:[%s201 + $0x4d8] sm:$0xff]
          %v411 = vld [vmem:[%s201 + $0x4e0] sm:$0xff]
          %v412 = vld [vmem:[%s201 + $0x4e8] sm:$0xff]
          %v413 = vld [vmem:[%s201 + $0x4f0] sm:$0xff]
          %v414 = vld [vmem:[%s201 + $0x4f8] sm:$0xff]
          %v415 = vld [vmem:[%s201 + $0x500] sm:$0xff]
          %v416 = vld [vmem:[%s201 + $0x508] sm:$0xff]
          %v417 = vld [vmem:[%s201 + $0x510] sm:$0xff]
          %v418 = vld [vmem:[%s201 + $0x518] sm:$0xff]
          %v419 = vld [vmem:[%s201 + $0x520] sm:$0xff]
          %v420 = vld [vmem:[%s201 + $0x528] sm:$0xff]
          %v421 = vld [vmem:[%s201 + $0x530] sm:$0xff]
          %v422 = vld [vmem:[%s201 + $0x538] sm:$0xff]
          %v423 = vld [vmem:[%s201 + $0x540] sm:$0xff]
          %v424 = vld [vmem:[%s201 + $0x548] sm:$0xff]
          %v425 = vld [vmem:[%s201 + $0x550] sm:$0xff]
          %v426 = vld [vmem:[%s201 + $0x558] sm:$0xff]
          %v427 = vld [vmem:[%s201 + $0x560] sm:$0xff]
          %v428 = vld [vmem:[%s201 + $0x568] sm:$0xff]
          %v429 = vld [vmem:[%s201 + $0x570] sm:$0xff]
          %v430 = vld [vmem:[%s201 + $0x578] sm:$0xff]
          %v431 = vld [vmem:[%s201 + $0x580] sm:$0xff]
          %v432 = vld [vmem:[%s201 + $0x588] sm:$0xff]
          %v433 = vld [vmem:[%s201 + $0x590] sm:$0xff]
          %v434 = vld [vmem:[%s201 + $0x598] sm:$0xff]
          %v435 = vld [vmem:[%s201 + $0x5a0] sm:$0xff]
          %v436 = vld [vmem:[%s201 + $0x5a8] sm:$0xff]
          %v437 = vld [vmem:[%s201 + $0x5b0] sm:$0xff]
          %v438 = vld [vmem:[%s201 + $0x5b8] sm:$0xff]
          %v439 = vld [vmem:[%s201 + $0x5c0] sm:$0xff]
          %v440 = vld [vmem:[%s201 + $0x5c8] sm:$0xff]
          %v441 = vld [vmem:[%s201 + $0x5d0] sm:$0xff]
          %v442 = vld [vmem:[%s201 + $0x5d8] sm:$0xff]
          %v443 = vld [vmem:[%s201 + $0x5e0] sm:$0xff]
          %v444 = vld [vmem:[%s201 + $0x5e8] sm:$0xff]
          %v445 = vld [vmem:[%s201 + $0x5f0] sm:$0xff]
          %v446 = vld [vmem:[%s201 + $0x5f8] sm:$0xff]
          %v447 = vld [vmem:[%s201 + $0x600] sm:$0xff]
          %v448 = vld [vmem:[%s201 + $0x608] sm:$0xff]
          %v449 = vld [vmem:[%s201 + $0x610] sm:$0xff]
          %v450 = vld [vmem:[%s201 + $0x618] sm:$0xff]
          %v451 = vld [vmem:[%s201 + $0x620] sm:$0xff]
          %v452 = vld [vmem:[%s201 + $0x628] sm:$0xff]
          %v453 = vld [vmem:[%s201 + $0x630] sm:$0xff]
          %v454 = vld [vmem:[%s201 + $0x638] sm:$0xff]
          %v455 = vld [vmem:[%s201 + $0x640] sm:$0xff]
          %v456 = vld [vmem:[%s201 + $0x648] sm:$0xff]
          %v457 = vld [vmem:[%s201 + $0x650] sm:$0xff]
          %v458 = vld [vmem:[%s201 + $0x658] sm:$0xff]
          %v459 = vld [vmem:[%s201 + $0x660] sm:$0xff]
          %v460 = vld [vmem:[%s201 + $0x668] sm:$0xff]
          %v461 = vld [vmem:[%s201 + $0x670] sm:$0xff]
          %v462 = vld [vmem:[%s201 + $0x678] sm:$0xff]
          %v463 = vld [vmem:[%s201 + $0x680] sm:$0xff]
          %v464 = vld [vmem:[%s201 + $0x688] sm:$0xff]
          %v465 = vld [vmem:[%s201 + $0x690] sm:$0xff]
          %v466 = vld [vmem:[%s201 + $0x698] sm:$0xff]
          %v467 = vld [vmem:[%s201 + $0x6a0] sm:$0xff]
          %v468 = vld [vmem:[%s201 + $0x6a8] sm:$0xff]
          %v469 = vld [vmem:[%s201 + $0x6b0] sm:$0xff]
          %v470 = vld [vmem:[%s201 + $0x6b8] sm:$0xff]
          %v471 = vld [vmem:[%s201 + $0x6c0] sm:$0xff]
          %v472 = vld [vmem:[%s201 + $0x6c8] sm:$0xff]
          %v473 = vld [vmem:[%s201 + $0x6d0] sm:$0xff]
          %v474 = vld [vmem:[%s201 + $0x6d8] sm:$0xff]
          %v475 = vld [vmem:[%s201 + $0x6e0] sm:$0xff]
          %v476 = vld [vmem:[%s201 + $0x6e8] sm:$0xff]
          %v477 = vld [vmem:[%s201 + $0x6f0] sm:$0xff]
          %v478 = vld [vmem:[%s201 + $0x6f8] sm:$0xff]
          %v479 = vld [vmem:[%s201 + $0x700] sm:$0xff]
          %v480 = vld [vmem:[%s201 + $0x708] sm:$0xff]
          %v481 = vld [vmem:[%s201 + $0x710] sm:$0xff]
          %v482 = vld [vmem:[%s201 + $0x718] sm:$0xff]
          %v483 = vld [vmem:[%s201 + $0x720] sm:$0xff]
          %v484 = vld [vmem:[%s201 + $0x728] sm:$0xff]
          %v485 = vld [vmem:[%s201 + $0x730] sm:$0xff]
          %v486 = vld [vmem:[%s201 + $0x738] sm:$0xff]
          %v487 = vld [vmem:[%s201 + $0x740] sm:$0xff]
          %v488 = vld [vmem:[%s201 + $0x748] sm:$0xff]
          %v489 = vld [vmem:[%s201 + $0x750] sm:$0xff]
          %v490 = vld [vmem:[%s201 + $0x758] sm:$0xff]
          %v491 = vld [vmem:[%s201 + $0x760] sm:$0xff]
          %v492 = vld [vmem:[%s201 + $0x768] sm:$0xff]
          %v493 = vld [vmem:[%s201 + $0x770] sm:$0xff]
          %v494 = vld [vmem:[%s201 + $0x778] sm:$0xff]
          %v495 = vld [vmem:[%s201 + $0x780] sm:$0xff]
          %v496 = vld [vmem:[%s201 + $0x788] sm:$0xff]
          %v497 = vld [vmem:[%s201 + $0x790] sm:$0xff]
          %v498 = vld [vmem:[%s201 + $0x798] sm:$0xff]
          %v499 = vld [vmem:[%s201 + $0x7a0] sm:$0xff]
          %v500 = vld [vmem:[%s201 + $0x7a8] sm:$0xff]
          %v501 = vld [vmem:[%s201 + $0x7b0] sm:$0xff]
          %v502 = vld [vmem:[%s201 + $0x7b8] sm:$0xff]
          %v503 = vld [vmem:[%s201 + $0x7c0] sm:$0xff]
          %v504 = vld [vmem:[%s201 + $0x7c8] sm:$0xff]
          %v505 = vld [vmem:[%s201 + $0x7d0] sm:$0xff]
          %v506 = vld [vmem:[%s201 + $0x7d8] sm:$0xff]
          %v507 = vld [vmem:[%s201 + $0x7e0] sm:$0xff]
          %v508 = vld [vmem:[%s201 + $0x7e8] sm:$0xff]
          %v509 = vld [vmem:[%s201 + $0x7f0] sm:$0xff]
          %v510 = vld [vmem:[%s201 + $0x7f8] sm:$0xff]
          %v511 = vld [vmem:[%s201 + $0x800] sm:$0xff]
          %v512 = vld [vmem:[%s201 + $0x808] sm:$0xff]
          %v513 = vld [vmem:[%s201 + $0x810] sm:$0xff]
          %v514 = vld [vmem:[%s201 + $0x818] sm:$0xff]
          %v515 = vld [vmem:[%s201 + $0x820] sm:$0xff]
          %v516 = vld [vmem:[%s201 + $0x828] sm:$0xff]
          %v517 = vld [vmem:[%s201 + $0x830] sm:$0xff]
          %v518 = vld [vmem:[%s201 + $0x838] sm:$0xff]
          %v519 = vld [vmem:[%s201 + $0x840] sm:$0xff]
          %v520 = vld [vmem:[%s201 + $0x848] sm:$0xff]
          %v521 = vld [vmem:[%s201 + $0x850] sm:$0xff]
          %v522 = vld [vmem:[%s201 + $0x858] sm:$0xff]
          %v523 = vld [vmem:[%s201 + $0x860] sm:$0xff]
          %v524 = vld [vmem:[%s201 + $0x868] sm:$0xff]
          %v525 = vld [vmem:[%s201 + $0x870] sm:$0xff]
          %v526 = vld [vmem:[%s201 + $0x878] sm:$0xff]
          %v527 = vld [vmem:[%s201 + $0x880] sm:$0xff]
          %v528 = vld [vmem:[%s201 + $0x888] sm:$0xff]
          %v529 = vld [vmem:[%s201 + $0x890] sm:$0xff]
          %v530 = vld [vmem:[%s201 + $0x898] sm:$0xff]
          %v531 = vld [vmem:[%s201 + $0x8a0] sm:$0xff]
          %v532 = vld [vmem:[%s201 + $0x8a8] sm:$0xff]
          %v533 = vld [vmem:[%s201 + $0x8b0] sm:$0xff]
          %v534 = vld [vmem:[%s201 + $0x8b8] sm:$0xff]
          %v535 = vld [vmem:[%s201 + $0x8c0] sm:$0xff]
          %v536 = vld [vmem:[%s201 + $0x8c8] sm:$0xff]
          %v537 = vld [vmem:[%s201 + $0x8d0] sm:$0xff]
          %v538 = vld [vmem:[%s201 + $0x8d8] sm:$0xff]
          %v539 = vld [vmem:[%s201 + $0x8e0] sm:$0xff]
          %v540 = vld [vmem:[%s201 + $0x8e8] sm:$0xff]
          %v541 = vld [vmem:[%s201 + $0x8f0] sm:$0xff]
          %v542 = vld [vmem:[%s201 + $0x8f8] sm:$0xff]
          %v543 = vld [vmem:[%s201 + $0x900] sm:$0xff]
          %v544 = vld [vmem:[%s201 + $0x908] sm:$0xff]
          %v545 = vld [vmem:[%s201 + $0x910] sm:$0xff]
          %v546 = vld [vmem:[%s201 + $0x918] sm:$0xff]
          %v547 = vld [vmem:[%s201 + $0x920] sm:$0xff]
          %v548 = vld [vmem:[%s201 + $0x928] sm:$0xff]
          %v549 = vld [vmem:[%s201 + $0x930] sm:$0xff]
          %v550 = vld [vmem:[%s201 + $0x938] sm:$0xff]
          %v551 = vld [vmem:[%s201 + $0x940] sm:$0xff]
          %v552 = vld [vmem:[%s201 + $0x948] sm:$0xff]
          %v553 = vld [vmem:[%s201 + $0x950] sm:$0xff]
          %v554 = vld [vmem:[%s201 + $0x958] sm:$0xff]
          %v555 = vld [vmem:[%s201 + $0x960] sm:$0xff]
          %v556 = vld [vmem:[%s201 + $0x968] sm:$0xff]
          %v557 = vld [vmem:[%s201 + $0x970] sm:$0xff]
          %v558 = vld [vmem:[%s201 + $0x978] sm:$0xff]
          %v559 = vld [vmem:[%s201 + $0x980] sm:$0xff]
          %v560 = vld [vmem:[%s201 + $0x988] sm:$0xff]
          %v561 = vld [vmem:[%s201 + $0x990] sm:$0xff]
          %v562 = vld [vmem:[%s201 + $0x998] sm:$0xff]
          %v563 = vld [vmem:[%s201 + $0x9a0] sm:$0xff]
          %v564 = vld [vmem:[%s201 + $0x9a8] sm:$0xff]
          %v565 = vld [vmem:[%s201 + $0x9b0] sm:$0xff]
          %v566 = vld [vmem:[%s201 + $0x9b8] sm:$0xff]
          %v567 = vld [vmem:[%s201 + $0x9c0] sm:$0xff]
          %v568 = vld [vmem:[%s201 + $0x9c8] sm:$0xff]
          %v569 = vld [vmem:[%s201 + $0x9d0] sm:$0xff]
          %v570 = vld [vmem:[%s201 + $0x9d8] sm:$0xff]
          %v571 = vld [vmem:[%s201 + $0x9e0] sm:$0xff]
          %v572 = vld [vmem:[%s201 + $0x9e8] sm:$0xff]
          %v573 = vld [vmem:[%s201 + $0x9f0] sm:$0xff]
          %v574 = vld [vmem:[%s201 + $0x9f8] sm:$0xff]
          %v575 = vld [vmem:[%s201 + $0xa00] sm:$0xff]
          %v576 = vld [vmem:[%s201 + $0xa08] sm:$0xff]
          %v577 = vld [vmem:[%s201 + $0xa10] sm:$0xff]
          %v578 = vld [vmem:[%s201 + $0xa18] sm:$0xff]
          %v579 = vld [vmem:[%s201 + $0xa20] sm:$0xff]
          %v580 = vld [vmem:[%s201 + $0xa28] sm:$0xff]
          %v581 = vld [vmem:[%s201 + $0xa30] sm:$0xff]
          %v582 = vld [vmem:[%s201 + $0xa38] sm:$0xff]
          %v583 = vld [vmem:[%s201 + $0xa40] sm:$0xff]
          %v584 = vld [vmem:[%s201 + $0xa48] sm:$0xff]
          %v585 = vld [vmem:[%s201 + $0xa50] sm:$0xff]
          %v586 = vld [vmem:[%s201 + $0xa58] sm:$0xff]
          %v587 = vld [vmem:[%s201 + $0xa60] sm:$0xff]
          %v588 = vld [vmem:[%s201 + $0xa68] sm:$0xff]
          %v589 = vld [vmem:[%s201 + $0xa70] sm:$0xff]
          %v590 = vld [vmem:[%s201 + $0xa78] sm:$0xff]
          %v591 = vld [vmem:[%s201 + $0xa80] sm:$0xff]
          %v592 = vld [vmem:[%s201 + $0xa88] sm:$0xff]
          %v593 = vld [vmem:[%s201 + $0xa90] sm:$0xff]
          %v594 = vld [vmem:[%s201 + $0xa98] sm:$0xff]
          %v595 = vld [vmem:[%s201 + $0xaa0] sm:$0xff]
          %v596 = vld [vmem:[%s201 + $0xaa8] sm:$0xff]
          %v597 = vld [vmem:[%s201 + $0xab0] sm:$0xff]
          %v598 = vld [vmem:[%s201 + $0xab8] sm:$0xff]
          %v599 = vld [vmem:[%s201 + $0xac0] sm:$0xff]
          %v600 = vld [vmem:[%s201 + $0xac8] sm:$0xff]
          %v601 = vld [vmem:[%s201 + $0xad0] sm:$0xff]
          %v602 = vld [vmem:[%s201 + $0xad8] sm:$0xff]
          %v603 = vld [vmem:[%s201 + $0xae0] sm:$0xff]
          %v604 = vld [vmem:[%s201 + $0xae8] sm:$0xff]
          %v605 = vld [vmem:[%s201 + $0xaf0] sm:$0xff]
          %v606 = vld [vmem:[%s201 + $0xaf8] sm:$0xff]
          %v607 = vld [vmem:[%s201 + $0xb00] sm:$0xff]
          %v608 = vld [vmem:[%s201 + $0xb08] sm:$0xff]
          %v609 = vld [vmem:[%s201 + $0xb10] sm:$0xff]
          %v610 = vld [vmem:[%s201 + $0xb18] sm:$0xff]
          %v611 = vld [vmem:[%s201 + $0xb20] sm:$0xff]
          %v612 = vld [vmem:[%s201 + $0xb28] sm:$0xff]
          %v613 = vld [vmem:[%s201 + $0xb30] sm:$0xff]
          %v614 = vld [vmem:[%s201 + $0xb38] sm:$0xff]
          %v615 = vld [vmem:[%s201 + $0xb40] sm:$0xff]
          %v616 = vld [vmem:[%s201 + $0xb48] sm:$0xff]
          %v617 = vld [vmem:[%s201 + $0xb50] sm:$0xff]
          %v618 = vld [vmem:[%s201 + $0xb58] sm:$0xff]
          %v619 = vld [vmem:[%s201 + $0xb60] sm:$0xff]
          %v620 = vld [vmem:[%s201 + $0xb68] sm:$0xff]
          %v621 = vld [vmem:[%s201 + $0xb70] sm:$0xff]
          %v622 = vld [vmem:[%s201 + $0xb78] sm:$0xff]
          %v623 = vld [vmem:[%s201 + $0xb80] sm:$0xff]
          %v624 = vld [vmem:[%s201 + $0xb88] sm:$0xff]
          %v625 = vld [vmem:[%s201 + $0xb90] sm:$0xff]
          %v626 = vld [vmem:[%s201 + $0xb98] sm:$0xff]
          %v627 = vld [vmem:[%s201 + $0xba0] sm:$0xff]
          %v628 = vld [vmem:[%s201 + $0xba8] sm:$0xff]
          %v629 = vld [vmem:[%s201 + $0xbb0] sm:$0xff]
          %v630 = vld [vmem:[%s201 + $0xbb8] sm:$0xff]
          %v631 = vld [vmem:[%s201 + $0xbc0] sm:$0xff]
          %v632 = vld [vmem:[%s201 + $0xbc8] sm:$0xff]
          %v633 = vld [vmem:[%s201 + $0xbd0] sm:$0xff]
          %v634 = vld [vmem:[%s201 + $0xbd8] sm:$0xff]
          %v635 = vld [vmem:[%s201 + $0xbe0] sm:$0xff]
          %v636 = vld [vmem:[%s201 + $0xbe8] sm:$0xff]
          %v637 = vld [vmem:[%s201 + $0xbf0] sm:$0xff]
          %v638 = vld [vmem:[%s201 + $0xbf8] sm:$0xff]
          %v639 = vld [vmem:[%s201 + $0xc00] sm:$0xff]
          %v640 = vld [vmem:[%s201 + $0xc08] sm:$0xff]
          %v641 = vld [vmem:[%s201 + $0xc10] sm:$0xff]
          %v642 = vld [vmem:[%s201 + $0xc18] sm:$0xff]
          %v643 = vld [vmem:[%s201 + $0xc20] sm:$0xff]
          %v644 = vld [vmem:[%s201 + $0xc28] sm:$0xff]
          %v645 = vld [vmem:[%s201 + $0xc30] sm:$0xff]
          %v646 = vld [vmem:[%s201 + $0xc38] sm:$0xff]
          %v647 = vld [vmem:[%s201 + $0xc40] sm:$0xff]
          %v648 = vld [vmem:[%s201 + $0xc48] sm:$0xff]
          %v649 = vld [vmem:[%s201 + $0xc50] sm:$0xff]
          %v650 = vld [vmem:[%s201 + $0xc58] sm:$0xff]
          %v651 = vld [vmem:[%s201 + $0xc60] sm:$0xff]
          %v652 = vld [vmem:[%s201 + $0xc68] sm:$0xff]
          %v653 = vld [vmem:[%s201 + $0xc70] sm:$0xff]
          %v654 = vld [vmem:[%s201 + $0xc78] sm:$0xff]
          %v655 = vld [vmem:[%s201 + $0xc80] sm:$0xff]
          %v656 = vld [vmem:[%s201 + $0xc88] sm:$0xff]
          %v657 = vld [vmem:[%s201 + $0xc90] sm:$0xff]
          %v658 = vld [vmem:[%s201 + $0xc98] sm:$0xff]
          %v659 = vld [vmem:[%s201 + $0xca0] sm:$0xff]
          %v660 = vld [vmem:[%s201 + $0xca8] sm:$0xff]
          %v661 = vld [vmem:[%s201 + $0xcb0] sm:$0xff]
          %v662 = vld [vmem:[%s201 + $0xcb8] sm:$0xff]
          %v663 = vld [vmem:[%s201 + $0xcc0] sm:$0xff]
          %v664 = vld [vmem:[%s201 + $0xcc8] sm:$0xff]
          %v665 = vld [vmem:[%s201 + $0xcd0] sm:$0xff]
          %v666 = vld [vmem:[%s201 + $0xcd8] sm:$0xff]
          %v667 = vld [vmem:[%s201 + $0xce0] sm:$0xff]
          %v668 = vld [vmem:[%s201 + $0xce8] sm:$0xff]
          %v669 = vld [vmem:[%s201 + $0xcf0] sm:$0xff]
          %v670 = vld [vmem:[%s201 + $0xcf8] sm:$0xff]
          %v671 = vld [vmem:[%s201 + $0xd00] sm:$0xff]
          %v672 = vld [vmem:[%s201 + $0xd08] sm:$0xff]
          %v673 = vld [vmem:[%s201 + $0xd10] sm:$0xff]
          %v674 = vld [vmem:[%s201 + $0xd18] sm:$0xff]
          %v675 = vld [vmem:[%s201 + $0xd20] sm:$0xff]
          %v676 = vld [vmem:[%s201 + $0xd28] sm:$0xff]
          %v677 = vld [vmem:[%s201 + $0xd30] sm:$0xff]
          %v678 = vld [vmem:[%s201 + $0xd38] sm:$0xff]
          %v679 = vld [vmem:[%s201 + $0xd40] sm:$0xff]
          %v680 = vld [vmem:[%s201 + $0xd48] sm:$0xff]
          %v681 = vld [vmem:[%s201 + $0xd50] sm:$0xff]
          %v682 = vld [vmem:[%s201 + $0xd58] sm:$0xff]
          %v683 = vld [vmem:[%s201 + $0xd60] sm:$0xff]
          %v684 = vld [vmem:[%s201 + $0xd68] sm:$0xff]
          %v685 = vld [vmem:[%s201 + $0xd70] sm:$0xff]
          %v686 = vld [vmem:[%s201 + $0xd78] sm:$0xff]
          %v687 = vld [vmem:[%s201 + $0xd80] sm:$0xff]
          %v688 = vld [vmem:[%s201 + $0xd88] sm:$0xff]
          %v689 = vld [vmem:[%s201 + $0xd90] sm:$0xff]
          %v690 = vld [vmem:[%s201 + $0xd98] sm:$0xff]
          %v691 = vld [vmem:[%s201 + $0xda0] sm:$0xff]
          %v692 = vld [vmem:[%s201 + $0xda8] sm:$0xff]
          %v693 = vld [vmem:[%s201 + $0xdb0] sm:$0xff]
          %v694 = vld [vmem:[%s201 + $0xdb8] sm:$0xff]
          %v695 = vld [vmem:[%s201 + $0xdc0] sm:$0xff]
          %v696 = vld [vmem:[%s201 + $0xdc8] sm:$0xff]
          %v697 = vld [vmem:[%s201 + $0xdd0] sm:$0xff]
          %v698 = vld [vmem:[%s201 + $0xdd8] sm:$0xff]
          %v699 = vld [vmem:[%s201 + $0xde0] sm:$0xff]
          %v700 = vld [vmem:[%s201 + $0xde8] sm:$0xff]
          %v701 = vld [vmem:[%s201 + $0xdf0] sm:$0xff]
          %v702 = vld [vmem:[%s201 + $0xdf8] sm:$0xff]
          %v703 = vld [vmem:[%s201 + $0xe00] sm:$0xff]
          %v704 = vld [vmem:[%s201 + $0xe08] sm:$0xff]
          %v705 = vld [vmem:[%s201 + $0xe10] sm:$0xff]
          %v706 = vld [vmem:[%s201 + $0xe18] sm:$0xff]
          %v707 = vld [vmem:[%s201 + $0xe20] sm:$0xff]
          %v708 = vld [vmem:[%s201 + $0xe28] sm:$0xff]
          %v709 = vld [vmem:[%s201 + $0xe30] sm:$0xff]
          %v710 = vld [vmem:[%s201 + $0xe38] sm:$0xff]
          %v711 = vld [vmem:[%s201 + $0xe40] sm:$0xff]
          %v712 = vld [vmem:[%s201 + $0xe48] sm:$0xff]
          %v713 = vld [vmem:[%s201 + $0xe50] sm:$0xff]
          %v714 = vld [vmem:[%s201 + $0xe58] sm:$0xff]
          %v715 = vld [vmem:[%s201 + $0xe60] sm:$0xff]
          %v716 = vld [vmem:[%s201 + $0xe68] sm:$0xff]
          %v717 = vld [vmem:[%s201 + $0xe70] sm:$0xff]
          %v718 = vld [vmem:[%s201 + $0xe78] sm:$0xff]
          %v719 = vld [vmem:[%s201 + $0xe80] sm:$0xff]
          %v720 = vld [vmem:[%s201 + $0xe88] sm:$0xff]
          %v721 = vld [vmem:[%s201 + $0xe90] sm:$0xff]
          %v722 = vld [vmem:[%s201 + $0xe98] sm:$0xff]
          %v723 = vld [vmem:[%s201 + $0xea0] sm:$0xff]
          %v724 = vld [vmem:[%s201 + $0xea8] sm:$0xff]
          %v725 = vld [vmem:[%s201 + $0xeb0] sm:$0xff]
          %v726 = vld [vmem:[%s201 + $0xeb8] sm:$0xff]
          %v727 = vld [vmem:[%s201 + $0xec0] sm:$0xff]
          %v728 = vld [vmem:[%s201 + $0xec8] sm:$0xff]
          %v729 = vld [vmem:[%s201 + $0xed0] sm:$0xff]
          %v730 = vld [vmem:[%s201 + $0xed8] sm:$0xff]
          %v731 = vld [vmem:[%s201 + $0xee0] sm:$0xff]
          %v732 = vld [vmem:[%s201 + $0xee8] sm:$0xff]
          %v733 = vld [vmem:[%s201 + $0xef0] sm:$0xff]
          %v734 = vld [vmem:[%s201 + $0xef8] sm:$0xff]
          %v735 = vld [vmem:[%s201 + $0xf00] sm:$0xff]
          %v736 = vld [vmem:[%s201 + $0xf08] sm:$0xff]
          %v737 = vld [vmem:[%s201 + $0xf10] sm:$0xff]
          %v738 = vld [vmem:[%s201 + $0xf18] sm:$0xff]
          %v739 = vld [vmem:[%s201 + $0xf20] sm:$0xff]
          %v740 = vld [vmem:[%s201 + $0xf28] sm:$0xff]
          %v741 = vld [vmem:[%s201 + $0xf30] sm:$0xff]
          %v742 = vld [vmem:[%s201 + $0xf38] sm:$0xff]
          %v743 = vld [vmem:[%s201 + $0xf40] sm:$0xff]
          %v744 = vld [vmem:[%s201 + $0xf48] sm:$0xff]
          %v745 = vld [vmem:[%s201 + $0xf50] sm:$0xff]
          %v746 = vld [vmem:[%s201 + $0xf58] sm:$0xff]
          %v747 = vld [vmem:[%s201 + $0xf60] sm:$0xff]
          %v748 = vld [vmem:[%s201 + $0xf68] sm:$0xff]
          %v749 = vld [vmem:[%s201 + $0xf70] sm:$0xff]
          %v750 = vld [vmem:[%s201 + $0xf78] sm:$0xff]
          %v751 = vld [vmem:[%s201 + $0xf80] sm:$0xff]
          %v752 = vld [vmem:[%s201 + $0xf88] sm:$0xff]
          %v753 = vld [vmem:[%s201 + $0xf90] sm:$0xff]
          %v754 = vld [vmem:[%s201 + $0xf98] sm:$0xff]
          %v755 = vld [vmem:[%s201 + $0xfa0] sm:$0xff]
          %v756 = vld [vmem:[%s201 + $0xfa8] sm:$0xff]
          %v757 = vld [vmem:[%s201 + $0xfb0] sm:$0xff]
          %v758 = vld [vmem:[%s201 + $0xfb8] sm:$0xff]
          %v759 = vld [vmem:[%s201 + $0xfc0] sm:$0xff]
          %v760 = vld [vmem:[%s201 + $0xfc8] sm:$0xff]
          %v761 = vld [vmem:[%s201 + $0xfd0] sm:$0xff]
          %v762 = vld [vmem:[%s201 + $0xfd8] sm:$0xff]
          %v763 = vld [vmem:[%s201 + $0xfe0] sm:$0xff]
          %v764 = vld [vmem:[%s201 + $0xfe8] sm:$0xff]
          %v765 = vld [vmem:[%s201 + $0xff0] sm:$0xff]
          %v766 = vld [vmem:[%s201 + $0xff8] sm:$0xff]
          %v767 = vld [vmem:[%s210] sm:$0xff]
          %v768 = vld [vmem:[%s210 + $0x8] sm:$0xff]
          %v769 = vld [vmem:[%s210 + $0x10] sm:$0xff]
          %v770 = vld [vmem:[%s210 + $0x18] sm:$0xff]
          %v771 = vld [vmem:[%s210 + $0x20] sm:$0xff]
          %v772 = vld [vmem:[%s210 + $0x28] sm:$0xff]
          %v773 = vld [vmem:[%s210 + $0x30] sm:$0xff]
          %v774 = vld [vmem:[%s210 + $0x38] sm:$0xff]
          %v775 = vld [vmem:[%s210 + $0x40] sm:$0xff]
          %v776 = vld [vmem:[%s210 + $0x48] sm:$0xff]
          %v777 = vld [vmem:[%s210 + $0x50] sm:$0xff]
          %v778 = vld [vmem:[%s210 + $0x58] sm:$0xff]
          %v779 = vld [vmem:[%s210 + $0x60] sm:$0xff]
          %v780 = vld [vmem:[%s210 + $0x68] sm:$0xff]
          %v781 = vld [vmem:[%s210 + $0x70] sm:$0xff]
          %v782 = vld [vmem:[%s210 + $0x78] sm:$0xff]
          %v783 = vld [vmem:[%s210 + $0x80] sm:$0xff]
          %v784 = vld [vmem:[%s210 + $0x88] sm:$0xff]
          %v785 = vld [vmem:[%s210 + $0x90] sm:$0xff]
          %v786 = vld [vmem:[%s210 + $0x98] sm:$0xff]
          %v787 = vld [vmem:[%s210 + $0xa0] sm:$0xff]
          %v788 = vld [vmem:[%s210 + $0xa8] sm:$0xff]
          %v789 = vld [vmem:[%s210 + $0xb0] sm:$0xff]
          %v790 = vld [vmem:[%s210 + $0xb8] sm:$0xff]
          %v791 = vld [vmem:[%s210 + $0xc0] sm:$0xff]
          %v792 = vld [vmem:[%s210 + $0xc8] sm:$0xff]
          %v793 = vld [vmem:[%s210 + $0xd0] sm:$0xff]
          %v794 = vld [vmem:[%s210 + $0xd8] sm:$0xff]
          %v795 = vld [vmem:[%s210 + $0xe0] sm:$0xff]
          %v796 = vld [vmem:[%s210 + $0xe8] sm:$0xff]
          %v797 = vld [vmem:[%s210 + $0xf0] sm:$0xff]
          %v798 = vld [vmem:[%s210 + $0xf8] sm:$0xff]
          %v799 = vld [vmem:[%s210 + $0x100] sm:$0xff]
          %v800 = vld [vmem:[%s210 + $0x108] sm:$0xff]
          %v801 = vld [vmem:[%s210 + $0x110] sm:$0xff]
          %v802 = vld [vmem:[%s210 + $0x118] sm:$0xff]
          %v803 = vld [vmem:[%s210 + $0x120] sm:$0xff]
          %v804 = vld [vmem:[%s210 + $0x128] sm:$0xff]
          %v805 = vld [vmem:[%s210 + $0x130] sm:$0xff]
          %v806 = vld [vmem:[%s210 + $0x138] sm:$0xff]
          %v807 = vld [vmem:[%s210 + $0x140] sm:$0xff]
          %v808 = vld [vmem:[%s210 + $0x148] sm:$0xff]
          %v809 = vld [vmem:[%s210 + $0x150] sm:$0xff]
          %v810 = vld [vmem:[%s210 + $0x158] sm:$0xff]
          %v811 = vld [vmem:[%s210 + $0x160] sm:$0xff]
          %v812 = vld [vmem:[%s210 + $0x168] sm:$0xff]
          %v813 = vld [vmem:[%s210 + $0x170] sm:$0xff]
          %v814 = vld [vmem:[%s210 + $0x178] sm:$0xff]
          %v815 = vld [vmem:[%s210 + $0x180] sm:$0xff]
          %v816 = vld [vmem:[%s210 + $0x188] sm:$0xff]
          %v817 = vld [vmem:[%s210 + $0x190] sm:$0xff]
          %v818 = vld [vmem:[%s210 + $0x198] sm:$0xff]
          %v819 = vld [vmem:[%s210 + $0x1a0] sm:$0xff]
          %v820 = vld [vmem:[%s210 + $0x1a8] sm:$0xff]
          %v821 = vld [vmem:[%s210 + $0x1b0] sm:$0xff]
          %v822 = vld [vmem:[%s210 + $0x1b8] sm:$0xff]
          %v823 = vld [vmem:[%s210 + $0x1c0] sm:$0xff]
          %v824 = vld [vmem:[%s210 + $0x1c8] sm:$0xff]
          %v825 = vld [vmem:[%s210 + $0x1d0] sm:$0xff]
          %v826 = vld [vmem:[%s210 + $0x1d8] sm:$0xff]
          %v827 = vld [vmem:[%s210 + $0x1e0] sm:$0xff]
          %v828 = vld [vmem:[%s210 + $0x1e8] sm:$0xff]
          %v829 = vld [vmem:[%s210 + $0x1f0] sm:$0xff]
          %v830 = vld [vmem:[%s210 + $0x1f8] sm:$0xff]
          %v831 = vld [vmem:[%s210 + $0x200] sm:$0xff]
          %v832 = vld [vmem:[%s210 + $0x208] sm:$0xff]
          %v833 = vld [vmem:[%s210 + $0x210] sm:$0xff]
          %v834 = vld [vmem:[%s210 + $0x218] sm:$0xff]
          %v835 = vld [vmem:[%s210 + $0x220] sm:$0xff]
          %v836 = vld [vmem:[%s210 + $0x228] sm:$0xff]
          %v837 = vld [vmem:[%s210 + $0x230] sm:$0xff]
          %v838 = vld [vmem:[%s210 + $0x238] sm:$0xff]
          %v839 = vld [vmem:[%s210 + $0x240] sm:$0xff]
          %v840 = vld [vmem:[%s210 + $0x248] sm:$0xff]
          %v841 = vld [vmem:[%s210 + $0x250] sm:$0xff]
          %v842 = vld [vmem:[%s210 + $0x258] sm:$0xff]
          %v843 = vld [vmem:[%s210 + $0x260] sm:$0xff]
          %v844 = vld [vmem:[%s210 + $0x268] sm:$0xff]
          %v845 = vld [vmem:[%s210 + $0x270] sm:$0xff]
          %v846 = vld [vmem:[%s210 + $0x278] sm:$0xff]
          %v847 = vld [vmem:[%s210 + $0x280] sm:$0xff]
          %v848 = vld [vmem:[%s210 + $0x288] sm:$0xff]
          %v849 = vld [vmem:[%s210 + $0x290] sm:$0xff]
          %v850 = vld [vmem:[%s210 + $0x298] sm:$0xff]
          %v851 = vld [vmem:[%s210 + $0x2a0] sm:$0xff]
          %v852 = vld [vmem:[%s210 + $0x2a8] sm:$0xff]
          %v853 = vld [vmem:[%s210 + $0x2b0] sm:$0xff]
          %v854 = vld [vmem:[%s210 + $0x2b8] sm:$0xff]
          %v855 = vld [vmem:[%s210 + $0x2c0] sm:$0xff]
          %v856 = vld [vmem:[%s210 + $0x2c8] sm:$0xff]
          %v857 = vld [vmem:[%s210 + $0x2d0] sm:$0xff]
          %v858 = vld [vmem:[%s210 + $0x2d8] sm:$0xff]
          %v859 = vld [vmem:[%s210 + $0x2e0] sm:$0xff]
          %v860 = vld [vmem:[%s210 + $0x2e8] sm:$0xff]
          %v861 = vld [vmem:[%s210 + $0x2f0] sm:$0xff]
          %v862 = vld [vmem:[%s210 + $0x2f8] sm:$0xff]
          %v863 = vld [vmem:[%s210 + $0x300] sm:$0xff]
          %v864 = vld [vmem:[%s210 + $0x308] sm:$0xff]
          %v865 = vld [vmem:[%s210 + $0x310] sm:$0xff]
          %v866 = vld [vmem:[%s210 + $0x318] sm:$0xff]
          %v867 = vld [vmem:[%s210 + $0x320] sm:$0xff]
          %v868 = vld [vmem:[%s210 + $0x328] sm:$0xff]
          %v869 = vld [vmem:[%s210 + $0x330] sm:$0xff]
          %v870 = vld [vmem:[%s210 + $0x338] sm:$0xff]
          %v871 = vld [vmem:[%s210 + $0x340] sm:$0xff]
          %v872 = vld [vmem:[%s210 + $0x348] sm:$0xff]
          %v873 = vld [vmem:[%s210 + $0x350] sm:$0xff]
          %v874 = vld [vmem:[%s210 + $0x358] sm:$0xff]
          %v875 = vld [vmem:[%s210 + $0x360] sm:$0xff]
          %v876 = vld [vmem:[%s210 + $0x368] sm:$0xff]
          %v877 = vld [vmem:[%s210 + $0x370] sm:$0xff]
          %v878 = vld [vmem:[%s210 + $0x378] sm:$0xff]
          %v879 = vld [vmem:[%s210 + $0x380] sm:$0xff]
          %v880 = vld [vmem:[%s210 + $0x388] sm:$0xff]
          %v881 = vld [vmem:[%s210 + $0x390] sm:$0xff]
          %v882 = vld [vmem:[%s210 + $0x398] sm:$0xff]
          %v883 = vld [vmem:[%s210 + $0x3a0] sm:$0xff]
          %v884 = vld [vmem:[%s210 + $0x3a8] sm:$0xff]
          %v885 = vld [vmem:[%s210 + $0x3b0] sm:$0xff]
          %v886 = vld [vmem:[%s210 + $0x3b8] sm:$0xff]
          %v887 = vld [vmem:[%s210 + $0x3c0] sm:$0xff]
          %v888 = vld [vmem:[%s210 + $0x3c8] sm:$0xff]
          %v889 = vld [vmem:[%s210 + $0x3d0] sm:$0xff]
          %v890 = vld [vmem:[%s210 + $0x3d8] sm:$0xff]
          %v891 = vld [vmem:[%s210 + $0x3e0] sm:$0xff]
          %v892 = vld [vmem:[%s210 + $0x3e8] sm:$0xff]
          %v893 = vld [vmem:[%s210 + $0x3f0] sm:$0xff]
          %v894 = vld [vmem:[%s210 + $0x3f8] sm:$0xff]
          %v895 = vld [vmem:[%s210 + $0x400] sm:$0xff]
          %v896 = vld [vmem:[%s210 + $0x408] sm:$0xff]
          %v897 = vld [vmem:[%s210 + $0x410] sm:$0xff]
          %v898 = vld [vmem:[%s210 + $0x418] sm:$0xff]
          %v899 = vld [vmem:[%s210 + $0x420] sm:$0xff]
          %v900 = vld [vmem:[%s210 + $0x428] sm:$0xff]
          %v901 = vld [vmem:[%s210 + $0x430] sm:$0xff]
          %v902 = vld [vmem:[%s210 + $0x438] sm:$0xff]
          %v903 = vld [vmem:[%s210 + $0x440] sm:$0xff]
          %v904 = vld [vmem:[%s210 + $0x448] sm:$0xff]
          %v905 = vld [vmem:[%s210 + $0x450] sm:$0xff]
          %v906 = vld [vmem:[%s210 + $0x458] sm:$0xff]
          %v907 = vld [vmem:[%s210 + $0x460] sm:$0xff]
          %v908 = vld [vmem:[%s210 + $0x468] sm:$0xff]
          %v909 = vld [vmem:[%s210 + $0x470] sm:$0xff]
          %v910 = vld [vmem:[%s210 + $0x478] sm:$0xff]
          %v911 = vld [vmem:[%s210 + $0x480] sm:$0xff]
          %v912 = vld [vmem:[%s210 + $0x488] sm:$0xff]
          %v913 = vld [vmem:[%s210 + $0x490] sm:$0xff]
          %v914 = vld [vmem:[%s210 + $0x498] sm:$0xff]
          %v915 = vld [vmem:[%s210 + $0x4a0] sm:$0xff]
          %v916 = vld [vmem:[%s210 + $0x4a8] sm:$0xff]
          %v917 = vld [vmem:[%s210 + $0x4b0] sm:$0xff]
          %v918 = vld [vmem:[%s210 + $0x4b8] sm:$0xff]
          %v919 = vld [vmem:[%s210 + $0x4c0] sm:$0xff]
          %v920 = vld [vmem:[%s210 + $0x4c8] sm:$0xff]
          %v921 = vld [vmem:[%s210 + $0x4d0] sm:$0xff]
          %v922 = vld [vmem:[%s210 + $0x4d8] sm:$0xff]
          %v923 = vld [vmem:[%s210 + $0x4e0] sm:$0xff]
          %v924 = vld [vmem:[%s210 + $0x4e8] sm:$0xff]
          %v925 = vld [vmem:[%s210 + $0x4f0] sm:$0xff]
          %v926 = vld [vmem:[%s210 + $0x4f8] sm:$0xff]
          %v927 = vld [vmem:[%s210 + $0x500] sm:$0xff]
          %v928 = vld [vmem:[%s210 + $0x508] sm:$0xff]
          %v929 = vld [vmem:[%s210 + $0x510] sm:$0xff]
          %v930 = vld [vmem:[%s210 + $0x518] sm:$0xff]
          %v931 = vld [vmem:[%s210 + $0x520] sm:$0xff]
          %v932 = vld [vmem:[%s210 + $0x528] sm:$0xff]
          %v933 = vld [vmem:[%s210 + $0x530] sm:$0xff]
          %v934 = vld [vmem:[%s210 + $0x538] sm:$0xff]
          %v935 = vld [vmem:[%s210 + $0x540] sm:$0xff]
          %v936 = vld [vmem:[%s210 + $0x548] sm:$0xff]
          %v937 = vld [vmem:[%s210 + $0x550] sm:$0xff]
          %v938 = vld [vmem:[%s210 + $0x558] sm:$0xff]
          %v939 = vld [vmem:[%s210 + $0x560] sm:$0xff]
          %v940 = vld [vmem:[%s210 + $0x568] sm:$0xff]
          %v941 = vld [vmem:[%s210 + $0x570] sm:$0xff]
          %v942 = vld [vmem:[%s210 + $0x578] sm:$0xff]
          %v943 = vld [vmem:[%s210 + $0x580] sm:$0xff]
          %v944 = vld [vmem:[%s210 + $0x588] sm:$0xff]
          %v945 = vld [vmem:[%s210 + $0x590] sm:$0xff]
          %v946 = vld [vmem:[%s210 + $0x598] sm:$0xff]
          %v947 = vld [vmem:[%s210 + $0x5a0] sm:$0xff]
          %v948 = vld [vmem:[%s210 + $0x5a8] sm:$0xff]
          %v949 = vld [vmem:[%s210 + $0x5b0] sm:$0xff]
          %v950 = vld [vmem:[%s210 + $0x5b8] sm:$0xff]
          %v951 = vld [vmem:[%s210 + $0x5c0] sm:$0xff]
          %v952 = vld [vmem:[%s210 + $0x5c8] sm:$0xff]
          %v953 = vld [vmem:[%s210 + $0x5d0] sm:$0xff]
          %v954 = vld [vmem:[%s210 + $0x5d8] sm:$0xff]
          %v955 = vld [vmem:[%s210 + $0x5e0] sm:$0xff]
          %v956 = vld [vmem:[%s210 + $0x5e8] sm:$0xff]
          %v957 = vld [vmem:[%s210 + $0x5f0] sm:$0xff]
          %v958 = vld [vmem:[%s210 + $0x5f8] sm:$0xff]
          %v959 = vld [vmem:[%s210 + $0x600] sm:$0xff]
          %v960 = vld [vmem:[%s210 + $0x608] sm:$0xff]
          %v961 = vld [vmem:[%s210 + $0x610] sm:$0xff]
          %v962 = vld [vmem:[%s210 + $0x618] sm:$0xff]
          %v963 = vld [vmem:[%s210 + $0x620] sm:$0xff]
          %v964 = vld [vmem:[%s210 + $0x628] sm:$0xff]
          %v965 = vld [vmem:[%s210 + $0x630] sm:$0xff]
          %v966 = vld [vmem:[%s210 + $0x638] sm:$0xff]
          %v967 = vld [vmem:[%s210 + $0x640] sm:$0xff]
          %v968 = vld [vmem:[%s210 + $0x648] sm:$0xff]
          %v969 = vld [vmem:[%s210 + $0x650] sm:$0xff]
          %v970 = vld [vmem:[%s210 + $0x658] sm:$0xff]
          %v971 = vld [vmem:[%s210 + $0x660] sm:$0xff]
          %v972 = vld [vmem:[%s210 + $0x668] sm:$0xff]
          %v973 = vld [vmem:[%s210 + $0x670] sm:$0xff]
          %v974 = vld [vmem:[%s210 + $0x678] sm:$0xff]
          %v975 = vld [vmem:[%s210 + $0x680] sm:$0xff]
          %v976 = vld [vmem:[%s210 + $0x688] sm:$0xff]
          %v977 = vld [vmem:[%s210 + $0x690] sm:$0xff]
          %v978 = vld [vmem:[%s210 + $0x698] sm:$0xff]
          %v979 = vld [vmem:[%s210 + $0x6a0] sm:$0xff]
          %v980 = vld [vmem:[%s210 + $0x6a8] sm:$0xff]
          %v981 = vld [vmem:[%s210 + $0x6b0] sm:$0xff]
          %v982 = vld [vmem:[%s210 + $0x6b8] sm:$0xff]
          %v983 = vld [vmem:[%s210 + $0x6c0] sm:$0xff]
          %v984 = vld [vmem:[%s210 + $0x6c8] sm:$0xff]
          %v985 = vld [vmem:[%s210 + $0x6d0] sm:$0xff]
          %v986 = vld [vmem:[%s210 + $0x6d8] sm:$0xff]
          %v987 = vld [vmem:[%s210 + $0x6e0] sm:$0xff]
          %v988 = vld [vmem:[%s210 + $0x6e8] sm:$0xff]
          %v989 = vld [vmem:[%s210 + $0x6f0] sm:$0xff]
          %v990 = vld [vmem:[%s210 + $0x6f8] sm:$0xff]
          %v991 = vld [vmem:[%s210 + $0x700] sm:$0xff]
          %v992 = vld [vmem:[%s210 + $0x708] sm:$0xff]
          %v993 = vld [vmem:[%s210 + $0x710] sm:$0xff]
          %v994 = vld [vmem:[%s210 + $0x718] sm:$0xff]
          %v995 = vld [vmem:[%s210 + $0x720] sm:$0xff]
          %v996 = vld [vmem:[%s210 + $0x728] sm:$0xff]
          %v997 = vld [vmem:[%s210 + $0x730] sm:$0xff]
          %v998 = vld [vmem:[%s210 + $0x738] sm:$0xff]
          %v999 = vld [vmem:[%s210 + $0x740] sm:$0xff]
          %v1000 = vld [vmem:[%s210 + $0x748] sm:$0xff]
          %v1001 = vld [vmem:[%s210 + $0x750] sm:$0xff]
          %v1002 = vld [vmem:[%s210 + $0x758] sm:$0xff]
          %v1003 = vld [vmem:[%s210 + $0x760] sm:$0xff]
          %v1004 = vld [vmem:[%s210 + $0x768] sm:$0xff]
          %v1005 = vld [vmem:[%s210 + $0x770] sm:$0xff]
          %v1006 = vld [vmem:[%s210 + $0x778] sm:$0xff]
          %v1007 = vld [vmem:[%s210 + $0x780] sm:$0xff]
          %v1008 = vld [vmem:[%s210 + $0x788] sm:$0xff]
          %v1009 = vld [vmem:[%s210 + $0x790] sm:$0xff]
          %v1010 = vld [vmem:[%s210 + $0x798] sm:$0xff]
          %v1011 = vld [vmem:[%s210 + $0x7a0] sm:$0xff]
          %v1012 = vld [vmem:[%s210 + $0x7a8] sm:$0xff]
          %v1013 = vld [vmem:[%s210 + $0x7b0] sm:$0xff]
          %v1014 = vld [vmem:[%s210 + $0x7b8] sm:$0xff]
          %v1015 = vld [vmem:[%s210 + $0x7c0] sm:$0xff]
          %v1016 = vld [vmem:[%s210 + $0x7c8] sm:$0xff]
          %v1017 = vld [vmem:[%s210 + $0x7d0] sm:$0xff]
          %v1018 = vld [vmem:[%s210 + $0x7d8] sm:$0xff]
          %v1019 = vld [vmem:[%s210 + $0x7e0] sm:$0xff]
          %v1020 = vld [vmem:[%s210 + $0x7e8] sm:$0xff]
          %v1021 = vld [vmem:[%s210 + $0x7f0] sm:$0xff]
          %v1022 = vld [vmem:[%s210 + $0x7f8] sm:$0xff]
          %v1023 = vld [vmem:[%s210 + $0x800] sm:$0xff]
          %v1024 = vld [vmem:[%s210 + $0x808] sm:$0xff]
          %v1025 = vld [vmem:[%s210 + $0x810] sm:$0xff]
          %v1026 = vld [vmem:[%s210 + $0x818] sm:$0xff]
          %v1027 = vld [vmem:[%s210 + $0x820] sm:$0xff]
          %v1028 = vld [vmem:[%s210 + $0x828] sm:$0xff]
          %v1029 = vld [vmem:[%s210 + $0x830] sm:$0xff]
          %v1030 = vld [vmem:[%s210 + $0x838] sm:$0xff]
          %v1031 = vld [vmem:[%s210 + $0x840] sm:$0xff]
          %v1032 = vld [vmem:[%s210 + $0x848] sm:$0xff]
          %v1033 = vld [vmem:[%s210 + $0x850] sm:$0xff]
          %v1034 = vld [vmem:[%s210 + $0x858] sm:$0xff]
          %v1035 = vld [vmem:[%s210 + $0x860] sm:$0xff]
          %v1036 = vld [vmem:[%s210 + $0x868] sm:$0xff]
          %v1037 = vld [vmem:[%s210 + $0x870] sm:$0xff]
          %v1038 = vld [vmem:[%s210 + $0x878] sm:$0xff]
          %v1039 = vld [vmem:[%s210 + $0x880] sm:$0xff]
          %v1040 = vld [vmem:[%s210 + $0x888] sm:$0xff]
          %v1041 = vld [vmem:[%s210 + $0x890] sm:$0xff]
          %v1042 = vld [vmem:[%s210 + $0x898] sm:$0xff]
          %v1043 = vld [vmem:[%s210 + $0x8a0] sm:$0xff]
          %v1044 = vld [vmem:[%s210 + $0x8a8] sm:$0xff]
          %v1045 = vld [vmem:[%s210 + $0x8b0] sm:$0xff]
          %v1046 = vld [vmem:[%s210 + $0x8b8] sm:$0xff]
          %v1047 = vld [vmem:[%s210 + $0x8c0] sm:$0xff]
          %v1048 = vld [vmem:[%s210 + $0x8c8] sm:$0xff]
          %v1049 = vld [vmem:[%s210 + $0x8d0] sm:$0xff]
          %v1050 = vld [vmem:[%s210 + $0x8d8] sm:$0xff]
          %v1051 = vld [vmem:[%s210 + $0x8e0] sm:$0xff]
          %v1052 = vld [vmem:[%s210 + $0x8e8] sm:$0xff]
          %v1053 = vld [vmem:[%s210 + $0x8f0] sm:$0xff]
          %v1054 = vld [vmem:[%s210 + $0x8f8] sm:$0xff]
          %v1055 = vld [vmem:[%s210 + $0x900] sm:$0xff]
          %v1056 = vld [vmem:[%s210 + $0x908] sm:$0xff]
          %v1057 = vld [vmem:[%s210 + $0x910] sm:$0xff]
          %v1058 = vld [vmem:[%s210 + $0x918] sm:$0xff]
          %v1059 = vld [vmem:[%s210 + $0x920] sm:$0xff]
          %v1060 = vld [vmem:[%s210 + $0x928] sm:$0xff]
          %v1061 = vld [vmem:[%s210 + $0x930] sm:$0xff]
          %v1062 = vld [vmem:[%s210 + $0x938] sm:$0xff]
          %v1063 = vld [vmem:[%s210 + $0x940] sm:$0xff]
          %v1064 = vld [vmem:[%s210 + $0x948] sm:$0xff]
          %v1065 = vld [vmem:[%s210 + $0x950] sm:$0xff]
          %v1066 = vld [vmem:[%s210 + $0x958] sm:$0xff]
          %v1067 = vld [vmem:[%s210 + $0x960] sm:$0xff]
          %v1068 = vld [vmem:[%s210 + $0x968] sm:$0xff]
          %v1069 = vld [vmem:[%s210 + $0x970] sm:$0xff]
          %v1070 = vld [vmem:[%s210 + $0x978] sm:$0xff]
          %v1071 = vld [vmem:[%s210 + $0x980] sm:$0xff]
          %v1072 = vld [vmem:[%s210 + $0x988] sm:$0xff]
          %v1073 = vld [vmem:[%s210 + $0x990] sm:$0xff]
          %v1074 = vld [vmem:[%s210 + $0x998] sm:$0xff]
          %v1075 = vld [vmem:[%s210 + $0x9a0] sm:$0xff]
          %v1076 = vld [vmem:[%s210 + $0x9a8] sm:$0xff]
          %v1077 = vld [vmem:[%s210 + $0x9b0] sm:$0xff]
          %v1078 = vld [vmem:[%s210 + $0x9b8] sm:$0xff]
          %v1079 = vld [vmem:[%s210 + $0x9c0] sm:$0xff]
          %v1080 = vld [vmem:[%s210 + $0x9c8] sm:$0xff]
          %v1081 = vld [vmem:[%s210 + $0x9d0] sm:$0xff]
          %v1082 = vld [vmem:[%s210 + $0x9d8] sm:$0xff]
          %v1083 = vld [vmem:[%s210 + $0x9e0] sm:$0xff]
          %v1084 = vld [vmem:[%s210 + $0x9e8] sm:$0xff]
          %v1085 = vld [vmem:[%s210 + $0x9f0] sm:$0xff]
          %v1086 = vld [vmem:[%s210 + $0x9f8] sm:$0xff]
          %v1087 = vld [vmem:[%s210 + $0xa00] sm:$0xff]
          %v1088 = vld [vmem:[%s210 + $0xa08] sm:$0xff]
          %v1089 = vld [vmem:[%s210 + $0xa10] sm:$0xff]
          %v1090 = vld [vmem:[%s210 + $0xa18] sm:$0xff]
          %v1091 = vld [vmem:[%s210 + $0xa20] sm:$0xff]
          %v1092 = vld [vmem:[%s210 + $0xa28] sm:$0xff]
          %v1093 = vld [vmem:[%s210 + $0xa30] sm:$0xff]
          %v1094 = vld [vmem:[%s210 + $0xa38] sm:$0xff]
          %v1095 = vld [vmem:[%s210 + $0xa40] sm:$0xff]
          %v1096 = vld [vmem:[%s210 + $0xa48] sm:$0xff]
          %v1097 = vld [vmem:[%s210 + $0xa50] sm:$0xff]
          %v1098 = vld [vmem:[%s210 + $0xa58] sm:$0xff]
          %v1099 = vld [vmem:[%s210 + $0xa60] sm:$0xff]
          %v1100 = vld [vmem:[%s210 + $0xa68] sm:$0xff]
          %v1101 = vld [vmem:[%s210 + $0xa70] sm:$0xff]
          %v1102 = vld [vmem:[%s210 + $0xa78] sm:$0xff]
          %v1103 = vld [vmem:[%s210 + $0xa80] sm:$0xff]
          %v1104 = vld [vmem:[%s210 + $0xa88] sm:$0xff]
          %v1105 = vld [vmem:[%s210 + $0xa90] sm:$0xff]
          %v1106 = vld [vmem:[%s210 + $0xa98] sm:$0xff]
          %v1107 = vld [vmem:[%s210 + $0xaa0] sm:$0xff]
          %v1108 = vld [vmem:[%s210 + $0xaa8] sm:$0xff]
          %v1109 = vld [vmem:[%s210 + $0xab0] sm:$0xff]
          %v1110 = vld [vmem:[%s210 + $0xab8] sm:$0xff]
          %v1111 = vld [vmem:[%s210 + $0xac0] sm:$0xff]
          %v1112 = vld [vmem:[%s210 + $0xac8] sm:$0xff]
          %v1113 = vld [vmem:[%s210 + $0xad0] sm:$0xff]
          %v1114 = vld [vmem:[%s210 + $0xad8] sm:$0xff]
          %v1115 = vld [vmem:[%s210 + $0xae0] sm:$0xff]
          %v1116 = vld [vmem:[%s210 + $0xae8] sm:$0xff]
          %v1117 = vld [vmem:[%s210 + $0xaf0] sm:$0xff]
          %v1118 = vld [vmem:[%s210 + $0xaf8] sm:$0xff]
          %v1119 = vld [vmem:[%s210 + $0xb00] sm:$0xff]
          %v1120 = vld [vmem:[%s210 + $0xb08] sm:$0xff]
          %v1121 = vld [vmem:[%s210 + $0xb10] sm:$0xff]
          %v1122 = vld [vmem:[%s210 + $0xb18] sm:$0xff]
          %v1123 = vld [vmem:[%s210 + $0xb20] sm:$0xff]
          %v1124 = vld [vmem:[%s210 + $0xb28] sm:$0xff]
          %v1125 = vld [vmem:[%s210 + $0xb30] sm:$0xff]
          %v1126 = vld [vmem:[%s210 + $0xb38] sm:$0xff]
          %v1127 = vld [vmem:[%s210 + $0xb40] sm:$0xff]
          %v1128 = vld [vmem:[%s210 + $0xb48] sm:$0xff]
          %v1129 = vld [vmem:[%s210 + $0xb50] sm:$0xff]
          %v1130 = vld [vmem:[%s210 + $0xb58] sm:$0xff]
          %v1131 = vld [vmem:[%s210 + $0xb60] sm:$0xff]
          %v1132 = vld [vmem:[%s210 + $0xb68] sm:$0xff]
          %v1133 = vld [vmem:[%s210 + $0xb70] sm:$0xff]
          %v1134 = vld [vmem:[%s210 + $0xb78] sm:$0xff]
          %v1135 = vld [vmem:[%s210 + $0xb80] sm:$0xff]
          %v1136 = vld [vmem:[%s210 + $0xb88] sm:$0xff]
          %v1137 = vld [vmem:[%s210 + $0xb90] sm:$0xff]
          %v1138 = vld [vmem:[%s210 + $0xb98] sm:$0xff]
          %v1139 = vld [vmem:[%s210 + $0xba0] sm:$0xff]
          %v1140 = vld [vmem:[%s210 + $0xba8] sm:$0xff]
          %v1141 = vld [vmem:[%s210 + $0xbb0] sm:$0xff]
          %v1142 = vld [vmem:[%s210 + $0xbb8] sm:$0xff]
          %v1143 = vld [vmem:[%s210 + $0xbc0] sm:$0xff]
          %v1144 = vld [vmem:[%s210 + $0xbc8] sm:$0xff]
          %v1145 = vld [vmem:[%s210 + $0xbd0] sm:$0xff]
          %v1146 = vld [vmem:[%s210 + $0xbd8] sm:$0xff]
          %v1147 = vld [vmem:[%s210 + $0xbe0] sm:$0xff]
          %v1148 = vld [vmem:[%s210 + $0xbe8] sm:$0xff]
          %v1149 = vld [vmem:[%s210 + $0xbf0] sm:$0xff]
          %v1150 = vld [vmem:[%s210 + $0xbf8] sm:$0xff]
          %v1151 = vld [vmem:[%s210 + $0xc00] sm:$0xff]
          %v1152 = vld [vmem:[%s210 + $0xc08] sm:$0xff]
          %v1153 = vld [vmem:[%s210 + $0xc10] sm:$0xff]
          %v1154 = vld [vmem:[%s210 + $0xc18] sm:$0xff]
          %v1155 = vld [vmem:[%s210 + $0xc20] sm:$0xff]
          %v1156 = vld [vmem:[%s210 + $0xc28] sm:$0xff]
          %v1157 = vld [vmem:[%s210 + $0xc30] sm:$0xff]
          %v1158 = vld [vmem:[%s210 + $0xc38] sm:$0xff]
          %v1159 = vld [vmem:[%s210 + $0xc40] sm:$0xff]
          %v1160 = vld [vmem:[%s210 + $0xc48] sm:$0xff]
          %v1161 = vld [vmem:[%s210 + $0xc50] sm:$0xff]
          %v1162 = vld [vmem:[%s210 + $0xc58] sm:$0xff]
          %v1163 = vld [vmem:[%s210 + $0xc60] sm:$0xff]
          %v1164 = vld [vmem:[%s210 + $0xc68] sm:$0xff]
          %v1165 = vld [vmem:[%s210 + $0xc70] sm:$0xff]
          %v1166 = vld [vmem:[%s210 + $0xc78] sm:$0xff]
          %v1167 = vld [vmem:[%s210 + $0xc80] sm:$0xff]
          %v1168 = vld [vmem:[%s210 + $0xc88] sm:$0xff]
          %v1169 = vld [vmem:[%s210 + $0xc90] sm:$0xff]
          %v1170 = vld [vmem:[%s210 + $0xc98] sm:$0xff]
          %v1171 = vld [vmem:[%s210 + $0xca0] sm:$0xff]
          %v1172 = vld [vmem:[%s210 + $0xca8] sm:$0xff]
          %v1173 = vld [vmem:[%s210 + $0xcb0] sm:$0xff]
          %v1174 = vld [vmem:[%s210 + $0xcb8] sm:$0xff]
          %v1175 = vld [vmem:[%s210 + $0xcc0] sm:$0xff]
          %v1176 = vld [vmem:[%s210 + $0xcc8] sm:$0xff]
          %v1177 = vld [vmem:[%s210 + $0xcd0] sm:$0xff]
          %v1178 = vld [vmem:[%s210 + $0xcd8] sm:$0xff]
          %v1179 = vld [vmem:[%s210 + $0xce0] sm:$0xff]
          %v1180 = vld [vmem:[%s210 + $0xce8] sm:$0xff]
          %v1181 = vld [vmem:[%s210 + $0xcf0] sm:$0xff]
          %v1182 = vld [vmem:[%s210 + $0xcf8] sm:$0xff]
          %v1183 = vld [vmem:[%s210 + $0xd00] sm:$0xff]
          %v1184 = vld [vmem:[%s210 + $0xd08] sm:$0xff]
          %v1185 = vld [vmem:[%s210 + $0xd10] sm:$0xff]
          %v1186 = vld [vmem:[%s210 + $0xd18] sm:$0xff]
          %v1187 = vld [vmem:[%s210 + $0xd20] sm:$0xff]
          %v1188 = vld [vmem:[%s210 + $0xd28] sm:$0xff]
          %v1189 = vld [vmem:[%s210 + $0xd30] sm:$0xff]
          %v1190 = vld [vmem:[%s210 + $0xd38] sm:$0xff]
          %v1191 = vld [vmem:[%s210 + $0xd40] sm:$0xff]
          %v1192 = vld [vmem:[%s210 + $0xd48] sm:$0xff]
          %v1193 = vld [vmem:[%s210 + $0xd50] sm:$0xff]
          %v1194 = vld [vmem:[%s210 + $0xd58] sm:$0xff]
          %v1195 = vld [vmem:[%s210 + $0xd60] sm:$0xff]
          %v1196 = vld [vmem:[%s210 + $0xd68] sm:$0xff]
          %v1197 = vld [vmem:[%s210 + $0xd70] sm:$0xff]
          %v1198 = vld [vmem:[%s210 + $0xd78] sm:$0xff]
          %v1199 = vld [vmem:[%s210 + $0xd80] sm:$0xff]
          %v1200 = vld [vmem:[%s210 + $0xd88] sm:$0xff]
          %v1201 = vld [vmem:[%s210 + $0xd90] sm:$0xff]
          %v1202 = vld [vmem:[%s210 + $0xd98] sm:$0xff]
          %v1203 = vld [vmem:[%s210 + $0xda0] sm:$0xff]
          %v1204 = vld [vmem:[%s210 + $0xda8] sm:$0xff]
          %v1205 = vld [vmem:[%s210 + $0xdb0] sm:$0xff]
          %v1206 = vld [vmem:[%s210 + $0xdb8] sm:$0xff]
          %v1207 = vld [vmem:[%s210 + $0xdc0] sm:$0xff]
          %v1208 = vld [vmem:[%s210 + $0xdc8] sm:$0xff]
          %v1209 = vld [vmem:[%s210 + $0xdd0] sm:$0xff]
          %v1210 = vld [vmem:[%s210 + $0xdd8] sm:$0xff]
          %v1211 = vld [vmem:[%s210 + $0xde0] sm:$0xff]
          %v1212 = vld [vmem:[%s210 + $0xde8] sm:$0xff]
          %v1213 = vld [vmem:[%s210 + $0xdf0] sm:$0xff]
          %v1214 = vld [vmem:[%s210 + $0xdf8] sm:$0xff]
          %v1215 = vld [vmem:[%s210 + $0xe00] sm:$0xff]
          %v1216 = vld [vmem:[%s210 + $0xe08] sm:$0xff]
          %v1217 = vld [vmem:[%s210 + $0xe10] sm:$0xff]
          %v1218 = vld [vmem:[%s210 + $0xe18] sm:$0xff]
          %v1219 = vld [vmem:[%s210 + $0xe20] sm:$0xff]
          %v1220 = vld [vmem:[%s210 + $0xe28] sm:$0xff]
          %v1221 = vld [vmem:[%s210 + $0xe30] sm:$0xff]
          %v1222 = vld [vmem:[%s210 + $0xe38] sm:$0xff]
          %v1223 = vld [vmem:[%s210 + $0xe40] sm:$0xff]
          %v1224 = vld [vmem:[%s210 + $0xe48] sm:$0xff]
          %v1225 = vld [vmem:[%s210 + $0xe50] sm:$0xff]
          %v1226 = vld [vmem:[%s210 + $0xe58] sm:$0xff]
          %v1227 = vld [vmem:[%s210 + $0xe60] sm:$0xff]
          %v1228 = vld [vmem:[%s210 + $0xe68] sm:$0xff]
          %v1229 = vld [vmem:[%s210 + $0xe70] sm:$0xff]
          %v1230 = vld [vmem:[%s210 + $0xe78] sm:$0xff]
          %v1231 = vld [vmem:[%s210 + $0xe80] sm:$0xff]
          %v1232 = vld [vmem:[%s210 + $0xe88] sm:$0xff]
          %v1233 = vld [vmem:[%s210 + $0xe90] sm:$0xff]
          %v1234 = vld [vmem:[%s210 + $0xe98] sm:$0xff]
          %v1235 = vld [vmem:[%s210 + $0xea0] sm:$0xff]
          %v1236 = vld [vmem:[%s210 + $0xea8] sm:$0xff]
          %v1237 = vld [vmem:[%s210 + $0xeb0] sm:$0xff]
          %v1238 = vld [vmem:[%s210 + $0xeb8] sm:$0xff]
          %v1239 = vld [vmem:[%s210 + $0xec0] sm:$0xff]
          %v1240 = vld [vmem:[%s210 + $0xec8] sm:$0xff]
          %v1241 = vld [vmem:[%s210 + $0xed0] sm:$0xff]
          %v1242 = vld [vmem:[%s210 + $0xed8] sm:$0xff]
          %v1243 = vld [vmem:[%s210 + $0xee0] sm:$0xff]
          %v1244 = vld [vmem:[%s210 + $0xee8] sm:$0xff]
          %v1245 = vld [vmem:[%s210 + $0xef0] sm:$0xff]
          %v1246 = vld [vmem:[%s210 + $0xef8] sm:$0xff]
          %v1247 = vld [vmem:[%s210 + $0xf00] sm:$0xff]
          %v1248 = vld [vmem:[%s210 + $0xf08] sm:$0xff]
          %v1249 = vld [vmem:[%s210 + $0xf10] sm:$0xff]
          %v1250 = vld [vmem:[%s210 + $0xf18] sm:$0xff]
          %v1251 = vld [vmem:[%s210 + $0xf20] sm:$0xff]
          %v1252 = vld [vmem:[%s210 + $0xf28] sm:$0xff]
          %v1253 = vld [vmem:[%s210 + $0xf30] sm:$0xff]
          %v1254 = vld [vmem:[%s210 + $0xf38] sm:$0xff]
          %v1255 = vld [vmem:[%s210 + $0xf40] sm:$0xff]
          %v1256 = vld [vmem:[%s210 + $0xf48] sm:$0xff]
          %v1257 = vld [vmem:[%s210 + $0xf50] sm:$0xff]
          %v1258 = vld [vmem:[%s210 + $0xf58] sm:$0xff]
          %v1259 = vld [vmem:[%s210 + $0xf60] sm:$0xff]
          %v1260 = vld [vmem:[%s210 + $0xf68] sm:$0xff]
          %v1261 = vld [vmem:[%s210 + $0xf70] sm:$0xff]
          %v1262 = vld [vmem:[%s210 + $0xf78] sm:$0xff]
          %v1263 = vld [vmem:[%s210 + $0xf80] sm:$0xff]
          %v1264 = vld [vmem:[%s210 + $0xf88] sm:$0xff]
          %v1265 = vld [vmem:[%s210 + $0xf90] sm:$0xff]
          %v1266 = vld [vmem:[%s210 + $0xf98] sm:$0xff]
          %v1267 = vld [vmem:[%s210 + $0xfa0] sm:$0xff]
          %v1268 = vld [vmem:[%s210 + $0xfa8] sm:$0xff]
          %v1269 = vld [vmem:[%s210 + $0xfb0] sm:$0xff]
          %v1270 = vld [vmem:[%s210 + $0xfb8] sm:$0xff]
          %v1271 = vld [vmem:[%s210 + $0xfc0] sm:$0xff]
          %v1272 = vld [vmem:[%s210 + $0xfc8] sm:$0xff]
          %v1273 = vld [vmem:[%s210 + $0xfd0] sm:$0xff]
          %v1274 = vld [vmem:[%s210 + $0xfd8] sm:$0xff]
          %v1275 = vld [vmem:[%s210 + $0xfe0] sm:$0xff]
          %v1276 = vld [vmem:[%s210 + $0xfe8] sm:$0xff]
          %v1277 = vld [vmem:[%s210 + $0xff0] sm:$0xff]
          %v1278 = vld [vmem:[%s210 + $0xff8] sm:$0xff]
          %v1279 = vsub.f32 %v255, %v767
          %v1280 = vsub.f32 %v256, %v768
          %v1281 = vsub.f32 %v257, %v769
          %v1282 = vsub.f32 %v258, %v770
          %v1283 = vsub.f32 %v259, %v771
          %v1284 = vsub.f32 %v260, %v772
          %v1285 = vsub.f32 %v261, %v773
          %v1286 = vsub.f32 %v262, %v774
          %v1287 = vsub.f32 %v263, %v775
          %v1288 = vsub.f32 %v264, %v776
          %v1289 = vsub.f32 %v265, %v777
          %v1290 = vsub.f32 %v266, %v778
          %v1291 = vsub.f32 %v267, %v779
          %v1292 = vsub.f32 %v268, %v780
          %v1293 = vsub.f32 %v269, %v781
          %v1294 = vsub.f32 %v270, %v782
          %v1295 = vsub.f32 %v271, %v783
          %v1296 = vsub.f32 %v272, %v784
          %v1297 = vsub.f32 %v273, %v785
          %v1298 = vsub.f32 %v274, %v786
          %v1299 = vsub.f32 %v275, %v787
          %v1300 = vsub.f32 %v276, %v788
          %v1301 = vsub.f32 %v277, %v789
          %v1302 = vsub.f32 %v278, %v790
          %v1303 = vsub.f32 %v279, %v791
          %v1304 = vsub.f32 %v280, %v792
          %v1305 = vsub.f32 %v281, %v793
          %v1306 = vsub.f32 %v282, %v794
          %v1307 = vsub.f32 %v283, %v795
          %v1308 = vsub.f32 %v284, %v796
          %v1309 = vsub.f32 %v285, %v797
          %v1310 = vsub.f32 %v286, %v798
          %v1311 = vsub.f32 %v287, %v799
          %v1312 = vsub.f32 %v288, %v800
          %v1313 = vsub.f32 %v289, %v801
          %v1314 = vsub.f32 %v290, %v802
          %v1315 = vsub.f32 %v291, %v803
          %v1316 = vsub.f32 %v292, %v804
          %v1317 = vsub.f32 %v293, %v805
          %v1318 = vsub.f32 %v294, %v806
          %v1319 = vsub.f32 %v295, %v807
          %v1320 = vsub.f32 %v296, %v808
          %v1321 = vsub.f32 %v297, %v809
          %v1322 = vsub.f32 %v298, %v810
          %v1323 = vsub.f32 %v299, %v811
          %v1324 = vsub.f32 %v300, %v812
          %v1325 = vsub.f32 %v301, %v813
          %v1326 = vsub.f32 %v302, %v814
          %v1327 = vsub.f32 %v303, %v815
          %v1328 = vsub.f32 %v304, %v816
          %v1329 = vsub.f32 %v305, %v817
          %v1330 = vsub.f32 %v306, %v818
          %v1331 = vsub.f32 %v307, %v819
          %v1332 = vsub.f32 %v308, %v820
          %v1333 = vsub.f32 %v309, %v821
          %v1334 = vsub.f32 %v310, %v822
          %v1335 = vsub.f32 %v311, %v823
          %v1336 = vsub.f32 %v312, %v824
          %v1337 = vsub.f32 %v313, %v825
          %v1338 = vsub.f32 %v314, %v826
          %v1339 = vsub.f32 %v315, %v827
          %v1340 = vsub.f32 %v316, %v828
          %v1341 = vsub.f32 %v317, %v829
          %v1342 = vsub.f32 %v318, %v830
          %v1343 = vsub.f32 %v319, %v831
          %v1344 = vsub.f32 %v320, %v832
          %v1345 = vsub.f32 %v321, %v833
          %v1346 = vsub.f32 %v322, %v834
          %v1347 = vsub.f32 %v323, %v835
          %v1348 = vsub.f32 %v324, %v836
          %v1349 = vsub.f32 %v325, %v837
          %v1350 = vsub.f32 %v326, %v838
          %v1351 = vsub.f32 %v327, %v839
          %v1352 = vsub.f32 %v328, %v840
          %v1353 = vsub.f32 %v329, %v841
          %v1354 = vsub.f32 %v330, %v842
          %v1355 = vsub.f32 %v331, %v843
          %v1356 = vsub.f32 %v332, %v844
          %v1357 = vsub.f32 %v333, %v845
          %v1358 = vsub.f32 %v334, %v846
          %v1359 = vsub.f32 %v335, %v847
          %v1360 = vsub.f32 %v336, %v848
          %v1361 = vsub.f32 %v337, %v849
          %v1362 = vsub.f32 %v338, %v850
          %v1363 = vsub.f32 %v339, %v851
          %v1364 = vsub.f32 %v340, %v852
          %v1365 = vsub.f32 %v341, %v853
          %v1366 = vsub.f32 %v342, %v854
          %v1367 = vsub.f32 %v343, %v855
          %v1368 = vsub.f32 %v344, %v856
          %v1369 = vsub.f32 %v345, %v857
          %v1370 = vsub.f32 %v346, %v858
          %v1371 = vsub.f32 %v347, %v859
          %v1372 = vsub.f32 %v348, %v860
          %v1373 = vsub.f32 %v349, %v861
          %v1374 = vsub.f32 %v350, %v862
          %v1375 = vsub.f32 %v351, %v863
          %v1376 = vsub.f32 %v352, %v864
          %v1377 = vsub.f32 %v353, %v865
          %v1378 = vsub.f32 %v354, %v866
          %v1379 = vsub.f32 %v355, %v867
          %v1380 = vsub.f32 %v356, %v868
          %v1381 = vsub.f32 %v357, %v869
          %v1382 = vsub.f32 %v358, %v870
          %v1383 = vsub.f32 %v359, %v871
          %v1384 = vsub.f32 %v360, %v872
          %v1385 = vsub.f32 %v361, %v873
          %v1386 = vsub.f32 %v362, %v874
          %v1387 = vsub.f32 %v363, %v875
          %v1388 = vsub.f32 %v364, %v876
          %v1389 = vsub.f32 %v365, %v877
          %v1390 = vsub.f32 %v366, %v878
          %v1391 = vsub.f32 %v367, %v879
          %v1392 = vsub.f32 %v368, %v880
          %v1393 = vsub.f32 %v369, %v881
          %v1394 = vsub.f32 %v370, %v882
          %v1395 = vsub.f32 %v371, %v883
          %v1396 = vsub.f32 %v372, %v884
          %v1397 = vsub.f32 %v373, %v885
          %v1398 = vsub.f32 %v374, %v886
          %v1399 = vsub.f32 %v375, %v887
          %v1400 = vsub.f32 %v376, %v888
          %v1401 = vsub.f32 %v377, %v889
          %v1402 = vsub.f32 %v378, %v890
          %v1403 = vsub.f32 %v379, %v891
          %v1404 = vsub.f32 %v380, %v892
          %v1405 = vsub.f32 %v381, %v893
          %v1406 = vsub.f32 %v382, %v894
          %v1407 = vsub.f32 %v383, %v895
          %v1408 = vsub.f32 %v384, %v896
          %v1409 = vsub.f32 %v385, %v897
          %v1410 = vsub.f32 %v386, %v898
          %v1411 = vsub.f32 %v387, %v899
          %v1412 = vsub.f32 %v388, %v900
          %v1413 = vsub.f32 %v389, %v901
          %v1414 = vsub.f32 %v390, %v902
          %v1415 = vsub.f32 %v391, %v903
          %v1416 = vsub.f32 %v392, %v904
          %v1417 = vsub.f32 %v393, %v905
          %v1418 = vsub.f32 %v394, %v906
          %v1419 = vsub.f32 %v395, %v907
          %v1420 = vsub.f32 %v396, %v908
          %v1421 = vsub.f32 %v397, %v909
          %v1422 = vsub.f32 %v398, %v910
          %v1423 = vsub.f32 %v399, %v911
          %v1424 = vsub.f32 %v400, %v912
          %v1425 = vsub.f32 %v401, %v913
          %v1426 = vsub.f32 %v402, %v914
          %v1427 = vsub.f32 %v403, %v915
          %v1428 = vsub.f32 %v404, %v916
          %v1429 = vsub.f32 %v405, %v917
          %v1430 = vsub.f32 %v406, %v918
          %v1431 = vsub.f32 %v407, %v919
          %v1432 = vsub.f32 %v408, %v920
          %v1433 = vsub.f32 %v409, %v921
          %v1434 = vsub.f32 %v410, %v922
          %v1435 = vsub.f32 %v411, %v923
          %v1436 = vsub.f32 %v412, %v924
          %v1437 = vsub.f32 %v413, %v925
          %v1438 = vsub.f32 %v414, %v926
          %v1439 = vsub.f32 %v415, %v927
          %v1440 = vsub.f32 %v416, %v928
          %v1441 = vsub.f32 %v417, %v929
          %v1442 = vsub.f32 %v418, %v930
          %v1443 = vsub.f32 %v419, %v931
          %v1444 = vsub.f32 %v420, %v932
          %v1445 = vsub.f32 %v421, %v933
          %v1446 = vsub.f32 %v422, %v934
          %v1447 = vsub.f32 %v423, %v935
          %v1448 = vsub.f32 %v424, %v936
          %v1449 = vsub.f32 %v425, %v937
          %v1450 = vsub.f32 %v426, %v938
          %v1451 = vsub.f32 %v427, %v939
          %v1452 = vsub.f32 %v428, %v940
          %v1453 = vsub.f32 %v429, %v941
          %v1454 = vsub.f32 %v430, %v942
          %v1455 = vsub.f32 %v431, %v943
          %v1456 = vsub.f32 %v432, %v944
          %v1457 = vsub.f32 %v433, %v945
          %v1458 = vsub.f32 %v434, %v946
          %v1459 = vsub.f32 %v435, %v947
          %v1460 = vsub.f32 %v436, %v948
          %v1461 = vsub.f32 %v437, %v949
          %v1462 = vsub.f32 %v438, %v950
          %v1463 = vsub.f32 %v439, %v951
          %v1464 = vsub.f32 %v440, %v952
          %v1465 = vsub.f32 %v441, %v953
          %v1466 = vsub.f32 %v442, %v954
          %v1467 = vsub.f32 %v443, %v955
          %v1468 = vsub.f32 %v444, %v956
          %v1469 = vsub.f32 %v445, %v957
          %v1470 = vsub.f32 %v446, %v958
          %v1471 = vsub.f32 %v447, %v959
          %v1472 = vsub.f32 %v448, %v960
          %v1473 = vsub.f32 %v449, %v961
          %v1474 = vsub.f32 %v450, %v962
          %v1475 = vsub.f32 %v451, %v963
          %v1476 = vsub.f32 %v452, %v964
          %v1477 = vsub.f32 %v453, %v965
          %v1478 = vsub.f32 %v454, %v966
          %v1479 = vsub.f32 %v455, %v967
          %v1480 = vsub.f32 %v456, %v968
          %v1481 = vsub.f32 %v457, %v969
          %v1482 = vsub.f32 %v458, %v970
          %v1483 = vsub.f32 %v459, %v971
          %v1484 = vsub.f32 %v460, %v972
          %v1485 = vsub.f32 %v461, %v973
          %v1486 = vsub.f32 %v462, %v974
          %v1487 = vsub.f32 %v463, %v975
          %v1488 = vsub.f32 %v464, %v976
          %v1489 = vsub.f32 %v465, %v977
          %v1490 = vsub.f32 %v466, %v978
          %v1491 = vsub.f32 %v467, %v979
          %v1492 = vsub.f32 %v468, %v980
          %v1493 = vsub.f32 %v469, %v981
          %v1494 = vsub.f32 %v470, %v982
          %v1495 = vsub.f32 %v471, %v983
          %v1496 = vsub.f32 %v472, %v984
          %v1497 = vsub.f32 %v473, %v985
          %v1498 = vsub.f32 %v474, %v986
          %v1499 = vsub.f32 %v475, %v987
          %v1500 = vsub.f32 %v476, %v988
          %v1501 = vsub.f32 %v477, %v989
          %v1502 = vsub.f32 %v478, %v990
          %v1503 = vsub.f32 %v479, %v991
          %v1504 = vsub.f32 %v480, %v992
          %v1505 = vsub.f32 %v481, %v993
          %v1506 = vsub.f32 %v482, %v994
          %v1507 = vsub.f32 %v483, %v995
          %v1508 = vsub.f32 %v484, %v996
          %v1509 = vsub.f32 %v485, %v997
          %v1510 = vsub.f32 %v486, %v998
          %v1511 = vsub.f32 %v487, %v999
          %v1512 = vsub.f32 %v488, %v1000
          %v1513 = vsub.f32 %v489, %v1001
          %v1514 = vsub.f32 %v490, %v1002
          %v1515 = vsub.f32 %v491, %v1003
          %v1516 = vsub.f32 %v492, %v1004
          %v1517 = vsub.f32 %v493, %v1005
          %v1518 = vsub.f32 %v494, %v1006
          %v1519 = vsub.f32 %v495, %v1007
          %v1520 = vsub.f32 %v496, %v1008
          %v1521 = vsub.f32 %v497, %v1009
          %v1522 = vsub.f32 %v498, %v1010
          %v1523 = vsub.f32 %v499, %v1011
          %v1524 = vsub.f32 %v500, %v1012
          %v1525 = vsub.f32 %v501, %v1013
          %v1526 = vsub.f32 %v502, %v1014
          %v1527 = vsub.f32 %v503, %v1015
          %v1528 = vsub.f32 %v504, %v1016
          %v1529 = vsub.f32 %v505, %v1017
          %v1530 = vsub.f32 %v506, %v1018
          %v1531 = vsub.f32 %v507, %v1019
          %v1532 = vsub.f32 %v508, %v1020
          %v1533 = vsub.f32 %v509, %v1021
          %v1534 = vsub.f32 %v510, %v1022
          %v1535 = vsub.f32 %v511, %v1023
          %v1536 = vsub.f32 %v512, %v1024
          %v1537 = vsub.f32 %v513, %v1025
          %v1538 = vsub.f32 %v514, %v1026
          %v1539 = vsub.f32 %v515, %v1027
          %v1540 = vsub.f32 %v516, %v1028
          %v1541 = vsub.f32 %v517, %v1029
          %v1542 = vsub.f32 %v518, %v1030
          %v1543 = vsub.f32 %v519, %v1031
          %v1544 = vsub.f32 %v520, %v1032
          %v1545 = vsub.f32 %v521, %v1033
          %v1546 = vsub.f32 %v522, %v1034
          %v1547 = vsub.f32 %v523, %v1035
          %v1548 = vsub.f32 %v524, %v1036
          %v1549 = vsub.f32 %v525, %v1037
          %v1550 = vsub.f32 %v526, %v1038
          %v1551 = vsub.f32 %v527, %v1039
          %v1552 = vsub.f32 %v528, %v1040
          %v1553 = vsub.f32 %v529, %v1041
          %v1554 = vsub.f32 %v530, %v1042
          %v1555 = vsub.f32 %v531, %v1043
          %v1556 = vsub.f32 %v532, %v1044
          %v1557 = vsub.f32 %v533, %v1045
          %v1558 = vsub.f32 %v534, %v1046
          %v1559 = vsub.f32 %v535, %v1047
          %v1560 = vsub.f32 %v536, %v1048
          %v1561 = vsub.f32 %v537, %v1049
          %v1562 = vsub.f32 %v538, %v1050
          %v1563 = vsub.f32 %v539, %v1051
          %v1564 = vsub.f32 %v540, %v1052
          %v1565 = vsub.f32 %v541, %v1053
          %v1566 = vsub.f32 %v542, %v1054
          %v1567 = vsub.f32 %v543, %v1055
          %v1568 = vsub.f32 %v544, %v1056
          %v1569 = vsub.f32 %v545, %v1057
          %v1570 = vsub.f32 %v546, %v1058
          %v1571 = vsub.f32 %v547, %v1059
          %v1572 = vsub.f32 %v548, %v1060
          %v1573 = vsub.f32 %v549, %v1061
          %v1574 = vsub.f32 %v550, %v1062
          %v1575 = vsub.f32 %v551, %v1063
          %v1576 = vsub.f32 %v552, %v1064
          %v1577 = vsub.f32 %v553, %v1065
          %v1578 = vsub.f32 %v554, %v1066
          %v1579 = vsub.f32 %v555, %v1067
          %v1580 = vsub.f32 %v556, %v1068
          %v1581 = vsub.f32 %v557, %v1069
          %v1582 = vsub.f32 %v558, %v1070
          %v1583 = vsub.f32 %v559, %v1071
          %v1584 = vsub.f32 %v560, %v1072
          %v1585 = vsub.f32 %v561, %v1073
          %v1586 = vsub.f32 %v562, %v1074
          %v1587 = vsub.f32 %v563, %v1075
          %v1588 = vsub.f32 %v564, %v1076
          %v1589 = vsub.f32 %v565, %v1077
          %v1590 = vsub.f32 %v566, %v1078
          %v1591 = vsub.f32 %v567, %v1079
          %v1592 = vsub.f32 %v568, %v1080
          %v1593 = vsub.f32 %v569, %v1081
          %v1594 = vsub.f32 %v570, %v1082
          %v1595 = vsub.f32 %v571, %v1083
          %v1596 = vsub.f32 %v572, %v1084
          %v1597 = vsub.f32 %v573, %v1085
          %v1598 = vsub.f32 %v574, %v1086
          %v1599 = vsub.f32 %v575, %v1087
          %v1600 = vsub.f32 %v576, %v1088
          %v1601 = vsub.f32 %v577, %v1089
          %v1602 = vsub.f32 %v578, %v1090
          %v1603 = vsub.f32 %v579, %v1091
          %v1604 = vsub.f32 %v580, %v1092
          %v1605 = vsub.f32 %v581, %v1093
          %v1606 = vsub.f32 %v582, %v1094
          %v1607 = vsub.f32 %v583, %v1095
          %v1608 = vsub.f32 %v584, %v1096
          %v1609 = vsub.f32 %v585, %v1097
          %v1610 = vsub.f32 %v586, %v1098
          %v1611 = vsub.f32 %v587, %v1099
          %v1612 = vsub.f32 %v588, %v1100
          %v1613 = vsub.f32 %v589, %v1101
          %v1614 = vsub.f32 %v590, %v1102
          %v1615 = vsub.f32 %v591, %v1103
          %v1616 = vsub.f32 %v592, %v1104
          %v1617 = vsub.f32 %v593, %v1105
          %v1618 = vsub.f32 %v594, %v1106
          %v1619 = vsub.f32 %v595, %v1107
          %v1620 = vsub.f32 %v596, %v1108
          %v1621 = vsub.f32 %v597, %v1109
          %v1622 = vsub.f32 %v598, %v1110
          %v1623 = vsub.f32 %v599, %v1111
          %v1624 = vsub.f32 %v600, %v1112
          %v1625 = vsub.f32 %v601, %v1113
          %v1626 = vsub.f32 %v602, %v1114
          %v1627 = vsub.f32 %v603, %v1115
          %v1628 = vsub.f32 %v604, %v1116
          %v1629 = vsub.f32 %v605, %v1117
          %v1630 = vsub.f32 %v606, %v1118
          %v1631 = vsub.f32 %v607, %v1119
          %v1632 = vsub.f32 %v608, %v1120
          %v1633 = vsub.f32 %v609, %v1121
          %v1634 = vsub.f32 %v610, %v1122
          %v1635 = vsub.f32 %v611, %v1123
          %v1636 = vsub.f32 %v612, %v1124
          %v1637 = vsub.f32 %v613, %v1125
          %v1638 = vsub.f32 %v614, %v1126
          %v1639 = vsub.f32 %v615, %v1127
          %v1640 = vsub.f32 %v616, %v1128
          %v1641 = vsub.f32 %v617, %v1129
          %v1642 = vsub.f32 %v618, %v1130
          %v1643 = vsub.f32 %v619, %v1131
          %v1644 = vsub.f32 %v620, %v1132
          %v1645 = vsub.f32 %v621, %v1133
          %v1646 = vsub.f32 %v622, %v1134
          %v1647 = vsub.f32 %v623, %v1135
          %v1648 = vsub.f32 %v624, %v1136
          %v1649 = vsub.f32 %v625, %v1137
          %v1650 = vsub.f32 %v626, %v1138
          %v1651 = vsub.f32 %v627, %v1139
          %v1652 = vsub.f32 %v628, %v1140
          %v1653 = vsub.f32 %v629, %v1141
          %v1654 = vsub.f32 %v630, %v1142
          %v1655 = vsub.f32 %v631, %v1143
          %v1656 = vsub.f32 %v632, %v1144
          %v1657 = vsub.f32 %v633, %v1145
          %v1658 = vsub.f32 %v634, %v1146
          %v1659 = vsub.f32 %v635, %v1147
          %v1660 = vsub.f32 %v636, %v1148
          %v1661 = vsub.f32 %v637, %v1149
          %v1662 = vsub.f32 %v638, %v1150
          %v1663 = vsub.f32 %v639, %v1151
          %v1664 = vsub.f32 %v640, %v1152
          %v1665 = vsub.f32 %v641, %v1153
          %v1666 = vsub.f32 %v642, %v1154
          %v1667 = vsub.f32 %v643, %v1155
          %v1668 = vsub.f32 %v644, %v1156
          %v1669 = vsub.f32 %v645, %v1157
          %v1670 = vsub.f32 %v646, %v1158
          %v1671 = vsub.f32 %v647, %v1159
          %v1672 = vsub.f32 %v648, %v1160
          %v1673 = vsub.f32 %v649, %v1161
          %v1674 = vsub.f32 %v650, %v1162
          %v1675 = vsub.f32 %v651, %v1163
          %v1676 = vsub.f32 %v652, %v1164
          %v1677 = vsub.f32 %v653, %v1165
          %v1678 = vsub.f32 %v654, %v1166
          %v1679 = vsub.f32 %v655, %v1167
          %v1680 = vsub.f32 %v656, %v1168
          %v1681 = vsub.f32 %v657, %v1169
          %v1682 = vsub.f32 %v658, %v1170
          %v1683 = vsub.f32 %v659, %v1171
          %v1684 = vsub.f32 %v660, %v1172
          %v1685 = vsub.f32 %v661, %v1173
          %v1686 = vsub.f32 %v662, %v1174
          %v1687 = vsub.f32 %v663, %v1175
          %v1688 = vsub.f32 %v664, %v1176
          %v1689 = vsub.f32 %v665, %v1177
          %v1690 = vsub.f32 %v666, %v1178
          %v1691 = vsub.f32 %v667, %v1179
          %v1692 = vsub.f32 %v668, %v1180
          %v1693 = vsub.f32 %v669, %v1181
          %v1694 = vsub.f32 %v670, %v1182
          %v1695 = vsub.f32 %v671, %v1183
          %v1696 = vsub.f32 %v672, %v1184
          %v1697 = vsub.f32 %v673, %v1185
          %v1698 = vsub.f32 %v674, %v1186
          %v1699 = vsub.f32 %v675, %v1187
          %v1700 = vsub.f32 %v676, %v1188
          %v1701 = vsub.f32 %v677, %v1189
          %v1702 = vsub.f32 %v678, %v1190
          %v1703 = vsub.f32 %v679, %v1191
          %v1704 = vsub.f32 %v680, %v1192
          %v1705 = vsub.f32 %v681, %v1193
          %v1706 = vsub.f32 %v682, %v1194
          %v1707 = vsub.f32 %v683, %v1195
          %v1708 = vsub.f32 %v684, %v1196
          %v1709 = vsub.f32 %v685, %v1197
          %v1710 = vsub.f32 %v686, %v1198
          %v1711 = vsub.f32 %v687, %v1199
          %v1712 = vsub.f32 %v688, %v1200
          %v1713 = vsub.f32 %v689, %v1201
          %v1714 = vsub.f32 %v690, %v1202
          %v1715 = vsub.f32 %v691, %v1203
          %v1716 = vsub.f32 %v692, %v1204
          %v1717 = vsub.f32 %v693, %v1205
          %v1718 = vsub.f32 %v694, %v1206
          %v1719 = vsub.f32 %v695, %v1207
          %v1720 = vsub.f32 %v696, %v1208
          %v1721 = vsub.f32 %v697, %v1209
          %v1722 = vsub.f32 %v698, %v1210
          %v1723 = vsub.f32 %v699, %v1211
          %v1724 = vsub.f32 %v700, %v1212
          %v1725 = vsub.f32 %v701, %v1213
          %v1726 = vsub.f32 %v702, %v1214
          %v1727 = vsub.f32 %v703, %v1215
          %v1728 = vsub.f32 %v704, %v1216
          %v1729 = vsub.f32 %v705, %v1217
          %v1730 = vsub.f32 %v706, %v1218
          %v1731 = vsub.f32 %v707, %v1219
          %v1732 = vsub.f32 %v708, %v1220
          %v1733 = vsub.f32 %v709, %v1221
          %v1734 = vsub.f32 %v710, %v1222
          %v1735 = vsub.f32 %v711, %v1223
          %v1736 = vsub.f32 %v712, %v1224
          %v1737 = vsub.f32 %v713, %v1225
          %v1738 = vsub.f32 %v714, %v1226
          %v1739 = vsub.f32 %v715, %v1227
          %v1740 = vsub.f32 %v716, %v1228
          %v1741 = vsub.f32 %v717, %v1229
          %v1742 = vsub.f32 %v718, %v1230
          %v1743 = vsub.f32 %v719, %v1231
          %v1744 = vsub.f32 %v720, %v1232
          %v1745 = vsub.f32 %v721, %v1233
          %v1746 = vsub.f32 %v722, %v1234
          %v1747 = vsub.f32 %v723, %v1235
          %v1748 = vsub.f32 %v724, %v1236
          %v1749 = vsub.f32 %v725, %v1237
          %v1750 = vsub.f32 %v726, %v1238
          %v1751 = vsub.f32 %v727, %v1239
          %v1752 = vsub.f32 %v728, %v1240
          %v1753 = vsub.f32 %v729, %v1241
          %v1754 = vsub.f32 %v730, %v1242
          %v1755 = vsub.f32 %v731, %v1243
          %v1756 = vsub.f32 %v732, %v1244
          %v1757 = vsub.f32 %v733, %v1245
          %v1758 = vsub.f32 %v734, %v1246
          %v1759 = vsub.f32 %v735, %v1247
          %v1760 = vsub.f32 %v736, %v1248
          %v1761 = vsub.f32 %v737, %v1249
          %v1762 = vsub.f32 %v738, %v1250
          %v1763 = vsub.f32 %v739, %v1251
          %v1764 = vsub.f32 %v740, %v1252
          %v1765 = vsub.f32 %v741, %v1253
          %v1766 = vsub.f32 %v742, %v1254
          %v1767 = vsub.f32 %v743, %v1255
          %v1768 = vsub.f32 %v744, %v1256
          %v1769 = vsub.f32 %v745, %v1257
          %v1770 = vsub.f32 %v746, %v1258
          %v1771 = vsub.f32 %v747, %v1259
          %v1772 = vsub.f32 %v748, %v1260
          %v1773 = vsub.f32 %v749, %v1261
          %v1774 = vsub.f32 %v750, %v1262
          %v1775 = vsub.f32 %v751, %v1263
          %v1776 = vsub.f32 %v752, %v1264
          %v1777 = vsub.f32 %v753, %v1265
          %v1778 = vsub.f32 %v754, %v1266
          %v1779 = vsub.f32 %v755, %v1267
          %v1780 = vsub.f32 %v756, %v1268
          %v1781 = vsub.f32 %v757, %v1269
          %v1782 = vsub.f32 %v758, %v1270
          %v1783 = vsub.f32 %v759, %v1271
          %v1784 = vsub.f32 %v760, %v1272
          %v1785 = vsub.f32 %v761, %v1273
          %v1786 = vsub.f32 %v762, %v1274
          %v1787 = vsub.f32 %v763, %v1275
          %v1788 = vsub.f32 %v764, %v1276
          %v1789 = vsub.f32 %v765, %v1277
          %v1790 = vsub.f32 %v766, %v1278
          %v1791 = vmul.f32 %v1279, %v1279
          %v1792 = vmul.f32 %v1280, %v1280
          %v1793 = vmul.f32 %v1281, %v1281
          %v1794 = vmul.f32 %v1282, %v1282
          %v1795 = vmul.f32 %v1283, %v1283
          %v1796 = vmul.f32 %v1284, %v1284
          %v1797 = vmul.f32 %v1285, %v1285
          %v1798 = vmul.f32 %v1286, %v1286
          %v1799 = vmul.f32 %v1287, %v1287
          %v1800 = vmul.f32 %v1288, %v1288
          %v1801 = vmul.f32 %v1289, %v1289
          %v1802 = vmul.f32 %v1290, %v1290
          %v1803 = vmul.f32 %v1291, %v1291
          %v1804 = vmul.f32 %v1292, %v1292
          %v1805 = vmul.f32 %v1293, %v1293
          %v1806 = vmul.f32 %v1294, %v1294
          %v1807 = vmul.f32 %v1295, %v1295
          %v1808 = vmul.f32 %v1296, %v1296
          %v1809 = vmul.f32 %v1297, %v1297
          %v1810 = vmul.f32 %v1298, %v1298
          %v1811 = vmul.f32 %v1299, %v1299
          %v1812 = vmul.f32 %v1300, %v1300
          %v1813 = vmul.f32 %v1301, %v1301
          %v1814 = vmul.f32 %v1302, %v1302
          %v1815 = vmul.f32 %v1303, %v1303
          %v1816 = vmul.f32 %v1304, %v1304
          %v1817 = vmul.f32 %v1305, %v1305
          %v1818 = vmul.f32 %v1306, %v1306
          %v1819 = vmul.f32 %v1307, %v1307
          %v1820 = vmul.f32 %v1308, %v1308
          %v1821 = vmul.f32 %v1309, %v1309
          %v1822 = vmul.f32 %v1310, %v1310
          %v1823 = vmul.f32 %v1311, %v1311
          %v1824 = vmul.f32 %v1312, %v1312
          %v1825 = vmul.f32 %v1313, %v1313
          %v1826 = vmul.f32 %v1314, %v1314
          %v1827 = vmul.f32 %v1315, %v1315
          %v1828 = vmul.f32 %v1316, %v1316
          %v1829 = vmul.f32 %v1317, %v1317
          %v1830 = vmul.f32 %v1318, %v1318
          %v1831 = vmul.f32 %v1319, %v1319
          %v1832 = vmul.f32 %v1320, %v1320
          %v1833 = vmul.f32 %v1321, %v1321
          %v1834 = vmul.f32 %v1322, %v1322
          %v1835 = vmul.f32 %v1323, %v1323
          %v1836 = vmul.f32 %v1324, %v1324
          %v1837 = vmul.f32 %v1325, %v1325
          %v1838 = vmul.f32 %v1326, %v1326
          %v1839 = vmul.f32 %v1327, %v1327
          %v1840 = vmul.f32 %v1328, %v1328
          %v1841 = vmul.f32 %v1329, %v1329
          %v1842 = vmul.f32 %v1330, %v1330
          %v1843 = vmul.f32 %v1331, %v1331
          %v1844 = vmul.f32 %v1332, %v1332
          %v1845 = vmul.f32 %v1333, %v1333
          %v1846 = vmul.f32 %v1334, %v1334
          %v1847 = vmul.f32 %v1335, %v1335
          %v1848 = vmul.f32 %v1336, %v1336
          %v1849 = vmul.f32 %v1337, %v1337
          %v1850 = vmul.f32 %v1338, %v1338
          %v1851 = vmul.f32 %v1339, %v1339
          %v1852 = vmul.f32 %v1340, %v1340
          %v1853 = vmul.f32 %v1341, %v1341
          %v1854 = vmul.f32 %v1342, %v1342
          %v1855 = vmul.f32 %v1343, %v1343
          %v1856 = vmul.f32 %v1344, %v1344
          %v1857 = vmul.f32 %v1345, %v1345
          %v1858 = vmul.f32 %v1346, %v1346
          %v1859 = vmul.f32 %v1347, %v1347
          %v1860 = vmul.f32 %v1348, %v1348
          %v1861 = vmul.f32 %v1349, %v1349
          %v1862 = vmul.f32 %v1350, %v1350
          %v1863 = vmul.f32 %v1351, %v1351
          %v1864 = vmul.f32 %v1352, %v1352
          %v1865 = vmul.f32 %v1353, %v1353
          %v1866 = vmul.f32 %v1354, %v1354
          %v1867 = vmul.f32 %v1355, %v1355
          %v1868 = vmul.f32 %v1356, %v1356
          %v1869 = vmul.f32 %v1357, %v1357
          %v1870 = vmul.f32 %v1358, %v1358
          %v1871 = vmul.f32 %v1359, %v1359
          %v1872 = vmul.f32 %v1360, %v1360
          %v1873 = vmul.f32 %v1361, %v1361
          %v1874 = vmul.f32 %v1362, %v1362
          %v1875 = vmul.f32 %v1363, %v1363
          %v1876 = vmul.f32 %v1364, %v1364
          %v1877 = vmul.f32 %v1365, %v1365
          %v1878 = vmul.f32 %v1366, %v1366
          %v1879 = vmul.f32 %v1367, %v1367
          %v1880 = vmul.f32 %v1368, %v1368
          %v1881 = vmul.f32 %v1369, %v1369
          %v1882 = vmul.f32 %v1370, %v1370
          %v1883 = vmul.f32 %v1371, %v1371
          %v1884 = vmul.f32 %v1372, %v1372
          %v1885 = vmul.f32 %v1373, %v1373
          %v1886 = vmul.f32 %v1374, %v1374
          %v1887 = vmul.f32 %v1375, %v1375
          %v1888 = vmul.f32 %v1376, %v1376
          %v1889 = vmul.f32 %v1377, %v1377
          %v1890 = vmul.f32 %v1378, %v1378
          %v1891 = vmul.f32 %v1379, %v1379
          %v1892 = vmul.f32 %v1380, %v1380
          %v1893 = vmul.f32 %v1381, %v1381
          %v1894 = vmul.f32 %v1382, %v1382
          %v1895 = vmul.f32 %v1383, %v1383
          %v1896 = vmul.f32 %v1384, %v1384
          %v1897 = vmul.f32 %v1385, %v1385
          %v1898 = vmul.f32 %v1386, %v1386
          %v1899 = vmul.f32 %v1387, %v1387
          %v1900 = vmul.f32 %v1388, %v1388
          %v1901 = vmul.f32 %v1389, %v1389
          %v1902 = vmul.f32 %v1390, %v1390
          %v1903 = vmul.f32 %v1391, %v1391
          %v1904 = vmul.f32 %v1392, %v1392
          %v1905 = vmul.f32 %v1393, %v1393
          %v1906 = vmul.f32 %v1394, %v1394
          %v1907 = vmul.f32 %v1395, %v1395
          %v1908 = vmul.f32 %v1396, %v1396
          %v1909 = vmul.f32 %v1397, %v1397
          %v1910 = vmul.f32 %v1398, %v1398
          %v1911 = vmul.f32 %v1399, %v1399
          %v1912 = vmul.f32 %v1400, %v1400
          %v1913 = vmul.f32 %v1401, %v1401
          %v1914 = vmul.f32 %v1402, %v1402
          %v1915 = vmul.f32 %v1403, %v1403
          %v1916 = vmul.f32 %v1404, %v1404
          %v1917 = vmul.f32 %v1405, %v1405
          %v1918 = vmul.f32 %v1406, %v1406
          %v1919 = vmul.f32 %v1407, %v1407
          %v1920 = vmul.f32 %v1408, %v1408
          %v1921 = vmul.f32 %v1409, %v1409
          %v1922 = vmul.f32 %v1410, %v1410
          %v1923 = vmul.f32 %v1411, %v1411
          %v1924 = vmul.f32 %v1412, %v1412
          %v1925 = vmul.f32 %v1413, %v1413
          %v1926 = vmul.f32 %v1414, %v1414
          %v1927 = vmul.f32 %v1415, %v1415
          %v1928 = vmul.f32 %v1416, %v1416
          %v1929 = vmul.f32 %v1417, %v1417
          %v1930 = vmul.f32 %v1418, %v1418
          %v1931 = vmul.f32 %v1419, %v1419
          %v1932 = vmul.f32 %v1420, %v1420
          %v1933 = vmul.f32 %v1421, %v1421
          %v1934 = vmul.f32 %v1422, %v1422
          %v1935 = vmul.f32 %v1423, %v1423
          %v1936 = vmul.f32 %v1424, %v1424
          %v1937 = vmul.f32 %v1425, %v1425
          %v1938 = vmul.f32 %v1426, %v1426
          %v1939 = vmul.f32 %v1427, %v1427
          %v1940 = vmul.f32 %v1428, %v1428
          %v1941 = vmul.f32 %v1429, %v1429
          %v1942 = vmul.f32 %v1430, %v1430
          %v1943 = vmul.f32 %v1431, %v1431
          %v1944 = vmul.f32 %v1432, %v1432
          %v1945 = vmul.f32 %v1433, %v1433
          %v1946 = vmul.f32 %v1434, %v1434
          %v1947 = vmul.f32 %v1435, %v1435
          %v1948 = vmul.f32 %v1436, %v1436
          %v1949 = vmul.f32 %v1437, %v1437
          %v1950 = vmul.f32 %v1438, %v1438
          %v1951 = vmul.f32 %v1439, %v1439
          %v1952 = vmul.f32 %v1440, %v1440
          %v1953 = vmul.f32 %v1441, %v1441
          %v1954 = vmul.f32 %v1442, %v1442
          %v1955 = vmul.f32 %v1443, %v1443
          %v1956 = vmul.f32 %v1444, %v1444
          %v1957 = vmul.f32 %v1445, %v1445
          %v1958 = vmul.f32 %v1446, %v1446
          %v1959 = vmul.f32 %v1447, %v1447
          %v1960 = vmul.f32 %v1448, %v1448
          %v1961 = vmul.f32 %v1449, %v1449
          %v1962 = vmul.f32 %v1450, %v1450
          %v1963 = vmul.f32 %v1451, %v1451
          %v1964 = vmul.f32 %v1452, %v1452
          %v1965 = vmul.f32 %v1453, %v1453
          %v1966 = vmul.f32 %v1454, %v1454
          %v1967 = vmul.f32 %v1455, %v1455
          %v1968 = vmul.f32 %v1456, %v1456
          %v1969 = vmul.f32 %v1457, %v1457
          %v1970 = vmul.f32 %v1458, %v1458
          %v1971 = vmul.f32 %v1459, %v1459
          %v1972 = vmul.f32 %v1460, %v1460
          %v1973 = vmul.f32 %v1461, %v1461
          %v1974 = vmul.f32 %v1462, %v1462
          %v1975 = vmul.f32 %v1463, %v1463
          %v1976 = vmul.f32 %v1464, %v1464
          %v1977 = vmul.f32 %v1465, %v1465
          %v1978 = vmul.f32 %v1466, %v1466
          %v1979 = vmul.f32 %v1467, %v1467
          %v1980 = vmul.f32 %v1468, %v1468
          %v1981 = vmul.f32 %v1469, %v1469
          %v1982 = vmul.f32 %v1470, %v1470
          %v1983 = vmul.f32 %v1471, %v1471
          %v1984 = vmul.f32 %v1472, %v1472
          %v1985 = vmul.f32 %v1473, %v1473
          %v1986 = vmul.f32 %v1474, %v1474
          %v1987 = vmul.f32 %v1475, %v1475
          %v1988 = vmul.f32 %v1476, %v1476
          %v1989 = vmul.f32 %v1477, %v1477
          %v1990 = vmul.f32 %v1478, %v1478
          %v1991 = vmul.f32 %v1479, %v1479
          %v1992 = vmul.f32 %v1480, %v1480
          %v1993 = vmul.f32 %v1481, %v1481
          %v1994 = vmul.f32 %v1482, %v1482
          %v1995 = vmul.f32 %v1483, %v1483
          %v1996 = vmul.f32 %v1484, %v1484
          %v1997 = vmul.f32 %v1485, %v1485
          %v1998 = vmul.f32 %v1486, %v1486
          %v1999 = vmul.f32 %v1487, %v1487
          %v2000 = vmul.f32 %v1488, %v1488
          %v2001 = vmul.f32 %v1489, %v1489
          %v2002 = vmul.f32 %v1490, %v1490
          %v2003 = vmul.f32 %v1491, %v1491
          %v2004 = vmul.f32 %v1492, %v1492
          %v2005 = vmul.f32 %v1493, %v1493
          %v2006 = vmul.f32 %v1494, %v1494
          %v2007 = vmul.f32 %v1495, %v1495
          %v2008 = vmul.f32 %v1496, %v1496
          %v2009 = vmul.f32 %v1497, %v1497
          %v2010 = vmul.f32 %v1498, %v1498
          %v2011 = vmul.f32 %v1499, %v1499
          %v2012 = vmul.f32 %v1500, %v1500
          %v2013 = vmul.f32 %v1501, %v1501
          %v2014 = vmul.f32 %v1502, %v1502
          %v2015 = vmul.f32 %v1503, %v1503
          %v2016 = vmul.f32 %v1504, %v1504
          %v2017 = vmul.f32 %v1505, %v1505
          %v2018 = vmul.f32 %v1506, %v1506
          %v2019 = vmul.f32 %v1507, %v1507
          %v2020 = vmul.f32 %v1508, %v1508
          %v2021 = vmul.f32 %v1509, %v1509
          %v2022 = vmul.f32 %v1510, %v1510
          %v2023 = vmul.f32 %v1511, %v1511
          %v2024 = vmul.f32 %v1512, %v1512
          %v2025 = vmul.f32 %v1513, %v1513
          %v2026 = vmul.f32 %v1514, %v1514
          %v2027 = vmul.f32 %v1515, %v1515
          %v2028 = vmul.f32 %v1516, %v1516
          %v2029 = vmul.f32 %v1517, %v1517
          %v2030 = vmul.f32 %v1518, %v1518
          %v2031 = vmul.f32 %v1519, %v1519
          %v2032 = vmul.f32 %v1520, %v1520
          %v2033 = vmul.f32 %v1521, %v1521
          %v2034 = vmul.f32 %v1522, %v1522
          %v2035 = vmul.f32 %v1523, %v1523
          %v2036 = vmul.f32 %v1524, %v1524
          %v2037 = vmul.f32 %v1525, %v1525
          %v2038 = vmul.f32 %v1526, %v1526
          %v2039 = vmul.f32 %v1527, %v1527
          %v2040 = vmul.f32 %v1528, %v1528
          %v2041 = vmul.f32 %v1529, %v1529
          %v2042 = vmul.f32 %v1530, %v1530
          %v2043 = vmul.f32 %v1531, %v1531
          %v2044 = vmul.f32 %v1532, %v1532
          %v2045 = vmul.f32 %v1533, %v1533
          %v2046 = vmul.f32 %v1534, %v1534
          %v2047 = vmul.f32 %v1535, %v1535
          %v2048 = vmul.f32 %v1536, %v1536
          %v2049 = vmul.f32 %v1537, %v1537
          %v2050 = vmul.f32 %v1538, %v1538
          %v2051 = vmul.f32 %v1539, %v1539
          %v2052 = vmul.f32 %v1540, %v1540
          %v2053 = vmul.f32 %v1541, %v1541
          %v2054 = vmul.f32 %v1542, %v1542
          %v2055 = vmul.f32 %v1543, %v1543
          %v2056 = vmul.f32 %v1544, %v1544
          %v2057 = vmul.f32 %v1545, %v1545
          %v2058 = vmul.f32 %v1546, %v1546
          %v2059 = vmul.f32 %v1547, %v1547
          %v2060 = vmul.f32 %v1548, %v1548
          %v2061 = vmul.f32 %v1549, %v1549
          %v2062 = vmul.f32 %v1550, %v1550
          %v2063 = vmul.f32 %v1551, %v1551
          %v2064 = vmul.f32 %v1552, %v1552
          %v2065 = vmul.f32 %v1553, %v1553
          %v2066 = vmul.f32 %v1554, %v1554
          %v2067 = vmul.f32 %v1555, %v1555
          %v2068 = vmul.f32 %v1556, %v1556
          %v2069 = vmul.f32 %v1557, %v1557
          %v2070 = vmul.f32 %v1558, %v1558
          %v2071 = vmul.f32 %v1559, %v1559
          %v2072 = vmul.f32 %v1560, %v1560
          %v2073 = vmul.f32 %v1561, %v1561
          %v2074 = vmul.f32 %v1562, %v1562
          %v2075 = vmul.f32 %v1563, %v1563
          %v2076 = vmul.f32 %v1564, %v1564
          %v2077 = vmul.f32 %v1565, %v1565
          %v2078 = vmul.f32 %v1566, %v1566
          %v2079 = vmul.f32 %v1567, %v1567
          %v2080 = vmul.f32 %v1568, %v1568
          %v2081 = vmul.f32 %v1569, %v1569
          %v2082 = vmul.f32 %v1570, %v1570
          %v2083 = vmul.f32 %v1571, %v1571
          %v2084 = vmul.f32 %v1572, %v1572
          %v2085 = vmul.f32 %v1573, %v1573
          %v2086 = vmul.f32 %v1574, %v1574
          %v2087 = vmul.f32 %v1575, %v1575
          %v2088 = vmul.f32 %v1576, %v1576
          %v2089 = vmul.f32 %v1577, %v1577
          %v2090 = vmul.f32 %v1578, %v1578
          %v2091 = vmul.f32 %v1579, %v1579
          %v2092 = vmul.f32 %v1580, %v1580
          %v2093 = vmul.f32 %v1581, %v1581
          %v2094 = vmul.f32 %v1582, %v1582
          %v2095 = vmul.f32 %v1583, %v1583
          %v2096 = vmul.f32 %v1584, %v1584
          %v2097 = vmul.f32 %v1585, %v1585
          %v2098 = vmul.f32 %v1586, %v1586
          %v2099 = vmul.f32 %v1587, %v1587
          %v2100 = vmul.f32 %v1588, %v1588
          %v2101 = vmul.f32 %v1589, %v1589
          %v2102 = vmul.f32 %v1590, %v1590
          %v2103 = vmul.f32 %v1591, %v1591
          %v2104 = vmul.f32 %v1592, %v1592
          %v2105 = vmul.f32 %v1593, %v1593
          %v2106 = vmul.f32 %v1594, %v1594
          %v2107 = vmul.f32 %v1595, %v1595
          %v2108 = vmul.f32 %v1596, %v1596
          %v2109 = vmul.f32 %v1597, %v1597
          %v2110 = vmul.f32 %v1598, %v1598
          %v2111 = vmul.f32 %v1599, %v1599
          %v2112 = vmul.f32 %v1600, %v1600
          %v2113 = vmul.f32 %v1601, %v1601
          %v2114 = vmul.f32 %v1602, %v1602
          %v2115 = vmul.f32 %v1603, %v1603
          %v2116 = vmul.f32 %v1604, %v1604
          %v2117 = vmul.f32 %v1605, %v1605
          %v2118 = vmul.f32 %v1606, %v1606
          %v2119 = vmul.f32 %v1607, %v1607
          %v2120 = vmul.f32 %v1608, %v1608
          %v2121 = vmul.f32 %v1609, %v1609
          %v2122 = vmul.f32 %v1610, %v1610
          %v2123 = vmul.f32 %v1611, %v1611
          %v2124 = vmul.f32 %v1612, %v1612
          %v2125 = vmul.f32 %v1613, %v1613
          %v2126 = vmul.f32 %v1614, %v1614
          %v2127 = vmul.f32 %v1615, %v1615
          %v2128 = vmul.f32 %v1616, %v1616
          %v2129 = vmul.f32 %v1617, %v1617
          %v2130 = vmul.f32 %v1618, %v1618
          %v2131 = vmul.f32 %v1619, %v1619
          %v2132 = vmul.f32 %v1620, %v1620
          %v2133 = vmul.f32 %v1621, %v1621
          %v2134 = vmul.f32 %v1622, %v1622
          %v2135 = vmul.f32 %v1623, %v1623
          %v2136 = vmul.f32 %v1624, %v1624
          %v2137 = vmul.f32 %v1625, %v1625
          %v2138 = vmul.f32 %v1626, %v1626
          %v2139 = vmul.f32 %v1627, %v1627
          %v2140 = vmul.f32 %v1628, %v1628
          %v2141 = vmul.f32 %v1629, %v1629
          %v2142 = vmul.f32 %v1630, %v1630
          %v2143 = vmul.f32 %v1631, %v1631
          %v2144 = vmul.f32 %v1632, %v1632
          %v2145 = vmul.f32 %v1633, %v1633
          %v2146 = vmul.f32 %v1634, %v1634
          %v2147 = vmul.f32 %v1635, %v1635
          %v2148 = vmul.f32 %v1636, %v1636
          %v2149 = vmul.f32 %v1637, %v1637
          %v2150 = vmul.f32 %v1638, %v1638
          %v2151 = vmul.f32 %v1639, %v1639
          %v2152 = vmul.f32 %v1640, %v1640
          %v2153 = vmul.f32 %v1641, %v1641
          %v2154 = vmul.f32 %v1642, %v1642
          %v2155 = vmul.f32 %v1643, %v1643
          %v2156 = vmul.f32 %v1644, %v1644
          %v2157 = vmul.f32 %v1645, %v1645
          %v2158 = vmul.f32 %v1646, %v1646
          %v2159 = vmul.f32 %v1647, %v1647
          %v2160 = vmul.f32 %v1648, %v1648
          %v2161 = vmul.f32 %v1649, %v1649
          %v2162 = vmul.f32 %v1650, %v1650
          %v2163 = vmul.f32 %v1651, %v1651
          %v2164 = vmul.f32 %v1652, %v1652
          %v2165 = vmul.f32 %v1653, %v1653
          %v2166 = vmul.f32 %v1654, %v1654
          %v2167 = vmul.f32 %v1655, %v1655
          %v2168 = vmul.f32 %v1656, %v1656
          %v2169 = vmul.f32 %v1657, %v1657
          %v2170 = vmul.f32 %v1658, %v1658
          %v2171 = vmul.f32 %v1659, %v1659
          %v2172 = vmul.f32 %v1660, %v1660
          %v2173 = vmul.f32 %v1661, %v1661
          %v2174 = vmul.f32 %v1662, %v1662
          %v2175 = vmul.f32 %v1663, %v1663
          %v2176 = vmul.f32 %v1664, %v1664
          %v2177 = vmul.f32 %v1665, %v1665
          %v2178 = vmul.f32 %v1666, %v1666
          %v2179 = vmul.f32 %v1667, %v1667
          %v2180 = vmul.f32 %v1668, %v1668
          %v2181 = vmul.f32 %v1669, %v1669
          %v2182 = vmul.f32 %v1670, %v1670
          %v2183 = vmul.f32 %v1671, %v1671
          %v2184 = vmul.f32 %v1672, %v1672
          %v2185 = vmul.f32 %v1673, %v1673
          %v2186 = vmul.f32 %v1674, %v1674
          %v2187 = vmul.f32 %v1675, %v1675
          %v2188 = vmul.f32 %v1676, %v1676
          %v2189 = vmul.f32 %v1677, %v1677
          %v2190 = vmul.f32 %v1678, %v1678
          %v2191 = vmul.f32 %v1679, %v1679
          %v2192 = vmul.f32 %v1680, %v1680
          %v2193 = vmul.f32 %v1681, %v1681
          %v2194 = vmul.f32 %v1682, %v1682
          %v2195 = vmul.f32 %v1683, %v1683
          %v2196 = vmul.f32 %v1684, %v1684
          %v2197 = vmul.f32 %v1685, %v1685
          %v2198 = vmul.f32 %v1686, %v1686
          %v2199 = vmul.f32 %v1687, %v1687
          %v2200 = vmul.f32 %v1688, %v1688
          %v2201 = vmul.f32 %v1689, %v1689
          %v2202 = vmul.f32 %v1690, %v1690
          %v2203 = vmul.f32 %v1691, %v1691
          %v2204 = vmul.f32 %v1692, %v1692
          %v2205 = vmul.f32 %v1693, %v1693
          %v2206 = vmul.f32 %v1694, %v1694
          %v2207 = vmul.f32 %v1695, %v1695
          %v2208 = vmul.f32 %v1696, %v1696
          %v2209 = vmul.f32 %v1697, %v1697
          %v2210 = vmul.f32 %v1698, %v1698
          %v2211 = vmul.f32 %v1699, %v1699
          %v2212 = vmul.f32 %v1700, %v1700
          %v2213 = vmul.f32 %v1701, %v1701
          %v2214 = vmul.f32 %v1702, %v1702
          %v2215 = vmul.f32 %v1703, %v1703
          %v2216 = vmul.f32 %v1704, %v1704
          %v2217 = vmul.f32 %v1705, %v1705
          %v2218 = vmul.f32 %v1706, %v1706
          %v2219 = vmul.f32 %v1707, %v1707
          %v2220 = vmul.f32 %v1708, %v1708
          %v2221 = vmul.f32 %v1709, %v1709
          %v2222 = vmul.f32 %v1710, %v1710
          %v2223 = vmul.f32 %v1711, %v1711
          %v2224 = vmul.f32 %v1712, %v1712
          %v2225 = vmul.f32 %v1713, %v1713
          %v2226 = vmul.f32 %v1714, %v1714
          %v2227 = vmul.f32 %v1715, %v1715
          %v2228 = vmul.f32 %v1716, %v1716
          %v2229 = vmul.f32 %v1717, %v1717
          %v2230 = vmul.f32 %v1718, %v1718
          %v2231 = vmul.f32 %v1719, %v1719
          %v2232 = vmul.f32 %v1720, %v1720
          %v2233 = vmul.f32 %v1721, %v1721
          %v2234 = vmul.f32 %v1722, %v1722
          %v2235 = vmul.f32 %v1723, %v1723
          %v2236 = vmul.f32 %v1724, %v1724
          %v2237 = vmul.f32 %v1725, %v1725
          %v2238 = vmul.f32 %v1726, %v1726
          %v2239 = vmul.f32 %v1727, %v1727
          %v2240 = vmul.f32 %v1728, %v1728
          %v2241 = vmul.f32 %v1729, %v1729
          %v2242 = vmul.f32 %v1730, %v1730
          %v2243 = vmul.f32 %v1731, %v1731
          %v2244 = vmul.f32 %v1732, %v1732
          %v2245 = vmul.f32 %v1733, %v1733
          %v2246 = vmul.f32 %v1734, %v1734
          %v2247 = vmul.f32 %v1735, %v1735
          %v2248 = vmul.f32 %v1736, %v1736
          %v2249 = vmul.f32 %v1737, %v1737
          %v2250 = vmul.f32 %v1738, %v1738
          %v2251 = vmul.f32 %v1739, %v1739
          %v2252 = vmul.f32 %v1740, %v1740
          %v2253 = vmul.f32 %v1741, %v1741
          %v2254 = vmul.f32 %v1742, %v1742
          %v2255 = vmul.f32 %v1743, %v1743
          %v2256 = vmul.f32 %v1744, %v1744
          %v2257 = vmul.f32 %v1745, %v1745
          %v2258 = vmul.f32 %v1746, %v1746
          %v2259 = vmul.f32 %v1747, %v1747
          %v2260 = vmul.f32 %v1748, %v1748
          %v2261 = vmul.f32 %v1749, %v1749
          %v2262 = vmul.f32 %v1750, %v1750
          %v2263 = vmul.f32 %v1751, %v1751
          %v2264 = vmul.f32 %v1752, %v1752
          %v2265 = vmul.f32 %v1753, %v1753
          %v2266 = vmul.f32 %v1754, %v1754
          %v2267 = vmul.f32 %v1755, %v1755
          %v2268 = vmul.f32 %v1756, %v1756
          %v2269 = vmul.f32 %v1757, %v1757
          %v2270 = vmul.f32 %v1758, %v1758
          %v2271 = vmul.f32 %v1759, %v1759
          %v2272 = vmul.f32 %v1760, %v1760
          %v2273 = vmul.f32 %v1761, %v1761
          %v2274 = vmul.f32 %v1762, %v1762
          %v2275 = vmul.f32 %v1763, %v1763
          %v2276 = vmul.f32 %v1764, %v1764
          %v2277 = vmul.f32 %v1765, %v1765
          %v2278 = vmul.f32 %v1766, %v1766
          %v2279 = vmul.f32 %v1767, %v1767
          %v2280 = vmul.f32 %v1768, %v1768
          %v2281 = vmul.f32 %v1769, %v1769
          %v2282 = vmul.f32 %v1770, %v1770
          %v2283 = vmul.f32 %v1771, %v1771
          %v2284 = vmul.f32 %v1772, %v1772
          %v2285 = vmul.f32 %v1773, %v1773
          %v2286 = vmul.f32 %v1774, %v1774
          %v2287 = vmul.f32 %v1775, %v1775
          %v2288 = vmul.f32 %v1776, %v1776
          %v2289 = vmul.f32 %v1777, %v1777
          %v2290 = vmul.f32 %v1778, %v1778
          %v2291 = vmul.f32 %v1779, %v1779
          %v2292 = vmul.f32 %v1780, %v1780
          %v2293 = vmul.f32 %v1781, %v1781
          %v2294 = vmul.f32 %v1782, %v1782
          %v2295 = vmul.f32 %v1783, %v1783
          %v2296 = vmul.f32 %v1784, %v1784
          %v2297 = vmul.f32 %v1785, %v1785
          %v2298 = vmul.f32 %v1786, %v1786
          %v2299 = vmul.f32 %v1787, %v1787
          %v2300 = vmul.f32 %v1788, %v1788
          %v2301 = vmul.f32 %v1789, %v1789
          %v2302 = vmul.f32 %v1790, %v1790
          %v2303 = vadd.f32 %v1791, %v1792
          %v2304 = vadd.f32 %v2303, %v1793
          %v2305 = vadd.f32 %v2304, %v1794
          %v2306 = vadd.f32 %v2305, %v1795
          %v2307 = vadd.f32 %v2306, %v1796
          %v2308 = vadd.f32 %v2307, %v1797
          %v2309 = vadd.f32 %v2308, %v1798
          %v2310 = vadd.f32 %v2309, %v1799
          %v2311 = vadd.f32 %v2310, %v1800
          %v2312 = vadd.f32 %v2311, %v1801
          %v2313 = vadd.f32 %v2312, %v1802
          %v2314 = vadd.f32 %v2313, %v1803
          %v2315 = vadd.f32 %v2314, %v1804
          %v2316 = vadd.f32 %v2315, %v1805
          %v2317 = vadd.f32 %v2316, %v1806
          %v2318 = vadd.f32 %v2317, %v1807
          %v2319 = vadd.f32 %v2318, %v1808
          %v2320 = vadd.f32 %v2319, %v1809
          %v2321 = vadd.f32 %v2320, %v1810
          %v2322 = vadd.f32 %v2321, %v1811
          %v2323 = vadd.f32 %v2322, %v1812
          %v2324 = vadd.f32 %v2323, %v1813
          %v2325 = vadd.f32 %v2324, %v1814
          %v2326 = vadd.f32 %v2325, %v1815
          %v2327 = vadd.f32 %v2326, %v1816
          %v2328 = vadd.f32 %v2327, %v1817
          %v2329 = vadd.f32 %v2328, %v1818
          %v2330 = vadd.f32 %v2329, %v1819
          %v2331 = vadd.f32 %v2330, %v1820
          %v2332 = vadd.f32 %v2331, %v1821
          %v2333 = vadd.f32 %v2332, %v1822
          %v2334 = vadd.f32 %v2333, %v1823
          %v2335 = vadd.f32 %v2334, %v1824
          %v2336 = vadd.f32 %v2335, %v1825
          %v2337 = vadd.f32 %v2336, %v1826
          %v2338 = vadd.f32 %v2337, %v1827
          %v2339 = vadd.f32 %v2338, %v1828
          %v2340 = vadd.f32 %v2339, %v1829
          %v2341 = vadd.f32 %v2340, %v1830
          %v2342 = vadd.f32 %v2341, %v1831
          %v2343 = vadd.f32 %v2342, %v1832
          %v2344 = vadd.f32 %v2343, %v1833
          %v2345 = vadd.f32 %v2344, %v1834
          %v2346 = vadd.f32 %v2345, %v1835
          %v2347 = vadd.f32 %v2346, %v1836
          %v2348 = vadd.f32 %v2347, %v1837
          %v2349 = vadd.f32 %v2348, %v1838
          %v2350 = vadd.f32 %v2349, %v1839
          %v2351 = vadd.f32 %v2350, %v1840
          %v2352 = vadd.f32 %v2351, %v1841
          %v2353 = vadd.f32 %v2352, %v1842
          %v2354 = vadd.f32 %v2353, %v1843
          %v2355 = vadd.f32 %v2354, %v1844
          %v2356 = vadd.f32 %v2355, %v1845
          %v2357 = vadd.f32 %v2356, %v1846
          %v2358 = vadd.f32 %v2357, %v1847
          %v2359 = vadd.f32 %v2358, %v1848
          %v2360 = vadd.f32 %v2359, %v1849
          %v2361 = vadd.f32 %v2360, %v1850
          %v2362 = vadd.f32 %v2361, %v1851
          %v2363 = vadd.f32 %v2362, %v1852
          %v2364 = vadd.f32 %v2363, %v1853
          %v2365 = vadd.f32 %v2364, %v1854
          %v2366 = vadd.f32 %v2365, %v1855
          %v2367 = vadd.f32 %v2366, %v1856
          %v2368 = vadd.f32 %v2367, %v1857
          %v2369 = vadd.f32 %v2368, %v1858
          %v2370 = vadd.f32 %v2369, %v1859
          %v2371 = vadd.f32 %v2370, %v1860
          %v2372 = vadd.f32 %v2371, %v1861
          %v2373 = vadd.f32 %v2372, %v1862
          %v2374 = vadd.f32 %v2373, %v1863
          %v2375 = vadd.f32 %v2374, %v1864
          %v2376 = vadd.f32 %v2375, %v1865
          %v2377 = vadd.f32 %v2376, %v1866
          %v2378 = vadd.f32 %v2377, %v1867
          %v2379 = vadd.f32 %v2378, %v1868
          %v2380 = vadd.f32 %v2379, %v1869
          %v2381 = vadd.f32 %v2380, %v1870
          %v2382 = vadd.f32 %v2381, %v1871
          %v2383 = vadd.f32 %v2382, %v1872
          %v2384 = vadd.f32 %v2383, %v1873
          %v2385 = vadd.f32 %v2384, %v1874
          %v2386 = vadd.f32 %v2385, %v1875
          %v2387 = vadd.f32 %v2386, %v1876
          %v2388 = vadd.f32 %v2387, %v1877
          %v2389 = vadd.f32 %v2388, %v1878
          %v2390 = vadd.f32 %v2389, %v1879
          %v2391 = vadd.f32 %v2390, %v1880
          %v2392 = vadd.f32 %v2391, %v1881
          %v2393 = vadd.f32 %v2392, %v1882
          %v2394 = vadd.f32 %v2393, %v1883
          %v2395 = vadd.f32 %v2394, %v1884
          %v2396 = vadd.f32 %v2395, %v1885
          %v2397 = vadd.f32 %v2396, %v1886
          %v2398 = vadd.f32 %v2397, %v1887
          %v2399 = vadd.f32 %v2398, %v1888
          %v2400 = vadd.f32 %v2399, %v1889
          %v2401 = vadd.f32 %v2400, %v1890
          %v2402 = vadd.f32 %v2401, %v1891
          %v2403 = vadd.f32 %v2402, %v1892
          %v2404 = vadd.f32 %v2403, %v1893
          %v2405 = vadd.f32 %v2404, %v1894
          %v2406 = vadd.f32 %v2405, %v1895
          %v2407 = vadd.f32 %v2406, %v1896
          %v2408 = vadd.f32 %v2407, %v1897
          %v2409 = vadd.f32 %v2408, %v1898
          %v2410 = vadd.f32 %v2409, %v1899
          %v2411 = vadd.f32 %v2410, %v1900
          %v2412 = vadd.f32 %v2411, %v1901
          %v2413 = vadd.f32 %v2412, %v1902
          %v2414 = vadd.f32 %v2413, %v1903
          %v2415 = vadd.f32 %v2414, %v1904
          %v2416 = vadd.f32 %v2415, %v1905
          %v2417 = vadd.f32 %v2416, %v1906
          %v2418 = vadd.f32 %v2417, %v1907
          %v2419 = vadd.f32 %v2418, %v1908
          %v2420 = vadd.f32 %v2419, %v1909
          %v2421 = vadd.f32 %v2420, %v1910
          %v2422 = vadd.f32 %v2421, %v1911
          %v2423 = vadd.f32 %v2422, %v1912
          %v2424 = vadd.f32 %v2423, %v1913
          %v2425 = vadd.f32 %v2424, %v1914
          %v2426 = vadd.f32 %v2425, %v1915
          %v2427 = vadd.f32 %v2426, %v1916
          %v2428 = vadd.f32 %v2427, %v1917
          %v2429 = vadd.f32 %v2428, %v1918
          %v2430 = vadd.f32 %v2429, %v1919
          %v2431 = vadd.f32 %v2430, %v1920
          %v2432 = vadd.f32 %v2431, %v1921
          %v2433 = vadd.f32 %v2432, %v1922
          %v2434 = vadd.f32 %v2433, %v1923
          %v2435 = vadd.f32 %v2434, %v1924
          %v2436 = vadd.f32 %v2435, %v1925
          %v2437 = vadd.f32 %v2436, %v1926
          %v2438 = vadd.f32 %v2437, %v1927
          %v2439 = vadd.f32 %v2438, %v1928
          %v2440 = vadd.f32 %v2439, %v1929
          %v2441 = vadd.f32 %v2440, %v1930
          %v2442 = vadd.f32 %v2441, %v1931
          %v2443 = vadd.f32 %v2442, %v1932
          %v2444 = vadd.f32 %v2443, %v1933
          %v2445 = vadd.f32 %v2444, %v1934
          %v2446 = vadd.f32 %v2445, %v1935
          %v2447 = vadd.f32 %v2446, %v1936
          %v2448 = vadd.f32 %v2447, %v1937
          %v2449 = vadd.f32 %v2448, %v1938
          %v2450 = vadd.f32 %v2449, %v1939
          %v2451 = vadd.f32 %v2450, %v1940
          %v2452 = vadd.f32 %v2451, %v1941
          %v2453 = vadd.f32 %v2452, %v1942
          %v2454 = vadd.f32 %v2453, %v1943
          %v2455 = vadd.f32 %v2454, %v1944
          %v2456 = vadd.f32 %v2455, %v1945
          %v2457 = vadd.f32 %v2456, %v1946
          %v2458 = vadd.f32 %v2457, %v1947
          %v2459 = vadd.f32 %v2458, %v1948
          %v2460 = vadd.f32 %v2459, %v1949
          %v2461 = vadd.f32 %v2460, %v1950
          %v2462 = vadd.f32 %v2461, %v1951
          %v2463 = vadd.f32 %v2462, %v1952
          %v2464 = vadd.f32 %v2463, %v1953
          %v2465 = vadd.f32 %v2464, %v1954
          %v2466 = vadd.f32 %v2465, %v1955
          %v2467 = vadd.f32 %v2466, %v1956
          %v2468 = vadd.f32 %v2467, %v1957
          %v2469 = vadd.f32 %v2468, %v1958
          %v2470 = vadd.f32 %v2469, %v1959
          %v2471 = vadd.f32 %v2470, %v1960
          %v2472 = vadd.f32 %v2471, %v1961
          %v2473 = vadd.f32 %v2472, %v1962
          %v2474 = vadd.f32 %v2473, %v1963
          %v2475 = vadd.f32 %v2474, %v1964
          %v2476 = vadd.f32 %v2475, %v1965
          %v2477 = vadd.f32 %v2476, %v1966
          %v2478 = vadd.f32 %v2477, %v1967
          %v2479 = vadd.f32 %v2478, %v1968
          %v2480 = vadd.f32 %v2479, %v1969
          %v2481 = vadd.f32 %v2480, %v1970
          %v2482 = vadd.f32 %v2481, %v1971
          %v2483 = vadd.f32 %v2482, %v1972
          %v2484 = vadd.f32 %v2483, %v1973
          %v2485 = vadd.f32 %v2484, %v1974
          %v2486 = vadd.f32 %v2485, %v1975
          %v2487 = vadd.f32 %v2486, %v1976
          %v2488 = vadd.f32 %v2487, %v1977
          %v2489 = vadd.f32 %v2488, %v1978
          %v2490 = vadd.f32 %v2489, %v1979
          %v2491 = vadd.f32 %v2490, %v1980
          %v2492 = vadd.f32 %v2491, %v1981
          %v2493 = vadd.f32 %v2492, %v1982
          %v2494 = vadd.f32 %v2493, %v1983
          %v2495 = vadd.f32 %v2494, %v1984
          %v2496 = vadd.f32 %v2495, %v1985
          %v2497 = vadd.f32 %v2496, %v1986
          %v2498 = vadd.f32 %v2497, %v1987
          %v2499 = vadd.f32 %v2498, %v1988
          %v2500 = vadd.f32 %v2499, %v1989
          %v2501 = vadd.f32 %v2500, %v1990
          %v2502 = vadd.f32 %v2501, %v1991
          %v2503 = vadd.f32 %v2502, %v1992
          %v2504 = vadd.f32 %v2503, %v1993
          %v2505 = vadd.f32 %v2504, %v1994
          %v2506 = vadd.f32 %v2505, %v1995
          %v2507 = vadd.f32 %v2506, %v1996
          %v2508 = vadd.f32 %v2507, %v1997
          %v2509 = vadd.f32 %v2508, %v1998
          %v2510 = vadd.f32 %v2509, %v1999
          %v2511 = vadd.f32 %v2510, %v2000
          %v2512 = vadd.f32 %v2511, %v2001
          %v2513 = vadd.f32 %v2512, %v2002
          %v2514 = vadd.f32 %v2513, %v2003
          %v2515 = vadd.f32 %v2514, %v2004
          %v2516 = vadd.f32 %v2515, %v2005
          %v2517 = vadd.f32 %v2516, %v2006
          %v2518 = vadd.f32 %v2517, %v2007
          %v2519 = vadd.f32 %v2518, %v2008
          %v2520 = vadd.f32 %v2519, %v2009
          %v2521 = vadd.f32 %v2520, %v2010
          %v2522 = vadd.f32 %v2521, %v2011
          %v2523 = vadd.f32 %v2522, %v2012
          %v2524 = vadd.f32 %v2523, %v2013
          %v2525 = vadd.f32 %v2524, %v2014
          %v2526 = vadd.f32 %v2525, %v2015
          %v2527 = vadd.f32 %v2526, %v2016
          %v2528 = vadd.f32 %v2527, %v2017
          %v2529 = vadd.f32 %v2528, %v2018
          %v2530 = vadd.f32 %v2529, %v2019
          %v2531 = vadd.f32 %v2530, %v2020
          %v2532 = vadd.f32 %v2531, %v2021
          %v2533 = vadd.f32 %v2532, %v2022
          %v2534 = vadd.f32 %v2533, %v2023
          %v2535 = vadd.f32 %v2534, %v2024
          %v2536 = vadd.f32 %v2535, %v2025
          %v2537 = vadd.f32 %v2536, %v2026
          %v2538 = vadd.f32 %v2537, %v2027
          %v2539 = vadd.f32 %v2538, %v2028
          %v2540 = vadd.f32 %v2539, %v2029
          %v2541 = vadd.f32 %v2540, %v2030
          %v2542 = vadd.f32 %v2541, %v2031
          %v2543 = vadd.f32 %v2542, %v2032
          %v2544 = vadd.f32 %v2543, %v2033
          %v2545 = vadd.f32 %v2544, %v2034
          %v2546 = vadd.f32 %v2545, %v2035
          %v2547 = vadd.f32 %v2546, %v2036
          %v2548 = vadd.f32 %v2547, %v2037
          %v2549 = vadd.f32 %v2548, %v2038
          %v2550 = vadd.f32 %v2549, %v2039
          %v2551 = vadd.f32 %v2550, %v2040
          %v2552 = vadd.f32 %v2551, %v2041
          %v2553 = vadd.f32 %v2552, %v2042
          %v2554 = vadd.f32 %v2553, %v2043
          %v2555 = vadd.f32 %v2554, %v2044
          %v2556 = vadd.f32 %v2555, %v2045
          %v2557 = vadd.f32 %v2556, %v2046
          %v2558 = vadd.f32 %v2557, %v2047
          %v2559 = vadd.f32 %v2558, %v2048
          %v2560 = vadd.f32 %v2559, %v2049
          %v2561 = vadd.f32 %v2560, %v2050
          %v2562 = vadd.f32 %v2561, %v2051
          %v2563 = vadd.f32 %v2562, %v2052
          %v2564 = vadd.f32 %v2563, %v2053
          %v2565 = vadd.f32 %v2564, %v2054
          %v2566 = vadd.f32 %v2565, %v2055
          %v2567 = vadd.f32 %v2566, %v2056
          %v2568 = vadd.f32 %v2567, %v2057
          %v2569 = vadd.f32 %v2568, %v2058
          %v2570 = vadd.f32 %v2569, %v2059
          %v2571 = vadd.f32 %v2570, %v2060
          %v2572 = vadd.f32 %v2571, %v2061
          %v2573 = vadd.f32 %v2572, %v2062
          %v2574 = vadd.f32 %v2573, %v2063
          %v2575 = vadd.f32 %v2574, %v2064
          %v2576 = vadd.f32 %v2575, %v2065
          %v2577 = vadd.f32 %v2576, %v2066
          %v2578 = vadd.f32 %v2577, %v2067
          %v2579 = vadd.f32 %v2578, %v2068
          %v2580 = vadd.f32 %v2579, %v2069
          %v2581 = vadd.f32 %v2580, %v2070
          %v2582 = vadd.f32 %v2581, %v2071
          %v2583 = vadd.f32 %v2582, %v2072
          %v2584 = vadd.f32 %v2583, %v2073
          %v2585 = vadd.f32 %v2584, %v2074
          %v2586 = vadd.f32 %v2585, %v2075
          %v2587 = vadd.f32 %v2586, %v2076
          %v2588 = vadd.f32 %v2587, %v2077
          %v2589 = vadd.f32 %v2588, %v2078
          %v2590 = vadd.f32 %v2589, %v2079
          %v2591 = vadd.f32 %v2590, %v2080
          %v2592 = vadd.f32 %v2591, %v2081
          %v2593 = vadd.f32 %v2592, %v2082
          %v2594 = vadd.f32 %v2593, %v2083
          %v2595 = vadd.f32 %v2594, %v2084
          %v2596 = vadd.f32 %v2595, %v2085
          %v2597 = vadd.f32 %v2596, %v2086
          %v2598 = vadd.f32 %v2597, %v2087
          %v2599 = vadd.f32 %v2598, %v2088
          %v2600 = vadd.f32 %v2599, %v2089
          %v2601 = vadd.f32 %v2600, %v2090
          %v2602 = vadd.f32 %v2601, %v2091
          %v2603 = vadd.f32 %v2602, %v2092
          %v2604 = vadd.f32 %v2603, %v2093
          %v2605 = vadd.f32 %v2604, %v2094
          %v2606 = vadd.f32 %v2605, %v2095
          %v2607 = vadd.f32 %v2606, %v2096
          %v2608 = vadd.f32 %v2607, %v2097
          %v2609 = vadd.f32 %v2608, %v2098
          %v2610 = vadd.f32 %v2609, %v2099
          %v2611 = vadd.f32 %v2610, %v2100
          %v2612 = vadd.f32 %v2611, %v2101
          %v2613 = vadd.f32 %v2612, %v2102
          %v2614 = vadd.f32 %v2613, %v2103
          %v2615 = vadd.f32 %v2614, %v2104
          %v2616 = vadd.f32 %v2615, %v2105
          %v2617 = vadd.f32 %v2616, %v2106
          %v2618 = vadd.f32 %v2617, %v2107
          %v2619 = vadd.f32 %v2618, %v2108
          %v2620 = vadd.f32 %v2619, %v2109
          %v2621 = vadd.f32 %v2620, %v2110
          %v2622 = vadd.f32 %v2621, %v2111
          %v2623 = vadd.f32 %v2622, %v2112
          %v2624 = vadd.f32 %v2623, %v2113
          %v2625 = vadd.f32 %v2624, %v2114
          %v2626 = vadd.f32 %v2625, %v2115
          %v2627 = vadd.f32 %v2626, %v2116
          %v2628 = vadd.f32 %v2627, %v2117
          %v2629 = vadd.f32 %v2628, %v2118
          %v2630 = vadd.f32 %v2629, %v2119
          %v2631 = vadd.f32 %v2630, %v2120
          %v2632 = vadd.f32 %v2631, %v2121
          %v2633 = vadd.f32 %v2632, %v2122
          %v2634 = vadd.f32 %v2633, %v2123
          %v2635 = vadd.f32 %v2634, %v2124
          %v2636 = vadd.f32 %v2635, %v2125
          %v2637 = vadd.f32 %v2636, %v2126
          %v2638 = vadd.f32 %v2637, %v2127
          %v2639 = vadd.f32 %v2638, %v2128
          %v2640 = vadd.f32 %v2639, %v2129
          %v2641 = vadd.f32 %v2640, %v2130
          %v2642 = vadd.f32 %v2641, %v2131
          %v2643 = vadd.f32 %v2642, %v2132
          %v2644 = vadd.f32 %v2643, %v2133
          %v2645 = vadd.f32 %v2644, %v2134
          %v2646 = vadd.f32 %v2645, %v2135
          %v2647 = vadd.f32 %v2646, %v2136
          %v2648 = vadd.f32 %v2647, %v2137
          %v2649 = vadd.f32 %v2648, %v2138
          %v2650 = vadd.f32 %v2649, %v2139
          %v2651 = vadd.f32 %v2650, %v2140
          %v2652 = vadd.f32 %v2651, %v2141
          %v2653 = vadd.f32 %v2652, %v2142
          %v2654 = vadd.f32 %v2653, %v2143
          %v2655 = vadd.f32 %v2654, %v2144
          %v2656 = vadd.f32 %v2655, %v2145
          %v2657 = vadd.f32 %v2656, %v2146
          %v2658 = vadd.f32 %v2657, %v2147
          %v2659 = vadd.f32 %v2658, %v2148
          %v2660 = vadd.f32 %v2659, %v2149
          %v2661 = vadd.f32 %v2660, %v2150
          %v2662 = vadd.f32 %v2661, %v2151
          %v2663 = vadd.f32 %v2662, %v2152
          %v2664 = vadd.f32 %v2663, %v2153
          %v2665 = vadd.f32 %v2664, %v2154
          %v2666 = vadd.f32 %v2665, %v2155
          %v2667 = vadd.f32 %v2666, %v2156
          %v2668 = vadd.f32 %v2667, %v2157
          %v2669 = vadd.f32 %v2668, %v2158
          %v2670 = vadd.f32 %v2669, %v2159
          %v2671 = vadd.f32 %v2670, %v2160
          %v2672 = vadd.f32 %v2671, %v2161
          %v2673 = vadd.f32 %v2672, %v2162
          %v2674 = vadd.f32 %v2673, %v2163
          %v2675 = vadd.f32 %v2674, %v2164
          %v2676 = vadd.f32 %v2675, %v2165
          %v2677 = vadd.f32 %v2676, %v2166
          %v2678 = vadd.f32 %v2677, %v2167
          %v2679 = vadd.f32 %v2678, %v2168
          %v2680 = vadd.f32 %v2679, %v2169
          %v2681 = vadd.f32 %v2680, %v2170
          %v2682 = vadd.f32 %v2681, %v2171
          %v2683 = vadd.f32 %v2682, %v2172
          %v2684 = vadd.f32 %v2683, %v2173
          %v2685 = vadd.f32 %v2684, %v2174
          %v2686 = vadd.f32 %v2685, %v2175
          %v2687 = vadd.f32 %v2686, %v2176
          %v2688 = vadd.f32 %v2687, %v2177
          %v2689 = vadd.f32 %v2688, %v2178
          %v2690 = vadd.f32 %v2689, %v2179
          %v2691 = vadd.f32 %v2690, %v2180
          %v2692 = vadd.f32 %v2691, %v2181
          %v2693 = vadd.f32 %v2692, %v2182
          %v2694 = vadd.f32 %v2693, %v2183
          %v2695 = vadd.f32 %v2694, %v2184
          %v2696 = vadd.f32 %v2695, %v2185
          %v2697 = vadd.f32 %v2696, %v2186
          %v2698 = vadd.f32 %v2697, %v2187
          %v2699 = vadd.f32 %v2698, %v2188
          %v2700 = vadd.f32 %v2699, %v2189
          %v2701 = vadd.f32 %v2700, %v2190
          %v2702 = vadd.f32 %v2701, %v2191
          %v2703 = vadd.f32 %v2702, %v2192
          %v2704 = vadd.f32 %v2703, %v2193
          %v2705 = vadd.f32 %v2704, %v2194
          %v2706 = vadd.f32 %v2705, %v2195
          %v2707 = vadd.f32 %v2706, %v2196
          %v2708 = vadd.f32 %v2707, %v2197
          %v2709 = vadd.f32 %v2708, %v2198
          %v2710 = vadd.f32 %v2709, %v2199
          %v2711 = vadd.f32 %v2710, %v2200
          %v2712 = vadd.f32 %v2711, %v2201
          %v2713 = vadd.f32 %v2712, %v2202
          %v2714 = vadd.f32 %v2713, %v2203
          %v2715 = vadd.f32 %v2714, %v2204
          %v2716 = vadd.f32 %v2715, %v2205
          %v2717 = vadd.f32 %v2716, %v2206
          %v2718 = vadd.f32 %v2717, %v2207
          %v2719 = vadd.f32 %v2718, %v2208
          %v2720 = vadd.f32 %v2719, %v2209
          %v2721 = vadd.f32 %v2720, %v2210
          %v2722 = vadd.f32 %v2721, %v2211
          %v2723 = vadd.f32 %v2722, %v2212
          %v2724 = vadd.f32 %v2723, %v2213
          %v2725 = vadd.f32 %v2724, %v2214
          %v2726 = vadd.f32 %v2725, %v2215
          %v2727 = vadd.f32 %v2726, %v2216
          %v2728 = vadd.f32 %v2727, %v2217
          %v2729 = vadd.f32 %v2728, %v2218
          %v2730 = vadd.f32 %v2729, %v2219
          %v2731 = vadd.f32 %v2730, %v2220
          %v2732 = vadd.f32 %v2731, %v2221
          %v2733 = vadd.f32 %v2732, %v2222
          %v2734 = vadd.f32 %v2733, %v2223
          %v2735 = vadd.f32 %v2734, %v2224
          %v2736 = vadd.f32 %v2735, %v2225
          %v2737 = vadd.f32 %v2736, %v2226
          %v2738 = vadd.f32 %v2737, %v2227
          %v2739 = vadd.f32 %v2738, %v2228
          %v2740 = vadd.f32 %v2739, %v2229
          %v2741 = vadd.f32 %v2740, %v2230
          %v2742 = vadd.f32 %v2741, %v2231
          %v2743 = vadd.f32 %v2742, %v2232
          %v2744 = vadd.f32 %v2743, %v2233
          %v2745 = vadd.f32 %v2744, %v2234
          %v2746 = vadd.f32 %v2745, %v2235
          %v2747 = vadd.f32 %v2746, %v2236
          %v2748 = vadd.f32 %v2747, %v2237
          %v2749 = vadd.f32 %v2748, %v2238
          %v2750 = vadd.f32 %v2749, %v2239
          %v2751 = vadd.f32 %v2750, %v2240
          %v2752 = vadd.f32 %v2751, %v2241
          %v2753 = vadd.f32 %v2752, %v2242
          %v2754 = vadd.f32 %v2753, %v2243
          %v2755 = vadd.f32 %v2754, %v2244
          %v2756 = vadd.f32 %v2755, %v2245
          %v2757 = vadd.f32 %v2756, %v2246
          %v2758 = vadd.f32 %v2757, %v2247
          %v2759 = vadd.f32 %v2758, %v2248
          %v2760 = vadd.f32 %v2759, %v2249
          %v2761 = vadd.f32 %v2760, %v2250
          %v2762 = vadd.f32 %v2761, %v2251
          %v2763 = vadd.f32 %v2762, %v2252
          %v2764 = vadd.f32 %v2763, %v2253
          %v2765 = vadd.f32 %v2764, %v2254
          %v2766 = vadd.f32 %v2765, %v2255
          %v2767 = vadd.f32 %v2766, %v2256
          %v2768 = vadd.f32 %v2767, %v2257
          %v2769 = vadd.f32 %v2768, %v2258
          %v2770 = vadd.f32 %v2769, %v2259
          %v2771 = vadd.f32 %v2770, %v2260
          %v2772 = vadd.f32 %v2771, %v2261
          %v2773 = vadd.f32 %v2772, %v2262
          %v2774 = vadd.f32 %v2773, %v2263
          %v2775 = vadd.f32 %v2774, %v2264
          %v2776 = vadd.f32 %v2775, %v2265
          %v2777 = vadd.f32 %v2776, %v2266
          %v2778 = vadd.f32 %v2777, %v2267
          %v2779 = vadd.f32 %v2778, %v2268
          %v2780 = vadd.f32 %v2779, %v2269
          %v2781 = vadd.f32 %v2780, %v2270
          %v2782 = vadd.f32 %v2781, %v2271
          %v2783 = vadd.f32 %v2782, %v2272
          %v2784 = vadd.f32 %v2783, %v2273
          %v2785 = vadd.f32 %v2784, %v2274
          %v2786 = vadd.f32 %v2785, %v2275
          %v2787 = vadd.f32 %v2786, %v2276
          %v2788 = vadd.f32 %v2787, %v2277
          %v2789 = vadd.f32 %v2788, %v2278
          %v2790 = vadd.f32 %v2789, %v2279
          %v2791 = vadd.f32 %v2790, %v2280
          %v2792 = vadd.f32 %v2791, %v2281
          %v2793 = vadd.f32 %v2792, %v2282
          %v2794 = vadd.f32 %v2793, %v2283
          %v2795 = vadd.f32 %v2794, %v2284
          %v2796 = vadd.f32 %v2795, %v2285
          %v2797 = vadd.f32 %v2796, %v2286
          %v2798 = vadd.f32 %v2797, %v2287
          %v2799 = vadd.f32 %v2798, %v2288
          %v2800 = vadd.f32 %v2799, %v2289
          %v2801 = vadd.f32 %v2800, %v2290
          %v2802 = vadd.f32 %v2801, %v2291
          %v2803 = vadd.f32 %v2802, %v2292
          %v2804 = vadd.f32 %v2803, %v2293
          %v2805 = vadd.f32 %v2804, %v2294
          %v2806 = vadd.f32 %v2805, %v2295
          %v2807 = vadd.f32 %v2806, %v2296
          %v2808 = vadd.f32 %v2807, %v2297
          %v2809 = vadd.f32 %v2808, %v2298
          %v2810 = vadd.f32 %v2809, %v2299
          %v2811 = vadd.f32 %v2810, %v2300
          %v2812 = vadd.f32 %v2811, %v2301
          %v2813 = vadd.f32 %v2812, %v2302
          %v2814 = vadd.f32 %v254, %v2813
          %2815 = vst [vmem:[#allocation7] sm:$0xff] %v2814
        $region44: #{tpu_custom_call.1} parent=27 // pred_fallthru
          _
        %p2816 = scmp.lt.s32.totalorder %s249, 524288
        // Predicated region
        $region45: #{tpu_custom_call.1} parent=27 // pred_check
          %p2817 = pneg %p2816
        $region46: #{tpu_custom_call.1} parent=27 // pred_check_branch
          %2819 = sbr.rel (%p2817) target = $region48
        $region47: #{tpu_custom_call.1} parent=27 // pred_region
          %v2820 = vld [vmem:[%s201] sm:$0xff]
          %v2821 = vld [vmem:[%s201 + $0x8] sm:$0xff]
          %v2822 = vld [vmem:[%s201 + $0x10] sm:$0xff]
          %v2823 = vld [vmem:[%s201 + $0x18] sm:$0xff]
          %v2824 = vld [vmem:[%s201 + $0x20] sm:$0xff]
          %v2825 = vld [vmem:[%s201 + $0x28] sm:$0xff]
          %v2826 = vld [vmem:[%s201 + $0x30] sm:$0xff]
          %v2827 = vld [vmem:[%s201 + $0x38] sm:$0xff]
          %v2828 = vld [vmem:[%s201 + $0x40] sm:$0xff]
          %v2829 = vld [vmem:[%s201 + $0x48] sm:$0xff]
          %v2830 = vld [vmem:[%s201 + $0x50] sm:$0xff]
          %v2831 = vld [vmem:[%s201 + $0x58] sm:$0xff]
          %v2832 = vld [vmem:[%s201 + $0x60] sm:$0xff]
          %v2833 = vld [vmem:[%s201 + $0x68] sm:$0xff]
          %v2834 = vld [vmem:[%s201 + $0x70] sm:$0xff]
          %v2835 = vld [vmem:[%s201 + $0x78] sm:$0xff]
          %v2836 = vld [vmem:[%s201 + $0x80] sm:$0xff]
          %v2837 = vld [vmem:[%s201 + $0x88] sm:$0xff]
          %v2838 = vld [vmem:[%s201 + $0x90] sm:$0xff]
          %v2839 = vld [vmem:[%s201 + $0x98] sm:$0xff]
          %v2840 = vld [vmem:[%s201 + $0xa0] sm:$0xff]
          %v2841 = vld [vmem:[%s201 + $0xa8] sm:$0xff]
          %v2842 = vld [vmem:[%s201 + $0xb0] sm:$0xff]
          %v2843 = vld [vmem:[%s201 + $0xb8] sm:$0xff]
          %v2844 = vld [vmem:[%s201 + $0xc0] sm:$0xff]
          %v2845 = vld [vmem:[%s201 + $0xc8] sm:$0xff]
          %v2846 = vld [vmem:[%s201 + $0xd0] sm:$0xff]
          %v2847 = vld [vmem:[%s201 + $0xd8] sm:$0xff]
          %v2848 = vld [vmem:[%s201 + $0xe0] sm:$0xff]
          %v2849 = vld [vmem:[%s201 + $0xe8] sm:$0xff]
          %v2850 = vld [vmem:[%s201 + $0xf0] sm:$0xff]
          %v2851 = vld [vmem:[%s201 + $0xf8] sm:$0xff]
          %v2852 = vld [vmem:[%s201 + $0x100] sm:$0xff]
          %v2853 = vld [vmem:[%s201 + $0x108] sm:$0xff]
          %v2854 = vld [vmem:[%s201 + $0x110] sm:$0xff]
          %v2855 = vld [vmem:[%s201 + $0x118] sm:$0xff]
          %v2856 = vld [vmem:[%s201 + $0x120] sm:$0xff]
          %v2857 = vld [vmem:[%s201 + $0x128] sm:$0xff]
          %v2858 = vld [vmem:[%s201 + $0x130] sm:$0xff]
          %v2859 = vld [vmem:[%s201 + $0x138] sm:$0xff]
          %v2860 = vld [vmem:[%s201 + $0x140] sm:$0xff]
          %v2861 = vld [vmem:[%s201 + $0x148] sm:$0xff]
          %v2862 = vld [vmem:[%s201 + $0x150] sm:$0xff]
          %v2863 = vld [vmem:[%s201 + $0x158] sm:$0xff]
          %v2864 = vld [vmem:[%s201 + $0x160] sm:$0xff]
          %v2865 = vld [vmem:[%s201 + $0x168] sm:$0xff]
          %v2866 = vld [vmem:[%s201 + $0x170] sm:$0xff]
          %v2867 = vld [vmem:[%s201 + $0x178] sm:$0xff]
          %v2868 = vld [vmem:[%s201 + $0x180] sm:$0xff]
          %v2869 = vld [vmem:[%s201 + $0x188] sm:$0xff]
          %v2870 = vld [vmem:[%s201 + $0x190] sm:$0xff]
          %v2871 = vld [vmem:[%s201 + $0x198] sm:$0xff]
          %v2872 = vld [vmem:[%s201 + $0x1a0] sm:$0xff]
          %v2873 = vld [vmem:[%s201 + $0x1a8] sm:$0xff]
          %v2874 = vld [vmem:[%s201 + $0x1b0] sm:$0xff]
          %v2875 = vld [vmem:[%s201 + $0x1b8] sm:$0xff]
          %v2876 = vld [vmem:[%s201 + $0x1c0] sm:$0xff]
          %v2877 = vld [vmem:[%s201 + $0x1c8] sm:$0xff]
          %v2878 = vld [vmem:[%s201 + $0x1d0] sm:$0xff]
          %v2879 = vld [vmem:[%s201 + $0x1d8] sm:$0xff]
          %v2880 = vld [vmem:[%s201 + $0x1e0] sm:$0xff]
          %v2881 = vld [vmem:[%s201 + $0x1e8] sm:$0xff]
          %v2882 = vld [vmem:[%s201 + $0x1f0] sm:$0xff]
          %v2883 = vld [vmem:[%s201 + $0x1f8] sm:$0xff]
          %v2884 = vld [vmem:[%s201 + $0x200] sm:$0xff]
          %v2885 = vld [vmem:[%s201 + $0x208] sm:$0xff]
          %v2886 = vld [vmem:[%s201 + $0x210] sm:$0xff]
          %v2887 = vld [vmem:[%s201 + $0x218] sm:$0xff]
          %v2888 = vld [vmem:[%s201 + $0x220] sm:$0xff]
          %v2889 = vld [vmem:[%s201 + $0x228] sm:$0xff]
          %v2890 = vld [vmem:[%s201 + $0x230] sm:$0xff]
          %v2891 = vld [vmem:[%s201 + $0x238] sm:$0xff]
          %v2892 = vld [vmem:[%s201 + $0x240] sm:$0xff]
          %v2893 = vld [vmem:[%s201 + $0x248] sm:$0xff]
          %v2894 = vld [vmem:[%s201 + $0x250] sm:$0xff]
          %v2895 = vld [vmem:[%s201 + $0x258] sm:$0xff]
          %v2896 = vld [vmem:[%s201 + $0x260] sm:$0xff]
          %v2897 = vld [vmem:[%s201 + $0x268] sm:$0xff]
          %v2898 = vld [vmem:[%s201 + $0x270] sm:$0xff]
          %v2899 = vld [vmem:[%s201 + $0x278] sm:$0xff]
          %v2900 = vld [vmem:[%s201 + $0x280] sm:$0xff]
          %v2901 = vld [vmem:[%s201 + $0x288] sm:$0xff]
          %v2902 = vld [vmem:[%s201 + $0x290] sm:$0xff]
          %v2903 = vld [vmem:[%s201 + $0x298] sm:$0xff]
          %v2904 = vld [vmem:[%s201 + $0x2a0] sm:$0xff]
          %v2905 = vld [vmem:[%s201 + $0x2a8] sm:$0xff]
          %v2906 = vld [vmem:[%s201 + $0x2b0] sm:$0xff]
          %v2907 = vld [vmem:[%s201 + $0x2b8] sm:$0xff]
          %v2908 = vld [vmem:[%s201 + $0x2c0] sm:$0xff]
          %v2909 = vld [vmem:[%s201 + $0x2c8] sm:$0xff]
          %v2910 = vld [vmem:[%s201 + $0x2d0] sm:$0xff]
          %v2911 = vld [vmem:[%s201 + $0x2d8] sm:$0xff]
          %v2912 = vld [vmem:[%s201 + $0x2e0] sm:$0xff]
          %v2913 = vld [vmem:[%s201 + $0x2e8] sm:$0xff]
          %v2914 = vld [vmem:[%s201 + $0x2f0] sm:$0xff]
          %v2915 = vld [vmem:[%s201 + $0x2f8] sm:$0xff]
          %v2916 = vld [vmem:[%s201 + $0x300] sm:$0xff]
          %v2917 = vld [vmem:[%s201 + $0x308] sm:$0xff]
          %v2918 = vld [vmem:[%s201 + $0x310] sm:$0xff]
          %v2919 = vld [vmem:[%s201 + $0x318] sm:$0xff]
          %v2920 = vld [vmem:[%s201 + $0x320] sm:$0xff]
          %v2921 = vld [vmem:[%s201 + $0x328] sm:$0xff]
          %v2922 = vld [vmem:[%s201 + $0x330] sm:$0xff]
          %v2923 = vld [vmem:[%s201 + $0x338] sm:$0xff]
          %v2924 = vld [vmem:[%s201 + $0x340] sm:$0xff]
          %v2925 = vld [vmem:[%s201 + $0x348] sm:$0xff]
          %v2926 = vld [vmem:[%s201 + $0x350] sm:$0xff]
          %v2927 = vld [vmem:[%s201 + $0x358] sm:$0xff]
          %v2928 = vld [vmem:[%s201 + $0x360] sm:$0xff]
          %v2929 = vld [vmem:[%s201 + $0x368] sm:$0xff]
          %v2930 = vld [vmem:[%s201 + $0x370] sm:$0xff]
          %v2931 = vld [vmem:[%s201 + $0x378] sm:$0xff]
          %v2932 = vld [vmem:[%s201 + $0x380] sm:$0xff]
          %v2933 = vld [vmem:[%s201 + $0x388] sm:$0xff]
          %v2934 = vld [vmem:[%s201 + $0x390] sm:$0xff]
          %v2935 = vld [vmem:[%s201 + $0x398] sm:$0xff]
          %v2936 = vld [vmem:[%s201 + $0x3a0] sm:$0xff]
          %v2937 = vld [vmem:[%s201 + $0x3a8] sm:$0xff]
          %v2938 = vld [vmem:[%s201 + $0x3b0] sm:$0xff]
          %v2939 = vld [vmem:[%s201 + $0x3b8] sm:$0xff]
          %v2940 = vld [vmem:[%s201 + $0x3c0] sm:$0xff]
          %v2941 = vld [vmem:[%s201 + $0x3c8] sm:$0xff]
          %v2942 = vld [vmem:[%s201 + $0x3d0] sm:$0xff]
          %v2943 = vld [vmem:[%s201 + $0x3d8] sm:$0xff]
          %v2944 = vld [vmem:[%s201 + $0x3e0] sm:$0xff]
          %v2945 = vld [vmem:[%s201 + $0x3e8] sm:$0xff]
          %v2946 = vld [vmem:[%s201 + $0x3f0] sm:$0xff]
          %v2947 = vld [vmem:[%s201 + $0x3f8] sm:$0xff]
          %v2948 = vld [vmem:[%s201 + $0x400] sm:$0xff]
          %v2949 = vld [vmem:[%s201 + $0x408] sm:$0xff]
          %v2950 = vld [vmem:[%s201 + $0x410] sm:$0xff]
          %v2951 = vld [vmem:[%s201 + $0x418] sm:$0xff]
          %v2952 = vld [vmem:[%s201 + $0x420] sm:$0xff]
          %v2953 = vld [vmem:[%s201 + $0x428] sm:$0xff]
          %v2954 = vld [vmem:[%s201 + $0x430] sm:$0xff]
          %v2955 = vld [vmem:[%s201 + $0x438] sm:$0xff]
          %v2956 = vld [vmem:[%s201 + $0x440] sm:$0xff]
          %v2957 = vld [vmem:[%s201 + $0x448] sm:$0xff]
          %v2958 = vld [vmem:[%s201 + $0x450] sm:$0xff]
          %v2959 = vld [vmem:[%s201 + $0x458] sm:$0xff]
          %v2960 = vld [vmem:[%s201 + $0x460] sm:$0xff]
          %v2961 = vld [vmem:[%s201 + $0x468] sm:$0xff]
          %v2962 = vld [vmem:[%s201 + $0x470] sm:$0xff]
          %v2963 = vld [vmem:[%s201 + $0x478] sm:$0xff]
          %v2964 = vld [vmem:[%s201 + $0x480] sm:$0xff]
          %v2965 = vld [vmem:[%s201 + $0x488] sm:$0xff]
          %v2966 = vld [vmem:[%s201 + $0x490] sm:$0xff]
          %v2967 = vld [vmem:[%s201 + $0x498] sm:$0xff]
          %v2968 = vld [vmem:[%s201 + $0x4a0] sm:$0xff]
          %v2969 = vld [vmem:[%s201 + $0x4a8] sm:$0xff]
          %v2970 = vld [vmem:[%s201 + $0x4b0] sm:$0xff]
          %v2971 = vld [vmem:[%s201 + $0x4b8] sm:$0xff]
          %v2972 = vld [vmem:[%s201 + $0x4c0] sm:$0xff]
          %v2973 = vld [vmem:[%s201 + $0x4c8] sm:$0xff]
          %v2974 = vld [vmem:[%s201 + $0x4d0] sm:$0xff]
          %v2975 = vld [vmem:[%s201 + $0x4d8] sm:$0xff]
          %v2976 = vld [vmem:[%s201 + $0x4e0] sm:$0xff]
          %v2977 = vld [vmem:[%s201 + $0x4e8] sm:$0xff]
          %v2978 = vld [vmem:[%s201 + $0x4f0] sm:$0xff]
          %v2979 = vld [vmem:[%s201 + $0x4f8] sm:$0xff]
          %v2980 = vld [vmem:[%s201 + $0x500] sm:$0xff]
          %v2981 = vld [vmem:[%s201 + $0x508] sm:$0xff]
          %v2982 = vld [vmem:[%s201 + $0x510] sm:$0xff]
          %v2983 = vld [vmem:[%s201 + $0x518] sm:$0xff]
          %v2984 = vld [vmem:[%s201 + $0x520] sm:$0xff]
          %v2985 = vld [vmem:[%s201 + $0x528] sm:$0xff]
          %v2986 = vld [vmem:[%s201 + $0x530] sm:$0xff]
          %v2987 = vld [vmem:[%s201 + $0x538] sm:$0xff]
          %v2988 = vld [vmem:[%s201 + $0x540] sm:$0xff]
          %v2989 = vld [vmem:[%s201 + $0x548] sm:$0xff]
          %v2990 = vld [vmem:[%s201 + $0x550] sm:$0xff]
          %v2991 = vld [vmem:[%s201 + $0x558] sm:$0xff]
          %v2992 = vld [vmem:[%s201 + $0x560] sm:$0xff]
          %v2993 = vld [vmem:[%s201 + $0x568] sm:$0xff]
          %v2994 = vld [vmem:[%s201 + $0x570] sm:$0xff]
          %v2995 = vld [vmem:[%s201 + $0x578] sm:$0xff]
          %v2996 = vld [vmem:[%s201 + $0x580] sm:$0xff]
          %v2997 = vld [vmem:[%s201 + $0x588] sm:$0xff]
          %v2998 = vld [vmem:[%s201 + $0x590] sm:$0xff]
          %v2999 = vld [vmem:[%s201 + $0x598] sm:$0xff]
          %v3000 = vld [vmem:[%s201 + $0x5a0] sm:$0xff]
          %v3001 = vld [vmem:[%s201 + $0x5a8] sm:$0xff]
          %v3002 = vld [vmem:[%s201 + $0x5b0] sm:$0xff]
          %v3003 = vld [vmem:[%s201 + $0x5b8] sm:$0xff]
          %v3004 = vld [vmem:[%s201 + $0x5c0] sm:$0xff]
          %v3005 = vld [vmem:[%s201 + $0x5c8] sm:$0xff]
          %v3006 = vld [vmem:[%s201 + $0x5d0] sm:$0xff]
          %v3007 = vld [vmem:[%s201 + $0x5d8] sm:$0xff]
          %v3008 = vld [vmem:[%s201 + $0x5e0] sm:$0xff]
          %v3009 = vld [vmem:[%s201 + $0x5e8] sm:$0xff]
          %v3010 = vld [vmem:[%s201 + $0x5f0] sm:$0xff]
          %v3011 = vld [vmem:[%s201 + $0x5f8] sm:$0xff]
          %v3012 = vld [vmem:[%s201 + $0x600] sm:$0xff]
          %v3013 = vld [vmem:[%s201 + $0x608] sm:$0xff]
          %v3014 = vld [vmem:[%s201 + $0x610] sm:$0xff]
          %v3015 = vld [vmem:[%s201 + $0x618] sm:$0xff]
          %v3016 = vld [vmem:[%s201 + $0x620] sm:$0xff]
          %v3017 = vld [vmem:[%s201 + $0x628] sm:$0xff]
          %v3018 = vld [vmem:[%s201 + $0x630] sm:$0xff]
          %v3019 = vld [vmem:[%s201 + $0x638] sm:$0xff]
          %v3020 = vld [vmem:[%s201 + $0x640] sm:$0xff]
          %v3021 = vld [vmem:[%s201 + $0x648] sm:$0xff]
          %v3022 = vld [vmem:[%s201 + $0x650] sm:$0xff]
          %v3023 = vld [vmem:[%s201 + $0x658] sm:$0xff]
          %v3024 = vld [vmem:[%s201 + $0x660] sm:$0xff]
          %v3025 = vld [vmem:[%s201 + $0x668] sm:$0xff]
          %v3026 = vld [vmem:[%s201 + $0x670] sm:$0xff]
          %v3027 = vld [vmem:[%s201 + $0x678] sm:$0xff]
          %v3028 = vld [vmem:[%s201 + $0x680] sm:$0xff]
          %v3029 = vld [vmem:[%s201 + $0x688] sm:$0xff]
          %v3030 = vld [vmem:[%s201 + $0x690] sm:$0xff]
          %v3031 = vld [vmem:[%s201 + $0x698] sm:$0xff]
          %v3032 = vld [vmem:[%s201 + $0x6a0] sm:$0xff]
          %v3033 = vld [vmem:[%s201 + $0x6a8] sm:$0xff]
          %v3034 = vld [vmem:[%s201 + $0x6b0] sm:$0xff]
          %v3035 = vld [vmem:[%s201 + $0x6b8] sm:$0xff]
          %v3036 = vld [vmem:[%s201 + $0x6c0] sm:$0xff]
          %v3037 = vld [vmem:[%s201 + $0x6c8] sm:$0xff]
          %v3038 = vld [vmem:[%s201 + $0x6d0] sm:$0xff]
          %v3039 = vld [vmem:[%s201 + $0x6d8] sm:$0xff]
          %v3040 = vld [vmem:[%s201 + $0x6e0] sm:$0xff]
          %v3041 = vld [vmem:[%s201 + $0x6e8] sm:$0xff]
          %v3042 = vld [vmem:[%s201 + $0x6f0] sm:$0xff]
          %v3043 = vld [vmem:[%s201 + $0x6f8] sm:$0xff]
          %v3044 = vld [vmem:[%s201 + $0x700] sm:$0xff]
          %v3045 = vld [vmem:[%s201 + $0x708] sm:$0xff]
          %v3046 = vld [vmem:[%s201 + $0x710] sm:$0xff]
          %v3047 = vld [vmem:[%s201 + $0x718] sm:$0xff]
          %v3048 = vld [vmem:[%s201 + $0x720] sm:$0xff]
          %v3049 = vld [vmem:[%s201 + $0x728] sm:$0xff]
          %v3050 = vld [vmem:[%s201 + $0x730] sm:$0xff]
          %v3051 = vld [vmem:[%s201 + $0x738] sm:$0xff]
          %v3052 = vld [vmem:[%s201 + $0x740] sm:$0xff]
          %v3053 = vld [vmem:[%s201 + $0x748] sm:$0xff]
          %v3054 = vld [vmem:[%s201 + $0x750] sm:$0xff]
          %v3055 = vld [vmem:[%s201 + $0x758] sm:$0xff]
          %v3056 = vld [vmem:[%s201 + $0x760] sm:$0xff]
          %v3057 = vld [vmem:[%s201 + $0x768] sm:$0xff]
          %v3058 = vld [vmem:[%s201 + $0x770] sm:$0xff]
          %v3059 = vld [vmem:[%s201 + $0x778] sm:$0xff]
          %v3060 = vld [vmem:[%s201 + $0x780] sm:$0xff]
          %v3061 = vld [vmem:[%s201 + $0x788] sm:$0xff]
          %v3062 = vld [vmem:[%s201 + $0x790] sm:$0xff]
          %v3063 = vld [vmem:[%s201 + $0x798] sm:$0xff]
          %v3064 = vld [vmem:[%s201 + $0x7a0] sm:$0xff]
          %v3065 = vld [vmem:[%s201 + $0x7a8] sm:$0xff]
          %v3066 = vld [vmem:[%s201 + $0x7b0] sm:$0xff]
          %v3067 = vld [vmem:[%s201 + $0x7b8] sm:$0xff]
          %v3068 = vld [vmem:[%s201 + $0x7c0] sm:$0xff]
          %v3069 = vld [vmem:[%s201 + $0x7c8] sm:$0xff]
          %v3070 = vld [vmem:[%s201 + $0x7d0] sm:$0xff]
          %v3071 = vld [vmem:[%s201 + $0x7d8] sm:$0xff]
          %v3072 = vld [vmem:[%s201 + $0x7e0] sm:$0xff]
          %v3073 = vld [vmem:[%s201 + $0x7e8] sm:$0xff]
          %v3074 = vld [vmem:[%s201 + $0x7f0] sm:$0xff]
          %v3075 = vld [vmem:[%s201 + $0x7f8] sm:$0xff]
          %v3076 = vld [vmem:[%s201 + $0x800] sm:$0xff]
          %v3077 = vld [vmem:[%s201 + $0x808] sm:$0xff]
          %v3078 = vld [vmem:[%s201 + $0x810] sm:$0xff]
          %v3079 = vld [vmem:[%s201 + $0x818] sm:$0xff]
          %v3080 = vld [vmem:[%s201 + $0x820] sm:$0xff]
          %v3081 = vld [vmem:[%s201 + $0x828] sm:$0xff]
          %v3082 = vld [vmem:[%s201 + $0x830] sm:$0xff]
          %v3083 = vld [vmem:[%s201 + $0x838] sm:$0xff]
          %v3084 = vld [vmem:[%s201 + $0x840] sm:$0xff]
          %v3085 = vld [vmem:[%s201 + $0x848] sm:$0xff]
          %v3086 = vld [vmem:[%s201 + $0x850] sm:$0xff]
          %v3087 = vld [vmem:[%s201 + $0x858] sm:$0xff]
          %v3088 = vld [vmem:[%s201 + $0x860] sm:$0xff]
          %v3089 = vld [vmem:[%s201 + $0x868] sm:$0xff]
          %v3090 = vld [vmem:[%s201 + $0x870] sm:$0xff]
          %v3091 = vld [vmem:[%s201 + $0x878] sm:$0xff]
          %v3092 = vld [vmem:[%s201 + $0x880] sm:$0xff]
          %v3093 = vld [vmem:[%s201 + $0x888] sm:$0xff]
          %v3094 = vld [vmem:[%s201 + $0x890] sm:$0xff]
          %v3095 = vld [vmem:[%s201 + $0x898] sm:$0xff]
          %v3096 = vld [vmem:[%s201 + $0x8a0] sm:$0xff]
          %v3097 = vld [vmem:[%s201 + $0x8a8] sm:$0xff]
          %v3098 = vld [vmem:[%s201 + $0x8b0] sm:$0xff]
          %v3099 = vld [vmem:[%s201 + $0x8b8] sm:$0xff]
          %v3100 = vld [vmem:[%s201 + $0x8c0] sm:$0xff]
          %v3101 = vld [vmem:[%s201 + $0x8c8] sm:$0xff]
          %v3102 = vld [vmem:[%s201 + $0x8d0] sm:$0xff]
          %v3103 = vld [vmem:[%s201 + $0x8d8] sm:$0xff]
          %v3104 = vld [vmem:[%s201 + $0x8e0] sm:$0xff]
          %v3105 = vld [vmem:[%s201 + $0x8e8] sm:$0xff]
          %v3106 = vld [vmem:[%s201 + $0x8f0] sm:$0xff]
          %v3107 = vld [vmem:[%s201 + $0x8f8] sm:$0xff]
          %v3108 = vld [vmem:[%s201 + $0x900] sm:$0xff]
          %v3109 = vld [vmem:[%s201 + $0x908] sm:$0xff]
          %v3110 = vld [vmem:[%s201 + $0x910] sm:$0xff]
          %v3111 = vld [vmem:[%s201 + $0x918] sm:$0xff]
          %v3112 = vld [vmem:[%s201 + $0x920] sm:$0xff]
          %v3113 = vld [vmem:[%s201 + $0x928] sm:$0xff]
          %v3114 = vld [vmem:[%s201 + $0x930] sm:$0xff]
          %v3115 = vld [vmem:[%s201 + $0x938] sm:$0xff]
          %v3116 = vld [vmem:[%s201 + $0x940] sm:$0xff]
          %v3117 = vld [vmem:[%s201 + $0x948] sm:$0xff]
          %v3118 = vld [vmem:[%s201 + $0x950] sm:$0xff]
          %v3119 = vld [vmem:[%s201 + $0x958] sm:$0xff]
          %v3120 = vld [vmem:[%s201 + $0x960] sm:$0xff]
          %v3121 = vld [vmem:[%s201 + $0x968] sm:$0xff]
          %v3122 = vld [vmem:[%s201 + $0x970] sm:$0xff]
          %v3123 = vld [vmem:[%s201 + $0x978] sm:$0xff]
          %v3124 = vld [vmem:[%s201 + $0x980] sm:$0xff]
          %v3125 = vld [vmem:[%s201 + $0x988] sm:$0xff]
          %v3126 = vld [vmem:[%s201 + $0x990] sm:$0xff]
          %v3127 = vld [vmem:[%s201 + $0x998] sm:$0xff]
          %v3128 = vld [vmem:[%s201 + $0x9a0] sm:$0xff]
          %v3129 = vld [vmem:[%s201 + $0x9a8] sm:$0xff]
          %v3130 = vld [vmem:[%s201 + $0x9b0] sm:$0xff]
          %v3131 = vld [vmem:[%s201 + $0x9b8] sm:$0xff]
          %v3132 = vld [vmem:[%s201 + $0x9c0] sm:$0xff]
          %v3133 = vld [vmem:[%s201 + $0x9c8] sm:$0xff]
          %v3134 = vld [vmem:[%s201 + $0x9d0] sm:$0xff]
          %v3135 = vld [vmem:[%s201 + $0x9d8] sm:$0xff]
          %v3136 = vld [vmem:[%s201 + $0x9e0] sm:$0xff]
          %v3137 = vld [vmem:[%s201 + $0x9e8] sm:$0xff]
          %v3138 = vld [vmem:[%s201 + $0x9f0] sm:$0xff]
          %v3139 = vld [vmem:[%s201 + $0x9f8] sm:$0xff]
          %v3140 = vld [vmem:[%s201 + $0xa00] sm:$0xff]
          %v3141 = vld [vmem:[%s201 + $0xa08] sm:$0xff]
          %v3142 = vld [vmem:[%s201 + $0xa10] sm:$0xff]
          %v3143 = vld [vmem:[%s201 + $0xa18] sm:$0xff]
          %v3144 = vld [vmem:[%s201 + $0xa20] sm:$0xff]
          %v3145 = vld [vmem:[%s201 + $0xa28] sm:$0xff]
          %v3146 = vld [vmem:[%s201 + $0xa30] sm:$0xff]
          %v3147 = vld [vmem:[%s201 + $0xa38] sm:$0xff]
          %v3148 = vld [vmem:[%s201 + $0xa40] sm:$0xff]
          %v3149 = vld [vmem:[%s201 + $0xa48] sm:$0xff]
          %v3150 = vld [vmem:[%s201 + $0xa50] sm:$0xff]
          %v3151 = vld [vmem:[%s201 + $0xa58] sm:$0xff]
          %v3152 = vld [vmem:[%s201 + $0xa60] sm:$0xff]
          %v3153 = vld [vmem:[%s201 + $0xa68] sm:$0xff]
          %v3154 = vld [vmem:[%s201 + $0xa70] sm:$0xff]
          %v3155 = vld [vmem:[%s201 + $0xa78] sm:$0xff]
          %v3156 = vld [vmem:[%s201 + $0xa80] sm:$0xff]
          %v3157 = vld [vmem:[%s201 + $0xa88] sm:$0xff]
          %v3158 = vld [vmem:[%s201 + $0xa90] sm:$0xff]
          %v3159 = vld [vmem:[%s201 + $0xa98] sm:$0xff]
          %v3160 = vld [vmem:[%s201 + $0xaa0] sm:$0xff]
          %v3161 = vld [vmem:[%s201 + $0xaa8] sm:$0xff]
          %v3162 = vld [vmem:[%s201 + $0xab0] sm:$0xff]
          %v3163 = vld [vmem:[%s201 + $0xab8] sm:$0xff]
          %v3164 = vld [vmem:[%s201 + $0xac0] sm:$0xff]
          %v3165 = vld [vmem:[%s201 + $0xac8] sm:$0xff]
          %v3166 = vld [vmem:[%s201 + $0xad0] sm:$0xff]
          %v3167 = vld [vmem:[%s201 + $0xad8] sm:$0xff]
          %v3168 = vld [vmem:[%s201 + $0xae0] sm:$0xff]
          %v3169 = vld [vmem:[%s201 + $0xae8] sm:$0xff]
          %v3170 = vld [vmem:[%s201 + $0xaf0] sm:$0xff]
          %v3171 = vld [vmem:[%s201 + $0xaf8] sm:$0xff]
          %v3172 = vld [vmem:[%s201 + $0xb00] sm:$0xff]
          %v3173 = vld [vmem:[%s201 + $0xb08] sm:$0xff]
          %v3174 = vld [vmem:[%s201 + $0xb10] sm:$0xff]
          %v3175 = vld [vmem:[%s201 + $0xb18] sm:$0xff]
          %v3176 = vld [vmem:[%s201 + $0xb20] sm:$0xff]
          %v3177 = vld [vmem:[%s201 + $0xb28] sm:$0xff]
          %v3178 = vld [vmem:[%s201 + $0xb30] sm:$0xff]
          %v3179 = vld [vmem:[%s201 + $0xb38] sm:$0xff]
          %v3180 = vld [vmem:[%s201 + $0xb40] sm:$0xff]
          %v3181 = vld [vmem:[%s201 + $0xb48] sm:$0xff]
          %v3182 = vld [vmem:[%s201 + $0xb50] sm:$0xff]
          %v3183 = vld [vmem:[%s201 + $0xb58] sm:$0xff]
          %v3184 = vld [vmem:[%s201 + $0xb60] sm:$0xff]
          %v3185 = vld [vmem:[%s201 + $0xb68] sm:$0xff]
          %v3186 = vld [vmem:[%s201 + $0xb70] sm:$0xff]
          %v3187 = vld [vmem:[%s201 + $0xb78] sm:$0xff]
          %v3188 = vld [vmem:[%s201 + $0xb80] sm:$0xff]
          %v3189 = vld [vmem:[%s201 + $0xb88] sm:$0xff]
          %v3190 = vld [vmem:[%s201 + $0xb90] sm:$0xff]
          %v3191 = vld [vmem:[%s201 + $0xb98] sm:$0xff]
          %v3192 = vld [vmem:[%s201 + $0xba0] sm:$0xff]
          %v3193 = vld [vmem:[%s201 + $0xba8] sm:$0xff]
          %v3194 = vld [vmem:[%s201 + $0xbb0] sm:$0xff]
          %v3195 = vld [vmem:[%s201 + $0xbb8] sm:$0xff]
          %v3196 = vld [vmem:[%s201 + $0xbc0] sm:$0xff]
          %v3197 = vld [vmem:[%s201 + $0xbc8] sm:$0xff]
          %v3198 = vld [vmem:[%s201 + $0xbd0] sm:$0xff]
          %v3199 = vld [vmem:[%s201 + $0xbd8] sm:$0xff]
          %v3200 = vld [vmem:[%s201 + $0xbe0] sm:$0xff]
          %v3201 = vld [vmem:[%s201 + $0xbe8] sm:$0xff]
          %v3202 = vld [vmem:[%s201 + $0xbf0] sm:$0xff]
          %v3203 = vld [vmem:[%s201 + $0xbf8] sm:$0xff]
          %v3204 = vld [vmem:[%s201 + $0xc00] sm:$0xff]
          %v3205 = vld [vmem:[%s201 + $0xc08] sm:$0xff]
          %v3206 = vld [vmem:[%s201 + $0xc10] sm:$0xff]
          %v3207 = vld [vmem:[%s201 + $0xc18] sm:$0xff]
          %v3208 = vld [vmem:[%s201 + $0xc20] sm:$0xff]
          %v3209 = vld [vmem:[%s201 + $0xc28] sm:$0xff]
          %v3210 = vld [vmem:[%s201 + $0xc30] sm:$0xff]
          %v3211 = vld [vmem:[%s201 + $0xc38] sm:$0xff]
          %v3212 = vld [vmem:[%s201 + $0xc40] sm:$0xff]
          %v3213 = vld [vmem:[%s201 + $0xc48] sm:$0xff]
          %v3214 = vld [vmem:[%s201 + $0xc50] sm:$0xff]
          %v3215 = vld [vmem:[%s201 + $0xc58] sm:$0xff]
          %v3216 = vld [vmem:[%s201 + $0xc60] sm:$0xff]
          %v3217 = vld [vmem:[%s201 + $0xc68] sm:$0xff]
          %v3218 = vld [vmem:[%s201 + $0xc70] sm:$0xff]
          %v3219 = vld [vmem:[%s201 + $0xc78] sm:$0xff]
          %v3220 = vld [vmem:[%s201 + $0xc80] sm:$0xff]
          %v3221 = vld [vmem:[%s201 + $0xc88] sm:$0xff]
          %v3222 = vld [vmem:[%s201 + $0xc90] sm:$0xff]
          %v3223 = vld [vmem:[%s201 + $0xc98] sm:$0xff]
          %v3224 = vld [vmem:[%s201 + $0xca0] sm:$0xff]
          %v3225 = vld [vmem:[%s201 + $0xca8] sm:$0xff]
          %v3226 = vld [vmem:[%s201 + $0xcb0] sm:$0xff]
          %v3227 = vld [vmem:[%s201 + $0xcb8] sm:$0xff]
          %v3228 = vld [vmem:[%s201 + $0xcc0] sm:$0xff]
          %v3229 = vld [vmem:[%s201 + $0xcc8] sm:$0xff]
          %v3230 = vld [vmem:[%s201 + $0xcd0] sm:$0xff]
          %v3231 = vld [vmem:[%s201 + $0xcd8] sm:$0xff]
          %v3232 = vld [vmem:[%s201 + $0xce0] sm:$0xff]
          %v3233 = vld [vmem:[%s201 + $0xce8] sm:$0xff]
          %v3234 = vld [vmem:[%s201 + $0xcf0] sm:$0xff]
          %v3235 = vld [vmem:[%s201 + $0xcf8] sm:$0xff]
          %v3236 = vld [vmem:[%s201 + $0xd00] sm:$0xff]
          %v3237 = vld [vmem:[%s201 + $0xd08] sm:$0xff]
          %v3238 = vld [vmem:[%s201 + $0xd10] sm:$0xff]
          %v3239 = vld [vmem:[%s201 + $0xd18] sm:$0xff]
          %v3240 = vld [vmem:[%s201 + $0xd20] sm:$0xff]
          %v3241 = vld [vmem:[%s201 + $0xd28] sm:$0xff]
          %v3242 = vld [vmem:[%s201 + $0xd30] sm:$0xff]
          %v3243 = vld [vmem:[%s201 + $0xd38] sm:$0xff]
          %v3244 = vld [vmem:[%s201 + $0xd40] sm:$0xff]
          %v3245 = vld [vmem:[%s201 + $0xd48] sm:$0xff]
          %v3246 = vld [vmem:[%s201 + $0xd50] sm:$0xff]
          %v3247 = vld [vmem:[%s201 + $0xd58] sm:$0xff]
          %v3248 = vld [vmem:[%s201 + $0xd60] sm:$0xff]
          %v3249 = vld [vmem:[%s201 + $0xd68] sm:$0xff]
          %v3250 = vld [vmem:[%s201 + $0xd70] sm:$0xff]
          %v3251 = vld [vmem:[%s201 + $0xd78] sm:$0xff]
          %v3252 = vld [vmem:[%s201 + $0xd80] sm:$0xff]
          %v3253 = vld [vmem:[%s201 + $0xd88] sm:$0xff]
          %v3254 = vld [vmem:[%s201 + $0xd90] sm:$0xff]
          %v3255 = vld [vmem:[%s201 + $0xd98] sm:$0xff]
          %v3256 = vld [vmem:[%s201 + $0xda0] sm:$0xff]
          %v3257 = vld [vmem:[%s201 + $0xda8] sm:$0xff]
          %v3258 = vld [vmem:[%s201 + $0xdb0] sm:$0xff]
          %v3259 = vld [vmem:[%s201 + $0xdb8] sm:$0xff]
          %v3260 = vld [vmem:[%s201 + $0xdc0] sm:$0xff]
          %v3261 = vld [vmem:[%s201 + $0xdc8] sm:$0xff]
          %v3262 = vld [vmem:[%s201 + $0xdd0] sm:$0xff]
          %v3263 = vld [vmem:[%s201 + $0xdd8] sm:$0xff]
          %v3264 = vld [vmem:[%s201 + $0xde0] sm:$0xff]
          %v3265 = vld [vmem:[%s201 + $0xde8] sm:$0xff]
          %v3266 = vld [vmem:[%s201 + $0xdf0] sm:$0xff]
          %v3267 = vld [vmem:[%s201 + $0xdf8] sm:$0xff]
          %v3268 = vld [vmem:[%s201 + $0xe00] sm:$0xff]
          %v3269 = vld [vmem:[%s201 + $0xe08] sm:$0xff]
          %v3270 = vld [vmem:[%s201 + $0xe10] sm:$0xff]
          %v3271 = vld [vmem:[%s201 + $0xe18] sm:$0xff]
          %v3272 = vld [vmem:[%s201 + $0xe20] sm:$0xff]
          %v3273 = vld [vmem:[%s201 + $0xe28] sm:$0xff]
          %v3274 = vld [vmem:[%s201 + $0xe30] sm:$0xff]
          %v3275 = vld [vmem:[%s201 + $0xe38] sm:$0xff]
          %v3276 = vld [vmem:[%s201 + $0xe40] sm:$0xff]
          %v3277 = vld [vmem:[%s201 + $0xe48] sm:$0xff]
          %v3278 = vld [vmem:[%s201 + $0xe50] sm:$0xff]
          %v3279 = vld [vmem:[%s201 + $0xe58] sm:$0xff]
          %v3280 = vld [vmem:[%s201 + $0xe60] sm:$0xff]
          %v3281 = vld [vmem:[%s201 + $0xe68] sm:$0xff]
          %v3282 = vld [vmem:[%s201 + $0xe70] sm:$0xff]
          %v3283 = vld [vmem:[%s201 + $0xe78] sm:$0xff]
          %v3284 = vld [vmem:[%s201 + $0xe80] sm:$0xff]
          %v3285 = vld [vmem:[%s201 + $0xe88] sm:$0xff]
          %v3286 = vld [vmem:[%s201 + $0xe90] sm:$0xff]
          %v3287 = vld [vmem:[%s201 + $0xe98] sm:$0xff]
          %v3288 = vld [vmem:[%s201 + $0xea0] sm:$0xff]
          %v3289 = vld [vmem:[%s201 + $0xea8] sm:$0xff]
          %v3290 = vld [vmem:[%s201 + $0xeb0] sm:$0xff]
          %v3291 = vld [vmem:[%s201 + $0xeb8] sm:$0xff]
          %v3292 = vld [vmem:[%s201 + $0xec0] sm:$0xff]
          %v3293 = vld [vmem:[%s201 + $0xec8] sm:$0xff]
          %v3294 = vld [vmem:[%s201 + $0xed0] sm:$0xff]
          %v3295 = vld [vmem:[%s201 + $0xed8] sm:$0xff]
          %v3296 = vld [vmem:[%s201 + $0xee0] sm:$0xff]
          %v3297 = vld [vmem:[%s201 + $0xee8] sm:$0xff]
          %v3298 = vld [vmem:[%s201 + $0xef0] sm:$0xff]
          %v3299 = vld [vmem:[%s201 + $0xef8] sm:$0xff]
          %v3300 = vld [vmem:[%s201 + $0xf00] sm:$0xff]
          %v3301 = vld [vmem:[%s201 + $0xf08] sm:$0xff]
          %v3302 = vld [vmem:[%s201 + $0xf10] sm:$0xff]
          %v3303 = vld [vmem:[%s201 + $0xf18] sm:$0xff]
          %v3304 = vld [vmem:[%s201 + $0xf20] sm:$0xff]
          %v3305 = vld [vmem:[%s201 + $0xf28] sm:$0xff]
          %v3306 = vld [vmem:[%s201 + $0xf30] sm:$0xff]
          %v3307 = vld [vmem:[%s201 + $0xf38] sm:$0xff]
          %v3308 = vld [vmem:[%s201 + $0xf40] sm:$0xff]
          %v3309 = vld [vmem:[%s201 + $0xf48] sm:$0xff]
          %v3310 = vld [vmem:[%s201 + $0xf50] sm:$0xff]
          %v3311 = vld [vmem:[%s201 + $0xf58] sm:$0xff]
          %v3312 = vld [vmem:[%s201 + $0xf60] sm:$0xff]
          %v3313 = vld [vmem:[%s201 + $0xf68] sm:$0xff]
          %v3314 = vld [vmem:[%s201 + $0xf70] sm:$0xff]
          %v3315 = vld [vmem:[%s201 + $0xf78] sm:$0xff]
          %v3316 = vld [vmem:[%s201 + $0xf80] sm:$0xff]
          %v3317 = vld [vmem:[%s201 + $0xf88] sm:$0xff]
          %v3318 = vld [vmem:[%s201 + $0xf90] sm:$0xff]
          %v3319 = vld [vmem:[%s201 + $0xf98] sm:$0xff]
          %v3320 = vld [vmem:[%s201 + $0xfa0] sm:$0xff]
          %v3321 = vld [vmem:[%s201 + $0xfa8] sm:$0xff]
          %v3322 = vld [vmem:[%s201 + $0xfb0] sm:$0xff]
          %v3323 = vld [vmem:[%s201 + $0xfb8] sm:$0xff]
          %v3324 = vld [vmem:[%s201 + $0xfc0] sm:$0xff]
          %v3325 = vld [vmem:[%s201 + $0xfc8] sm:$0xff]
          %v3326 = vld [vmem:[%s201 + $0xfd0] sm:$0xff]
          %v3327 = vld [vmem:[%s201 + $0xfd8] sm:$0xff]
          %v3328 = vld [vmem:[%s201 + $0xfe0] sm:$0xff]
          %v3329 = vld [vmem:[%s201 + $0xfe8] sm:$0xff]
          %v3330 = vld [vmem:[%s201 + $0xff0] sm:$0xff]
          %v3331 = vld [vmem:[%s201 + $0xff8] sm:$0xff]
          %v3332 = vld [vmem:[%s210] sm:$0xff]
          %v3333 = vld [vmem:[%s210 + $0x8] sm:$0xff]
          %v3334 = vld [vmem:[%s210 + $0x10] sm:$0xff]
          %v3335 = vld [vmem:[%s210 + $0x18] sm:$0xff]
          %v3336 = vld [vmem:[%s210 + $0x20] sm:$0xff]
          %v3337 = vld [vmem:[%s210 + $0x28] sm:$0xff]
          %v3338 = vld [vmem:[%s210 + $0x30] sm:$0xff]
          %v3339 = vld [vmem:[%s210 + $0x38] sm:$0xff]
          %v3340 = vld [vmem:[%s210 + $0x40] sm:$0xff]
          %v3341 = vld [vmem:[%s210 + $0x48] sm:$0xff]
          %v3342 = vld [vmem:[%s210 + $0x50] sm:$0xff]
          %v3343 = vld [vmem:[%s210 + $0x58] sm:$0xff]
          %v3344 = vld [vmem:[%s210 + $0x60] sm:$0xff]
          %v3345 = vld [vmem:[%s210 + $0x68] sm:$0xff]
          %v3346 = vld [vmem:[%s210 + $0x70] sm:$0xff]
          %v3347 = vld [vmem:[%s210 + $0x78] sm:$0xff]
          %v3348 = vld [vmem:[%s210 + $0x80] sm:$0xff]
          %v3349 = vld [vmem:[%s210 + $0x88] sm:$0xff]
          %v3350 = vld [vmem:[%s210 + $0x90] sm:$0xff]
          %v3351 = vld [vmem:[%s210 + $0x98] sm:$0xff]
          %v3352 = vld [vmem:[%s210 + $0xa0] sm:$0xff]
          %v3353 = vld [vmem:[%s210 + $0xa8] sm:$0xff]
          %v3354 = vld [vmem:[%s210 + $0xb0] sm:$0xff]
          %v3355 = vld [vmem:[%s210 + $0xb8] sm:$0xff]
          %v3356 = vld [vmem:[%s210 + $0xc0] sm:$0xff]
          %v3357 = vld [vmem:[%s210 + $0xc8] sm:$0xff]
          %v3358 = vld [vmem:[%s210 + $0xd0] sm:$0xff]
          %v3359 = vld [vmem:[%s210 + $0xd8] sm:$0xff]
          %v3360 = vld [vmem:[%s210 + $0xe0] sm:$0xff]
          %v3361 = vld [vmem:[%s210 + $0xe8] sm:$0xff]
          %v3362 = vld [vmem:[%s210 + $0xf0] sm:$0xff]
          %v3363 = vld [vmem:[%s210 + $0xf8] sm:$0xff]
          %v3364 = vld [vmem:[%s210 + $0x100] sm:$0xff]
          %v3365 = vld [vmem:[%s210 + $0x108] sm:$0xff]
          %v3366 = vld [vmem:[%s210 + $0x110] sm:$0xff]
          %v3367 = vld [vmem:[%s210 + $0x118] sm:$0xff]
          %v3368 = vld [vmem:[%s210 + $0x120] sm:$0xff]
          %v3369 = vld [vmem:[%s210 + $0x128] sm:$0xff]
          %v3370 = vld [vmem:[%s210 + $0x130] sm:$0xff]
          %v3371 = vld [vmem:[%s210 + $0x138] sm:$0xff]
          %v3372 = vld [vmem:[%s210 + $0x140] sm:$0xff]
          %v3373 = vld [vmem:[%s210 + $0x148] sm:$0xff]
          %v3374 = vld [vmem:[%s210 + $0x150] sm:$0xff]
          %v3375 = vld [vmem:[%s210 + $0x158] sm:$0xff]
          %v3376 = vld [vmem:[%s210 + $0x160] sm:$0xff]
          %v3377 = vld [vmem:[%s210 + $0x168] sm:$0xff]
          %v3378 = vld [vmem:[%s210 + $0x170] sm:$0xff]
          %v3379 = vld [vmem:[%s210 + $0x178] sm:$0xff]
          %v3380 = vld [vmem:[%s210 + $0x180] sm:$0xff]
          %v3381 = vld [vmem:[%s210 + $0x188] sm:$0xff]
          %v3382 = vld [vmem:[%s210 + $0x190] sm:$0xff]
          %v3383 = vld [vmem:[%s210 + $0x198] sm:$0xff]
          %v3384 = vld [vmem:[%s210 + $0x1a0] sm:$0xff]
          %v3385 = vld [vmem:[%s210 + $0x1a8] sm:$0xff]
          %v3386 = vld [vmem:[%s210 + $0x1b0] sm:$0xff]
          %v3387 = vld [vmem:[%s210 + $0x1b8] sm:$0xff]
          %v3388 = vld [vmem:[%s210 + $0x1c0] sm:$0xff]
          %v3389 = vld [vmem:[%s210 + $0x1c8] sm:$0xff]
          %v3390 = vld [vmem:[%s210 + $0x1d0] sm:$0xff]
          %v3391 = vld [vmem:[%s210 + $0x1d8] sm:$0xff]
          %v3392 = vld [vmem:[%s210 + $0x1e0] sm:$0xff]
          %v3393 = vld [vmem:[%s210 + $0x1e8] sm:$0xff]
          %v3394 = vld [vmem:[%s210 + $0x1f0] sm:$0xff]
          %v3395 = vld [vmem:[%s210 + $0x1f8] sm:$0xff]
          %v3396 = vld [vmem:[%s210 + $0x200] sm:$0xff]
          %v3397 = vld [vmem:[%s210 + $0x208] sm:$0xff]
          %v3398 = vld [vmem:[%s210 + $0x210] sm:$0xff]
          %v3399 = vld [vmem:[%s210 + $0x218] sm:$0xff]
          %v3400 = vld [vmem:[%s210 + $0x220] sm:$0xff]
          %v3401 = vld [vmem:[%s210 + $0x228] sm:$0xff]
          %v3402 = vld [vmem:[%s210 + $0x230] sm:$0xff]
          %v3403 = vld [vmem:[%s210 + $0x238] sm:$0xff]
          %v3404 = vld [vmem:[%s210 + $0x240] sm:$0xff]
          %v3405 = vld [vmem:[%s210 + $0x248] sm:$0xff]
          %v3406 = vld [vmem:[%s210 + $0x250] sm:$0xff]
          %v3407 = vld [vmem:[%s210 + $0x258] sm:$0xff]
          %v3408 = vld [vmem:[%s210 + $0x260] sm:$0xff]
          %v3409 = vld [vmem:[%s210 + $0x268] sm:$0xff]
          %v3410 = vld [vmem:[%s210 + $0x270] sm:$0xff]
          %v3411 = vld [vmem:[%s210 + $0x278] sm:$0xff]
          %v3412 = vld [vmem:[%s210 + $0x280] sm:$0xff]
          %v3413 = vld [vmem:[%s210 + $0x288] sm:$0xff]
          %v3414 = vld [vmem:[%s210 + $0x290] sm:$0xff]
          %v3415 = vld [vmem:[%s210 + $0x298] sm:$0xff]
          %v3416 = vld [vmem:[%s210 + $0x2a0] sm:$0xff]
          %v3417 = vld [vmem:[%s210 + $0x2a8] sm:$0xff]
          %v3418 = vld [vmem:[%s210 + $0x2b0] sm:$0xff]
          %v3419 = vld [vmem:[%s210 + $0x2b8] sm:$0xff]
          %v3420 = vld [vmem:[%s210 + $0x2c0] sm:$0xff]
          %v3421 = vld [vmem:[%s210 + $0x2c8] sm:$0xff]
          %v3422 = vld [vmem:[%s210 + $0x2d0] sm:$0xff]
          %v3423 = vld [vmem:[%s210 + $0x2d8] sm:$0xff]
          %v3424 = vld [vmem:[%s210 + $0x2e0] sm:$0xff]
          %v3425 = vld [vmem:[%s210 + $0x2e8] sm:$0xff]
          %v3426 = vld [vmem:[%s210 + $0x2f0] sm:$0xff]
          %v3427 = vld [vmem:[%s210 + $0x2f8] sm:$0xff]
          %v3428 = vld [vmem:[%s210 + $0x300] sm:$0xff]
          %v3429 = vld [vmem:[%s210 + $0x308] sm:$0xff]
          %v3430 = vld [vmem:[%s210 + $0x310] sm:$0xff]
          %v3431 = vld [vmem:[%s210 + $0x318] sm:$0xff]
          %v3432 = vld [vmem:[%s210 + $0x320] sm:$0xff]
          %v3433 = vld [vmem:[%s210 + $0x328] sm:$0xff]
          %v3434 = vld [vmem:[%s210 + $0x330] sm:$0xff]
          %v3435 = vld [vmem:[%s210 + $0x338] sm:$0xff]
          %v3436 = vld [vmem:[%s210 + $0x340] sm:$0xff]
          %v3437 = vld [vmem:[%s210 + $0x348] sm:$0xff]
          %v3438 = vld [vmem:[%s210 + $0x350] sm:$0xff]
          %v3439 = vld [vmem:[%s210 + $0x358] sm:$0xff]
          %v3440 = vld [vmem:[%s210 + $0x360] sm:$0xff]
          %v3441 = vld [vmem:[%s210 + $0x368] sm:$0xff]
          %v3442 = vld [vmem:[%s210 + $0x370] sm:$0xff]
          %v3443 = vld [vmem:[%s210 + $0x378] sm:$0xff]
          %v3444 = vld [vmem:[%s210 + $0x380] sm:$0xff]
          %v3445 = vld [vmem:[%s210 + $0x388] sm:$0xff]
          %v3446 = vld [vmem:[%s210 + $0x390] sm:$0xff]
          %v3447 = vld [vmem:[%s210 + $0x398] sm:$0xff]
          %v3448 = vld [vmem:[%s210 + $0x3a0] sm:$0xff]
          %v3449 = vld [vmem:[%s210 + $0x3a8] sm:$0xff]
          %v3450 = vld [vmem:[%s210 + $0x3b0] sm:$0xff]
          %v3451 = vld [vmem:[%s210 + $0x3b8] sm:$0xff]
          %v3452 = vld [vmem:[%s210 + $0x3c0] sm:$0xff]
          %v3453 = vld [vmem:[%s210 + $0x3c8] sm:$0xff]
          %v3454 = vld [vmem:[%s210 + $0x3d0] sm:$0xff]
          %v3455 = vld [vmem:[%s210 + $0x3d8] sm:$0xff]
          %v3456 = vld [vmem:[%s210 + $0x3e0] sm:$0xff]
          %v3457 = vld [vmem:[%s210 + $0x3e8] sm:$0xff]
          %v3458 = vld [vmem:[%s210 + $0x3f0] sm:$0xff]
          %v3459 = vld [vmem:[%s210 + $0x3f8] sm:$0xff]
          %v3460 = vld [vmem:[%s210 + $0x400] sm:$0xff]
          %v3461 = vld [vmem:[%s210 + $0x408] sm:$0xff]
          %v3462 = vld [vmem:[%s210 + $0x410] sm:$0xff]
          %v3463 = vld [vmem:[%s210 + $0x418] sm:$0xff]
          %v3464 = vld [vmem:[%s210 + $0x420] sm:$0xff]
          %v3465 = vld [vmem:[%s210 + $0x428] sm:$0xff]
          %v3466 = vld [vmem:[%s210 + $0x430] sm:$0xff]
          %v3467 = vld [vmem:[%s210 + $0x438] sm:$0xff]
          %v3468 = vld [vmem:[%s210 + $0x440] sm:$0xff]
          %v3469 = vld [vmem:[%s210 + $0x448] sm:$0xff]
          %v3470 = vld [vmem:[%s210 + $0x450] sm:$0xff]
          %v3471 = vld [vmem:[%s210 + $0x458] sm:$0xff]
          %v3472 = vld [vmem:[%s210 + $0x460] sm:$0xff]
          %v3473 = vld [vmem:[%s210 + $0x468] sm:$0xff]
          %v3474 = vld [vmem:[%s210 + $0x470] sm:$0xff]
          %v3475 = vld [vmem:[%s210 + $0x478] sm:$0xff]
          %v3476 = vld [vmem:[%s210 + $0x480] sm:$0xff]
          %v3477 = vld [vmem:[%s210 + $0x488] sm:$0xff]
          %v3478 = vld [vmem:[%s210 + $0x490] sm:$0xff]
          %v3479 = vld [vmem:[%s210 + $0x498] sm:$0xff]
          %v3480 = vld [vmem:[%s210 + $0x4a0] sm:$0xff]
          %v3481 = vld [vmem:[%s210 + $0x4a8] sm:$0xff]
          %v3482 = vld [vmem:[%s210 + $0x4b0] sm:$0xff]
          %v3483 = vld [vmem:[%s210 + $0x4b8] sm:$0xff]
          %v3484 = vld [vmem:[%s210 + $0x4c0] sm:$0xff]
          %v3485 = vld [vmem:[%s210 + $0x4c8] sm:$0xff]
          %v3486 = vld [vmem:[%s210 + $0x4d0] sm:$0xff]
          %v3487 = vld [vmem:[%s210 + $0x4d8] sm:$0xff]
          %v3488 = vld [vmem:[%s210 + $0x4e0] sm:$0xff]
          %v3489 = vld [vmem:[%s210 + $0x4e8] sm:$0xff]
          %v3490 = vld [vmem:[%s210 + $0x4f0] sm:$0xff]
          %v3491 = vld [vmem:[%s210 + $0x4f8] sm:$0xff]
          %v3492 = vld [vmem:[%s210 + $0x500] sm:$0xff]
          %v3493 = vld [vmem:[%s210 + $0x508] sm:$0xff]
          %v3494 = vld [vmem:[%s210 + $0x510] sm:$0xff]
          %v3495 = vld [vmem:[%s210 + $0x518] sm:$0xff]
          %v3496 = vld [vmem:[%s210 + $0x520] sm:$0xff]
          %v3497 = vld [vmem:[%s210 + $0x528] sm:$0xff]
          %v3498 = vld [vmem:[%s210 + $0x530] sm:$0xff]
          %v3499 = vld [vmem:[%s210 + $0x538] sm:$0xff]
          %v3500 = vld [vmem:[%s210 + $0x540] sm:$0xff]
          %v3501 = vld [vmem:[%s210 + $0x548] sm:$0xff]
          %v3502 = vld [vmem:[%s210 + $0x550] sm:$0xff]
          %v3503 = vld [vmem:[%s210 + $0x558] sm:$0xff]
          %v3504 = vld [vmem:[%s210 + $0x560] sm:$0xff]
          %v3505 = vld [vmem:[%s210 + $0x568] sm:$0xff]
          %v3506 = vld [vmem:[%s210 + $0x570] sm:$0xff]
          %v3507 = vld [vmem:[%s210 + $0x578] sm:$0xff]
          %v3508 = vld [vmem:[%s210 + $0x580] sm:$0xff]
          %v3509 = vld [vmem:[%s210 + $0x588] sm:$0xff]
          %v3510 = vld [vmem:[%s210 + $0x590] sm:$0xff]
          %v3511 = vld [vmem:[%s210 + $0x598] sm:$0xff]
          %v3512 = vld [vmem:[%s210 + $0x5a0] sm:$0xff]
          %v3513 = vld [vmem:[%s210 + $0x5a8] sm:$0xff]
          %v3514 = vld [vmem:[%s210 + $0x5b0] sm:$0xff]
          %v3515 = vld [vmem:[%s210 + $0x5b8] sm:$0xff]
          %v3516 = vld [vmem:[%s210 + $0x5c0] sm:$0xff]
          %v3517 = vld [vmem:[%s210 + $0x5c8] sm:$0xff]
          %v3518 = vld [vmem:[%s210 + $0x5d0] sm:$0xff]
          %v3519 = vld [vmem:[%s210 + $0x5d8] sm:$0xff]
          %v3520 = vld [vmem:[%s210 + $0x5e0] sm:$0xff]
          %v3521 = vld [vmem:[%s210 + $0x5e8] sm:$0xff]
          %v3522 = vld [vmem:[%s210 + $0x5f0] sm:$0xff]
          %v3523 = vld [vmem:[%s210 + $0x5f8] sm:$0xff]
          %v3524 = vld [vmem:[%s210 + $0x600] sm:$0xff]
          %v3525 = vld [vmem:[%s210 + $0x608] sm:$0xff]
          %v3526 = vld [vmem:[%s210 + $0x610] sm:$0xff]
          %v3527 = vld [vmem:[%s210 + $0x618] sm:$0xff]
          %v3528 = vld [vmem:[%s210 + $0x620] sm:$0xff]
          %v3529 = vld [vmem:[%s210 + $0x628] sm:$0xff]
          %v3530 = vld [vmem:[%s210 + $0x630] sm:$0xff]
          %v3531 = vld [vmem:[%s210 + $0x638] sm:$0xff]
          %v3532 = vld [vmem:[%s210 + $0x640] sm:$0xff]
          %v3533 = vld [vmem:[%s210 + $0x648] sm:$0xff]
          %v3534 = vld [vmem:[%s210 + $0x650] sm:$0xff]
          %v3535 = vld [vmem:[%s210 + $0x658] sm:$0xff]
          %v3536 = vld [vmem:[%s210 + $0x660] sm:$0xff]
          %v3537 = vld [vmem:[%s210 + $0x668] sm:$0xff]
          %v3538 = vld [vmem:[%s210 + $0x670] sm:$0xff]
          %v3539 = vld [vmem:[%s210 + $0x678] sm:$0xff]
          %v3540 = vld [vmem:[%s210 + $0x680] sm:$0xff]
          %v3541 = vld [vmem:[%s210 + $0x688] sm:$0xff]
          %v3542 = vld [vmem:[%s210 + $0x690] sm:$0xff]
          %v3543 = vld [vmem:[%s210 + $0x698] sm:$0xff]
          %v3544 = vld [vmem:[%s210 + $0x6a0] sm:$0xff]
          %v3545 = vld [vmem:[%s210 + $0x6a8] sm:$0xff]
          %v3546 = vld [vmem:[%s210 + $0x6b0] sm:$0xff]
          %v3547 = vld [vmem:[%s210 + $0x6b8] sm:$0xff]
          %v3548 = vld [vmem:[%s210 + $0x6c0] sm:$0xff]
          %v3549 = vld [vmem:[%s210 + $0x6c8] sm:$0xff]
          %v3550 = vld [vmem:[%s210 + $0x6d0] sm:$0xff]
          %v3551 = vld [vmem:[%s210 + $0x6d8] sm:$0xff]
          %v3552 = vld [vmem:[%s210 + $0x6e0] sm:$0xff]
          %v3553 = vld [vmem:[%s210 + $0x6e8] sm:$0xff]
          %v3554 = vld [vmem:[%s210 + $0x6f0] sm:$0xff]
          %v3555 = vld [vmem:[%s210 + $0x6f8] sm:$0xff]
          %v3556 = vld [vmem:[%s210 + $0x700] sm:$0xff]
          %v3557 = vld [vmem:[%s210 + $0x708] sm:$0xff]
          %v3558 = vld [vmem:[%s210 + $0x710] sm:$0xff]
          %v3559 = vld [vmem:[%s210 + $0x718] sm:$0xff]
          %v3560 = vld [vmem:[%s210 + $0x720] sm:$0xff]
          %v3561 = vld [vmem:[%s210 + $0x728] sm:$0xff]
          %v3562 = vld [vmem:[%s210 + $0x730] sm:$0xff]
          %v3563 = vld [vmem:[%s210 + $0x738] sm:$0xff]
          %v3564 = vld [vmem:[%s210 + $0x740] sm:$0xff]
          %v3565 = vld [vmem:[%s210 + $0x748] sm:$0xff]
          %v3566 = vld [vmem:[%s210 + $0x750] sm:$0xff]
          %v3567 = vld [vmem:[%s210 + $0x758] sm:$0xff]
          %v3568 = vld [vmem:[%s210 + $0x760] sm:$0xff]
          %v3569 = vld [vmem:[%s210 + $0x768] sm:$0xff]
          %v3570 = vld [vmem:[%s210 + $0x770] sm:$0xff]
          %v3571 = vld [vmem:[%s210 + $0x778] sm:$0xff]
          %v3572 = vld [vmem:[%s210 + $0x780] sm:$0xff]
          %v3573 = vld [vmem:[%s210 + $0x788] sm:$0xff]
          %v3574 = vld [vmem:[%s210 + $0x790] sm:$0xff]
          %v3575 = vld [vmem:[%s210 + $0x798] sm:$0xff]
          %v3576 = vld [vmem:[%s210 + $0x7a0] sm:$0xff]
          %v3577 = vld [vmem:[%s210 + $0x7a8] sm:$0xff]
          %v3578 = vld [vmem:[%s210 + $0x7b0] sm:$0xff]
          %v3579 = vld [vmem:[%s210 + $0x7b8] sm:$0xff]
          %v3580 = vld [vmem:[%s210 + $0x7c0] sm:$0xff]
          %v3581 = vld [vmem:[%s210 + $0x7c8] sm:$0xff]
          %v3582 = vld [vmem:[%s210 + $0x7d0] sm:$0xff]
          %v3583 = vld [vmem:[%s210 + $0x7d8] sm:$0xff]
          %v3584 = vld [vmem:[%s210 + $0x7e0] sm:$0xff]
          %v3585 = vld [vmem:[%s210 + $0x7e8] sm:$0xff]
          %v3586 = vld [vmem:[%s210 + $0x7f0] sm:$0xff]
          %v3587 = vld [vmem:[%s210 + $0x7f8] sm:$0xff]
          %v3588 = vld [vmem:[%s210 + $0x800] sm:$0xff]
          %v3589 = vld [vmem:[%s210 + $0x808] sm:$0xff]
          %v3590 = vld [vmem:[%s210 + $0x810] sm:$0xff]
          %v3591 = vld [vmem:[%s210 + $0x818] sm:$0xff]
          %v3592 = vld [vmem:[%s210 + $0x820] sm:$0xff]
          %v3593 = vld [vmem:[%s210 + $0x828] sm:$0xff]
          %v3594 = vld [vmem:[%s210 + $0x830] sm:$0xff]
          %v3595 = vld [vmem:[%s210 + $0x838] sm:$0xff]
          %v3596 = vld [vmem:[%s210 + $0x840] sm:$0xff]
          %v3597 = vld [vmem:[%s210 + $0x848] sm:$0xff]
          %v3598 = vld [vmem:[%s210 + $0x850] sm:$0xff]
          %v3599 = vld [vmem:[%s210 + $0x858] sm:$0xff]
          %v3600 = vld [vmem:[%s210 + $0x860] sm:$0xff]
          %v3601 = vld [vmem:[%s210 + $0x868] sm:$0xff]
          %v3602 = vld [vmem:[%s210 + $0x870] sm:$0xff]
          %v3603 = vld [vmem:[%s210 + $0x878] sm:$0xff]
          %v3604 = vld [vmem:[%s210 + $0x880] sm:$0xff]
          %v3605 = vld [vmem:[%s210 + $0x888] sm:$0xff]
          %v3606 = vld [vmem:[%s210 + $0x890] sm:$0xff]
          %v3607 = vld [vmem:[%s210 + $0x898] sm:$0xff]
          %v3608 = vld [vmem:[%s210 + $0x8a0] sm:$0xff]
          %v3609 = vld [vmem:[%s210 + $0x8a8] sm:$0xff]
          %v3610 = vld [vmem:[%s210 + $0x8b0] sm:$0xff]
          %v3611 = vld [vmem:[%s210 + $0x8b8] sm:$0xff]
          %v3612 = vld [vmem:[%s210 + $0x8c0] sm:$0xff]
          %v3613 = vld [vmem:[%s210 + $0x8c8] sm:$0xff]
          %v3614 = vld [vmem:[%s210 + $0x8d0] sm:$0xff]
          %v3615 = vld [vmem:[%s210 + $0x8d8] sm:$0xff]
          %v3616 = vld [vmem:[%s210 + $0x8e0] sm:$0xff]
          %v3617 = vld [vmem:[%s210 + $0x8e8] sm:$0xff]
          %v3618 = vld [vmem:[%s210 + $0x8f0] sm:$0xff]
          %v3619 = vld [vmem:[%s210 + $0x8f8] sm:$0xff]
          %v3620 = vld [vmem:[%s210 + $0x900] sm:$0xff]
          %v3621 = vld [vmem:[%s210 + $0x908] sm:$0xff]
          %v3622 = vld [vmem:[%s210 + $0x910] sm:$0xff]
          %v3623 = vld [vmem:[%s210 + $0x918] sm:$0xff]
          %v3624 = vld [vmem:[%s210 + $0x920] sm:$0xff]
          %v3625 = vld [vmem:[%s210 + $0x928] sm:$0xff]
          %v3626 = vld [vmem:[%s210 + $0x930] sm:$0xff]
          %v3627 = vld [vmem:[%s210 + $0x938] sm:$0xff]
          %v3628 = vld [vmem:[%s210 + $0x940] sm:$0xff]
          %v3629 = vld [vmem:[%s210 + $0x948] sm:$0xff]
          %v3630 = vld [vmem:[%s210 + $0x950] sm:$0xff]
          %v3631 = vld [vmem:[%s210 + $0x958] sm:$0xff]
          %v3632 = vld [vmem:[%s210 + $0x960] sm:$0xff]
          %v3633 = vld [vmem:[%s210 + $0x968] sm:$0xff]
          %v3634 = vld [vmem:[%s210 + $0x970] sm:$0xff]
          %v3635 = vld [vmem:[%s210 + $0x978] sm:$0xff]
          %v3636 = vld [vmem:[%s210 + $0x980] sm:$0xff]
          %v3637 = vld [vmem:[%s210 + $0x988] sm:$0xff]
          %v3638 = vld [vmem:[%s210 + $0x990] sm:$0xff]
          %v3639 = vld [vmem:[%s210 + $0x998] sm:$0xff]
          %v3640 = vld [vmem:[%s210 + $0x9a0] sm:$0xff]
          %v3641 = vld [vmem:[%s210 + $0x9a8] sm:$0xff]
          %v3642 = vld [vmem:[%s210 + $0x9b0] sm:$0xff]
          %v3643 = vld [vmem:[%s210 + $0x9b8] sm:$0xff]
          %v3644 = vld [vmem:[%s210 + $0x9c0] sm:$0xff]
          %v3645 = vld [vmem:[%s210 + $0x9c8] sm:$0xff]
          %v3646 = vld [vmem:[%s210 + $0x9d0] sm:$0xff]
          %v3647 = vld [vmem:[%s210 + $0x9d8] sm:$0xff]
          %v3648 = vld [vmem:[%s210 + $0x9e0] sm:$0xff]
          %v3649 = vld [vmem:[%s210 + $0x9e8] sm:$0xff]
          %v3650 = vld [vmem:[%s210 + $0x9f0] sm:$0xff]
          %v3651 = vld [vmem:[%s210 + $0x9f8] sm:$0xff]
          %v3652 = vld [vmem:[%s210 + $0xa00] sm:$0xff]
          %v3653 = vld [vmem:[%s210 + $0xa08] sm:$0xff]
          %v3654 = vld [vmem:[%s210 + $0xa10] sm:$0xff]
          %v3655 = vld [vmem:[%s210 + $0xa18] sm:$0xff]
          %v3656 = vld [vmem:[%s210 + $0xa20] sm:$0xff]
          %v3657 = vld [vmem:[%s210 + $0xa28] sm:$0xff]
          %v3658 = vld [vmem:[%s210 + $0xa30] sm:$0xff]
          %v3659 = vld [vmem:[%s210 + $0xa38] sm:$0xff]
          %v3660 = vld [vmem:[%s210 + $0xa40] sm:$0xff]
          %v3661 = vld [vmem:[%s210 + $0xa48] sm:$0xff]
          %v3662 = vld [vmem:[%s210 + $0xa50] sm:$0xff]
          %v3663 = vld [vmem:[%s210 + $0xa58] sm:$0xff]
          %v3664 = vld [vmem:[%s210 + $0xa60] sm:$0xff]
          %v3665 = vld [vmem:[%s210 + $0xa68] sm:$0xff]
          %v3666 = vld [vmem:[%s210 + $0xa70] sm:$0xff]
          %v3667 = vld [vmem:[%s210 + $0xa78] sm:$0xff]
          %v3668 = vld [vmem:[%s210 + $0xa80] sm:$0xff]
          %v3669 = vld [vmem:[%s210 + $0xa88] sm:$0xff]
          %v3670 = vld [vmem:[%s210 + $0xa90] sm:$0xff]
          %v3671 = vld [vmem:[%s210 + $0xa98] sm:$0xff]
          %v3672 = vld [vmem:[%s210 + $0xaa0] sm:$0xff]
          %v3673 = vld [vmem:[%s210 + $0xaa8] sm:$0xff]
          %v3674 = vld [vmem:[%s210 + $0xab0] sm:$0xff]
          %v3675 = vld [vmem:[%s210 + $0xab8] sm:$0xff]
          %v3676 = vld [vmem:[%s210 + $0xac0] sm:$0xff]
          %v3677 = vld [vmem:[%s210 + $0xac8] sm:$0xff]
          %v3678 = vld [vmem:[%s210 + $0xad0] sm:$0xff]
          %v3679 = vld [vmem:[%s210 + $0xad8] sm:$0xff]
          %v3680 = vld [vmem:[%s210 + $0xae0] sm:$0xff]
          %v3681 = vld [vmem:[%s210 + $0xae8] sm:$0xff]
          %v3682 = vld [vmem:[%s210 + $0xaf0] sm:$0xff]
          %v3683 = vld [vmem:[%s210 + $0xaf8] sm:$0xff]
          %v3684 = vld [vmem:[%s210 + $0xb00] sm:$0xff]
          %v3685 = vld [vmem:[%s210 + $0xb08] sm:$0xff]
          %v3686 = vld [vmem:[%s210 + $0xb10] sm:$0xff]
          %v3687 = vld [vmem:[%s210 + $0xb18] sm:$0xff]
          %v3688 = vld [vmem:[%s210 + $0xb20] sm:$0xff]
          %v3689 = vld [vmem:[%s210 + $0xb28] sm:$0xff]
          %v3690 = vld [vmem:[%s210 + $0xb30] sm:$0xff]
          %v3691 = vld [vmem:[%s210 + $0xb38] sm:$0xff]
          %v3692 = vld [vmem:[%s210 + $0xb40] sm:$0xff]
          %v3693 = vld [vmem:[%s210 + $0xb48] sm:$0xff]
          %v3694 = vld [vmem:[%s210 + $0xb50] sm:$0xff]
          %v3695 = vld [vmem:[%s210 + $0xb58] sm:$0xff]
          %v3696 = vld [vmem:[%s210 + $0xb60] sm:$0xff]
          %v3697 = vld [vmem:[%s210 + $0xb68] sm:$0xff]
          %v3698 = vld [vmem:[%s210 + $0xb70] sm:$0xff]
          %v3699 = vld [vmem:[%s210 + $0xb78] sm:$0xff]
          %v3700 = vld [vmem:[%s210 + $0xb80] sm:$0xff]
          %v3701 = vld [vmem:[%s210 + $0xb88] sm:$0xff]
          %v3702 = vld [vmem:[%s210 + $0xb90] sm:$0xff]
          %v3703 = vld [vmem:[%s210 + $0xb98] sm:$0xff]
          %v3704 = vld [vmem:[%s210 + $0xba0] sm:$0xff]
          %v3705 = vld [vmem:[%s210 + $0xba8] sm:$0xff]
          %v3706 = vld [vmem:[%s210 + $0xbb0] sm:$0xff]
          %v3707 = vld [vmem:[%s210 + $0xbb8] sm:$0xff]
          %v3708 = vld [vmem:[%s210 + $0xbc0] sm:$0xff]
          %v3709 = vld [vmem:[%s210 + $0xbc8] sm:$0xff]
          %v3710 = vld [vmem:[%s210 + $0xbd0] sm:$0xff]
          %v3711 = vld [vmem:[%s210 + $0xbd8] sm:$0xff]
          %v3712 = vld [vmem:[%s210 + $0xbe0] sm:$0xff]
          %v3713 = vld [vmem:[%s210 + $0xbe8] sm:$0xff]
          %v3714 = vld [vmem:[%s210 + $0xbf0] sm:$0xff]
          %v3715 = vld [vmem:[%s210 + $0xbf8] sm:$0xff]
          %v3716 = vld [vmem:[%s210 + $0xc00] sm:$0xff]
          %v3717 = vld [vmem:[%s210 + $0xc08] sm:$0xff]
          %v3718 = vld [vmem:[%s210 + $0xc10] sm:$0xff]
          %v3719 = vld [vmem:[%s210 + $0xc18] sm:$0xff]
          %v3720 = vld [vmem:[%s210 + $0xc20] sm:$0xff]
          %v3721 = vld [vmem:[%s210 + $0xc28] sm:$0xff]
          %v3722 = vld [vmem:[%s210 + $0xc30] sm:$0xff]
          %v3723 = vld [vmem:[%s210 + $0xc38] sm:$0xff]
          %v3724 = vld [vmem:[%s210 + $0xc40] sm:$0xff]
          %v3725 = vld [vmem:[%s210 + $0xc48] sm:$0xff]
          %v3726 = vld [vmem:[%s210 + $0xc50] sm:$0xff]
          %v3727 = vld [vmem:[%s210 + $0xc58] sm:$0xff]
          %v3728 = vld [vmem:[%s210 + $0xc60] sm:$0xff]
          %v3729 = vld [vmem:[%s210 + $0xc68] sm:$0xff]
          %v3730 = vld [vmem:[%s210 + $0xc70] sm:$0xff]
          %v3731 = vld [vmem:[%s210 + $0xc78] sm:$0xff]
          %v3732 = vld [vmem:[%s210 + $0xc80] sm:$0xff]
          %v3733 = vld [vmem:[%s210 + $0xc88] sm:$0xff]
          %v3734 = vld [vmem:[%s210 + $0xc90] sm:$0xff]
          %v3735 = vld [vmem:[%s210 + $0xc98] sm:$0xff]
          %v3736 = vld [vmem:[%s210 + $0xca0] sm:$0xff]
          %v3737 = vld [vmem:[%s210 + $0xca8] sm:$0xff]
          %v3738 = vld [vmem:[%s210 + $0xcb0] sm:$0xff]
          %v3739 = vld [vmem:[%s210 + $0xcb8] sm:$0xff]
          %v3740 = vld [vmem:[%s210 + $0xcc0] sm:$0xff]
          %v3741 = vld [vmem:[%s210 + $0xcc8] sm:$0xff]
          %v3742 = vld [vmem:[%s210 + $0xcd0] sm:$0xff]
          %v3743 = vld [vmem:[%s210 + $0xcd8] sm:$0xff]
          %v3744 = vld [vmem:[%s210 + $0xce0] sm:$0xff]
          %v3745 = vld [vmem:[%s210 + $0xce8] sm:$0xff]
          %v3746 = vld [vmem:[%s210 + $0xcf0] sm:$0xff]
          %v3747 = vld [vmem:[%s210 + $0xcf8] sm:$0xff]
          %v3748 = vld [vmem:[%s210 + $0xd00] sm:$0xff]
          %v3749 = vld [vmem:[%s210 + $0xd08] sm:$0xff]
          %v3750 = vld [vmem:[%s210 + $0xd10] sm:$0xff]
          %v3751 = vld [vmem:[%s210 + $0xd18] sm:$0xff]
          %v3752 = vld [vmem:[%s210 + $0xd20] sm:$0xff]
          %v3753 = vld [vmem:[%s210 + $0xd28] sm:$0xff]
          %v3754 = vld [vmem:[%s210 + $0xd30] sm:$0xff]
          %v3755 = vld [vmem:[%s210 + $0xd38] sm:$0xff]
          %v3756 = vld [vmem:[%s210 + $0xd40] sm:$0xff]
          %v3757 = vld [vmem:[%s210 + $0xd48] sm:$0xff]
          %v3758 = vld [vmem:[%s210 + $0xd50] sm:$0xff]
          %v3759 = vld [vmem:[%s210 + $0xd58] sm:$0xff]
          %v3760 = vld [vmem:[%s210 + $0xd60] sm:$0xff]
          %v3761 = vld [vmem:[%s210 + $0xd68] sm:$0xff]
          %v3762 = vld [vmem:[%s210 + $0xd70] sm:$0xff]
          %v3763 = vld [vmem:[%s210 + $0xd78] sm:$0xff]
          %v3764 = vld [vmem:[%s210 + $0xd80] sm:$0xff]
          %v3765 = vld [vmem:[%s210 + $0xd88] sm:$0xff]
          %v3766 = vld [vmem:[%s210 + $0xd90] sm:$0xff]
          %v3767 = vld [vmem:[%s210 + $0xd98] sm:$0xff]
          %v3768 = vld [vmem:[%s210 + $0xda0] sm:$0xff]
          %v3769 = vld [vmem:[%s210 + $0xda8] sm:$0xff]
          %v3770 = vld [vmem:[%s210 + $0xdb0] sm:$0xff]
          %v3771 = vld [vmem:[%s210 + $0xdb8] sm:$0xff]
          %v3772 = vld [vmem:[%s210 + $0xdc0] sm:$0xff]
          %v3773 = vld [vmem:[%s210 + $0xdc8] sm:$0xff]
          %v3774 = vld [vmem:[%s210 + $0xdd0] sm:$0xff]
          %v3775 = vld [vmem:[%s210 + $0xdd8] sm:$0xff]
          %v3776 = vld [vmem:[%s210 + $0xde0] sm:$0xff]
          %v3777 = vld [vmem:[%s210 + $0xde8] sm:$0xff]
          %v3778 = vld [vmem:[%s210 + $0xdf0] sm:$0xff]
          %v3779 = vld [vmem:[%s210 + $0xdf8] sm:$0xff]
          %v3780 = vld [vmem:[%s210 + $0xe00] sm:$0xff]
          %v3781 = vld [vmem:[%s210 + $0xe08] sm:$0xff]
          %v3782 = vld [vmem:[%s210 + $0xe10] sm:$0xff]
          %v3783 = vld [vmem:[%s210 + $0xe18] sm:$0xff]
          %v3784 = vld [vmem:[%s210 + $0xe20] sm:$0xff]
          %v3785 = vld [vmem:[%s210 + $0xe28] sm:$0xff]
          %v3786 = vld [vmem:[%s210 + $0xe30] sm:$0xff]
          %v3787 = vld [vmem:[%s210 + $0xe38] sm:$0xff]
          %v3788 = vld [vmem:[%s210 + $0xe40] sm:$0xff]
          %v3789 = vld [vmem:[%s210 + $0xe48] sm:$0xff]
          %v3790 = vld [vmem:[%s210 + $0xe50] sm:$0xff]
          %v3791 = vld [vmem:[%s210 + $0xe58] sm:$0xff]
          %v3792 = vld [vmem:[%s210 + $0xe60] sm:$0xff]
          %v3793 = vld [vmem:[%s210 + $0xe68] sm:$0xff]
          %v3794 = vld [vmem:[%s210 + $0xe70] sm:$0xff]
          %v3795 = vld [vmem:[%s210 + $0xe78] sm:$0xff]
          %v3796 = vld [vmem:[%s210 + $0xe80] sm:$0xff]
          %v3797 = vld [vmem:[%s210 + $0xe88] sm:$0xff]
          %v3798 = vld [vmem:[%s210 + $0xe90] sm:$0xff]
          %v3799 = vld [vmem:[%s210 + $0xe98] sm:$0xff]
          %v3800 = vld [vmem:[%s210 + $0xea0] sm:$0xff]
          %v3801 = vld [vmem:[%s210 + $0xea8] sm:$0xff]
          %v3802 = vld [vmem:[%s210 + $0xeb0] sm:$0xff]
          %v3803 = vld [vmem:[%s210 + $0xeb8] sm:$0xff]
          %v3804 = vld [vmem:[%s210 + $0xec0] sm:$0xff]
          %v3805 = vld [vmem:[%s210 + $0xec8] sm:$0xff]
          %v3806 = vld [vmem:[%s210 + $0xed0] sm:$0xff]
          %v3807 = vld [vmem:[%s210 + $0xed8] sm:$0xff]
          %v3808 = vld [vmem:[%s210 + $0xee0] sm:$0xff]
          %v3809 = vld [vmem:[%s210 + $0xee8] sm:$0xff]
          %v3810 = vld [vmem:[%s210 + $0xef0] sm:$0xff]
          %v3811 = vld [vmem:[%s210 + $0xef8] sm:$0xff]
          %v3812 = vld [vmem:[%s210 + $0xf00] sm:$0xff]
          %v3813 = vld [vmem:[%s210 + $0xf08] sm:$0xff]
          %v3814 = vld [vmem:[%s210 + $0xf10] sm:$0xff]
          %v3815 = vld [vmem:[%s210 + $0xf18] sm:$0xff]
          %v3816 = vld [vmem:[%s210 + $0xf20] sm:$0xff]
          %v3817 = vld [vmem:[%s210 + $0xf28] sm:$0xff]
          %v3818 = vld [vmem:[%s210 + $0xf30] sm:$0xff]
          %v3819 = vld [vmem:[%s210 + $0xf38] sm:$0xff]
          %v3820 = vld [vmem:[%s210 + $0xf40] sm:$0xff]
          %v3821 = vld [vmem:[%s210 + $0xf48] sm:$0xff]
          %v3822 = vld [vmem:[%s210 + $0xf50] sm:$0xff]
          %v3823 = vld [vmem:[%s210 + $0xf58] sm:$0xff]
          %v3824 = vld [vmem:[%s210 + $0xf60] sm:$0xff]
          %v3825 = vld [vmem:[%s210 + $0xf68] sm:$0xff]
          %v3826 = vld [vmem:[%s210 + $0xf70] sm:$0xff]
          %v3827 = vld [vmem:[%s210 + $0xf78] sm:$0xff]
          %v3828 = vld [vmem:[%s210 + $0xf80] sm:$0xff]
          %v3829 = vld [vmem:[%s210 + $0xf88] sm:$0xff]
          %v3830 = vld [vmem:[%s210 + $0xf90] sm:$0xff]
          %v3831 = vld [vmem:[%s210 + $0xf98] sm:$0xff]
          %v3832 = vld [vmem:[%s210 + $0xfa0] sm:$0xff]
          %v3833 = vld [vmem:[%s210 + $0xfa8] sm:$0xff]
          %v3834 = vld [vmem:[%s210 + $0xfb0] sm:$0xff]
          %v3835 = vld [vmem:[%s210 + $0xfb8] sm:$0xff]
          %v3836 = vld [vmem:[%s210 + $0xfc0] sm:$0xff]
          %v3837 = vld [vmem:[%s210 + $0xfc8] sm:$0xff]
          %v3838 = vld [vmem:[%s210 + $0xfd0] sm:$0xff]
          %v3839 = vld [vmem:[%s210 + $0xfd8] sm:$0xff]
          %v3840 = vld [vmem:[%s210 + $0xfe0] sm:$0xff]
          %v3841 = vld [vmem:[%s210 + $0xfe8] sm:$0xff]
          %v3842 = vld [vmem:[%s210 + $0xff0] sm:$0xff]
          %v3843 = vld [vmem:[%s210 + $0xff8] sm:$0xff]
          %v3844 = vsub.f32 %v2820, %v3332
          %v3845 = vsub.f32 %v2821, %v3333
          %v3846 = vsub.f32 %v2822, %v3334
          %v3847 = vsub.f32 %v2823, %v3335
          %v3848 = vsub.f32 %v2824, %v3336
          %v3849 = vsub.f32 %v2825, %v3337
          %v3850 = vsub.f32 %v2826, %v3338
          %v3851 = vsub.f32 %v2827, %v3339
          %v3852 = vsub.f32 %v2828, %v3340
          %v3853 = vsub.f32 %v2829, %v3341
          %v3854 = vsub.f32 %v2830, %v3342
          %v3855 = vsub.f32 %v2831, %v3343
          %v3856 = vsub.f32 %v2832, %v3344
          %v3857 = vsub.f32 %v2833, %v3345
          %v3858 = vsub.f32 %v2834, %v3346
          %v3859 = vsub.f32 %v2835, %v3347
          %v3860 = vsub.f32 %v2836, %v3348
          %v3861 = vsub.f32 %v2837, %v3349
          %v3862 = vsub.f32 %v2838, %v3350
          %v3863 = vsub.f32 %v2839, %v3351
          %v3864 = vsub.f32 %v2840, %v3352
          %v3865 = vsub.f32 %v2841, %v3353
          %v3866 = vsub.f32 %v2842, %v3354
          %v3867 = vsub.f32 %v2843, %v3355
          %v3868 = vsub.f32 %v2844, %v3356
          %v3869 = vsub.f32 %v2845, %v3357
          %v3870 = vsub.f32 %v2846, %v3358
          %v3871 = vsub.f32 %v2847, %v3359
          %v3872 = vsub.f32 %v2848, %v3360
          %v3873 = vsub.f32 %v2849, %v3361
          %v3874 = vsub.f32 %v2850, %v3362
          %v3875 = vsub.f32 %v2851, %v3363
          %v3876 = vsub.f32 %v2852, %v3364
          %v3877 = vsub.f32 %v2853, %v3365
          %v3878 = vsub.f32 %v2854, %v3366
          %v3879 = vsub.f32 %v2855, %v3367
          %v3880 = vsub.f32 %v2856, %v3368
          %v3881 = vsub.f32 %v2857, %v3369
          %v3882 = vsub.f32 %v2858, %v3370
          %v3883 = vsub.f32 %v2859, %v3371
          %v3884 = vsub.f32 %v2860, %v3372
          %v3885 = vsub.f32 %v2861, %v3373
          %v3886 = vsub.f32 %v2862, %v3374
          %v3887 = vsub.f32 %v2863, %v3375
          %v3888 = vsub.f32 %v2864, %v3376
          %v3889 = vsub.f32 %v2865, %v3377
          %v3890 = vsub.f32 %v2866, %v3378
          %v3891 = vsub.f32 %v2867, %v3379
          %v3892 = vsub.f32 %v2868, %v3380
          %v3893 = vsub.f32 %v2869, %v3381
          %v3894 = vsub.f32 %v2870, %v3382
          %v3895 = vsub.f32 %v2871, %v3383
          %v3896 = vsub.f32 %v2872, %v3384
          %v3897 = vsub.f32 %v2873, %v3385
          %v3898 = vsub.f32 %v2874, %v3386
          %v3899 = vsub.f32 %v2875, %v3387
          %v3900 = vsub.f32 %v2876, %v3388
          %v3901 = vsub.f32 %v2877, %v3389
          %v3902 = vsub.f32 %v2878, %v3390
          %v3903 = vsub.f32 %v2879, %v3391
          %v3904 = vsub.f32 %v2880, %v3392
          %v3905 = vsub.f32 %v2881, %v3393
          %v3906 = vsub.f32 %v2882, %v3394
          %v3907 = vsub.f32 %v2883, %v3395
          %v3908 = vsub.f32 %v2884, %v3396
          %v3909 = vsub.f32 %v2885, %v3397
          %v3910 = vsub.f32 %v2886, %v3398
          %v3911 = vsub.f32 %v2887, %v3399
          %v3912 = vsub.f32 %v2888, %v3400
          %v3913 = vsub.f32 %v2889, %v3401
          %v3914 = vsub.f32 %v2890, %v3402
          %v3915 = vsub.f32 %v2891, %v3403
          %v3916 = vsub.f32 %v2892, %v3404
          %v3917 = vsub.f32 %v2893, %v3405
          %v3918 = vsub.f32 %v2894, %v3406
          %v3919 = vsub.f32 %v2895, %v3407
          %v3920 = vsub.f32 %v2896, %v3408
          %v3921 = vsub.f32 %v2897, %v3409
          %v3922 = vsub.f32 %v2898, %v3410
          %v3923 = vsub.f32 %v2899, %v3411
          %v3924 = vsub.f32 %v2900, %v3412
          %v3925 = vsub.f32 %v2901, %v3413
          %v3926 = vsub.f32 %v2902, %v3414
          %v3927 = vsub.f32 %v2903, %v3415
          %v3928 = vsub.f32 %v2904, %v3416
          %v3929 = vsub.f32 %v2905, %v3417
          %v3930 = vsub.f32 %v2906, %v3418
          %v3931 = vsub.f32 %v2907, %v3419
          %v3932 = vsub.f32 %v2908, %v3420
          %v3933 = vsub.f32 %v2909, %v3421
          %v3934 = vsub.f32 %v2910, %v3422
          %v3935 = vsub.f32 %v2911, %v3423
          %v3936 = vsub.f32 %v2912, %v3424
          %v3937 = vsub.f32 %v2913, %v3425
          %v3938 = vsub.f32 %v2914, %v3426
          %v3939 = vsub.f32 %v2915, %v3427
          %v3940 = vsub.f32 %v2916, %v3428
          %v3941 = vsub.f32 %v2917, %v3429
          %v3942 = vsub.f32 %v2918, %v3430
          %v3943 = vsub.f32 %v2919, %v3431
          %v3944 = vsub.f32 %v2920, %v3432
          %v3945 = vsub.f32 %v2921, %v3433
          %v3946 = vsub.f32 %v2922, %v3434
          %v3947 = vsub.f32 %v2923, %v3435
          %v3948 = vsub.f32 %v2924, %v3436
          %v3949 = vsub.f32 %v2925, %v3437
          %v3950 = vsub.f32 %v2926, %v3438
          %v3951 = vsub.f32 %v2927, %v3439
          %v3952 = vsub.f32 %v2928, %v3440
          %v3953 = vsub.f32 %v2929, %v3441
          %v3954 = vsub.f32 %v2930, %v3442
          %v3955 = vsub.f32 %v2931, %v3443
          %v3956 = vsub.f32 %v2932, %v3444
          %v3957 = vsub.f32 %v2933, %v3445
          %v3958 = vsub.f32 %v2934, %v3446
          %v3959 = vsub.f32 %v2935, %v3447
          %v3960 = vsub.f32 %v2936, %v3448
          %v3961 = vsub.f32 %v2937, %v3449
          %v3962 = vsub.f32 %v2938, %v3450
          %v3963 = vsub.f32 %v2939, %v3451
          %v3964 = vsub.f32 %v2940, %v3452
          %v3965 = vsub.f32 %v2941, %v3453
          %v3966 = vsub.f32 %v2942, %v3454
          %v3967 = vsub.f32 %v2943, %v3455
          %v3968 = vsub.f32 %v2944, %v3456
          %v3969 = vsub.f32 %v2945, %v3457
          %v3970 = vsub.f32 %v2946, %v3458
          %v3971 = vsub.f32 %v2947, %v3459
          %v3972 = vsub.f32 %v2948, %v3460
          %v3973 = vsub.f32 %v2949, %v3461
          %v3974 = vsub.f32 %v2950, %v3462
          %v3975 = vsub.f32 %v2951, %v3463
          %v3976 = vsub.f32 %v2952, %v3464
          %v3977 = vsub.f32 %v2953, %v3465
          %v3978 = vsub.f32 %v2954, %v3466
          %v3979 = vsub.f32 %v2955, %v3467
          %v3980 = vsub.f32 %v2956, %v3468
          %v3981 = vsub.f32 %v2957, %v3469
          %v3982 = vsub.f32 %v2958, %v3470
          %v3983 = vsub.f32 %v2959, %v3471
          %v3984 = vsub.f32 %v2960, %v3472
          %v3985 = vsub.f32 %v2961, %v3473
          %v3986 = vsub.f32 %v2962, %v3474
          %v3987 = vsub.f32 %v2963, %v3475
          %v3988 = vsub.f32 %v2964, %v3476
          %v3989 = vsub.f32 %v2965, %v3477
          %v3990 = vsub.f32 %v2966, %v3478
          %v3991 = vsub.f32 %v2967, %v3479
          %v3992 = vsub.f32 %v2968, %v3480
          %v3993 = vsub.f32 %v2969, %v3481
          %v3994 = vsub.f32 %v2970, %v3482
          %v3995 = vsub.f32 %v2971, %v3483
          %v3996 = vsub.f32 %v2972, %v3484
          %v3997 = vsub.f32 %v2973, %v3485
          %v3998 = vsub.f32 %v2974, %v3486
          %v3999 = vsub.f32 %v2975, %v3487
          %v4000 = vsub.f32 %v2976, %v3488
          %v4001 = vsub.f32 %v2977, %v3489
          %v4002 = vsub.f32 %v2978, %v3490
          %v4003 = vsub.f32 %v2979, %v3491
          %v4004 = vsub.f32 %v2980, %v3492
          %v4005 = vsub.f32 %v2981, %v3493
          %v4006 = vsub.f32 %v2982, %v3494
          %v4007 = vsub.f32 %v2983, %v3495
          %v4008 = vsub.f32 %v2984, %v3496
          %v4009 = vsub.f32 %v2985, %v3497
          %v4010 = vsub.f32 %v2986, %v3498
          %v4011 = vsub.f32 %v2987, %v3499
          %v4012 = vsub.f32 %v2988, %v3500
          %v4013 = vsub.f32 %v2989, %v3501
          %v4014 = vsub.f32 %v2990, %v3502
          %v4015 = vsub.f32 %v2991, %v3503
          %v4016 = vsub.f32 %v2992, %v3504
          %v4017 = vsub.f32 %v2993, %v3505
          %v4018 = vsub.f32 %v2994, %v3506
          %v4019 = vsub.f32 %v2995, %v3507
          %v4020 = vsub.f32 %v2996, %v3508
          %v4021 = vsub.f32 %v2997, %v3509
          %v4022 = vsub.f32 %v2998, %v3510
          %v4023 = vsub.f32 %v2999, %v3511
          %v4024 = vsub.f32 %v3000, %v3512
          %v4025 = vsub.f32 %v3001, %v3513
          %v4026 = vsub.f32 %v3002, %v3514
          %v4027 = vsub.f32 %v3003, %v3515
          %v4028 = vsub.f32 %v3004, %v3516
          %v4029 = vsub.f32 %v3005, %v3517
          %v4030 = vsub.f32 %v3006, %v3518
          %v4031 = vsub.f32 %v3007, %v3519
          %v4032 = vsub.f32 %v3008, %v3520
          %v4033 = vsub.f32 %v3009, %v3521
          %v4034 = vsub.f32 %v3010, %v3522
          %v4035 = vsub.f32 %v3011, %v3523
          %v4036 = vsub.f32 %v3012, %v3524
          %v4037 = vsub.f32 %v3013, %v3525
          %v4038 = vsub.f32 %v3014, %v3526
          %v4039 = vsub.f32 %v3015, %v3527
          %v4040 = vsub.f32 %v3016, %v3528
          %v4041 = vsub.f32 %v3017, %v3529
          %v4042 = vsub.f32 %v3018, %v3530
          %v4043 = vsub.f32 %v3019, %v3531
          %v4044 = vsub.f32 %v3020, %v3532
          %v4045 = vsub.f32 %v3021, %v3533
          %v4046 = vsub.f32 %v3022, %v3534
          %v4047 = vsub.f32 %v3023, %v3535
          %v4048 = vsub.f32 %v3024, %v3536
          %v4049 = vsub.f32 %v3025, %v3537
          %v4050 = vsub.f32 %v3026, %v3538
          %v4051 = vsub.f32 %v3027, %v3539
          %v4052 = vsub.f32 %v3028, %v3540
          %v4053 = vsub.f32 %v3029, %v3541
          %v4054 = vsub.f32 %v3030, %v3542
          %v4055 = vsub.f32 %v3031, %v3543
          %v4056 = vsub.f32 %v3032, %v3544
          %v4057 = vsub.f32 %v3033, %v3545
          %v4058 = vsub.f32 %v3034, %v3546
          %v4059 = vsub.f32 %v3035, %v3547
          %v4060 = vsub.f32 %v3036, %v3548
          %v4061 = vsub.f32 %v3037, %v3549
          %v4062 = vsub.f32 %v3038, %v3550
          %v4063 = vsub.f32 %v3039, %v3551
          %v4064 = vsub.f32 %v3040, %v3552
          %v4065 = vsub.f32 %v3041, %v3553
          %v4066 = vsub.f32 %v3042, %v3554
          %v4067 = vsub.f32 %v3043, %v3555
          %v4068 = vsub.f32 %v3044, %v3556
          %v4069 = vsub.f32 %v3045, %v3557
          %v4070 = vsub.f32 %v3046, %v3558
          %v4071 = vsub.f32 %v3047, %v3559
          %v4072 = vsub.f32 %v3048, %v3560
          %v4073 = vsub.f32 %v3049, %v3561
          %v4074 = vsub.f32 %v3050, %v3562
          %v4075 = vsub.f32 %v3051, %v3563
          %v4076 = vsub.f32 %v3052, %v3564
          %v4077 = vsub.f32 %v3053, %v3565
          %v4078 = vsub.f32 %v3054, %v3566
          %v4079 = vsub.f32 %v3055, %v3567
          %v4080 = vsub.f32 %v3056, %v3568
          %v4081 = vsub.f32 %v3057, %v3569
          %v4082 = vsub.f32 %v3058, %v3570
          %v4083 = vsub.f32 %v3059, %v3571
          %v4084 = vsub.f32 %v3060, %v3572
          %v4085 = vsub.f32 %v3061, %v3573
          %v4086 = vsub.f32 %v3062, %v3574
          %v4087 = vsub.f32 %v3063, %v3575
          %v4088 = vsub.f32 %v3064, %v3576
          %v4089 = vsub.f32 %v3065, %v3577
          %v4090 = vsub.f32 %v3066, %v3578
          %v4091 = vsub.f32 %v3067, %v3579
          %v4092 = vsub.f32 %v3068, %v3580
          %v4093 = vsub.f32 %v3069, %v3581
          %v4094 = vsub.f32 %v3070, %v3582
          %v4095 = vsub.f32 %v3071, %v3583
          %v4096 = vsub.f32 %v3072, %v3584
          %v4097 = vsub.f32 %v3073, %v3585
          %v4098 = vsub.f32 %v3074, %v3586
          %v4099 = vsub.f32 %v3075, %v3587
          %v4100 = vsub.f32 %v3076, %v3588
          %v4101 = vsub.f32 %v3077, %v3589
          %v4102 = vsub.f32 %v3078, %v3590
          %v4103 = vsub.f32 %v3079, %v3591
          %v4104 = vsub.f32 %v3080, %v3592
          %v4105 = vsub.f32 %v3081, %v3593
          %v4106 = vsub.f32 %v3082, %v3594
          %v4107 = vsub.f32 %v3083, %v3595
          %v4108 = vsub.f32 %v3084, %v3596
          %v4109 = vsub.f32 %v3085, %v3597
          %v4110 = vsub.f32 %v3086, %v3598
          %v4111 = vsub.f32 %v3087, %v3599
          %v4112 = vsub.f32 %v3088, %v3600
          %v4113 = vsub.f32 %v3089, %v3601
          %v4114 = vsub.f32 %v3090, %v3602
          %v4115 = vsub.f32 %v3091, %v3603
          %v4116 = vsub.f32 %v3092, %v3604
          %v4117 = vsub.f32 %v3093, %v3605
          %v4118 = vsub.f32 %v3094, %v3606
          %v4119 = vsub.f32 %v3095, %v3607
          %v4120 = vsub.f32 %v3096, %v3608
          %v4121 = vsub.f32 %v3097, %v3609
          %v4122 = vsub.f32 %v3098, %v3610
          %v4123 = vsub.f32 %v3099, %v3611
          %v4124 = vsub.f32 %v3100, %v3612
          %v4125 = vsub.f32 %v3101, %v3613
          %v4126 = vsub.f32 %v3102, %v3614
          %v4127 = vsub.f32 %v3103, %v3615
          %v4128 = vsub.f32 %v3104, %v3616
          %v4129 = vsub.f32 %v3105, %v3617
          %v4130 = vsub.f32 %v3106, %v3618
          %v4131 = vsub.f32 %v3107, %v3619
          %v4132 = vsub.f32 %v3108, %v3620
          %v4133 = vsub.f32 %v3109, %v3621
          %v4134 = vsub.f32 %v3110, %v3622
          %v4135 = vsub.f32 %v3111, %v3623
          %v4136 = vsub.f32 %v3112, %v3624
          %v4137 = vsub.f32 %v3113, %v3625
          %v4138 = vsub.f32 %v3114, %v3626
          %v4139 = vsub.f32 %v3115, %v3627
          %v4140 = vsub.f32 %v3116, %v3628
          %v4141 = vsub.f32 %v3117, %v3629
          %v4142 = vsub.f32 %v3118, %v3630
          %v4143 = vsub.f32 %v3119, %v3631
          %v4144 = vsub.f32 %v3120, %v3632
          %v4145 = vsub.f32 %v3121, %v3633
          %v4146 = vsub.f32 %v3122, %v3634
          %v4147 = vsub.f32 %v3123, %v3635
          %v4148 = vsub.f32 %v3124, %v3636
          %v4149 = vsub.f32 %v3125, %v3637
          %v4150 = vsub.f32 %v3126, %v3638
          %v4151 = vsub.f32 %v3127, %v3639
          %v4152 = vsub.f32 %v3128, %v3640
          %v4153 = vsub.f32 %v3129, %v3641
          %v4154 = vsub.f32 %v3130, %v3642
          %v4155 = vsub.f32 %v3131, %v3643
          %v4156 = vsub.f32 %v3132, %v3644
          %v4157 = vsub.f32 %v3133, %v3645
          %v4158 = vsub.f32 %v3134, %v3646
          %v4159 = vsub.f32 %v3135, %v3647
          %v4160 = vsub.f32 %v3136, %v3648
          %v4161 = vsub.f32 %v3137, %v3649
          %v4162 = vsub.f32 %v3138, %v3650
          %v4163 = vsub.f32 %v3139, %v3651
          %v4164 = vsub.f32 %v3140, %v3652
          %v4165 = vsub.f32 %v3141, %v3653
          %v4166 = vsub.f32 %v3142, %v3654
          %v4167 = vsub.f32 %v3143, %v3655
          %v4168 = vsub.f32 %v3144, %v3656
          %v4169 = vsub.f32 %v3145, %v3657
          %v4170 = vsub.f32 %v3146, %v3658
          %v4171 = vsub.f32 %v3147, %v3659
          %v4172 = vsub.f32 %v3148, %v3660
          %v4173 = vsub.f32 %v3149, %v3661
          %v4174 = vsub.f32 %v3150, %v3662
          %v4175 = vsub.f32 %v3151, %v3663
          %v4176 = vsub.f32 %v3152, %v3664
          %v4177 = vsub.f32 %v3153, %v3665
          %v4178 = vsub.f32 %v3154, %v3666
          %v4179 = vsub.f32 %v3155, %v3667
          %v4180 = vsub.f32 %v3156, %v3668
          %v4181 = vsub.f32 %v3157, %v3669
          %v4182 = vsub.f32 %v3158, %v3670
          %v4183 = vsub.f32 %v3159, %v3671
          %v4184 = vsub.f32 %v3160, %v3672
          %v4185 = vsub.f32 %v3161, %v3673
          %v4186 = vsub.f32 %v3162, %v3674
          %v4187 = vsub.f32 %v3163, %v3675
          %v4188 = vsub.f32 %v3164, %v3676
          %v4189 = vsub.f32 %v3165, %v3677
          %v4190 = vsub.f32 %v3166, %v3678
          %v4191 = vsub.f32 %v3167, %v3679
          %v4192 = vsub.f32 %v3168, %v3680
          %v4193 = vsub.f32 %v3169, %v3681
          %v4194 = vsub.f32 %v3170, %v3682
          %v4195 = vsub.f32 %v3171, %v3683
          %v4196 = vsub.f32 %v3172, %v3684
          %v4197 = vsub.f32 %v3173, %v3685
          %v4198 = vsub.f32 %v3174, %v3686
          %v4199 = vsub.f32 %v3175, %v3687
          %v4200 = vsub.f32 %v3176, %v3688
          %v4201 = vsub.f32 %v3177, %v3689
          %v4202 = vsub.f32 %v3178, %v3690
          %v4203 = vsub.f32 %v3179, %v3691
          %v4204 = vsub.f32 %v3180, %v3692
          %v4205 = vsub.f32 %v3181, %v3693
          %v4206 = vsub.f32 %v3182, %v3694
          %v4207 = vsub.f32 %v3183, %v3695
          %v4208 = vsub.f32 %v3184, %v3696
          %v4209 = vsub.f32 %v3185, %v3697
          %v4210 = vsub.f32 %v3186, %v3698
          %v4211 = vsub.f32 %v3187, %v3699
          %v4212 = vsub.f32 %v3188, %v3700
          %v4213 = vsub.f32 %v3189, %v3701
          %v4214 = vsub.f32 %v3190, %v3702
          %v4215 = vsub.f32 %v3191, %v3703
          %v4216 = vsub.f32 %v3192, %v3704
          %v4217 = vsub.f32 %v3193, %v3705
          %v4218 = vsub.f32 %v3194, %v3706
          %v4219 = vsub.f32 %v3195, %v3707
          %v4220 = vsub.f32 %v3196, %v3708
          %v4221 = vsub.f32 %v3197, %v3709
          %v4222 = vsub.f32 %v3198, %v3710
          %v4223 = vsub.f32 %v3199, %v3711
          %v4224 = vsub.f32 %v3200, %v3712
          %v4225 = vsub.f32 %v3201, %v3713
          %v4226 = vsub.f32 %v3202, %v3714
          %v4227 = vsub.f32 %v3203, %v3715
          %v4228 = vsub.f32 %v3204, %v3716
          %v4229 = vsub.f32 %v3205, %v3717
          %v4230 = vsub.f32 %v3206, %v3718
          %v4231 = vsub.f32 %v3207, %v3719
          %v4232 = vsub.f32 %v3208, %v3720
          %v4233 = vsub.f32 %v3209, %v3721
          %v4234 = vsub.f32 %v3210, %v3722
          %v4235 = vsub.f32 %v3211, %v3723
          %v4236 = vsub.f32 %v3212, %v3724
          %v4237 = vsub.f32 %v3213, %v3725
          %v4238 = vsub.f32 %v3214, %v3726
          %v4239 = vsub.f32 %v3215, %v3727
          %v4240 = vsub.f32 %v3216, %v3728
          %v4241 = vsub.f32 %v3217, %v3729
          %v4242 = vsub.f32 %v3218, %v3730
          %v4243 = vsub.f32 %v3219, %v3731
          %v4244 = vsub.f32 %v3220, %v3732
          %v4245 = vsub.f32 %v3221, %v3733
          %v4246 = vsub.f32 %v3222, %v3734
          %v4247 = vsub.f32 %v3223, %v3735
          %v4248 = vsub.f32 %v3224, %v3736
          %v4249 = vsub.f32 %v3225, %v3737
          %v4250 = vsub.f32 %v3226, %v3738
          %v4251 = vsub.f32 %v3227, %v3739
          %v4252 = vsub.f32 %v3228, %v3740
          %v4253 = vsub.f32 %v3229, %v3741
          %v4254 = vsub.f32 %v3230, %v3742
          %v4255 = vsub.f32 %v3231, %v3743
          %v4256 = vsub.f32 %v3232, %v3744
          %v4257 = vsub.f32 %v3233, %v3745
          %v4258 = vsub.f32 %v3234, %v3746
          %v4259 = vsub.f32 %v3235, %v3747
          %v4260 = vsub.f32 %v3236, %v3748
          %v4261 = vsub.f32 %v3237, %v3749
          %v4262 = vsub.f32 %v3238, %v3750
          %v4263 = vsub.f32 %v3239, %v3751
          %v4264 = vsub.f32 %v3240, %v3752
          %v4265 = vsub.f32 %v3241, %v3753
          %v4266 = vsub.f32 %v3242, %v3754
          %v4267 = vsub.f32 %v3243, %v3755
          %v4268 = vsub.f32 %v3244, %v3756
          %v4269 = vsub.f32 %v3245, %v3757
          %v4270 = vsub.f32 %v3246, %v3758
          %v4271 = vsub.f32 %v3247, %v3759
          %v4272 = vsub.f32 %v3248, %v3760
          %v4273 = vsub.f32 %v3249, %v3761
          %v4274 = vsub.f32 %v3250, %v3762
          %v4275 = vsub.f32 %v3251, %v3763
          %v4276 = vsub.f32 %v3252, %v3764
          %v4277 = vsub.f32 %v3253, %v3765
          %v4278 = vsub.f32 %v3254, %v3766
          %v4279 = vsub.f32 %v3255, %v3767
          %v4280 = vsub.f32 %v3256, %v3768
          %v4281 = vsub.f32 %v3257, %v3769
          %v4282 = vsub.f32 %v3258, %v3770
          %v4283 = vsub.f32 %v3259, %v3771
          %v4284 = vsub.f32 %v3260, %v3772
          %v4285 = vsub.f32 %v3261, %v3773
          %v4286 = vsub.f32 %v3262, %v3774
          %v4287 = vsub.f32 %v3263, %v3775
          %v4288 = vsub.f32 %v3264, %v3776
          %v4289 = vsub.f32 %v3265, %v3777
          %v4290 = vsub.f32 %v3266, %v3778
          %v4291 = vsub.f32 %v3267, %v3779
          %v4292 = vsub.f32 %v3268, %v3780
          %v4293 = vsub.f32 %v3269, %v3781
          %v4294 = vsub.f32 %v3270, %v3782
          %v4295 = vsub.f32 %v3271, %v3783
          %v4296 = vsub.f32 %v3272, %v3784
          %v4297 = vsub.f32 %v3273, %v3785
          %v4298 = vsub.f32 %v3274, %v3786
          %v4299 = vsub.f32 %v3275, %v3787
          %v4300 = vsub.f32 %v3276, %v3788
          %v4301 = vsub.f32 %v3277, %v3789
          %v4302 = vsub.f32 %v3278, %v3790
          %v4303 = vsub.f32 %v3279, %v3791
          %v4304 = vsub.f32 %v3280, %v3792
          %v4305 = vsub.f32 %v3281, %v3793
          %v4306 = vsub.f32 %v3282, %v3794
          %v4307 = vsub.f32 %v3283, %v3795
          %v4308 = vsub.f32 %v3284, %v3796
          %v4309 = vsub.f32 %v3285, %v3797
          %v4310 = vsub.f32 %v3286, %v3798
          %v4311 = vsub.f32 %v3287, %v3799
          %v4312 = vsub.f32 %v3288, %v3800
          %v4313 = vsub.f32 %v3289, %v3801
          %v4314 = vsub.f32 %v3290, %v3802
          %v4315 = vsub.f32 %v3291, %v3803
          %v4316 = vsub.f32 %v3292, %v3804
          %v4317 = vsub.f32 %v3293, %v3805
          %v4318 = vsub.f32 %v3294, %v3806
          %v4319 = vsub.f32 %v3295, %v3807
          %v4320 = vsub.f32 %v3296, %v3808
          %v4321 = vsub.f32 %v3297, %v3809
          %v4322 = vsub.f32 %v3298, %v3810
          %v4323 = vsub.f32 %v3299, %v3811
          %v4324 = vsub.f32 %v3300, %v3812
          %v4325 = vsub.f32 %v3301, %v3813
          %v4326 = vsub.f32 %v3302, %v3814
          %v4327 = vsub.f32 %v3303, %v3815
          %v4328 = vsub.f32 %v3304, %v3816
          %v4329 = vsub.f32 %v3305, %v3817
          %v4330 = vsub.f32 %v3306, %v3818
          %v4331 = vsub.f32 %v3307, %v3819
          %v4332 = vsub.f32 %v3308, %v3820
          %v4333 = vsub.f32 %v3309, %v3821
          %v4334 = vsub.f32 %v3310, %v3822
          %v4335 = vsub.f32 %v3311, %v3823
          %v4336 = vsub.f32 %v3312, %v3824
          %v4337 = vsub.f32 %v3313, %v3825
          %v4338 = vsub.f32 %v3314, %v3826
          %v4339 = vsub.f32 %v3315, %v3827
          %v4340 = vsub.f32 %v3316, %v3828
          %v4341 = vsub.f32 %v3317, %v3829
          %v4342 = vsub.f32 %v3318, %v3830
          %v4343 = vsub.f32 %v3319, %v3831
          %v4344 = vsub.f32 %v3320, %v3832
          %v4345 = vsub.f32 %v3321, %v3833
          %v4346 = vsub.f32 %v3322, %v3834
          %v4347 = vsub.f32 %v3323, %v3835
          %v4348 = vsub.f32 %v3324, %v3836
          %v4349 = vsub.f32 %v3325, %v3837
          %v4350 = vsub.f32 %v3326, %v3838
          %v4351 = vsub.f32 %v3327, %v3839
          %v4352 = vsub.f32 %v3328, %v3840
          %v4353 = vsub.f32 %v3329, %v3841
          %v4354 = vsub.f32 %v3330, %v3842
          %v4355 = vsub.f32 %v3331, %v3843
          %v4356 = vmul.f32 %v3844, %v3844
          %v4357 = vmul.f32 %v3845, %v3845
          %v4358 = vmul.f32 %v3846, %v3846
          %v4359 = vmul.f32 %v3847, %v3847
          %v4360 = vmul.f32 %v3848, %v3848
          %v4361 = vmul.f32 %v3849, %v3849
          %v4362 = vmul.f32 %v3850, %v3850
          %v4363 = vmul.f32 %v3851, %v3851
          %v4364 = vmul.f32 %v3852, %v3852
          %v4365 = vmul.f32 %v3853, %v3853
          %v4366 = vmul.f32 %v3854, %v3854
          %v4367 = vmul.f32 %v3855, %v3855
          %v4368 = vmul.f32 %v3856, %v3856
          %v4369 = vmul.f32 %v3857, %v3857
          %v4370 = vmul.f32 %v3858, %v3858
          %v4371 = vmul.f32 %v3859, %v3859
          %v4372 = vmul.f32 %v3860, %v3860
          %v4373 = vmul.f32 %v3861, %v3861
          %v4374 = vmul.f32 %v3862, %v3862
          %v4375 = vmul.f32 %v3863, %v3863
          %v4376 = vmul.f32 %v3864, %v3864
          %v4377 = vmul.f32 %v3865, %v3865
          %v4378 = vmul.f32 %v3866, %v3866
          %v4379 = vmul.f32 %v3867, %v3867
          %v4380 = vmul.f32 %v3868, %v3868
          %v4381 = vmul.f32 %v3869, %v3869
          %v4382 = vmul.f32 %v3870, %v3870
          %v4383 = vmul.f32 %v3871, %v3871
          %v4384 = vmul.f32 %v3872, %v3872
          %v4385 = vmul.f32 %v3873, %v3873
          %v4386 = vmul.f32 %v3874, %v3874
          %v4387 = vmul.f32 %v3875, %v3875
          %v4388 = vmul.f32 %v3876, %v3876
          %v4389 = vmul.f32 %v3877, %v3877
          %v4390 = vmul.f32 %v3878, %v3878
          %v4391 = vmul.f32 %v3879, %v3879
          %v4392 = vmul.f32 %v3880, %v3880
          %v4393 = vmul.f32 %v3881, %v3881
          %v4394 = vmul.f32 %v3882, %v3882
          %v4395 = vmul.f32 %v3883, %v3883
          %v4396 = vmul.f32 %v3884, %v3884
          %v4397 = vmul.f32 %v3885, %v3885
          %v4398 = vmul.f32 %v3886, %v3886
          %v4399 = vmul.f32 %v3887, %v3887
          %v4400 = vmul.f32 %v3888, %v3888
          %v4401 = vmul.f32 %v3889, %v3889
          %v4402 = vmul.f32 %v3890, %v3890
          %v4403 = vmul.f32 %v3891, %v3891
          %v4404 = vmul.f32 %v3892, %v3892
          %v4405 = vmul.f32 %v3893, %v3893
          %v4406 = vmul.f32 %v3894, %v3894
          %v4407 = vmul.f32 %v3895, %v3895
          %v4408 = vmul.f32 %v3896, %v3896
          %v4409 = vmul.f32 %v3897, %v3897
          %v4410 = vmul.f32 %v3898, %v3898
          %v4411 = vmul.f32 %v3899, %v3899
          %v4412 = vmul.f32 %v3900, %v3900
          %v4413 = vmul.f32 %v3901, %v3901
          %v4414 = vmul.f32 %v3902, %v3902
          %v4415 = vmul.f32 %v3903, %v3903
          %v4416 = vmul.f32 %v3904, %v3904
          %v4417 = vmul.f32 %v3905, %v3905
          %v4418 = vmul.f32 %v3906, %v3906
          %v4419 = vmul.f32 %v3907, %v3907
          %v4420 = vmul.f32 %v3908, %v3908
          %v4421 = vmul.f32 %v3909, %v3909
          %v4422 = vmul.f32 %v3910, %v3910
          %v4423 = vmul.f32 %v3911, %v3911
          %v4424 = vmul.f32 %v3912, %v3912
          %v4425 = vmul.f32 %v3913, %v3913
          %v4426 = vmul.f32 %v3914, %v3914
          %v4427 = vmul.f32 %v3915, %v3915
          %v4428 = vmul.f32 %v3916, %v3916
          %v4429 = vmul.f32 %v3917, %v3917
          %v4430 = vmul.f32 %v3918, %v3918
          %v4431 = vmul.f32 %v3919, %v3919
          %v4432 = vmul.f32 %v3920, %v3920
          %v4433 = vmul.f32 %v3921, %v3921
          %v4434 = vmul.f32 %v3922, %v3922
          %v4435 = vmul.f32 %v3923, %v3923
          %v4436 = vmul.f32 %v3924, %v3924
          %v4437 = vmul.f32 %v3925, %v3925
          %v4438 = vmul.f32 %v3926, %v3926
          %v4439 = vmul.f32 %v3927, %v3927
          %v4440 = vmul.f32 %v3928, %v3928
          %v4441 = vmul.f32 %v3929, %v3929
          %v4442 = vmul.f32 %v3930, %v3930
          %v4443 = vmul.f32 %v3931, %v3931
          %v4444 = vmul.f32 %v3932, %v3932
          %v4445 = vmul.f32 %v3933, %v3933
          %v4446 = vmul.f32 %v3934, %v3934
          %v4447 = vmul.f32 %v3935, %v3935
          %v4448 = vmul.f32 %v3936, %v3936
          %v4449 = vmul.f32 %v3937, %v3937
          %v4450 = vmul.f32 %v3938, %v3938
          %v4451 = vmul.f32 %v3939, %v3939
          %v4452 = vmul.f32 %v3940, %v3940
          %v4453 = vmul.f32 %v3941, %v3941
          %v4454 = vmul.f32 %v3942, %v3942
          %v4455 = vmul.f32 %v3943, %v3943
          %v4456 = vmul.f32 %v3944, %v3944
          %v4457 = vmul.f32 %v3945, %v3945
          %v4458 = vmul.f32 %v3946, %v3946
          %v4459 = vmul.f32 %v3947, %v3947
          %v4460 = vmul.f32 %v3948, %v3948
          %v4461 = vmul.f32 %v3949, %v3949
          %v4462 = vmul.f32 %v3950, %v3950
          %v4463 = vmul.f32 %v3951, %v3951
          %v4464 = vmul.f32 %v3952, %v3952
          %v4465 = vmul.f32 %v3953, %v3953
          %v4466 = vmul.f32 %v3954, %v3954
          %v4467 = vmul.f32 %v3955, %v3955
          %v4468 = vmul.f32 %v3956, %v3956
          %v4469 = vmul.f32 %v3957, %v3957
          %v4470 = vmul.f32 %v3958, %v3958
          %v4471 = vmul.f32 %v3959, %v3959
          %v4472 = vmul.f32 %v3960, %v3960
          %v4473 = vmul.f32 %v3961, %v3961
          %v4474 = vmul.f32 %v3962, %v3962
          %v4475 = vmul.f32 %v3963, %v3963
          %v4476 = vmul.f32 %v3964, %v3964
          %v4477 = vmul.f32 %v3965, %v3965
          %v4478 = vmul.f32 %v3966, %v3966
          %v4479 = vmul.f32 %v3967, %v3967
          %v4480 = vmul.f32 %v3968, %v3968
          %v4481 = vmul.f32 %v3969, %v3969
          %v4482 = vmul.f32 %v3970, %v3970
          %v4483 = vmul.f32 %v3971, %v3971
          %v4484 = vmul.f32 %v3972, %v3972
          %v4485 = vmul.f32 %v3973, %v3973
          %v4486 = vmul.f32 %v3974, %v3974
          %v4487 = vmul.f32 %v3975, %v3975
          %v4488 = vmul.f32 %v3976, %v3976
          %v4489 = vmul.f32 %v3977, %v3977
          %v4490 = vmul.f32 %v3978, %v3978
          %v4491 = vmul.f32 %v3979, %v3979
          %v4492 = vmul.f32 %v3980, %v3980
          %v4493 = vmul.f32 %v3981, %v3981
          %v4494 = vmul.f32 %v3982, %v3982
          %v4495 = vmul.f32 %v3983, %v3983
          %v4496 = vmul.f32 %v3984, %v3984
          %v4497 = vmul.f32 %v3985, %v3985
          %v4498 = vmul.f32 %v3986, %v3986
          %v4499 = vmul.f32 %v3987, %v3987
          %v4500 = vmul.f32 %v3988, %v3988
          %v4501 = vmul.f32 %v3989, %v3989
          %v4502 = vmul.f32 %v3990, %v3990
          %v4503 = vmul.f32 %v3991, %v3991
          %v4504 = vmul.f32 %v3992, %v3992
          %v4505 = vmul.f32 %v3993, %v3993
          %v4506 = vmul.f32 %v3994, %v3994
          %v4507 = vmul.f32 %v3995, %v3995
          %v4508 = vmul.f32 %v3996, %v3996
          %v4509 = vmul.f32 %v3997, %v3997
          %v4510 = vmul.f32 %v3998, %v3998
          %v4511 = vmul.f32 %v3999, %v3999
          %v4512 = vmul.f32 %v4000, %v4000
          %v4513 = vmul.f32 %v4001, %v4001
          %v4514 = vmul.f32 %v4002, %v4002
          %v4515 = vmul.f32 %v4003, %v4003
          %v4516 = vmul.f32 %v4004, %v4004
          %v4517 = vmul.f32 %v4005, %v4005
          %v4518 = vmul.f32 %v4006, %v4006
          %v4519 = vmul.f32 %v4007, %v4007
          %v4520 = vmul.f32 %v4008, %v4008
          %v4521 = vmul.f32 %v4009, %v4009
          %v4522 = vmul.f32 %v4010, %v4010
          %v4523 = vmul.f32 %v4011, %v4011
          %v4524 = vmul.f32 %v4012, %v4012
          %v4525 = vmul.f32 %v4013, %v4013
          %v4526 = vmul.f32 %v4014, %v4014
          %v4527 = vmul.f32 %v4015, %v4015
          %v4528 = vmul.f32 %v4016, %v4016
          %v4529 = vmul.f32 %v4017, %v4017
          %v4530 = vmul.f32 %v4018, %v4018
          %v4531 = vmul.f32 %v4019, %v4019
          %v4532 = vmul.f32 %v4020, %v4020
          %v4533 = vmul.f32 %v4021, %v4021
          %v4534 = vmul.f32 %v4022, %v4022
          %v4535 = vmul.f32 %v4023, %v4023
          %v4536 = vmul.f32 %v4024, %v4024
          %v4537 = vmul.f32 %v4025, %v4025
          %v4538 = vmul.f32 %v4026, %v4026
          %v4539 = vmul.f32 %v4027, %v4027
          %v4540 = vmul.f32 %v4028, %v4028
          %v4541 = vmul.f32 %v4029, %v4029
          %v4542 = vmul.f32 %v4030, %v4030
          %v4543 = vmul.f32 %v4031, %v4031
          %v4544 = vmul.f32 %v4032, %v4032
          %v4545 = vmul.f32 %v4033, %v4033
          %v4546 = vmul.f32 %v4034, %v4034
          %v4547 = vmul.f32 %v4035, %v4035
          %v4548 = vmul.f32 %v4036, %v4036
          %v4549 = vmul.f32 %v4037, %v4037
          %v4550 = vmul.f32 %v4038, %v4038
          %v4551 = vmul.f32 %v4039, %v4039
          %v4552 = vmul.f32 %v4040, %v4040
          %v4553 = vmul.f32 %v4041, %v4041
          %v4554 = vmul.f32 %v4042, %v4042
          %v4555 = vmul.f32 %v4043, %v4043
          %v4556 = vmul.f32 %v4044, %v4044
          %v4557 = vmul.f32 %v4045, %v4045
          %v4558 = vmul.f32 %v4046, %v4046
          %v4559 = vmul.f32 %v4047, %v4047
          %v4560 = vmul.f32 %v4048, %v4048
          %v4561 = vmul.f32 %v4049, %v4049
          %v4562 = vmul.f32 %v4050, %v4050
          %v4563 = vmul.f32 %v4051, %v4051
          %v4564 = vmul.f32 %v4052, %v4052
          %v4565 = vmul.f32 %v4053, %v4053
          %v4566 = vmul.f32 %v4054, %v4054
          %v4567 = vmul.f32 %v4055, %v4055
          %v4568 = vmul.f32 %v4056, %v4056
          %v4569 = vmul.f32 %v4057, %v4057
          %v4570 = vmul.f32 %v4058, %v4058
          %v4571 = vmul.f32 %v4059, %v4059
          %v4572 = vmul.f32 %v4060, %v4060
          %v4573 = vmul.f32 %v4061, %v4061
          %v4574 = vmul.f32 %v4062, %v4062
          %v4575 = vmul.f32 %v4063, %v4063
          %v4576 = vmul.f32 %v4064, %v4064
          %v4577 = vmul.f32 %v4065, %v4065
          %v4578 = vmul.f32 %v4066, %v4066
          %v4579 = vmul.f32 %v4067, %v4067
          %v4580 = vmul.f32 %v4068, %v4068
          %v4581 = vmul.f32 %v4069, %v4069
          %v4582 = vmul.f32 %v4070, %v4070
          %v4583 = vmul.f32 %v4071, %v4071
          %v4584 = vmul.f32 %v4072, %v4072
          %v4585 = vmul.f32 %v4073, %v4073
          %v4586 = vmul.f32 %v4074, %v4074
          %v4587 = vmul.f32 %v4075, %v4075
          %v4588 = vmul.f32 %v4076, %v4076
          %v4589 = vmul.f32 %v4077, %v4077
          %v4590 = vmul.f32 %v4078, %v4078
          %v4591 = vmul.f32 %v4079, %v4079
          %v4592 = vmul.f32 %v4080, %v4080
          %v4593 = vmul.f32 %v4081, %v4081
          %v4594 = vmul.f32 %v4082, %v4082
          %v4595 = vmul.f32 %v4083, %v4083
          %v4596 = vmul.f32 %v4084, %v4084
          %v4597 = vmul.f32 %v4085, %v4085
          %v4598 = vmul.f32 %v4086, %v4086
          %v4599 = vmul.f32 %v4087, %v4087
          %v4600 = vmul.f32 %v4088, %v4088
          %v4601 = vmul.f32 %v4089, %v4089
          %v4602 = vmul.f32 %v4090, %v4090
          %v4603 = vmul.f32 %v4091, %v4091
          %v4604 = vmul.f32 %v4092, %v4092
          %v4605 = vmul.f32 %v4093, %v4093
          %v4606 = vmul.f32 %v4094, %v4094
          %v4607 = vmul.f32 %v4095, %v4095
          %v4608 = vmul.f32 %v4096, %v4096
          %v4609 = vmul.f32 %v4097, %v4097
          %v4610 = vmul.f32 %v4098, %v4098
          %v4611 = vmul.f32 %v4099, %v4099
          %v4612 = vmul.f32 %v4100, %v4100
          %v4613 = vmul.f32 %v4101, %v4101
          %v4614 = vmul.f32 %v4102, %v4102
          %v4615 = vmul.f32 %v4103, %v4103
          %v4616 = vmul.f32 %v4104, %v4104
          %v4617 = vmul.f32 %v4105, %v4105
          %v4618 = vmul.f32 %v4106, %v4106
          %v4619 = vmul.f32 %v4107, %v4107
          %v4620 = vmul.f32 %v4108, %v4108
          %v4621 = vmul.f32 %v4109, %v4109
          %v4622 = vmul.f32 %v4110, %v4110
          %v4623 = vmul.f32 %v4111, %v4111
          %v4624 = vmul.f32 %v4112, %v4112
          %v4625 = vmul.f32 %v4113, %v4113
          %v4626 = vmul.f32 %v4114, %v4114
          %v4627 = vmul.f32 %v4115, %v4115
          %v4628 = vmul.f32 %v4116, %v4116
          %v4629 = vmul.f32 %v4117, %v4117
          %v4630 = vmul.f32 %v4118, %v4118
          %v4631 = vmul.f32 %v4119, %v4119
          %v4632 = vmul.f32 %v4120, %v4120
          %v4633 = vmul.f32 %v4121, %v4121
          %v4634 = vmul.f32 %v4122, %v4122
          %v4635 = vmul.f32 %v4123, %v4123
          %v4636 = vmul.f32 %v4124, %v4124
          %v4637 = vmul.f32 %v4125, %v4125
          %v4638 = vmul.f32 %v4126, %v4126
          %v4639 = vmul.f32 %v4127, %v4127
          %v4640 = vmul.f32 %v4128, %v4128
          %v4641 = vmul.f32 %v4129, %v4129
          %v4642 = vmul.f32 %v4130, %v4130
          %v4643 = vmul.f32 %v4131, %v4131
          %v4644 = vmul.f32 %v4132, %v4132
          %v4645 = vmul.f32 %v4133, %v4133
          %v4646 = vmul.f32 %v4134, %v4134
          %v4647 = vmul.f32 %v4135, %v4135
          %v4648 = vmul.f32 %v4136, %v4136
          %v4649 = vmul.f32 %v4137, %v4137
          %v4650 = vmul.f32 %v4138, %v4138
          %v4651 = vmul.f32 %v4139, %v4139
          %v4652 = vmul.f32 %v4140, %v4140
          %v4653 = vmul.f32 %v4141, %v4141
          %v4654 = vmul.f32 %v4142, %v4142
          %v4655 = vmul.f32 %v4143, %v4143
          %v4656 = vmul.f32 %v4144, %v4144
          %v4657 = vmul.f32 %v4145, %v4145
          %v4658 = vmul.f32 %v4146, %v4146
          %v4659 = vmul.f32 %v4147, %v4147
          %v4660 = vmul.f32 %v4148, %v4148
          %v4661 = vmul.f32 %v4149, %v4149
          %v4662 = vmul.f32 %v4150, %v4150
          %v4663 = vmul.f32 %v4151, %v4151
          %v4664 = vmul.f32 %v4152, %v4152
          %v4665 = vmul.f32 %v4153, %v4153
          %v4666 = vmul.f32 %v4154, %v4154
          %v4667 = vmul.f32 %v4155, %v4155
          %v4668 = vmul.f32 %v4156, %v4156
          %v4669 = vmul.f32 %v4157, %v4157
          %v4670 = vmul.f32 %v4158, %v4158
          %v4671 = vmul.f32 %v4159, %v4159
          %v4672 = vmul.f32 %v4160, %v4160
          %v4673 = vmul.f32 %v4161, %v4161
          %v4674 = vmul.f32 %v4162, %v4162
          %v4675 = vmul.f32 %v4163, %v4163
          %v4676 = vmul.f32 %v4164, %v4164
          %v4677 = vmul.f32 %v4165, %v4165
          %v4678 = vmul.f32 %v4166, %v4166
          %v4679 = vmul.f32 %v4167, %v4167
          %v4680 = vmul.f32 %v4168, %v4168
          %v4681 = vmul.f32 %v4169, %v4169
          %v4682 = vmul.f32 %v4170, %v4170
          %v4683 = vmul.f32 %v4171, %v4171
          %v4684 = vmul.f32 %v4172, %v4172
          %v4685 = vmul.f32 %v4173, %v4173
          %v4686 = vmul.f32 %v4174, %v4174
          %v4687 = vmul.f32 %v4175, %v4175
          %v4688 = vmul.f32 %v4176, %v4176
          %v4689 = vmul.f32 %v4177, %v4177
          %v4690 = vmul.f32 %v4178, %v4178
          %v4691 = vmul.f32 %v4179, %v4179
          %v4692 = vmul.f32 %v4180, %v4180
          %v4693 = vmul.f32 %v4181, %v4181
          %v4694 = vmul.f32 %v4182, %v4182
          %v4695 = vmul.f32 %v4183, %v4183
          %v4696 = vmul.f32 %v4184, %v4184
          %v4697 = vmul.f32 %v4185, %v4185
          %v4698 = vmul.f32 %v4186, %v4186
          %v4699 = vmul.f32 %v4187, %v4187
          %v4700 = vmul.f32 %v4188, %v4188
          %v4701 = vmul.f32 %v4189, %v4189
          %v4702 = vmul.f32 %v4190, %v4190
          %v4703 = vmul.f32 %v4191, %v4191
          %v4704 = vmul.f32 %v4192, %v4192
          %v4705 = vmul.f32 %v4193, %v4193
          %v4706 = vmul.f32 %v4194, %v4194
          %v4707 = vmul.f32 %v4195, %v4195
          %v4708 = vmul.f32 %v4196, %v4196
          %v4709 = vmul.f32 %v4197, %v4197
          %v4710 = vmul.f32 %v4198, %v4198
          %v4711 = vmul.f32 %v4199, %v4199
          %v4712 = vmul.f32 %v4200, %v4200
          %v4713 = vmul.f32 %v4201, %v4201
          %v4714 = vmul.f32 %v4202, %v4202
          %v4715 = vmul.f32 %v4203, %v4203
          %v4716 = vmul.f32 %v4204, %v4204
          %v4717 = vmul.f32 %v4205, %v4205
          %v4718 = vmul.f32 %v4206, %v4206
          %v4719 = vmul.f32 %v4207, %v4207
          %v4720 = vmul.f32 %v4208, %v4208
          %v4721 = vmul.f32 %v4209, %v4209
          %v4722 = vmul.f32 %v4210, %v4210
          %v4723 = vmul.f32 %v4211, %v4211
          %v4724 = vmul.f32 %v4212, %v4212
          %v4725 = vmul.f32 %v4213, %v4213
          %v4726 = vmul.f32 %v4214, %v4214
          %v4727 = vmul.f32 %v4215, %v4215
          %v4728 = vmul.f32 %v4216, %v4216
          %v4729 = vmul.f32 %v4217, %v4217
          %v4730 = vmul.f32 %v4218, %v4218
          %v4731 = vmul.f32 %v4219, %v4219
          %v4732 = vmul.f32 %v4220, %v4220
          %v4733 = vmul.f32 %v4221, %v4221
          %v4734 = vmul.f32 %v4222, %v4222
          %v4735 = vmul.f32 %v4223, %v4223
          %v4736 = vmul.f32 %v4224, %v4224
          %v4737 = vmul.f32 %v4225, %v4225
          %v4738 = vmul.f32 %v4226, %v4226
          %v4739 = vmul.f32 %v4227, %v4227
          %v4740 = vmul.f32 %v4228, %v4228
          %v4741 = vmul.f32 %v4229, %v4229
          %v4742 = vmul.f32 %v4230, %v4230
          %v4743 = vmul.f32 %v4231, %v4231
          %v4744 = vmul.f32 %v4232, %v4232
          %v4745 = vmul.f32 %v4233, %v4233
          %v4746 = vmul.f32 %v4234, %v4234
          %v4747 = vmul.f32 %v4235, %v4235
          %v4748 = vmul.f32 %v4236, %v4236
          %v4749 = vmul.f32 %v4237, %v4237
          %v4750 = vmul.f32 %v4238, %v4238
          %v4751 = vmul.f32 %v4239, %v4239
          %v4752 = vmul.f32 %v4240, %v4240
          %v4753 = vmul.f32 %v4241, %v4241
          %v4754 = vmul.f32 %v4242, %v4242
          %v4755 = vmul.f32 %v4243, %v4243
          %v4756 = vmul.f32 %v4244, %v4244
          %v4757 = vmul.f32 %v4245, %v4245
          %v4758 = vmul.f32 %v4246, %v4246
          %v4759 = vmul.f32 %v4247, %v4247
          %v4760 = vmul.f32 %v4248, %v4248
          %v4761 = vmul.f32 %v4249, %v4249
          %v4762 = vmul.f32 %v4250, %v4250
          %v4763 = vmul.f32 %v4251, %v4251
          %v4764 = vmul.f32 %v4252, %v4252
          %v4765 = vmul.f32 %v4253, %v4253
          %v4766 = vmul.f32 %v4254, %v4254
          %v4767 = vmul.f32 %v4255, %v4255
          %v4768 = vmul.f32 %v4256, %v4256
          %v4769 = vmul.f32 %v4257, %v4257
          %v4770 = vmul.f32 %v4258, %v4258
          %v4771 = vmul.f32 %v4259, %v4259
          %v4772 = vmul.f32 %v4260, %v4260
          %v4773 = vmul.f32 %v4261, %v4261
          %v4774 = vmul.f32 %v4262, %v4262
          %v4775 = vmul.f32 %v4263, %v4263
          %v4776 = vmul.f32 %v4264, %v4264
          %v4777 = vmul.f32 %v4265, %v4265
          %v4778 = vmul.f32 %v4266, %v4266
          %v4779 = vmul.f32 %v4267, %v4267
          %v4780 = vmul.f32 %v4268, %v4268
          %v4781 = vmul.f32 %v4269, %v4269
          %v4782 = vmul.f32 %v4270, %v4270
          %v4783 = vmul.f32 %v4271, %v4271
          %v4784 = vmul.f32 %v4272, %v4272
          %v4785 = vmul.f32 %v4273, %v4273
          %v4786 = vmul.f32 %v4274, %v4274
          %v4787 = vmul.f32 %v4275, %v4275
          %v4788 = vmul.f32 %v4276, %v4276
          %v4789 = vmul.f32 %v4277, %v4277
          %v4790 = vmul.f32 %v4278, %v4278
          %v4791 = vmul.f32 %v4279, %v4279
          %v4792 = vmul.f32 %v4280, %v4280
          %v4793 = vmul.f32 %v4281, %v4281
          %v4794 = vmul.f32 %v4282, %v4282
          %v4795 = vmul.f32 %v4283, %v4283
          %v4796 = vmul.f32 %v4284, %v4284
          %v4797 = vmul.f32 %v4285, %v4285
          %v4798 = vmul.f32 %v4286, %v4286
          %v4799 = vmul.f32 %v4287, %v4287
          %v4800 = vmul.f32 %v4288, %v4288
          %v4801 = vmul.f32 %v4289, %v4289
          %v4802 = vmul.f32 %v4290, %v4290
          %v4803 = vmul.f32 %v4291, %v4291
          %v4804 = vmul.f32 %v4292, %v4292
          %v4805 = vmul.f32 %v4293, %v4293
          %v4806 = vmul.f32 %v4294, %v4294
          %v4807 = vmul.f32 %v4295, %v4295
          %v4808 = vmul.f32 %v4296, %v4296
          %v4809 = vmul.f32 %v4297, %v4297
          %v4810 = vmul.f32 %v4298, %v4298
          %v4811 = vmul.f32 %v4299, %v4299
          %v4812 = vmul.f32 %v4300, %v4300
          %v4813 = vmul.f32 %v4301, %v4301
          %v4814 = vmul.f32 %v4302, %v4302
          %v4815 = vmul.f32 %v4303, %v4303
          %v4816 = vmul.f32 %v4304, %v4304
          %v4817 = vmul.f32 %v4305, %v4305
          %v4818 = vmul.f32 %v4306, %v4306
          %v4819 = vmul.f32 %v4307, %v4307
          %v4820 = vmul.f32 %v4308, %v4308
          %v4821 = vmul.f32 %v4309, %v4309
          %v4822 = vmul.f32 %v4310, %v4310
          %v4823 = vmul.f32 %v4311, %v4311
          %v4824 = vmul.f32 %v4312, %v4312
          %v4825 = vmul.f32 %v4313, %v4313
          %v4826 = vmul.f32 %v4314, %v4314
          %v4827 = vmul.f32 %v4315, %v4315
          %v4828 = vmul.f32 %v4316, %v4316
          %v4829 = vmul.f32 %v4317, %v4317
          %v4830 = vmul.f32 %v4318, %v4318
          %v4831 = vmul.f32 %v4319, %v4319
          %v4832 = vmul.f32 %v4320, %v4320
          %v4833 = vmul.f32 %v4321, %v4321
          %v4834 = vmul.f32 %v4322, %v4322
          %v4835 = vmul.f32 %v4323, %v4323
          %v4836 = vmul.f32 %v4324, %v4324
          %v4837 = vmul.f32 %v4325, %v4325
          %v4838 = vmul.f32 %v4326, %v4326
          %v4839 = vmul.f32 %v4327, %v4327
          %v4840 = vmul.f32 %v4328, %v4328
          %v4841 = vmul.f32 %v4329, %v4329
          %v4842 = vmul.f32 %v4330, %v4330
          %v4843 = vmul.f32 %v4331, %v4331
          %v4844 = vmul.f32 %v4332, %v4332
          %v4845 = vmul.f32 %v4333, %v4333
          %v4846 = vmul.f32 %v4334, %v4334
          %v4847 = vmul.f32 %v4335, %v4335
          %v4848 = vmul.f32 %v4336, %v4336
          %v4849 = vmul.f32 %v4337, %v4337
          %v4850 = vmul.f32 %v4338, %v4338
          %v4851 = vmul.f32 %v4339, %v4339
          %v4852 = vmul.f32 %v4340, %v4340
          %v4853 = vmul.f32 %v4341, %v4341
          %v4854 = vmul.f32 %v4342, %v4342
          %v4855 = vmul.f32 %v4343, %v4343
          %v4856 = vmul.f32 %v4344, %v4344
          %v4857 = vmul.f32 %v4345, %v4345
          %v4858 = vmul.f32 %v4346, %v4346
          %v4859 = vmul.f32 %v4347, %v4347
          %v4860 = vmul.f32 %v4348, %v4348
          %v4861 = vmul.f32 %v4349, %v4349
          %v4862 = vmul.f32 %v4350, %v4350
          %v4863 = vmul.f32 %v4351, %v4351
          %v4864 = vmul.f32 %v4352, %v4352
          %v4865 = vmul.f32 %v4353, %v4353
          %v4866 = vmul.f32 %v4354, %v4354
          %v4867 = vmul.f32 %v4355, %v4355
          %v4868 = vlaneseq
          %v4869 = vshrl.u32 %v4868, 7
          %v4870 = vadd.s32 %v4869, 8
          %v4871 = vadd.s32 %v4869, 16
          %v4872 = vadd.s32 %v4869, 24
          %v4873 = vadd.s32 %v4869, 32
          %v4874 = vadd.s32 %v4869, 40
          %v4875 = vadd.s32 %v4869, 48
          %v4876 = vadd.s32 %v4869, 56
          %v4877 = vadd.s32 %v4869, 64
          %v4878 = vadd.s32 %v4869, 72
          %v4879 = vadd.s32 %v4869, 80
          %v4880 = vadd.s32 %v4869, 88
          %v4881 = vadd.s32 %v4869, 96
          %v4882 = vadd.s32 %v4869, 104
          %v4883 = vadd.s32 %v4869, 112
          %v4884 = vadd.s32 %v4869, 120
          %v4885 = vadd.s32 %v4869, 128
          %v4886 = vadd.s32 %v4869, 136
          %v4887 = vadd.s32 %v4869, 144
          %v4888 = vadd.s32 %v4869, 152
          %v4889 = vadd.s32 %v4869, 160
          %v4890 = vadd.s32 %v4869, 168
          %v4891 = vadd.s32 %v4869, 176
          %v4892 = vadd.s32 %v4869, 184
          %v4893 = vadd.s32 %v4869, 192
          %v4894 = vadd.s32 %v4869, 200
          %v4895 = vadd.s32 %v4869, 208
          %v4896 = vadd.s32 %v4869, 216
          %v4897 = vadd.s32 %v4869, 224
          %v4898 = vadd.s32 %v4869, 232
          %v4899 = vadd.s32 %v4869, 240
          %v4900 = vadd.s32 %v4869, 248
          %v4901 = vadd.s32 %v4869, 256
          %v4902 = vadd.s32 %v4869, 264
          %v4903 = vadd.s32 %v4869, 272
          %v4904 = vadd.s32 %v4869, 280
          %v4905 = vadd.s32 %v4869, 288
          %v4906 = vadd.s32 %v4869, 296
          %v4907 = vadd.s32 %v4869, 304
          %v4908 = vadd.s32 %v4869, 312
          %v4909 = vadd.s32 %v4869, 320
          %v4910 = vadd.s32 %v4869, 328
          %v4911 = vadd.s32 %v4869, 336
          %v4912 = vadd.s32 %v4869, 344
          %v4913 = vadd.s32 %v4869, 352
          %v4914 = vadd.s32 %v4869, 360
          %v4915 = vadd.s32 %v4869, 368
          %v4916 = vadd.s32 %v4869, 376
          %v4917 = vadd.s32 %v4869, 384
          %v4918 = vadd.s32 %v4869, 392
          %v4919 = vadd.s32 %v4869, 400
          %v4920 = vadd.s32 %v4869, 408
          %v4921 = vadd.s32 %v4869, 416
          %v4922 = vadd.s32 %v4869, 424
          %v4923 = vadd.s32 %v4869, 432
          %v4924 = vadd.s32 %v4869, 440
          %v4925 = vadd.s32 %v4869, 448
          %v4926 = vadd.s32 %v4869, 456
          %v4927 = vadd.s32 %v4869, 464
          %v4928 = vadd.s32 %v4869, 472
          %v4929 = vadd.s32 %v4869, 480
          %v4930 = vadd.s32 %v4869, 488
          %v4931 = vadd.s32 %v4869, 496
          %v4932 = vadd.s32 %v4869, 504
          %v4933 = vadd.s32 %v4869, 512
          %v4934 = vadd.s32 %v4869, 520
          %v4935 = vadd.s32 %v4869, 528
          %v4936 = vadd.s32 %v4869, 536
          %v4937 = vadd.s32 %v4869, 544
          %v4938 = vadd.s32 %v4869, 552
          %v4939 = vadd.s32 %v4869, 560
          %v4940 = vadd.s32 %v4869, 568
          %v4941 = vadd.s32 %v4869, 576
          %v4942 = vadd.s32 %v4869, 584
          %v4943 = vadd.s32 %v4869, 592
          %v4944 = vadd.s32 %v4869, 600
          %v4945 = vadd.s32 %v4869, 608
          %v4946 = vadd.s32 %v4869, 616
          %v4947 = vadd.s32 %v4869, 624
          %v4948 = vadd.s32 %v4869, 632
          %v4949 = vadd.s32 %v4869, 640
          %v4950 = vadd.s32 %v4869, 648
          %v4951 = vadd.s32 %v4869, 656
          %v4952 = vadd.s32 %v4869, 664
          %v4953 = vadd.s32 %v4869, 672
          %v4954 = vadd.s32 %v4869, 680
          %v4955 = vadd.s32 %v4869, 688
          %v4956 = vadd.s32 %v4869, 696
          %v4957 = vadd.s32 %v4869, 704
          %v4958 = vadd.s32 %v4869, 712
          %v4959 = vadd.s32 %v4869, 720
          %v4960 = vadd.s32 %v4869, 728
          %v4961 = vadd.s32 %v4869, 736
          %v4962 = vadd.s32 %v4869, 744
          %v4963 = vadd.s32 %v4869, 752
          %v4964 = vadd.s32 %v4869, 760
          %v4965 = vadd.s32 %v4869, 768
          %v4966 = vadd.s32 %v4869, 776
          %v4967 = vadd.s32 %v4869, 784
          %v4968 = vadd.s32 %v4869, 792
          %v4969 = vadd.s32 %v4869, 800
          %v4970 = vadd.s32 %v4869, 808
          %v4971 = vadd.s32 %v4869, 816
          %v4972 = vadd.s32 %v4869, 824
          %v4973 = vadd.s32 %v4869, 832
          %v4974 = vadd.s32 %v4869, 840
          %v4975 = vadd.s32 %v4869, 848
          %v4976 = vadd.s32 %v4869, 856
          %v4977 = vadd.s32 %v4869, 864
          %v4978 = vadd.s32 %v4869, 872
          %v4979 = vadd.s32 %v4869, 880
          %v4980 = vadd.s32 %v4869, 888
          %v4981 = vadd.s32 %v4869, 896
          %v4982 = vadd.s32 %v4869, 904
          %v4983 = vadd.s32 %v4869, 912
          %v4984 = vadd.s32 %v4869, 920
          %v4985 = vadd.s32 %v4869, 928
          %v4986 = vadd.s32 %v4869, 936
          %v4987 = vadd.s32 %v4869, 944
          %v4988 = vadd.s32 %v4869, 952
          %v4989 = vadd.s32 %v4869, 960
          %v4990 = vadd.s32 %v4869, 968
          %v4991 = vadd.s32 %v4869, 976
          %v4992 = vadd.s32 %v4869, 984
          %v4993 = vadd.s32 %v4869, 992
          %v4994 = vadd.s32 %v4869, 1000
          %v4995 = vadd.s32 %v4869, 1008
          %v4996 = vadd.s32 %v4869, 1016
          %v4997 = vadd.s32 %v4869, 1024
          %v4998 = vadd.s32 %v4869, 1032
          %v4999 = vadd.s32 %v4869, 1040
          %v5000 = vadd.s32 %v4869, 1048
          %v5001 = vadd.s32 %v4869, 1056
          %v5002 = vadd.s32 %v4869, 1064
          %v5003 = vadd.s32 %v4869, 1072
          %v5004 = vadd.s32 %v4869, 1080
          %v5005 = vadd.s32 %v4869, 1088
          %v5006 = vadd.s32 %v4869, 1096
          %v5007 = vadd.s32 %v4869, 1104
          %v5008 = vadd.s32 %v4869, 1112
          %v5009 = vadd.s32 %v4869, 1120
          %v5010 = vadd.s32 %v4869, 1128
          %v5011 = vadd.s32 %v4869, 1136
          %v5012 = vadd.s32 %v4869, 1144
          %v5013 = vadd.s32 %v4869, 1152
          %v5014 = vadd.s32 %v4869, 1160
          %v5015 = vadd.s32 %v4869, 1168
          %v5016 = vadd.s32 %v4869, 1176
          %v5017 = vadd.s32 %v4869, 1184
          %v5018 = vadd.s32 %v4869, 1192
          %v5019 = vadd.s32 %v4869, 1200
          %v5020 = vadd.s32 %v4869, 1208
          %v5021 = vadd.s32 %v4869, 1216
          %v5022 = vadd.s32 %v4869, 1224
          %v5023 = vadd.s32 %v4869, 1232
          %v5024 = vadd.s32 %v4869, 1240
          %v5025 = vadd.s32 %v4869, 1248
          %v5026 = vadd.s32 %v4869, 1256
          %v5027 = vadd.s32 %v4869, 1264
          %v5028 = vadd.s32 %v4869, 1272
          %v5029 = vadd.s32 %v4869, 1280
          %v5030 = vadd.s32 %v4869, 1288
          %v5031 = vadd.s32 %v4869, 1296
          %v5032 = vadd.s32 %v4869, 1304
          %v5033 = vadd.s32 %v4869, 1312
          %v5034 = vadd.s32 %v4869, 1320
          %v5035 = vadd.s32 %v4869, 1328
          %v5036 = vadd.s32 %v4869, 1336
          %v5037 = vadd.s32 %v4869, 1344
          %v5038 = vadd.s32 %v4869, 1352
          %v5039 = vadd.s32 %v4869, 1360
          %v5040 = vadd.s32 %v4869, 1368
          %v5041 = vadd.s32 %v4869, 1376
          %v5042 = vadd.s32 %v4869, 1384
          %v5043 = vadd.s32 %v4869, 1392
          %v5044 = vadd.s32 %v4869, 1400
          %v5045 = vadd.s32 %v4869, 1408
          %v5046 = vadd.s32 %v4869, 1416
          %v5047 = vadd.s32 %v4869, 1424
          %v5048 = vadd.s32 %v4869, 1432
          %v5049 = vadd.s32 %v4869, 1440
          %v5050 = vadd.s32 %v4869, 1448
          %v5051 = vadd.s32 %v4869, 1456
          %v5052 = vadd.s32 %v4869, 1464
          %v5053 = vadd.s32 %v4869, 1472
          %v5054 = vadd.s32 %v4869, 1480
          %v5055 = vadd.s32 %v4869, 1488
          %v5056 = vadd.s32 %v4869, 1496
          %v5057 = vadd.s32 %v4869, 1504
          %v5058 = vadd.s32 %v4869, 1512
          %v5059 = vadd.s32 %v4869, 1520
          %v5060 = vadd.s32 %v4869, 1528
          %v5061 = vadd.s32 %v4869, 1536
          %v5062 = vadd.s32 %v4869, 1544
          %v5063 = vadd.s32 %v4869, 1552
          %v5064 = vadd.s32 %v4869, 1560
          %v5065 = vadd.s32 %v4869, 1568
          %v5066 = vadd.s32 %v4869, 1576
          %v5067 = vadd.s32 %v4869, 1584
          %v5068 = vadd.s32 %v4869, 1592
          %v5069 = vadd.s32 %v4869, 1600
          %v5070 = vadd.s32 %v4869, 1608
          %v5071 = vadd.s32 %v4869, 1616
          %v5072 = vadd.s32 %v4869, 1624
          %v5073 = vadd.s32 %v4869, 1632
          %v5074 = vadd.s32 %v4869, 1640
          %v5075 = vadd.s32 %v4869, 1648
          %v5076 = vadd.s32 %v4869, 1656
          %v5077 = vadd.s32 %v4869, 1664
          %v5078 = vadd.s32 %v4869, 1672
          %v5079 = vadd.s32 %v4869, 1680
          %v5080 = vadd.s32 %v4869, 1688
          %v5081 = vadd.s32 %v4869, 1696
          %v5082 = vadd.s32 %v4869, 1704
          %v5083 = vadd.s32 %v4869, 1712
          %v5084 = vadd.s32 %v4869, 1720
          %v5085 = vadd.s32 %v4869, 1728
          %v5086 = vadd.s32 %v4869, 1736
          %v5087 = vadd.s32 %v4869, 1744
          %v5088 = vadd.s32 %v4869, 1752
          %v5089 = vadd.s32 %v4869, 1760
          %v5090 = vadd.s32 %v4869, 1768
          %v5091 = vadd.s32 %v4869, 1776
          %v5092 = vadd.s32 %v4869, 1784
          %v5093 = vadd.s32 %v4869, 1792
          %v5094 = vadd.s32 %v4869, 1800
          %v5095 = vadd.s32 %v4869, 1808
          %v5096 = vadd.s32 %v4869, 1816
          %v5097 = vadd.s32 %v4869, 1824
          %v5098 = vadd.s32 %v4869, 1832
          %v5099 = vadd.s32 %v4869, 1840
          %v5100 = vadd.s32 %v4869, 1848
          %v5101 = vadd.s32 %v4869, 1856
          %v5102 = vadd.s32 %v4869, 1864
          %v5103 = vadd.s32 %v4869, 1872
          %v5104 = vadd.s32 %v4869, 1880
          %v5105 = vadd.s32 %v4869, 1888
          %v5106 = vadd.s32 %v4869, 1896
          %v5107 = vadd.s32 %v4869, 1904
          %v5108 = vadd.s32 %v4869, 1912
          %v5109 = vadd.s32 %v4869, 1920
          %v5110 = vadd.s32 %v4869, 1928
          %v5111 = vadd.s32 %v4869, 1936
          %v5112 = vadd.s32 %v4869, 1944
          %v5113 = vadd.s32 %v4869, 1952
          %v5114 = vadd.s32 %v4869, 1960
          %v5115 = vadd.s32 %v4869, 1968
          %v5116 = vadd.s32 %v4869, 1976
          %v5117 = vadd.s32 %v4869, 1984
          %v5118 = vadd.s32 %v4869, 1992
          %v5119 = vadd.s32 %v4869, 2000
          %v5120 = vadd.s32 %v4869, 2008
          %v5121 = vadd.s32 %v4869, 2016
          %v5122 = vadd.s32 %v4869, 2024
          %v5123 = vadd.s32 %v4869, 2032
          %v5124 = vadd.s32 %v4869, 2040
          %v5125 = vadd.s32 %v4869, 2048
          %v5126 = vadd.s32 %v4869, 2056
          %v5127 = vadd.s32 %v4869, 2064
          %v5128 = vadd.s32 %v4869, 2072
          %v5129 = vadd.s32 %v4869, 2080
          %v5130 = vadd.s32 %v4869, 2088
          %v5131 = vadd.s32 %v4869, 2096
          %v5132 = vadd.s32 %v4869, 2104
          %v5133 = vadd.s32 %v4869, 2112
          %v5134 = vadd.s32 %v4869, 2120
          %v5135 = vadd.s32 %v4869, 2128
          %v5136 = vadd.s32 %v4869, 2136
          %v5137 = vadd.s32 %v4869, 2144
          %v5138 = vadd.s32 %v4869, 2152
          %v5139 = vadd.s32 %v4869, 2160
          %v5140 = vadd.s32 %v4869, 2168
          %v5141 = vadd.s32 %v4869, 2176
          %v5142 = vadd.s32 %v4869, 2184
          %v5143 = vadd.s32 %v4869, 2192
          %v5144 = vadd.s32 %v4869, 2200
          %v5145 = vadd.s32 %v4869, 2208
          %v5146 = vadd.s32 %v4869, 2216
          %v5147 = vadd.s32 %v4869, 2224
          %v5148 = vadd.s32 %v4869, 2232
          %v5149 = vadd.s32 %v4869, 2240
          %v5150 = vadd.s32 %v4869, 2248
          %v5151 = vadd.s32 %v4869, 2256
          %v5152 = vadd.s32 %v4869, 2264
          %v5153 = vadd.s32 %v4869, 2272
          %v5154 = vadd.s32 %v4869, 2280
          %v5155 = vadd.s32 %v4869, 2288
          %v5156 = vadd.s32 %v4869, 2296
          %v5157 = vadd.s32 %v4869, 2304
          %v5158 = vadd.s32 %v4869, 2312
          %v5159 = vadd.s32 %v4869, 2320
          %v5160 = vadd.s32 %v4869, 2328
          %v5161 = vadd.s32 %v4869, 2336
          %v5162 = vadd.s32 %v4869, 2344
          %v5163 = vadd.s32 %v4869, 2352
          %v5164 = vadd.s32 %v4869, 2360
          %v5165 = vadd.s32 %v4869, 2368
          %v5166 = vadd.s32 %v4869, 2376
          %v5167 = vadd.s32 %v4869, 2384
          %v5168 = vadd.s32 %v4869, 2392
          %v5169 = vadd.s32 %v4869, 2400
          %v5170 = vadd.s32 %v4869, 2408
          %v5171 = vadd.s32 %v4869, 2416
          %v5172 = vadd.s32 %v4869, 2424
          %v5173 = vadd.s32 %v4869, 2432
          %v5174 = vadd.s32 %v4869, 2440
          %v5175 = vadd.s32 %v4869, 2448
          %v5176 = vadd.s32 %v4869, 2456
          %v5177 = vadd.s32 %v4869, 2464
          %v5178 = vadd.s32 %v4869, 2472
          %v5179 = vadd.s32 %v4869, 2480
          %v5180 = vadd.s32 %v4869, 2488
          %v5181 = vadd.s32 %v4869, 2496
          %v5182 = vadd.s32 %v4869, 2504
          %v5183 = vadd.s32 %v4869, 2512
          %v5184 = vadd.s32 %v4869, 2520
          %v5185 = vadd.s32 %v4869, 2528
          %v5186 = vadd.s32 %v4869, 2536
          %v5187 = vadd.s32 %v4869, 2544
          %v5188 = vadd.s32 %v4869, 2552
          %v5189 = vadd.s32 %v4869, 2560
          %v5190 = vadd.s32 %v4869, 2568
          %v5191 = vadd.s32 %v4869, 2576
          %v5192 = vadd.s32 %v4869, 2584
          %v5193 = vadd.s32 %v4869, 2592
          %v5194 = vadd.s32 %v4869, 2600
          %v5195 = vadd.s32 %v4869, 2608
          %v5196 = vadd.s32 %v4869, 2616
          %v5197 = vadd.s32 %v4869, 2624
          %v5198 = vadd.s32 %v4869, 2632
          %v5199 = vadd.s32 %v4869, 2640
          %v5200 = vadd.s32 %v4869, 2648
          %v5201 = vadd.s32 %v4869, 2656
          %v5202 = vadd.s32 %v4869, 2664
          %v5203 = vadd.s32 %v4869, 2672
          %v5204 = vadd.s32 %v4869, 2680
          %v5205 = vadd.s32 %v4869, 2688
          %v5206 = vadd.s32 %v4869, 2696
          %v5207 = vadd.s32 %v4869, 2704
          %v5208 = vadd.s32 %v4869, 2712
          %v5209 = vadd.s32 %v4869, 2720
          %v5210 = vadd.s32 %v4869, 2728
          %v5211 = vadd.s32 %v4869, 2736
          %v5212 = vadd.s32 %v4869, 2744
          %v5213 = vadd.s32 %v4869, 2752
          %v5214 = vadd.s32 %v4869, 2760
          %v5215 = vadd.s32 %v4869, 2768
          %v5216 = vadd.s32 %v4869, 2776
          %v5217 = vadd.s32 %v4869, 2784
          %v5218 = vadd.s32 %v4869, 2792
          %v5219 = vadd.s32 %v4869, 2800
          %v5220 = vadd.s32 %v4869, 2808
          %v5221 = vadd.s32 %v4869, 2816
          %v5222 = vadd.s32 %v4869, 2824
          %v5223 = vadd.s32 %v4869, 2832
          %v5224 = vadd.s32 %v4869, 2840
          %v5225 = vadd.s32 %v4869, 2848
          %v5226 = vadd.s32 %v4869, 2856
          %v5227 = vadd.s32 %v4869, 2864
          %v5228 = vadd.s32 %v4869, 2872
          %v5229 = vadd.s32 %v4869, 2880
          %v5230 = vadd.s32 %v4869, 2888
          %v5231 = vadd.s32 %v4869, 2896
          %v5232 = vadd.s32 %v4869, 2904
          %v5233 = vadd.s32 %v4869, 2912
          %v5234 = vadd.s32 %v4869, 2920
          %v5235 = vadd.s32 %v4869, 2928
          %v5236 = vadd.s32 %v4869, 2936
          %v5237 = vadd.s32 %v4869, 2944
          %v5238 = vadd.s32 %v4869, 2952
          %v5239 = vadd.s32 %v4869, 2960
          %v5240 = vadd.s32 %v4869, 2968
          %v5241 = vadd.s32 %v4869, 2976
          %v5242 = vadd.s32 %v4869, 2984
          %v5243 = vadd.s32 %v4869, 2992
          %v5244 = vadd.s32 %v4869, 3000
          %v5245 = vadd.s32 %v4869, 3008
          %v5246 = vadd.s32 %v4869, 3016
          %v5247 = vadd.s32 %v4869, 3024
          %v5248 = vadd.s32 %v4869, 3032
          %v5249 = vadd.s32 %v4869, 3040
          %v5250 = vadd.s32 %v4869, 3048
          %v5251 = vadd.s32 %v4869, 3056
          %v5252 = vadd.s32 %v4869, 3064
          %v5253 = vadd.s32 %v4869, 3072
          %v5254 = vadd.s32 %v4869, 3080
          %v5255 = vadd.s32 %v4869, 3088
          %v5256 = vadd.s32 %v4869, 3096
          %v5257 = vadd.s32 %v4869, 3104
          %v5258 = vadd.s32 %v4869, 3112
          %v5259 = vadd.s32 %v4869, 3120
          %v5260 = vadd.s32 %v4869, 3128
          %v5261 = vadd.s32 %v4869, 3136
          %v5262 = vadd.s32 %v4869, 3144
          %v5263 = vadd.s32 %v4869, 3152
          %v5264 = vadd.s32 %v4869, 3160
          %v5265 = vadd.s32 %v4869, 3168
          %v5266 = vadd.s32 %v4869, 3176
          %v5267 = vadd.s32 %v4869, 3184
          %v5268 = vadd.s32 %v4869, 3192
          %v5269 = vadd.s32 %v4869, 3200
          %v5270 = vadd.s32 %v4869, 3208
          %v5271 = vadd.s32 %v4869, 3216
          %v5272 = vadd.s32 %v4869, 3224
          %v5273 = vadd.s32 %v4869, 3232
          %v5274 = vadd.s32 %v4869, 3240
          %v5275 = vadd.s32 %v4869, 3248
          %v5276 = vadd.s32 %v4869, 3256
          %v5277 = vadd.s32 %v4869, 3264
          %v5278 = vadd.s32 %v4869, 3272
          %v5279 = vadd.s32 %v4869, 3280
          %v5280 = vadd.s32 %v4869, 3288
          %v5281 = vadd.s32 %v4869, 3296
          %v5282 = vadd.s32 %v4869, 3304
          %v5283 = vadd.s32 %v4869, 3312
          %v5284 = vadd.s32 %v4869, 3320
          %v5285 = vadd.s32 %v4869, 3328
          %v5286 = vadd.s32 %v4869, 3336
          %v5287 = vadd.s32 %v4869, 3344
          %v5288 = vadd.s32 %v4869, 3352
          %v5289 = vadd.s32 %v4869, 3360
          %v5290 = vadd.s32 %v4869, 3368
          %v5291 = vadd.s32 %v4869, 3376
          %v5292 = vadd.s32 %v4869, 3384
          %v5293 = vadd.s32 %v4869, 3392
          %v5294 = vadd.s32 %v4869, 3400
          %v5295 = vadd.s32 %v4869, 3408
          %v5296 = vadd.s32 %v4869, 3416
          %v5297 = vadd.s32 %v4869, 3424
          %v5298 = vadd.s32 %v4869, 3432
          %v5299 = vadd.s32 %v4869, 3440
          %v5300 = vadd.s32 %v4869, 3448
          %v5301 = vadd.s32 %v4869, 3456
          %v5302 = vadd.s32 %v4869, 3464
          %v5303 = vadd.s32 %v4869, 3472
          %v5304 = vadd.s32 %v4869, 3480
          %v5305 = vadd.s32 %v4869, 3488
          %v5306 = vadd.s32 %v4869, 3496
          %v5307 = vadd.s32 %v4869, 3504
          %v5308 = vadd.s32 %v4869, 3512
          %v5309 = vadd.s32 %v4869, 3520
          %v5310 = vadd.s32 %v4869, 3528
          %v5311 = vadd.s32 %v4869, 3536
          %v5312 = vadd.s32 %v4869, 3544
          %v5313 = vadd.s32 %v4869, 3552
          %v5314 = vadd.s32 %v4869, 3560
          %v5315 = vadd.s32 %v4869, 3568
          %v5316 = vadd.s32 %v4869, 3576
          %v5317 = vadd.s32 %v4869, 3584
          %v5318 = vadd.s32 %v4869, 3592
          %v5319 = vadd.s32 %v4869, 3600
          %v5320 = vadd.s32 %v4869, 3608
          %v5321 = vadd.s32 %v4869, 3616
          %v5322 = vadd.s32 %v4869, 3624
          %v5323 = vadd.s32 %v4869, 3632
          %v5324 = vadd.s32 %v4869, 3640
          %v5325 = vadd.s32 %v4869, 3648
          %v5326 = vadd.s32 %v4869, 3656
          %v5327 = vadd.s32 %v4869, 3664
          %v5328 = vadd.s32 %v4869, 3672
          %v5329 = vadd.s32 %v4869, 3680
          %v5330 = vadd.s32 %v4869, 3688
          %v5331 = vadd.s32 %v4869, 3696
          %v5332 = vadd.s32 %v4869, 3704
          %v5333 = vadd.s32 %v4869, 3712
          %v5334 = vadd.s32 %v4869, 3720
          %v5335 = vadd.s32 %v4869, 3728
          %v5336 = vadd.s32 %v4869, 3736
          %v5337 = vadd.s32 %v4869, 3744
          %v5338 = vadd.s32 %v4869, 3752
          %v5339 = vadd.s32 %v4869, 3760
          %v5340 = vadd.s32 %v4869, 3768
          %v5341 = vadd.s32 %v4869, 3776
          %v5342 = vadd.s32 %v4869, 3784
          %v5343 = vadd.s32 %v4869, 3792
          %v5344 = vadd.s32 %v4869, 3800
          %v5345 = vadd.s32 %v4869, 3808
          %v5346 = vadd.s32 %v4869, 3816
          %v5347 = vadd.s32 %v4869, 3824
          %v5348 = vadd.s32 %v4869, 3832
          %v5349 = vadd.s32 %v4869, 3840
          %v5350 = vadd.s32 %v4869, 3848
          %v5351 = vadd.s32 %v4869, 3856
          %v5352 = vadd.s32 %v4869, 3864
          %v5353 = vadd.s32 %v4869, 3872
          %v5354 = vadd.s32 %v4869, 3880
          %v5355 = vadd.s32 %v4869, 3888
          %v5356 = vadd.s32 %v4869, 3896
          %v5357 = vadd.s32 %v4869, 3904
          %v5358 = vadd.s32 %v4869, 3912
          %v5359 = vadd.s32 %v4869, 3920
          %v5360 = vadd.s32 %v4869, 3928
          %v5361 = vadd.s32 %v4869, 3936
          %v5362 = vadd.s32 %v4869, 3944
          %v5363 = vadd.s32 %v4869, 3952
          %v5364 = vadd.s32 %v4869, 3960
          %v5365 = vadd.s32 %v4869, 3968
          %v5366 = vadd.s32 %v4869, 3976
          %v5367 = vadd.s32 %v4869, 3984
          %v5368 = vadd.s32 %v4869, 3992
          %v5369 = vadd.s32 %v4869, 4000
          %v5370 = vadd.s32 %v4869, 4008
          %v5371 = vadd.s32 %v4869, 4016
          %v5372 = vadd.s32 %v4869, 4024
          %v5373 = vadd.s32 %v4869, 4032
          %v5374 = vadd.s32 %v4869, 4040
          %v5375 = vadd.s32 %v4869, 4048
          %v5376 = vadd.s32 %v4869, 4056
          %v5377 = vadd.s32 %v4869, 4064
          %v5378 = vadd.s32 %v4869, 4072
          %v5379 = vadd.s32 %v4869, 4080
          %v5380 = vadd.s32 %v4869, 4088
          %v5381 = vmul.u32 %v4869, 128
          %v5382 = vmul.u32 %v4870, 128
          %v5383 = vmul.u32 %v4871, 128
          %v5384 = vmul.u32 %v4872, 128
          %v5385 = vmul.u32 %v4873, 128
          %v5386 = vmul.u32 %v4874, 128
          %v5387 = vmul.u32 %v4875, 128
          %v5388 = vmul.u32 %v4876, 128
          %v5389 = vmul.u32 %v4877, 128
          %v5390 = vmul.u32 %v4878, 128
          %v5391 = vmul.u32 %v4879, 128
          %v5392 = vmul.u32 %v4880, 128
          %v5393 = vmul.u32 %v4881, 128
          %v5394 = vmul.u32 %v4882, 128
          %v5395 = vmul.u32 %v4883, 128
          %v5396 = vmul.u32 %v4884, 128
          %v5397 = vmul.u32 %v4885, 128
          %v5398 = vmul.u32 %v4886, 128
          %v5399 = vmul.u32 %v4887, 128
          %v5400 = vmul.u32 %v4888, 128
          %v5401 = vmul.u32 %v4889, 128
          %v5402 = vmul.u32 %v4890, 128
          %v5403 = vmul.u32 %v4891, 128
          %v5404 = vmul.u32 %v4892, 128
          %v5405 = vmul.u32 %v4893, 128
          %v5406 = vmul.u32 %v4894, 128
          %v5407 = vmul.u32 %v4895, 128
          %v5408 = vmul.u32 %v4896, 128
          %v5409 = vmul.u32 %v4897, 128
          %v5410 = vmul.u32 %v4898, 128
          %v5411 = vmul.u32 %v4899, 128
          %v5412 = vmul.u32 %v4900, 128
          %v5413 = vmul.u32 %v4901, 128
          %v5414 = vmul.u32 %v4902, 128
          %v5415 = vmul.u32 %v4903, 128
          %v5416 = vmul.u32 %v4904, 128
          %v5417 = vmul.u32 %v4905, 128
          %v5418 = vmul.u32 %v4906, 128
          %v5419 = vmul.u32 %v4907, 128
          %v5420 = vmul.u32 %v4908, 128
          %v5421 = vmul.u32 %v4909, 128
          %v5422 = vmul.u32 %v4910, 128
          %v5423 = vmul.u32 %v4911, 128
          %v5424 = vmul.u32 %v4912, 128
          %v5425 = vmul.u32 %v4913, 128
          %v5426 = vmul.u32 %v4914, 128
          %v5427 = vmul.u32 %v4915, 128
          %v5428 = vmul.u32 %v4916, 128
          %v5429 = vmul.u32 %v4917, 128
          %v5430 = vmul.u32 %v4918, 128
          %v5431 = vmul.u32 %v4919, 128
          %v5432 = vmul.u32 %v4920, 128
          %v5433 = vmul.u32 %v4921, 128
          %v5434 = vmul.u32 %v4922, 128
          %v5435 = vmul.u32 %v4923, 128
          %v5436 = vmul.u32 %v4924, 128
          %v5437 = vmul.u32 %v4925, 128
          %v5438 = vmul.u32 %v4926, 128
          %v5439 = vmul.u32 %v4927, 128
          %v5440 = vmul.u32 %v4928, 128
          %v5441 = vmul.u32 %v4929, 128
          %v5442 = vmul.u32 %v4930, 128
          %v5443 = vmul.u32 %v4931, 128
          %v5444 = vmul.u32 %v4932, 128
          %v5445 = vmul.u32 %v4933, 128
          %v5446 = vmul.u32 %v4934, 128
          %v5447 = vmul.u32 %v4935, 128
          %v5448 = vmul.u32 %v4936, 128
          %v5449 = vmul.u32 %v4937, 128
          %v5450 = vmul.u32 %v4938, 128
          %v5451 = vmul.u32 %v4939, 128
          %v5452 = vmul.u32 %v4940, 128
          %v5453 = vmul.u32 %v4941, 128
          %v5454 = vmul.u32 %v4942, 128
          %v5455 = vmul.u32 %v4943, 128
          %v5456 = vmul.u32 %v4944, 128
          %v5457 = vmul.u32 %v4945, 128
          %v5458 = vmul.u32 %v4946, 128
          %v5459 = vmul.u32 %v4947, 128
          %v5460 = vmul.u32 %v4948, 128
          %v5461 = vmul.u32 %v4949, 128
          %v5462 = vmul.u32 %v4950, 128
          %v5463 = vmul.u32 %v4951, 128
          %v5464 = vmul.u32 %v4952, 128
          %v5465 = vmul.u32 %v4953, 128
          %v5466 = vmul.u32 %v4954, 128
          %v5467 = vmul.u32 %v4955, 128
          %v5468 = vmul.u32 %v4956, 128
          %v5469 = vmul.u32 %v4957, 128
          %v5470 = vmul.u32 %v4958, 128
          %v5471 = vmul.u32 %v4959, 128
          %v5472 = vmul.u32 %v4960, 128
          %v5473 = vmul.u32 %v4961, 128
          %v5474 = vmul.u32 %v4962, 128
          %v5475 = vmul.u32 %v4963, 128
          %v5476 = vmul.u32 %v4964, 128
          %v5477 = vmul.u32 %v4965, 128
          %v5478 = vmul.u32 %v4966, 128
          %v5479 = vmul.u32 %v4967, 128
          %v5480 = vmul.u32 %v4968, 128
          %v5481 = vmul.u32 %v4969, 128
          %v5482 = vmul.u32 %v4970, 128
          %v5483 = vmul.u32 %v4971, 128
          %v5484 = vmul.u32 %v4972, 128
          %v5485 = vmul.u32 %v4973, 128
          %v5486 = vmul.u32 %v4974, 128
          %v5487 = vmul.u32 %v4975, 128
          %v5488 = vmul.u32 %v4976, 128
          %v5489 = vmul.u32 %v4977, 128
          %v5490 = vmul.u32 %v4978, 128
          %v5491 = vmul.u32 %v4979, 128
          %v5492 = vmul.u32 %v4980, 128
          %v5493 = vmul.u32 %v4981, 128
          %v5494 = vmul.u32 %v4982, 128
          %v5495 = vmul.u32 %v4983, 128
          %v5496 = vmul.u32 %v4984, 128
          %v5497 = vmul.u32 %v4985, 128
          %v5498 = vmul.u32 %v4986, 128
          %v5499 = vmul.u32 %v4987, 128
          %v5500 = vmul.u32 %v4988, 128
          %v5501 = vmul.u32 %v4989, 128
          %v5502 = vmul.u32 %v4990, 128
          %v5503 = vmul.u32 %v4991, 128
          %v5504 = vmul.u32 %v4992, 128
          %v5505 = vmul.u32 %v4993, 128
          %v5506 = vmul.u32 %v4994, 128
          %v5507 = vmul.u32 %v4995, 128
          %v5508 = vmul.u32 %v4996, 128
          %v5509 = vmul.u32 %v4997, 128
          %v5510 = vmul.u32 %v4998, 128
          %v5511 = vmul.u32 %v4999, 128
          %v5512 = vmul.u32 %v5000, 128
          %v5513 = vmul.u32 %v5001, 128
          %v5514 = vmul.u32 %v5002, 128
          %v5515 = vmul.u32 %v5003, 128
          %v5516 = vmul.u32 %v5004, 128
          %v5517 = vmul.u32 %v5005, 128
          %v5518 = vmul.u32 %v5006, 128
          %v5519 = vmul.u32 %v5007, 128
          %v5520 = vmul.u32 %v5008, 128
          %v5521 = vmul.u32 %v5009, 128
          %v5522 = vmul.u32 %v5010, 128
          %v5523 = vmul.u32 %v5011, 128
          %v5524 = vmul.u32 %v5012, 128
          %v5525 = vmul.u32 %v5013, 128
          %v5526 = vmul.u32 %v5014, 128
          %v5527 = vmul.u32 %v5015, 128
          %v5528 = vmul.u32 %v5016, 128
          %v5529 = vmul.u32 %v5017, 128
          %v5530 = vmul.u32 %v5018, 128
          %v5531 = vmul.u32 %v5019, 128
          %v5532 = vmul.u32 %v5020, 128
          %v5533 = vmul.u32 %v5021, 128
          %v5534 = vmul.u32 %v5022, 128
          %v5535 = vmul.u32 %v5023, 128
          %v5536 = vmul.u32 %v5024, 128
          %v5537 = vmul.u32 %v5025, 128
          %v5538 = vmul.u32 %v5026, 128
          %v5539 = vmul.u32 %v5027, 128
          %v5540 = vmul.u32 %v5028, 128
          %v5541 = vmul.u32 %v5029, 128
          %v5542 = vmul.u32 %v5030, 128
          %v5543 = vmul.u32 %v5031, 128
          %v5544 = vmul.u32 %v5032, 128
          %v5545 = vmul.u32 %v5033, 128
          %v5546 = vmul.u32 %v5034, 128
          %v5547 = vmul.u32 %v5035, 128
          %v5548 = vmul.u32 %v5036, 128
          %v5549 = vmul.u32 %v5037, 128
          %v5550 = vmul.u32 %v5038, 128
          %v5551 = vmul.u32 %v5039, 128
          %v5552 = vmul.u32 %v5040, 128
          %v5553 = vmul.u32 %v5041, 128
          %v5554 = vmul.u32 %v5042, 128
          %v5555 = vmul.u32 %v5043, 128
          %v5556 = vmul.u32 %v5044, 128
          %v5557 = vmul.u32 %v5045, 128
          %v5558 = vmul.u32 %v5046, 128
          %v5559 = vmul.u32 %v5047, 128
          %v5560 = vmul.u32 %v5048, 128
          %v5561 = vmul.u32 %v5049, 128
          %v5562 = vmul.u32 %v5050, 128
          %v5563 = vmul.u32 %v5051, 128
          %v5564 = vmul.u32 %v5052, 128
          %v5565 = vmul.u32 %v5053, 128
          %v5566 = vmul.u32 %v5054, 128
          %v5567 = vmul.u32 %v5055, 128
          %v5568 = vmul.u32 %v5056, 128
          %v5569 = vmul.u32 %v5057, 128
          %v5570 = vmul.u32 %v5058, 128
          %v5571 = vmul.u32 %v5059, 128
          %v5572 = vmul.u32 %v5060, 128
          %v5573 = vmul.u32 %v5061, 128
          %v5574 = vmul.u32 %v5062, 128
          %v5575 = vmul.u32 %v5063, 128
          %v5576 = vmul.u32 %v5064, 128
          %v5577 = vmul.u32 %v5065, 128
          %v5578 = vmul.u32 %v5066, 128
          %v5579 = vmul.u32 %v5067, 128
          %v5580 = vmul.u32 %v5068, 128
          %v5581 = vmul.u32 %v5069, 128
          %v5582 = vmul.u32 %v5070, 128
          %v5583 = vmul.u32 %v5071, 128
          %v5584 = vmul.u32 %v5072, 128
          %v5585 = vmul.u32 %v5073, 128
          %v5586 = vmul.u32 %v5074, 128
          %v5587 = vmul.u32 %v5075, 128
          %v5588 = vmul.u32 %v5076, 128
          %v5589 = vmul.u32 %v5077, 128
          %v5590 = vmul.u32 %v5078, 128
          %v5591 = vmul.u32 %v5079, 128
          %v5592 = vmul.u32 %v5080, 128
          %v5593 = vmul.u32 %v5081, 128
          %v5594 = vmul.u32 %v5082, 128
          %v5595 = vmul.u32 %v5083, 128
          %v5596 = vmul.u32 %v5084, 128
          %v5597 = vmul.u32 %v5085, 128
          %v5598 = vmul.u32 %v5086, 128
          %v5599 = vmul.u32 %v5087, 128
          %v5600 = vmul.u32 %v5088, 128
          %v5601 = vmul.u32 %v5089, 128
          %v5602 = vmul.u32 %v5090, 128
          %v5603 = vmul.u32 %v5091, 128
          %v5604 = vmul.u32 %v5092, 128
          %v5605 = vmul.u32 %v5093, 128
          %v5606 = vmul.u32 %v5094, 128
          %v5607 = vmul.u32 %v5095, 128
          %v5608 = vmul.u32 %v5096, 128
          %v5609 = vmul.u32 %v5097, 128
          %v5610 = vmul.u32 %v5098, 128
          %v5611 = vmul.u32 %v5099, 128
          %v5612 = vmul.u32 %v5100, 128
          %v5613 = vmul.u32 %v5101, 128
          %v5614 = vmul.u32 %v5102, 128
          %v5615 = vmul.u32 %v5103, 128
          %v5616 = vmul.u32 %v5104, 128
          %v5617 = vmul.u32 %v5105, 128
          %v5618 = vmul.u32 %v5106, 128
          %v5619 = vmul.u32 %v5107, 128
          %v5620 = vmul.u32 %v5108, 128
          %v5621 = vmul.u32 %v5109, 128
          %v5622 = vmul.u32 %v5110, 128
          %v5623 = vmul.u32 %v5111, 128
          %v5624 = vmul.u32 %v5112, 128
          %v5625 = vmul.u32 %v5113, 128
          %v5626 = vmul.u32 %v5114, 128
          %v5627 = vmul.u32 %v5115, 128
          %v5628 = vmul.u32 %v5116, 128
          %v5629 = vmul.u32 %v5117, 128
          %v5630 = vmul.u32 %v5118, 128
          %v5631 = vmul.u32 %v5119, 128
          %v5632 = vmul.u32 %v5120, 128
          %v5633 = vmul.u32 %v5121, 128
          %v5634 = vmul.u32 %v5122, 128
          %v5635 = vmul.u32 %v5123, 128
          %v5636 = vmul.u32 %v5124, 128
          %v5637 = vmul.u32 %v5125, 128
          %v5638 = vmul.u32 %v5126, 128
          %v5639 = vmul.u32 %v5127, 128
          %v5640 = vmul.u32 %v5128, 128
          %v5641 = vmul.u32 %v5129, 128
          %v5642 = vmul.u32 %v5130, 128
          %v5643 = vmul.u32 %v5131, 128
          %v5644 = vmul.u32 %v5132, 128
          %v5645 = vmul.u32 %v5133, 128
          %v5646 = vmul.u32 %v5134, 128
          %v5647 = vmul.u32 %v5135, 128
          %v5648 = vmul.u32 %v5136, 128
          %v5649 = vmul.u32 %v5137, 128
          %v5650 = vmul.u32 %v5138, 128
          %v5651 = vmul.u32 %v5139, 128
          %v5652 = vmul.u32 %v5140, 128
          %v5653 = vmul.u32 %v5141, 128
          %v5654 = vmul.u32 %v5142, 128
          %v5655 = vmul.u32 %v5143, 128
          %v5656 = vmul.u32 %v5144, 128
          %v5657 = vmul.u32 %v5145, 128
          %v5658 = vmul.u32 %v5146, 128
          %v5659 = vmul.u32 %v5147, 128
          %v5660 = vmul.u32 %v5148, 128
          %v5661 = vmul.u32 %v5149, 128
          %v5662 = vmul.u32 %v5150, 128
          %v5663 = vmul.u32 %v5151, 128
          %v5664 = vmul.u32 %v5152, 128
          %v5665 = vmul.u32 %v5153, 128
          %v5666 = vmul.u32 %v5154, 128
          %v5667 = vmul.u32 %v5155, 128
          %v5668 = vmul.u32 %v5156, 128
          %v5669 = vmul.u32 %v5157, 128
          %v5670 = vmul.u32 %v5158, 128
          %v5671 = vmul.u32 %v5159, 128
          %v5672 = vmul.u32 %v5160, 128
          %v5673 = vmul.u32 %v5161, 128
          %v5674 = vmul.u32 %v5162, 128
          %v5675 = vmul.u32 %v5163, 128
          %v5676 = vmul.u32 %v5164, 128
          %v5677 = vmul.u32 %v5165, 128
          %v5678 = vmul.u32 %v5166, 128
          %v5679 = vmul.u32 %v5167, 128
          %v5680 = vmul.u32 %v5168, 128
          %v5681 = vmul.u32 %v5169, 128
          %v5682 = vmul.u32 %v5170, 128
          %v5683 = vmul.u32 %v5171, 128
          %v5684 = vmul.u32 %v5172, 128
          %v5685 = vmul.u32 %v5173, 128
          %v5686 = vmul.u32 %v5174, 128
          %v5687 = vmul.u32 %v5175, 128
          %v5688 = vmul.u32 %v5176, 128
          %v5689 = vmul.u32 %v5177, 128
          %v5690 = vmul.u32 %v5178, 128
          %v5691 = vmul.u32 %v5179, 128
          %v5692 = vmul.u32 %v5180, 128
          %v5693 = vmul.u32 %v5181, 128
          %v5694 = vmul.u32 %v5182, 128
          %v5695 = vmul.u32 %v5183, 128
          %v5696 = vmul.u32 %v5184, 128
          %v5697 = vmul.u32 %v5185, 128
          %v5698 = vmul.u32 %v5186, 128
          %v5699 = vmul.u32 %v5187, 128
          %v5700 = vmul.u32 %v5188, 128
          %v5701 = vmul.u32 %v5189, 128
          %v5702 = vmul.u32 %v5190, 128
          %v5703 = vmul.u32 %v5191, 128
          %v5704 = vmul.u32 %v5192, 128
          %v5705 = vmul.u32 %v5193, 128
          %v5706 = vmul.u32 %v5194, 128
          %v5707 = vmul.u32 %v5195, 128
          %v5708 = vmul.u32 %v5196, 128
          %v5709 = vmul.u32 %v5197, 128
          %v5710 = vmul.u32 %v5198, 128
          %v5711 = vmul.u32 %v5199, 128
          %v5712 = vmul.u32 %v5200, 128
          %v5713 = vmul.u32 %v5201, 128
          %v5714 = vmul.u32 %v5202, 128
          %v5715 = vmul.u32 %v5203, 128
          %v5716 = vmul.u32 %v5204, 128
          %v5717 = vmul.u32 %v5205, 128
          %v5718 = vmul.u32 %v5206, 128
          %v5719 = vmul.u32 %v5207, 128
          %v5720 = vmul.u32 %v5208, 128
          %v5721 = vmul.u32 %v5209, 128
          %v5722 = vmul.u32 %v5210, 128
          %v5723 = vmul.u32 %v5211, 128
          %v5724 = vmul.u32 %v5212, 128
          %v5725 = vmul.u32 %v5213, 128
          %v5726 = vmul.u32 %v5214, 128
          %v5727 = vmul.u32 %v5215, 128
          %v5728 = vmul.u32 %v5216, 128
          %v5729 = vmul.u32 %v5217, 128
          %v5730 = vmul.u32 %v5218, 128
          %v5731 = vmul.u32 %v5219, 128
          %v5732 = vmul.u32 %v5220, 128
          %v5733 = vmul.u32 %v5221, 128
          %v5734 = vmul.u32 %v5222, 128
          %v5735 = vmul.u32 %v5223, 128
          %v5736 = vmul.u32 %v5224, 128
          %v5737 = vmul.u32 %v5225, 128
          %v5738 = vmul.u32 %v5226, 128
          %v5739 = vmul.u32 %v5227, 128
          %v5740 = vmul.u32 %v5228, 128
          %v5741 = vmul.u32 %v5229, 128
          %v5742 = vmul.u32 %v5230, 128
          %v5743 = vmul.u32 %v5231, 128
          %v5744 = vmul.u32 %v5232, 128
          %v5745 = vmul.u32 %v5233, 128
          %v5746 = vmul.u32 %v5234, 128
          %v5747 = vmul.u32 %v5235, 128
          %v5748 = vmul.u32 %v5236, 128
          %v5749 = vmul.u32 %v5237, 128
          %v5750 = vmul.u32 %v5238, 128
          %v5751 = vmul.u32 %v5239, 128
          %v5752 = vmul.u32 %v5240, 128
          %v5753 = vmul.u32 %v5241, 128
          %v5754 = vmul.u32 %v5242, 128
          %v5755 = vmul.u32 %v5243, 128
          %v5756 = vmul.u32 %v5244, 128
          %v5757 = vmul.u32 %v5245, 128
          %v5758 = vmul.u32 %v5246, 128
          %v5759 = vmul.u32 %v5247, 128
          %v5760 = vmul.u32 %v5248, 128
          %v5761 = vmul.u32 %v5249, 128
          %v5762 = vmul.u32 %v5250, 128
          %v5763 = vmul.u32 %v5251, 128
          %v5764 = vmul.u32 %v5252, 128
          %v5765 = vmul.u32 %v5253, 128
          %v5766 = vmul.u32 %v5254, 128
          %v5767 = vmul.u32 %v5255, 128
          %v5768 = vmul.u32 %v5256, 128
          %v5769 = vmul.u32 %v5257, 128
          %v5770 = vmul.u32 %v5258, 128
          %v5771 = vmul.u32 %v5259, 128
          %v5772 = vmul.u32 %v5260, 128
          %v5773 = vmul.u32 %v5261, 128
          %v5774 = vmul.u32 %v5262, 128
          %v5775 = vmul.u32 %v5263, 128
          %v5776 = vmul.u32 %v5264, 128
          %v5777 = vmul.u32 %v5265, 128
          %v5778 = vmul.u32 %v5266, 128
          %v5779 = vmul.u32 %v5267, 128
          %v5780 = vmul.u32 %v5268, 128
          %v5781 = vmul.u32 %v5269, 128
          %v5782 = vmul.u32 %v5270, 128
          %v5783 = vmul.u32 %v5271, 128
          %v5784 = vmul.u32 %v5272, 128
          %v5785 = vmul.u32 %v5273, 128
          %v5786 = vmul.u32 %v5274, 128
          %v5787 = vmul.u32 %v5275, 128
          %v5788 = vmul.u32 %v5276, 128
          %v5789 = vmul.u32 %v5277, 128
          %v5790 = vmul.u32 %v5278, 128
          %v5791 = vmul.u32 %v5279, 128
          %v5792 = vmul.u32 %v5280, 128
          %v5793 = vmul.u32 %v5281, 128
          %v5794 = vmul.u32 %v5282, 128
          %v5795 = vmul.u32 %v5283, 128
          %v5796 = vmul.u32 %v5284, 128
          %v5797 = vmul.u32 %v5285, 128
          %v5798 = vmul.u32 %v5286, 128
          %v5799 = vmul.u32 %v5287, 128
          %v5800 = vmul.u32 %v5288, 128
          %v5801 = vmul.u32 %v5289, 128
          %v5802 = vmul.u32 %v5290, 128
          %v5803 = vmul.u32 %v5291, 128
          %v5804 = vmul.u32 %v5292, 128
          %v5805 = vmul.u32 %v5293, 128
          %v5806 = vmul.u32 %v5294, 128
          %v5807 = vmul.u32 %v5295, 128
          %v5808 = vmul.u32 %v5296, 128
          %v5809 = vmul.u32 %v5297, 128
          %v5810 = vmul.u32 %v5298, 128
          %v5811 = vmul.u32 %v5299, 128
          %v5812 = vmul.u32 %v5300, 128
          %v5813 = vmul.u32 %v5301, 128
          %v5814 = vmul.u32 %v5302, 128
          %v5815 = vmul.u32 %v5303, 128
          %v5816 = vmul.u32 %v5304, 128
          %v5817 = vmul.u32 %v5305, 128
          %v5818 = vmul.u32 %v5306, 128
          %v5819 = vmul.u32 %v5307, 128
          %v5820 = vmul.u32 %v5308, 128
          %v5821 = vmul.u32 %v5309, 128
          %v5822 = vmul.u32 %v5310, 128
          %v5823 = vmul.u32 %v5311, 128
          %v5824 = vmul.u32 %v5312, 128
          %v5825 = vmul.u32 %v5313, 128
          %v5826 = vmul.u32 %v5314, 128
          %v5827 = vmul.u32 %v5315, 128
          %v5828 = vmul.u32 %v5316, 128
          %v5829 = vmul.u32 %v5317, 128
          %v5830 = vmul.u32 %v5318, 128
          %v5831 = vmul.u32 %v5319, 128
          %v5832 = vmul.u32 %v5320, 128
          %v5833 = vmul.u32 %v5321, 128
          %v5834 = vmul.u32 %v5322, 128
          %v5835 = vmul.u32 %v5323, 128
          %v5836 = vmul.u32 %v5324, 128
          %v5837 = vmul.u32 %v5325, 128
          %v5838 = vmul.u32 %v5326, 128
          %v5839 = vmul.u32 %v5327, 128
          %v5840 = vmul.u32 %v5328, 128
          %v5841 = vmul.u32 %v5329, 128
          %v5842 = vmul.u32 %v5330, 128
          %v5843 = vmul.u32 %v5331, 128
          %v5844 = vmul.u32 %v5332, 128
          %v5845 = vmul.u32 %v5333, 128
          %v5846 = vmul.u32 %v5334, 128
          %v5847 = vmul.u32 %v5335, 128
          %v5848 = vmul.u32 %v5336, 128
          %v5849 = vmul.u32 %v5337, 128
          %v5850 = vmul.u32 %v5338, 128
          %v5851 = vmul.u32 %v5339, 128
          %v5852 = vmul.u32 %v5340, 128
          %v5853 = vmul.u32 %v5341, 128
          %v5854 = vmul.u32 %v5342, 128
          %v5855 = vmul.u32 %v5343, 128
          %v5856 = vmul.u32 %v5344, 128
          %v5857 = vmul.u32 %v5345, 128
          %v5858 = vmul.u32 %v5346, 128
          %v5859 = vmul.u32 %v5347, 128
          %v5860 = vmul.u32 %v5348, 128
          %v5861 = vmul.u32 %v5349, 128
          %v5862 = vmul.u32 %v5350, 128
          %v5863 = vmul.u32 %v5351, 128
          %v5864 = vmul.u32 %v5352, 128
          %v5865 = vmul.u32 %v5353, 128
          %v5866 = vmul.u32 %v5354, 128
          %v5867 = vmul.u32 %v5355, 128
          %v5868 = vmul.u32 %v5356, 128
          %v5869 = vmul.u32 %v5357, 128
          %v5870 = vmul.u32 %v5358, 128
          %v5871 = vmul.u32 %v5359, 128
          %v5872 = vmul.u32 %v5360, 128
          %v5873 = vmul.u32 %v5361, 128
          %v5874 = vmul.u32 %v5362, 128
          %v5875 = vmul.u32 %v5363, 128
          %v5876 = vmul.u32 %v5364, 128
          %v5877 = vmul.u32 %v5365, 128
          %v5878 = vmul.u32 %v5366, 128
          %v5879 = vmul.u32 %v5367, 128
          %v5880 = vmul.u32 %v5368, 128
          %v5881 = vmul.u32 %v5369, 128
          %v5882 = vmul.u32 %v5370, 128
          %v5883 = vmul.u32 %v5371, 128
          %v5884 = vmul.u32 %v5372, 128
          %v5885 = vmul.u32 %v5373, 128
          %v5886 = vmul.u32 %v5374, 128
          %v5887 = vmul.u32 %v5375, 128
          %v5888 = vmul.u32 %v5376, 128
          %v5889 = vmul.u32 %v5377, 128
          %v5890 = vmul.u32 %v5378, 128
          %v5891 = vmul.u32 %v5379, 128
          %v5892 = vmul.u32 %v5380, 128
          %v5893 = vlaneseq
          %v5894 = vand.u32 %v5893, 127
          %v5895 = vadd.s32 %v5381, %v5894
          %v5896 = vadd.s32 %v5382, %v5894
          %v5897 = vadd.s32 %v5383, %v5894
          %v5898 = vadd.s32 %v5384, %v5894
          %v5899 = vadd.s32 %v5385, %v5894
          %v5900 = vadd.s32 %v5386, %v5894
          %v5901 = vadd.s32 %v5387, %v5894
          %v5902 = vadd.s32 %v5388, %v5894
          %v5903 = vadd.s32 %v5389, %v5894
          %v5904 = vadd.s32 %v5390, %v5894
          %v5905 = vadd.s32 %v5391, %v5894
          %v5906 = vadd.s32 %v5392, %v5894
          %v5907 = vadd.s32 %v5393, %v5894
          %v5908 = vadd.s32 %v5394, %v5894
          %v5909 = vadd.s32 %v5395, %v5894
          %v5910 = vadd.s32 %v5396, %v5894
          %v5911 = vadd.s32 %v5397, %v5894
          %v5912 = vadd.s32 %v5398, %v5894
          %v5913 = vadd.s32 %v5399, %v5894
          %v5914 = vadd.s32 %v5400, %v5894
          %v5915 = vadd.s32 %v5401, %v5894
          %v5916 = vadd.s32 %v5402, %v5894
          %v5917 = vadd.s32 %v5403, %v5894
          %v5918 = vadd.s32 %v5404, %v5894
          %v5919 = vadd.s32 %v5405, %v5894
          %v5920 = vadd.s32 %v5406, %v5894
          %v5921 = vadd.s32 %v5407, %v5894
          %v5922 = vadd.s32 %v5408, %v5894
          %v5923 = vadd.s32 %v5409, %v5894
          %v5924 = vadd.s32 %v5410, %v5894
          %v5925 = vadd.s32 %v5411, %v5894
          %v5926 = vadd.s32 %v5412, %v5894
          %v5927 = vadd.s32 %v5413, %v5894
          %v5928 = vadd.s32 %v5414, %v5894
          %v5929 = vadd.s32 %v5415, %v5894
          %v5930 = vadd.s32 %v5416, %v5894
          %v5931 = vadd.s32 %v5417, %v5894
          %v5932 = vadd.s32 %v5418, %v5894
          %v5933 = vadd.s32 %v5419, %v5894
          %v5934 = vadd.s32 %v5420, %v5894
          %v5935 = vadd.s32 %v5421, %v5894
          %v5936 = vadd.s32 %v5422, %v5894
          %v5937 = vadd.s32 %v5423, %v5894
          %v5938 = vadd.s32 %v5424, %v5894
          %v5939 = vadd.s32 %v5425, %v5894
          %v5940 = vadd.s32 %v5426, %v5894
          %v5941 = vadd.s32 %v5427, %v5894
          %v5942 = vadd.s32 %v5428, %v5894
          %v5943 = vadd.s32 %v5429, %v5894
          %v5944 = vadd.s32 %v5430, %v5894
          %v5945 = vadd.s32 %v5431, %v5894
          %v5946 = vadd.s32 %v5432, %v5894
          %v5947 = vadd.s32 %v5433, %v5894
          %v5948 = vadd.s32 %v5434, %v5894
          %v5949 = vadd.s32 %v5435, %v5894
          %v5950 = vadd.s32 %v5436, %v5894
          %v5951 = vadd.s32 %v5437, %v5894
          %v5952 = vadd.s32 %v5438, %v5894
          %v5953 = vadd.s32 %v5439, %v5894
          %v5954 = vadd.s32 %v5440, %v5894
          %v5955 = vadd.s32 %v5441, %v5894
          %v5956 = vadd.s32 %v5442, %v5894
          %v5957 = vadd.s32 %v5443, %v5894
          %v5958 = vadd.s32 %v5444, %v5894
          %v5959 = vadd.s32 %v5445, %v5894
          %v5960 = vadd.s32 %v5446, %v5894
          %v5961 = vadd.s32 %v5447, %v5894
          %v5962 = vadd.s32 %v5448, %v5894
          %v5963 = vadd.s32 %v5449, %v5894
          %v5964 = vadd.s32 %v5450, %v5894
          %v5965 = vadd.s32 %v5451, %v5894
          %v5966 = vadd.s32 %v5452, %v5894
          %v5967 = vadd.s32 %v5453, %v5894
          %v5968 = vadd.s32 %v5454, %v5894
          %v5969 = vadd.s32 %v5455, %v5894
          %v5970 = vadd.s32 %v5456, %v5894
          %v5971 = vadd.s32 %v5457, %v5894
          %v5972 = vadd.s32 %v5458, %v5894
          %v5973 = vadd.s32 %v5459, %v5894
          %v5974 = vadd.s32 %v5460, %v5894
          %v5975 = vadd.s32 %v5461, %v5894
          %v5976 = vadd.s32 %v5462, %v5894
          %v5977 = vadd.s32 %v5463, %v5894
          %v5978 = vadd.s32 %v5464, %v5894
          %v5979 = vadd.s32 %v5465, %v5894
          %v5980 = vadd.s32 %v5466, %v5894
          %v5981 = vadd.s32 %v5467, %v5894
          %v5982 = vadd.s32 %v5468, %v5894
          %v5983 = vadd.s32 %v5469, %v5894
          %v5984 = vadd.s32 %v5470, %v5894
          %v5985 = vadd.s32 %v5471, %v5894
          %v5986 = vadd.s32 %v5472, %v5894
          %v5987 = vadd.s32 %v5473, %v5894
          %v5988 = vadd.s32 %v5474, %v5894
          %v5989 = vadd.s32 %v5475, %v5894
          %v5990 = vadd.s32 %v5476, %v5894
          %v5991 = vadd.s32 %v5477, %v5894
          %v5992 = vadd.s32 %v5478, %v5894
          %v5993 = vadd.s32 %v5479, %v5894
          %v5994 = vadd.s32 %v5480, %v5894
          %v5995 = vadd.s32 %v5481, %v5894
          %v5996 = vadd.s32 %v5482, %v5894
          %v5997 = vadd.s32 %v5483, %v5894
          %v5998 = vadd.s32 %v5484, %v5894
          %v5999 = vadd.s32 %v5485, %v5894
          %v6000 = vadd.s32 %v5486, %v5894
          %v6001 = vadd.s32 %v5487, %v5894
          %v6002 = vadd.s32 %v5488, %v5894
          %v6003 = vadd.s32 %v5489, %v5894
          %v6004 = vadd.s32 %v5490, %v5894
          %v6005 = vadd.s32 %v5491, %v5894
          %v6006 = vadd.s32 %v5492, %v5894
          %v6007 = vadd.s32 %v5493, %v5894
          %v6008 = vadd.s32 %v5494, %v5894
          %v6009 = vadd.s32 %v5495, %v5894
          %v6010 = vadd.s32 %v5496, %v5894
          %v6011 = vadd.s32 %v5497, %v5894
          %v6012 = vadd.s32 %v5498, %v5894
          %v6013 = vadd.s32 %v5499, %v5894
          %v6014 = vadd.s32 %v5500, %v5894
          %v6015 = vadd.s32 %v5501, %v5894
          %v6016 = vadd.s32 %v5502, %v5894
          %v6017 = vadd.s32 %v5503, %v5894
          %v6018 = vadd.s32 %v5504, %v5894
          %v6019 = vadd.s32 %v5505, %v5894
          %v6020 = vadd.s32 %v5506, %v5894
          %v6021 = vadd.s32 %v5507, %v5894
          %v6022 = vadd.s32 %v5508, %v5894
          %v6023 = vadd.s32 %v5509, %v5894
          %v6024 = vadd.s32 %v5510, %v5894
          %v6025 = vadd.s32 %v5511, %v5894
          %v6026 = vadd.s32 %v5512, %v5894
          %v6027 = vadd.s32 %v5513, %v5894
          %v6028 = vadd.s32 %v5514, %v5894
          %v6029 = vadd.s32 %v5515, %v5894
          %v6030 = vadd.s32 %v5516, %v5894
          %v6031 = vadd.s32 %v5517, %v5894
          %v6032 = vadd.s32 %v5518, %v5894
          %v6033 = vadd.s32 %v5519, %v5894
          %v6034 = vadd.s32 %v5520, %v5894
          %v6035 = vadd.s32 %v5521, %v5894
          %v6036 = vadd.s32 %v5522, %v5894
          %v6037 = vadd.s32 %v5523, %v5894
          %v6038 = vadd.s32 %v5524, %v5894
          %v6039 = vadd.s32 %v5525, %v5894
          %v6040 = vadd.s32 %v5526, %v5894
          %v6041 = vadd.s32 %v5527, %v5894
          %v6042 = vadd.s32 %v5528, %v5894
          %v6043 = vadd.s32 %v5529, %v5894
          %v6044 = vadd.s32 %v5530, %v5894
          %v6045 = vadd.s32 %v5531, %v5894
          %v6046 = vadd.s32 %v5532, %v5894
          %v6047 = vadd.s32 %v5533, %v5894
          %v6048 = vadd.s32 %v5534, %v5894
          %v6049 = vadd.s32 %v5535, %v5894
          %v6050 = vadd.s32 %v5536, %v5894
          %v6051 = vadd.s32 %v5537, %v5894
          %v6052 = vadd.s32 %v5538, %v5894
          %v6053 = vadd.s32 %v5539, %v5894
          %v6054 = vadd.s32 %v5540, %v5894
          %v6055 = vadd.s32 %v5541, %v5894
          %v6056 = vadd.s32 %v5542, %v5894
          %v6057 = vadd.s32 %v5543, %v5894
          %v6058 = vadd.s32 %v5544, %v5894
          %v6059 = vadd.s32 %v5545, %v5894
          %v6060 = vadd.s32 %v5546, %v5894
          %v6061 = vadd.s32 %v5547, %v5894
          %v6062 = vadd.s32 %v5548, %v5894
          %v6063 = vadd.s32 %v5549, %v5894
          %v6064 = vadd.s32 %v5550, %v5894
          %v6065 = vadd.s32 %v5551, %v5894
          %v6066 = vadd.s32 %v5552, %v5894
          %v6067 = vadd.s32 %v5553, %v5894
          %v6068 = vadd.s32 %v5554, %v5894
          %v6069 = vadd.s32 %v5555, %v5894
          %v6070 = vadd.s32 %v5556, %v5894
          %v6071 = vadd.s32 %v5557, %v5894
          %v6072 = vadd.s32 %v5558, %v5894
          %v6073 = vadd.s32 %v5559, %v5894
          %v6074 = vadd.s32 %v5560, %v5894
          %v6075 = vadd.s32 %v5561, %v5894
          %v6076 = vadd.s32 %v5562, %v5894
          %v6077 = vadd.s32 %v5563, %v5894
          %v6078 = vadd.s32 %v5564, %v5894
          %v6079 = vadd.s32 %v5565, %v5894
          %v6080 = vadd.s32 %v5566, %v5894
          %v6081 = vadd.s32 %v5567, %v5894
          %v6082 = vadd.s32 %v5568, %v5894
          %v6083 = vadd.s32 %v5569, %v5894
          %v6084 = vadd.s32 %v5570, %v5894
          %v6085 = vadd.s32 %v5571, %v5894
          %v6086 = vadd.s32 %v5572, %v5894
          %v6087 = vadd.s32 %v5573, %v5894
          %v6088 = vadd.s32 %v5574, %v5894
          %v6089 = vadd.s32 %v5575, %v5894
          %v6090 = vadd.s32 %v5576, %v5894
          %v6091 = vadd.s32 %v5577, %v5894
          %v6092 = vadd.s32 %v5578, %v5894
          %v6093 = vadd.s32 %v5579, %v5894
          %v6094 = vadd.s32 %v5580, %v5894
          %v6095 = vadd.s32 %v5581, %v5894
          %v6096 = vadd.s32 %v5582, %v5894
          %v6097 = vadd.s32 %v5583, %v5894
          %v6098 = vadd.s32 %v5584, %v5894
          %v6099 = vadd.s32 %v5585, %v5894
          %v6100 = vadd.s32 %v5586, %v5894
          %v6101 = vadd.s32 %v5587, %v5894
          %v6102 = vadd.s32 %v5588, %v5894
          %v6103 = vadd.s32 %v5589, %v5894
          %v6104 = vadd.s32 %v5590, %v5894
          %v6105 = vadd.s32 %v5591, %v5894
          %v6106 = vadd.s32 %v5592, %v5894
          %v6107 = vadd.s32 %v5593, %v5894
          %v6108 = vadd.s32 %v5594, %v5894
          %v6109 = vadd.s32 %v5595, %v5894
          %v6110 = vadd.s32 %v5596, %v5894
          %v6111 = vadd.s32 %v5597, %v5894
          %v6112 = vadd.s32 %v5598, %v5894
          %v6113 = vadd.s32 %v5599, %v5894
          %v6114 = vadd.s32 %v5600, %v5894
          %v6115 = vadd.s32 %v5601, %v5894
          %v6116 = vadd.s32 %v5602, %v5894
          %v6117 = vadd.s32 %v5603, %v5894
          %v6118 = vadd.s32 %v5604, %v5894
          %v6119 = vadd.s32 %v5605, %v5894
          %v6120 = vadd.s32 %v5606, %v5894
          %v6121 = vadd.s32 %v5607, %v5894
          %v6122 = vadd.s32 %v5608, %v5894
          %v6123 = vadd.s32 %v5609, %v5894
          %v6124 = vadd.s32 %v5610, %v5894
          %v6125 = vadd.s32 %v5611, %v5894
          %v6126 = vadd.s32 %v5612, %v5894
          %v6127 = vadd.s32 %v5613, %v5894
          %v6128 = vadd.s32 %v5614, %v5894
          %v6129 = vadd.s32 %v5615, %v5894
          %v6130 = vadd.s32 %v5616, %v5894
          %v6131 = vadd.s32 %v5617, %v5894
          %v6132 = vadd.s32 %v5618, %v5894
          %v6133 = vadd.s32 %v5619, %v5894
          %v6134 = vadd.s32 %v5620, %v5894
          %v6135 = vadd.s32 %v5621, %v5894
          %v6136 = vadd.s32 %v5622, %v5894
          %v6137 = vadd.s32 %v5623, %v5894
          %v6138 = vadd.s32 %v5624, %v5894
          %v6139 = vadd.s32 %v5625, %v5894
          %v6140 = vadd.s32 %v5626, %v5894
          %v6141 = vadd.s32 %v5627, %v5894
          %v6142 = vadd.s32 %v5628, %v5894
          %v6143 = vadd.s32 %v5629, %v5894
          %v6144 = vadd.s32 %v5630, %v5894
          %v6145 = vadd.s32 %v5631, %v5894
          %v6146 = vadd.s32 %v5632, %v5894
          %v6147 = vadd.s32 %v5633, %v5894
          %v6148 = vadd.s32 %v5634, %v5894
          %v6149 = vadd.s32 %v5635, %v5894
          %v6150 = vadd.s32 %v5636, %v5894
          %v6151 = vadd.s32 %v5637, %v5894
          %v6152 = vadd.s32 %v5638, %v5894
          %v6153 = vadd.s32 %v5639, %v5894
          %v6154 = vadd.s32 %v5640, %v5894
          %v6155 = vadd.s32 %v5641, %v5894
          %v6156 = vadd.s32 %v5642, %v5894
          %v6157 = vadd.s32 %v5643, %v5894
          %v6158 = vadd.s32 %v5644, %v5894
          %v6159 = vadd.s32 %v5645, %v5894
          %v6160 = vadd.s32 %v5646, %v5894
          %v6161 = vadd.s32 %v5647, %v5894
          %v6162 = vadd.s32 %v5648, %v5894
          %v6163 = vadd.s32 %v5649, %v5894
          %v6164 = vadd.s32 %v5650, %v5894
          %v6165 = vadd.s32 %v5651, %v5894
          %v6166 = vadd.s32 %v5652, %v5894
          %v6167 = vadd.s32 %v5653, %v5894
          %v6168 = vadd.s32 %v5654, %v5894
          %v6169 = vadd.s32 %v5655, %v5894
          %v6170 = vadd.s32 %v5656, %v5894
          %v6171 = vadd.s32 %v5657, %v5894
          %v6172 = vadd.s32 %v5658, %v5894
          %v6173 = vadd.s32 %v5659, %v5894
          %v6174 = vadd.s32 %v5660, %v5894
          %v6175 = vadd.s32 %v5661, %v5894
          %v6176 = vadd.s32 %v5662, %v5894
          %v6177 = vadd.s32 %v5663, %v5894
          %v6178 = vadd.s32 %v5664, %v5894
          %v6179 = vadd.s32 %v5665, %v5894
          %v6180 = vadd.s32 %v5666, %v5894
          %v6181 = vadd.s32 %v5667, %v5894
          %v6182 = vadd.s32 %v5668, %v5894
          %v6183 = vadd.s32 %v5669, %v5894
          %v6184 = vadd.s32 %v5670, %v5894
          %v6185 = vadd.s32 %v5671, %v5894
          %v6186 = vadd.s32 %v5672, %v5894
          %v6187 = vadd.s32 %v5673, %v5894
          %v6188 = vadd.s32 %v5674, %v5894
          %v6189 = vadd.s32 %v5675, %v5894
          %v6190 = vadd.s32 %v5676, %v5894
          %v6191 = vadd.s32 %v5677, %v5894
          %v6192 = vadd.s32 %v5678, %v5894
          %v6193 = vadd.s32 %v5679, %v5894
          %v6194 = vadd.s32 %v5680, %v5894
          %v6195 = vadd.s32 %v5681, %v5894
          %v6196 = vadd.s32 %v5682, %v5894
          %v6197 = vadd.s32 %v5683, %v5894
          %v6198 = vadd.s32 %v5684, %v5894
          %v6199 = vadd.s32 %v5685, %v5894
          %v6200 = vadd.s32 %v5686, %v5894
          %v6201 = vadd.s32 %v5687, %v5894
          %v6202 = vadd.s32 %v5688, %v5894
          %v6203 = vadd.s32 %v5689, %v5894
          %v6204 = vadd.s32 %v5690, %v5894
          %v6205 = vadd.s32 %v5691, %v5894
          %v6206 = vadd.s32 %v5692, %v5894
          %v6207 = vadd.s32 %v5693, %v5894
          %v6208 = vadd.s32 %v5694, %v5894
          %v6209 = vadd.s32 %v5695, %v5894
          %v6210 = vadd.s32 %v5696, %v5894
          %v6211 = vadd.s32 %v5697, %v5894
          %v6212 = vadd.s32 %v5698, %v5894
          %v6213 = vadd.s32 %v5699, %v5894
          %v6214 = vadd.s32 %v5700, %v5894
          %v6215 = vadd.s32 %v5701, %v5894
          %v6216 = vadd.s32 %v5702, %v5894
          %v6217 = vadd.s32 %v5703, %v5894
          %v6218 = vadd.s32 %v5704, %v5894
          %v6219 = vadd.s32 %v5705, %v5894
          %v6220 = vadd.s32 %v5706, %v5894
          %v6221 = vadd.s32 %v5707, %v5894
          %v6222 = vadd.s32 %v5708, %v5894
          %v6223 = vadd.s32 %v5709, %v5894
          %v6224 = vadd.s32 %v5710, %v5894
          %v6225 = vadd.s32 %v5711, %v5894
          %v6226 = vadd.s32 %v5712, %v5894
          %v6227 = vadd.s32 %v5713, %v5894
          %v6228 = vadd.s32 %v5714, %v5894
          %v6229 = vadd.s32 %v5715, %v5894
          %v6230 = vadd.s32 %v5716, %v5894
          %v6231 = vadd.s32 %v5717, %v5894
          %v6232 = vadd.s32 %v5718, %v5894
          %v6233 = vadd.s32 %v5719, %v5894
          %v6234 = vadd.s32 %v5720, %v5894
          %v6235 = vadd.s32 %v5721, %v5894
          %v6236 = vadd.s32 %v5722, %v5894
          %v6237 = vadd.s32 %v5723, %v5894
          %v6238 = vadd.s32 %v5724, %v5894
          %v6239 = vadd.s32 %v5725, %v5894
          %v6240 = vadd.s32 %v5726, %v5894
          %v6241 = vadd.s32 %v5727, %v5894
          %v6242 = vadd.s32 %v5728, %v5894
          %v6243 = vadd.s32 %v5729, %v5894
          %v6244 = vadd.s32 %v5730, %v5894
          %v6245 = vadd.s32 %v5731, %v5894
          %v6246 = vadd.s32 %v5732, %v5894
          %v6247 = vadd.s32 %v5733, %v5894
          %v6248 = vadd.s32 %v5734, %v5894
          %v6249 = vadd.s32 %v5735, %v5894
          %v6250 = vadd.s32 %v5736, %v5894
          %v6251 = vadd.s32 %v5737, %v5894
          %v6252 = vadd.s32 %v5738, %v5894
          %v6253 = vadd.s32 %v5739, %v5894
          %v6254 = vadd.s32 %v5740, %v5894
          %v6255 = vadd.s32 %v5741, %v5894
          %v6256 = vadd.s32 %v5742, %v5894
          %v6257 = vadd.s32 %v5743, %v5894
          %v6258 = vadd.s32 %v5744, %v5894
          %v6259 = vadd.s32 %v5745, %v5894
          %v6260 = vadd.s32 %v5746, %v5894
          %v6261 = vadd.s32 %v5747, %v5894
          %v6262 = vadd.s32 %v5748, %v5894
          %v6263 = vadd.s32 %v5749, %v5894
          %v6264 = vadd.s32 %v5750, %v5894
          %v6265 = vadd.s32 %v5751, %v5894
          %v6266 = vadd.s32 %v5752, %v5894
          %v6267 = vadd.s32 %v5753, %v5894
          %v6268 = vadd.s32 %v5754, %v5894
          %v6269 = vadd.s32 %v5755, %v5894
          %v6270 = vadd.s32 %v5756, %v5894
          %v6271 = vadd.s32 %v5757, %v5894
          %v6272 = vadd.s32 %v5758, %v5894
          %v6273 = vadd.s32 %v5759, %v5894
          %v6274 = vadd.s32 %v5760, %v5894
          %v6275 = vadd.s32 %v5761, %v5894
          %v6276 = vadd.s32 %v5762, %v5894
          %v6277 = vadd.s32 %v5763, %v5894
          %v6278 = vadd.s32 %v5764, %v5894
          %v6279 = vadd.s32 %v5765, %v5894
          %v6280 = vadd.s32 %v5766, %v5894
          %v6281 = vadd.s32 %v5767, %v5894
          %v6282 = vadd.s32 %v5768, %v5894
          %v6283 = vadd.s32 %v5769, %v5894
          %v6284 = vadd.s32 %v5770, %v5894
          %v6285 = vadd.s32 %v5771, %v5894
          %v6286 = vadd.s32 %v5772, %v5894
          %v6287 = vadd.s32 %v5773, %v5894
          %v6288 = vadd.s32 %v5774, %v5894
          %v6289 = vadd.s32 %v5775, %v5894
          %v6290 = vadd.s32 %v5776, %v5894
          %v6291 = vadd.s32 %v5777, %v5894
          %v6292 = vadd.s32 %v5778, %v5894
          %v6293 = vadd.s32 %v5779, %v5894
          %v6294 = vadd.s32 %v5780, %v5894
          %v6295 = vadd.s32 %v5781, %v5894
          %v6296 = vadd.s32 %v5782, %v5894
          %v6297 = vadd.s32 %v5783, %v5894
          %v6298 = vadd.s32 %v5784, %v5894
          %v6299 = vadd.s32 %v5785, %v5894
          %v6300 = vadd.s32 %v5786, %v5894
          %v6301 = vadd.s32 %v5787, %v5894
          %v6302 = vadd.s32 %v5788, %v5894
          %v6303 = vadd.s32 %v5789, %v5894
          %v6304 = vadd.s32 %v5790, %v5894
          %v6305 = vadd.s32 %v5791, %v5894
          %v6306 = vadd.s32 %v5792, %v5894
          %v6307 = vadd.s32 %v5793, %v5894
          %v6308 = vadd.s32 %v5794, %v5894
          %v6309 = vadd.s32 %v5795, %v5894
          %v6310 = vadd.s32 %v5796, %v5894
          %v6311 = vadd.s32 %v5797, %v5894
          %v6312 = vadd.s32 %v5798, %v5894
          %v6313 = vadd.s32 %v5799, %v5894
          %v6314 = vadd.s32 %v5800, %v5894
          %v6315 = vadd.s32 %v5801, %v5894
          %v6316 = vadd.s32 %v5802, %v5894
          %v6317 = vadd.s32 %v5803, %v5894
          %v6318 = vadd.s32 %v5804, %v5894
          %v6319 = vadd.s32 %v5805, %v5894
          %v6320 = vadd.s32 %v5806, %v5894
          %v6321 = vadd.s32 %v5807, %v5894
          %v6322 = vadd.s32 %v5808, %v5894
          %v6323 = vadd.s32 %v5809, %v5894
          %v6324 = vadd.s32 %v5810, %v5894
          %v6325 = vadd.s32 %v5811, %v5894
          %v6326 = vadd.s32 %v5812, %v5894
          %v6327 = vadd.s32 %v5813, %v5894
          %v6328 = vadd.s32 %v5814, %v5894
          %v6329 = vadd.s32 %v5815, %v5894
          %v6330 = vadd.s32 %v5816, %v5894
          %v6331 = vadd.s32 %v5817, %v5894
          %v6332 = vadd.s32 %v5818, %v5894
          %v6333 = vadd.s32 %v5819, %v5894
          %v6334 = vadd.s32 %v5820, %v5894
          %v6335 = vadd.s32 %v5821, %v5894
          %v6336 = vadd.s32 %v5822, %v5894
          %v6337 = vadd.s32 %v5823, %v5894
          %v6338 = vadd.s32 %v5824, %v5894
          %v6339 = vadd.s32 %v5825, %v5894
          %v6340 = vadd.s32 %v5826, %v5894
          %v6341 = vadd.s32 %v5827, %v5894
          %v6342 = vadd.s32 %v5828, %v5894
          %v6343 = vadd.s32 %v5829, %v5894
          %v6344 = vadd.s32 %v5830, %v5894
          %v6345 = vadd.s32 %v5831, %v5894
          %v6346 = vadd.s32 %v5832, %v5894
          %v6347 = vadd.s32 %v5833, %v5894
          %v6348 = vadd.s32 %v5834, %v5894
          %v6349 = vadd.s32 %v5835, %v5894
          %v6350 = vadd.s32 %v5836, %v5894
          %v6351 = vadd.s32 %v5837, %v5894
          %v6352 = vadd.s32 %v5838, %v5894
          %v6353 = vadd.s32 %v5839, %v5894
          %v6354 = vadd.s32 %v5840, %v5894
          %v6355 = vadd.s32 %v5841, %v5894
          %v6356 = vadd.s32 %v5842, %v5894
          %v6357 = vadd.s32 %v5843, %v5894
          %v6358 = vadd.s32 %v5844, %v5894
          %v6359 = vadd.s32 %v5845, %v5894
          %v6360 = vadd.s32 %v5846, %v5894
          %v6361 = vadd.s32 %v5847, %v5894
          %v6362 = vadd.s32 %v5848, %v5894
          %v6363 = vadd.s32 %v5849, %v5894
          %v6364 = vadd.s32 %v5850, %v5894
          %v6365 = vadd.s32 %v5851, %v5894
          %v6366 = vadd.s32 %v5852, %v5894
          %v6367 = vadd.s32 %v5853, %v5894
          %v6368 = vadd.s32 %v5854, %v5894
          %v6369 = vadd.s32 %v5855, %v5894
          %v6370 = vadd.s32 %v5856, %v5894
          %v6371 = vadd.s32 %v5857, %v5894
          %v6372 = vadd.s32 %v5858, %v5894
          %v6373 = vadd.s32 %v5859, %v5894
          %v6374 = vadd.s32 %v5860, %v5894
          %v6375 = vadd.s32 %v5861, %v5894
          %v6376 = vadd.s32 %v5862, %v5894
          %v6377 = vadd.s32 %v5863, %v5894
          %v6378 = vadd.s32 %v5864, %v5894
          %v6379 = vadd.s32 %v5865, %v5894
          %v6380 = vadd.s32 %v5866, %v5894
          %v6381 = vadd.s32 %v5867, %v5894
          %v6382 = vadd.s32 %v5868, %v5894
          %v6383 = vadd.s32 %v5869, %v5894
          %v6384 = vadd.s32 %v5870, %v5894
          %v6385 = vadd.s32 %v5871, %v5894
          %v6386 = vadd.s32 %v5872, %v5894
          %v6387 = vadd.s32 %v5873, %v5894
          %v6388 = vadd.s32 %v5874, %v5894
          %v6389 = vadd.s32 %v5875, %v5894
          %v6390 = vadd.s32 %v5876, %v5894
          %v6391 = vadd.s32 %v5877, %v5894
          %v6392 = vadd.s32 %v5878, %v5894
          %v6393 = vadd.s32 %v5879, %v5894
          %v6394 = vadd.s32 %v5880, %v5894
          %v6395 = vadd.s32 %v5881, %v5894
          %v6396 = vadd.s32 %v5882, %v5894
          %v6397 = vadd.s32 %v5883, %v5894
          %v6398 = vadd.s32 %v5884, %v5894
          %v6399 = vadd.s32 %v5885, %v5894
          %v6400 = vadd.s32 %v5886, %v5894
          %v6401 = vadd.s32 %v5887, %v5894
          %v6402 = vadd.s32 %v5888, %v5894
          %v6403 = vadd.s32 %v5889, %v5894
          %v6404 = vadd.s32 %v5890, %v5894
          %v6405 = vadd.s32 %v5891, %v5894
          %v6406 = vadd.s32 %v5892, %v5894
          %v6407 = vstv %s249
          %vm6408 = vcmp.lt.s32.totalorder %v5895, %v6407
          %vm6409 = vcmp.lt.s32.totalorder %v5896, %v6407
          %vm6410 = vcmp.lt.s32.totalorder %v5897, %v6407
          %vm6411 = vcmp.lt.s32.totalorder %v5898, %v6407
          %vm6412 = vcmp.lt.s32.totalorder %v5899, %v6407
          %vm6413 = vcmp.lt.s32.totalorder %v5900, %v6407
          %vm6414 = vcmp.lt.s32.totalorder %v5901, %v6407
          %vm6415 = vcmp.lt.s32.totalorder %v5902, %v6407
          %vm6416 = vcmp.lt.s32.totalorder %v5903, %v6407
          %vm6417 = vcmp.lt.s32.totalorder %v5904, %v6407
          %vm6418 = vcmp.lt.s32.totalorder %v5905, %v6407
          %vm6419 = vcmp.lt.s32.totalorder %v5906, %v6407
          %vm6420 = vcmp.lt.s32.totalorder %v5907, %v6407
          %vm6421 = vcmp.lt.s32.totalorder %v5908, %v6407
          %vm6422 = vcmp.lt.s32.totalorder %v5909, %v6407
          %vm6423 = vcmp.lt.s32.totalorder %v5910, %v6407
          %vm6424 = vcmp.lt.s32.totalorder %v5911, %v6407
          %vm6425 = vcmp.lt.s32.totalorder %v5912, %v6407
          %vm6426 = vcmp.lt.s32.totalorder %v5913, %v6407
          %vm6427 = vcmp.lt.s32.totalorder %v5914, %v6407
          %vm6428 = vcmp.lt.s32.totalorder %v5915, %v6407
          %vm6429 = vcmp.lt.s32.totalorder %v5916, %v6407
          %vm6430 = vcmp.lt.s32.totalorder %v5917, %v6407
          %vm6431 = vcmp.lt.s32.totalorder %v5918, %v6407
          %vm6432 = vcmp.lt.s32.totalorder %v5919, %v6407
          %vm6433 = vcmp.lt.s32.totalorder %v5920, %v6407
          %vm6434 = vcmp.lt.s32.totalorder %v5921, %v6407
          %vm6435 = vcmp.lt.s32.totalorder %v5922, %v6407
          %vm6436 = vcmp.lt.s32.totalorder %v5923, %v6407
          %vm6437 = vcmp.lt.s32.totalorder %v5924, %v6407
          %vm6438 = vcmp.lt.s32.totalorder %v5925, %v6407
          %vm6439 = vcmp.lt.s32.totalorder %v5926, %v6407
          %vm6440 = vcmp.lt.s32.totalorder %v5927, %v6407
          %vm6441 = vcmp.lt.s32.totalorder %v5928, %v6407
          %vm6442 = vcmp.lt.s32.totalorder %v5929, %v6407
          %vm6443 = vcmp.lt.s32.totalorder %v5930, %v6407
          %vm6444 = vcmp.lt.s32.totalorder %v5931, %v6407
          %vm6445 = vcmp.lt.s32.totalorder %v5932, %v6407
          %vm6446 = vcmp.lt.s32.totalorder %v5933, %v6407
          %vm6447 = vcmp.lt.s32.totalorder %v5934, %v6407
          %vm6448 = vcmp.lt.s32.totalorder %v5935, %v6407
          %vm6449 = vcmp.lt.s32.totalorder %v5936, %v6407
          %vm6450 = vcmp.lt.s32.totalorder %v5937, %v6407
          %vm6451 = vcmp.lt.s32.totalorder %v5938, %v6407
          %vm6452 = vcmp.lt.s32.totalorder %v5939, %v6407
          %vm6453 = vcmp.lt.s32.totalorder %v5940, %v6407
          %vm6454 = vcmp.lt.s32.totalorder %v5941, %v6407
          %vm6455 = vcmp.lt.s32.totalorder %v5942, %v6407
          %vm6456 = vcmp.lt.s32.totalorder %v5943, %v6407
          %vm6457 = vcmp.lt.s32.totalorder %v5944, %v6407
          %vm6458 = vcmp.lt.s32.totalorder %v5945, %v6407
          %vm6459 = vcmp.lt.s32.totalorder %v5946, %v6407
          %vm6460 = vcmp.lt.s32.totalorder %v5947, %v6407
          %vm6461 = vcmp.lt.s32.totalorder %v5948, %v6407
          %vm6462 = vcmp.lt.s32.totalorder %v5949, %v6407
          %vm6463 = vcmp.lt.s32.totalorder %v5950, %v6407
          %vm6464 = vcmp.lt.s32.totalorder %v5951, %v6407
          %vm6465 = vcmp.lt.s32.totalorder %v5952, %v6407
          %vm6466 = vcmp.lt.s32.totalorder %v5953, %v6407
          %vm6467 = vcmp.lt.s32.totalorder %v5954, %v6407
          %vm6468 = vcmp.lt.s32.totalorder %v5955, %v6407
          %vm6469 = vcmp.lt.s32.totalorder %v5956, %v6407
          %vm6470 = vcmp.lt.s32.totalorder %v5957, %v6407
          %vm6471 = vcmp.lt.s32.totalorder %v5958, %v6407
          %vm6472 = vcmp.lt.s32.totalorder %v5959, %v6407
          %vm6473 = vcmp.lt.s32.totalorder %v5960, %v6407
          %vm6474 = vcmp.lt.s32.totalorder %v5961, %v6407
          %vm6475 = vcmp.lt.s32.totalorder %v5962, %v6407
          %vm6476 = vcmp.lt.s32.totalorder %v5963, %v6407
          %vm6477 = vcmp.lt.s32.totalorder %v5964, %v6407
          %vm6478 = vcmp.lt.s32.totalorder %v5965, %v6407
          %vm6479 = vcmp.lt.s32.totalorder %v5966, %v6407
          %vm6480 = vcmp.lt.s32.totalorder %v5967, %v6407
          %vm6481 = vcmp.lt.s32.totalorder %v5968, %v6407
          %vm6482 = vcmp.lt.s32.totalorder %v5969, %v6407
          %vm6483 = vcmp.lt.s32.totalorder %v5970, %v6407
          %vm6484 = vcmp.lt.s32.totalorder %v5971, %v6407
          %vm6485 = vcmp.lt.s32.totalorder %v5972, %v6407
          %vm6486 = vcmp.lt.s32.totalorder %v5973, %v6407
          %vm6487 = vcmp.lt.s32.totalorder %v5974, %v6407
          %vm6488 = vcmp.lt.s32.totalorder %v5975, %v6407
          %vm6489 = vcmp.lt.s32.totalorder %v5976, %v6407
          %vm6490 = vcmp.lt.s32.totalorder %v5977, %v6407
          %vm6491 = vcmp.lt.s32.totalorder %v5978, %v6407
          %vm6492 = vcmp.lt.s32.totalorder %v5979, %v6407
          %vm6493 = vcmp.lt.s32.totalorder %v5980, %v6407
          %vm6494 = vcmp.lt.s32.totalorder %v5981, %v6407
          %vm6495 = vcmp.lt.s32.totalorder %v5982, %v6407
          %vm6496 = vcmp.lt.s32.totalorder %v5983, %v6407
          %vm6497 = vcmp.lt.s32.totalorder %v5984, %v6407
          %vm6498 = vcmp.lt.s32.totalorder %v5985, %v6407
          %vm6499 = vcmp.lt.s32.totalorder %v5986, %v6407
          %vm6500 = vcmp.lt.s32.totalorder %v5987, %v6407
          %vm6501 = vcmp.lt.s32.totalorder %v5988, %v6407
          %vm6502 = vcmp.lt.s32.totalorder %v5989, %v6407
          %vm6503 = vcmp.lt.s32.totalorder %v5990, %v6407
          %vm6504 = vcmp.lt.s32.totalorder %v5991, %v6407
          %vm6505 = vcmp.lt.s32.totalorder %v5992, %v6407
          %vm6506 = vcmp.lt.s32.totalorder %v5993, %v6407
          %vm6507 = vcmp.lt.s32.totalorder %v5994, %v6407
          %vm6508 = vcmp.lt.s32.totalorder %v5995, %v6407
          %vm6509 = vcmp.lt.s32.totalorder %v5996, %v6407
          %vm6510 = vcmp.lt.s32.totalorder %v5997, %v6407
          %vm6511 = vcmp.lt.s32.totalorder %v5998, %v6407
          %vm6512 = vcmp.lt.s32.totalorder %v5999, %v6407
          %vm6513 = vcmp.lt.s32.totalorder %v6000, %v6407
          %vm6514 = vcmp.lt.s32.totalorder %v6001, %v6407
          %vm6515 = vcmp.lt.s32.totalorder %v6002, %v6407
          %vm6516 = vcmp.lt.s32.totalorder %v6003, %v6407
          %vm6517 = vcmp.lt.s32.totalorder %v6004, %v6407
          %vm6518 = vcmp.lt.s32.totalorder %v6005, %v6407
          %vm6519 = vcmp.lt.s32.totalorder %v6006, %v6407
          %vm6520 = vcmp.lt.s32.totalorder %v6007, %v6407
          %vm6521 = vcmp.lt.s32.totalorder %v6008, %v6407
          %vm6522 = vcmp.lt.s32.totalorder %v6009, %v6407
          %vm6523 = vcmp.lt.s32.totalorder %v6010, %v6407
          %vm6524 = vcmp.lt.s32.totalorder %v6011, %v6407
          %vm6525 = vcmp.lt.s32.totalorder %v6012, %v6407
          %vm6526 = vcmp.lt.s32.totalorder %v6013, %v6407
          %vm6527 = vcmp.lt.s32.totalorder %v6014, %v6407
          %vm6528 = vcmp.lt.s32.totalorder %v6015, %v6407
          %vm6529 = vcmp.lt.s32.totalorder %v6016, %v6407
          %vm6530 = vcmp.lt.s32.totalorder %v6017, %v6407
          %vm6531 = vcmp.lt.s32.totalorder %v6018, %v6407
          %vm6532 = vcmp.lt.s32.totalorder %v6019, %v6407
          %vm6533 = vcmp.lt.s32.totalorder %v6020, %v6407
          %vm6534 = vcmp.lt.s32.totalorder %v6021, %v6407
          %vm6535 = vcmp.lt.s32.totalorder %v6022, %v6407
          %vm6536 = vcmp.lt.s32.totalorder %v6023, %v6407
          %vm6537 = vcmp.lt.s32.totalorder %v6024, %v6407
          %vm6538 = vcmp.lt.s32.totalorder %v6025, %v6407
          %vm6539 = vcmp.lt.s32.totalorder %v6026, %v6407
          %vm6540 = vcmp.lt.s32.totalorder %v6027, %v6407
          %vm6541 = vcmp.lt.s32.totalorder %v6028, %v6407
          %vm6542 = vcmp.lt.s32.totalorder %v6029, %v6407
          %vm6543 = vcmp.lt.s32.totalorder %v6030, %v6407
          %vm6544 = vcmp.lt.s32.totalorder %v6031, %v6407
          %vm6545 = vcmp.lt.s32.totalorder %v6032, %v6407
          %vm6546 = vcmp.lt.s32.totalorder %v6033, %v6407
          %vm6547 = vcmp.lt.s32.totalorder %v6034, %v6407
          %vm6548 = vcmp.lt.s32.totalorder %v6035, %v6407
          %vm6549 = vcmp.lt.s32.totalorder %v6036, %v6407
          %vm6550 = vcmp.lt.s32.totalorder %v6037, %v6407
          %vm6551 = vcmp.lt.s32.totalorder %v6038, %v6407
          %vm6552 = vcmp.lt.s32.totalorder %v6039, %v6407
          %vm6553 = vcmp.lt.s32.totalorder %v6040, %v6407
          %vm6554 = vcmp.lt.s32.totalorder %v6041, %v6407
          %vm6555 = vcmp.lt.s32.totalorder %v6042, %v6407
          %vm6556 = vcmp.lt.s32.totalorder %v6043, %v6407
          %vm6557 = vcmp.lt.s32.totalorder %v6044, %v6407
          %vm6558 = vcmp.lt.s32.totalorder %v6045, %v6407
          %vm6559 = vcmp.lt.s32.totalorder %v6046, %v6407
          %vm6560 = vcmp.lt.s32.totalorder %v6047, %v6407
          %vm6561 = vcmp.lt.s32.totalorder %v6048, %v6407
          %vm6562 = vcmp.lt.s32.totalorder %v6049, %v6407
          %vm6563 = vcmp.lt.s32.totalorder %v6050, %v6407
          %vm6564 = vcmp.lt.s32.totalorder %v6051, %v6407
          %vm6565 = vcmp.lt.s32.totalorder %v6052, %v6407
          %vm6566 = vcmp.lt.s32.totalorder %v6053, %v6407
          %vm6567 = vcmp.lt.s32.totalorder %v6054, %v6407
          %vm6568 = vcmp.lt.s32.totalorder %v6055, %v6407
          %vm6569 = vcmp.lt.s32.totalorder %v6056, %v6407
          %vm6570 = vcmp.lt.s32.totalorder %v6057, %v6407
          %vm6571 = vcmp.lt.s32.totalorder %v6058, %v6407
          %vm6572 = vcmp.lt.s32.totalorder %v6059, %v6407
          %vm6573 = vcmp.lt.s32.totalorder %v6060, %v6407
          %vm6574 = vcmp.lt.s32.totalorder %v6061, %v6407
          %vm6575 = vcmp.lt.s32.totalorder %v6062, %v6407
          %vm6576 = vcmp.lt.s32.totalorder %v6063, %v6407
          %vm6577 = vcmp.lt.s32.totalorder %v6064, %v6407
          %vm6578 = vcmp.lt.s32.totalorder %v6065, %v6407
          %vm6579 = vcmp.lt.s32.totalorder %v6066, %v6407
          %vm6580 = vcmp.lt.s32.totalorder %v6067, %v6407
          %vm6581 = vcmp.lt.s32.totalorder %v6068, %v6407
          %vm6582 = vcmp.lt.s32.totalorder %v6069, %v6407
          %vm6583 = vcmp.lt.s32.totalorder %v6070, %v6407
          %vm6584 = vcmp.lt.s32.totalorder %v6071, %v6407
          %vm6585 = vcmp.lt.s32.totalorder %v6072, %v6407
          %vm6586 = vcmp.lt.s32.totalorder %v6073, %v6407
          %vm6587 = vcmp.lt.s32.totalorder %v6074, %v6407
          %vm6588 = vcmp.lt.s32.totalorder %v6075, %v6407
          %vm6589 = vcmp.lt.s32.totalorder %v6076, %v6407
          %vm6590 = vcmp.lt.s32.totalorder %v6077, %v6407
          %vm6591 = vcmp.lt.s32.totalorder %v6078, %v6407
          %vm6592 = vcmp.lt.s32.totalorder %v6079, %v6407
          %vm6593 = vcmp.lt.s32.totalorder %v6080, %v6407
          %vm6594 = vcmp.lt.s32.totalorder %v6081, %v6407
          %vm6595 = vcmp.lt.s32.totalorder %v6082, %v6407
          %vm6596 = vcmp.lt.s32.totalorder %v6083, %v6407
          %vm6597 = vcmp.lt.s32.totalorder %v6084, %v6407
          %vm6598 = vcmp.lt.s32.totalorder %v6085, %v6407
          %vm6599 = vcmp.lt.s32.totalorder %v6086, %v6407
          %vm6600 = vcmp.lt.s32.totalorder %v6087, %v6407
          %vm6601 = vcmp.lt.s32.totalorder %v6088, %v6407
          %vm6602 = vcmp.lt.s32.totalorder %v6089, %v6407
          %vm6603 = vcmp.lt.s32.totalorder %v6090, %v6407
          %vm6604 = vcmp.lt.s32.totalorder %v6091, %v6407
          %vm6605 = vcmp.lt.s32.totalorder %v6092, %v6407
          %vm6606 = vcmp.lt.s32.totalorder %v6093, %v6407
          %vm6607 = vcmp.lt.s32.totalorder %v6094, %v6407
          %vm6608 = vcmp.lt.s32.totalorder %v6095, %v6407
          %vm6609 = vcmp.lt.s32.totalorder %v6096, %v6407
          %vm6610 = vcmp.lt.s32.totalorder %v6097, %v6407
          %vm6611 = vcmp.lt.s32.totalorder %v6098, %v6407
          %vm6612 = vcmp.lt.s32.totalorder %v6099, %v6407
          %vm6613 = vcmp.lt.s32.totalorder %v6100, %v6407
          %vm6614 = vcmp.lt.s32.totalorder %v6101, %v6407
          %vm6615 = vcmp.lt.s32.totalorder %v6102, %v6407
          %vm6616 = vcmp.lt.s32.totalorder %v6103, %v6407
          %vm6617 = vcmp.lt.s32.totalorder %v6104, %v6407
          %vm6618 = vcmp.lt.s32.totalorder %v6105, %v6407
          %vm6619 = vcmp.lt.s32.totalorder %v6106, %v6407
          %vm6620 = vcmp.lt.s32.totalorder %v6107, %v6407
          %vm6621 = vcmp.lt.s32.totalorder %v6108, %v6407
          %vm6622 = vcmp.lt.s32.totalorder %v6109, %v6407
          %vm6623 = vcmp.lt.s32.totalorder %v6110, %v6407
          %vm6624 = vcmp.lt.s32.totalorder %v6111, %v6407
          %vm6625 = vcmp.lt.s32.totalorder %v6112, %v6407
          %vm6626 = vcmp.lt.s32.totalorder %v6113, %v6407
          %vm6627 = vcmp.lt.s32.totalorder %v6114, %v6407
          %vm6628 = vcmp.lt.s32.totalorder %v6115, %v6407
          %vm6629 = vcmp.lt.s32.totalorder %v6116, %v6407
          %vm6630 = vcmp.lt.s32.totalorder %v6117, %v6407
          %vm6631 = vcmp.lt.s32.totalorder %v6118, %v6407
          %vm6632 = vcmp.lt.s32.totalorder %v6119, %v6407
          %vm6633 = vcmp.lt.s32.totalorder %v6120, %v6407
          %vm6634 = vcmp.lt.s32.totalorder %v6121, %v6407
          %vm6635 = vcmp.lt.s32.totalorder %v6122, %v6407
          %vm6636 = vcmp.lt.s32.totalorder %v6123, %v6407
          %vm6637 = vcmp.lt.s32.totalorder %v6124, %v6407
          %vm6638 = vcmp.lt.s32.totalorder %v6125, %v6407
          %vm6639 = vcmp.lt.s32.totalorder %v6126, %v6407
          %vm6640 = vcmp.lt.s32.totalorder %v6127, %v6407
          %vm6641 = vcmp.lt.s32.totalorder %v6128, %v6407
          %vm6642 = vcmp.lt.s32.totalorder %v6129, %v6407
          %vm6643 = vcmp.lt.s32.totalorder %v6130, %v6407
          %vm6644 = vcmp.lt.s32.totalorder %v6131, %v6407
          %vm6645 = vcmp.lt.s32.totalorder %v6132, %v6407
          %vm6646 = vcmp.lt.s32.totalorder %v6133, %v6407
          %vm6647 = vcmp.lt.s32.totalorder %v6134, %v6407
          %vm6648 = vcmp.lt.s32.totalorder %v6135, %v6407
          %vm6649 = vcmp.lt.s32.totalorder %v6136, %v6407
          %vm6650 = vcmp.lt.s32.totalorder %v6137, %v6407
          %vm6651 = vcmp.lt.s32.totalorder %v6138, %v6407
          %vm6652 = vcmp.lt.s32.totalorder %v6139, %v6407
          %vm6653 = vcmp.lt.s32.totalorder %v6140, %v6407
          %vm6654 = vcmp.lt.s32.totalorder %v6141, %v6407
          %vm6655 = vcmp.lt.s32.totalorder %v6142, %v6407
          %vm6656 = vcmp.lt.s32.totalorder %v6143, %v6407
          %vm6657 = vcmp.lt.s32.totalorder %v6144, %v6407
          %vm6658 = vcmp.lt.s32.totalorder %v6145, %v6407
          %vm6659 = vcmp.lt.s32.totalorder %v6146, %v6407
          %vm6660 = vcmp.lt.s32.totalorder %v6147, %v6407
          %vm6661 = vcmp.lt.s32.totalorder %v6148, %v6407
          %vm6662 = vcmp.lt.s32.totalorder %v6149, %v6407
          %vm6663 = vcmp.lt.s32.totalorder %v6150, %v6407
          %vm6664 = vcmp.lt.s32.totalorder %v6151, %v6407
          %vm6665 = vcmp.lt.s32.totalorder %v6152, %v6407
          %vm6666 = vcmp.lt.s32.totalorder %v6153, %v6407
          %vm6667 = vcmp.lt.s32.totalorder %v6154, %v6407
          %vm6668 = vcmp.lt.s32.totalorder %v6155, %v6407
          %vm6669 = vcmp.lt.s32.totalorder %v6156, %v6407
          %vm6670 = vcmp.lt.s32.totalorder %v6157, %v6407
          %vm6671 = vcmp.lt.s32.totalorder %v6158, %v6407
          %vm6672 = vcmp.lt.s32.totalorder %v6159, %v6407
          %vm6673 = vcmp.lt.s32.totalorder %v6160, %v6407
          %vm6674 = vcmp.lt.s32.totalorder %v6161, %v6407
          %vm6675 = vcmp.lt.s32.totalorder %v6162, %v6407
          %vm6676 = vcmp.lt.s32.totalorder %v6163, %v6407
          %vm6677 = vcmp.lt.s32.totalorder %v6164, %v6407
          %vm6678 = vcmp.lt.s32.totalorder %v6165, %v6407
          %vm6679 = vcmp.lt.s32.totalorder %v6166, %v6407
          %vm6680 = vcmp.lt.s32.totalorder %v6167, %v6407
          %vm6681 = vcmp.lt.s32.totalorder %v6168, %v6407
          %vm6682 = vcmp.lt.s32.totalorder %v6169, %v6407
          %vm6683 = vcmp.lt.s32.totalorder %v6170, %v6407
          %vm6684 = vcmp.lt.s32.totalorder %v6171, %v6407
          %vm6685 = vcmp.lt.s32.totalorder %v6172, %v6407
          %vm6686 = vcmp.lt.s32.totalorder %v6173, %v6407
          %vm6687 = vcmp.lt.s32.totalorder %v6174, %v6407
          %vm6688 = vcmp.lt.s32.totalorder %v6175, %v6407
          %vm6689 = vcmp.lt.s32.totalorder %v6176, %v6407
          %vm6690 = vcmp.lt.s32.totalorder %v6177, %v6407
          %vm6691 = vcmp.lt.s32.totalorder %v6178, %v6407
          %vm6692 = vcmp.lt.s32.totalorder %v6179, %v6407
          %vm6693 = vcmp.lt.s32.totalorder %v6180, %v6407
          %vm6694 = vcmp.lt.s32.totalorder %v6181, %v6407
          %vm6695 = vcmp.lt.s32.totalorder %v6182, %v6407
          %vm6696 = vcmp.lt.s32.totalorder %v6183, %v6407
          %vm6697 = vcmp.lt.s32.totalorder %v6184, %v6407
          %vm6698 = vcmp.lt.s32.totalorder %v6185, %v6407
          %vm6699 = vcmp.lt.s32.totalorder %v6186, %v6407
          %vm6700 = vcmp.lt.s32.totalorder %v6187, %v6407
          %vm6701 = vcmp.lt.s32.totalorder %v6188, %v6407
          %vm6702 = vcmp.lt.s32.totalorder %v6189, %v6407
          %vm6703 = vcmp.lt.s32.totalorder %v6190, %v6407
          %vm6704 = vcmp.lt.s32.totalorder %v6191, %v6407
          %vm6705 = vcmp.lt.s32.totalorder %v6192, %v6407
          %vm6706 = vcmp.lt.s32.totalorder %v6193, %v6407
          %vm6707 = vcmp.lt.s32.totalorder %v6194, %v6407
          %vm6708 = vcmp.lt.s32.totalorder %v6195, %v6407
          %vm6709 = vcmp.lt.s32.totalorder %v6196, %v6407
          %vm6710 = vcmp.lt.s32.totalorder %v6197, %v6407
          %vm6711 = vcmp.lt.s32.totalorder %v6198, %v6407
          %vm6712 = vcmp.lt.s32.totalorder %v6199, %v6407
          %vm6713 = vcmp.lt.s32.totalorder %v6200, %v6407
          %vm6714 = vcmp.lt.s32.totalorder %v6201, %v6407
          %vm6715 = vcmp.lt.s32.totalorder %v6202, %v6407
          %vm6716 = vcmp.lt.s32.totalorder %v6203, %v6407
          %vm6717 = vcmp.lt.s32.totalorder %v6204, %v6407
          %vm6718 = vcmp.lt.s32.totalorder %v6205, %v6407
          %vm6719 = vcmp.lt.s32.totalorder %v6206, %v6407
          %vm6720 = vcmp.lt.s32.totalorder %v6207, %v6407
          %vm6721 = vcmp.lt.s32.totalorder %v6208, %v6407
          %vm6722 = vcmp.lt.s32.totalorder %v6209, %v6407
          %vm6723 = vcmp.lt.s32.totalorder %v6210, %v6407
          %vm6724 = vcmp.lt.s32.totalorder %v6211, %v6407
          %vm6725 = vcmp.lt.s32.totalorder %v6212, %v6407
          %vm6726 = vcmp.lt.s32.totalorder %v6213, %v6407
          %vm6727 = vcmp.lt.s32.totalorder %v6214, %v6407
          %vm6728 = vcmp.lt.s32.totalorder %v6215, %v6407
          %vm6729 = vcmp.lt.s32.totalorder %v6216, %v6407
          %vm6730 = vcmp.lt.s32.totalorder %v6217, %v6407
          %vm6731 = vcmp.lt.s32.totalorder %v6218, %v6407
          %vm6732 = vcmp.lt.s32.totalorder %v6219, %v6407
          %vm6733 = vcmp.lt.s32.totalorder %v6220, %v6407
          %vm6734 = vcmp.lt.s32.totalorder %v6221, %v6407
          %vm6735 = vcmp.lt.s32.totalorder %v6222, %v6407
          %vm6736 = vcmp.lt.s32.totalorder %v6223, %v6407
          %vm6737 = vcmp.lt.s32.totalorder %v6224, %v6407
          %vm6738 = vcmp.lt.s32.totalorder %v6225, %v6407
          %vm6739 = vcmp.lt.s32.totalorder %v6226, %v6407
          %vm6740 = vcmp.lt.s32.totalorder %v6227, %v6407
          %vm6741 = vcmp.lt.s32.totalorder %v6228, %v6407
          %vm6742 = vcmp.lt.s32.totalorder %v6229, %v6407
          %vm6743 = vcmp.lt.s32.totalorder %v6230, %v6407
          %vm6744 = vcmp.lt.s32.totalorder %v6231, %v6407
          %vm6745 = vcmp.lt.s32.totalorder %v6232, %v6407
          %vm6746 = vcmp.lt.s32.totalorder %v6233, %v6407
          %vm6747 = vcmp.lt.s32.totalorder %v6234, %v6407
          %vm6748 = vcmp.lt.s32.totalorder %v6235, %v6407
          %vm6749 = vcmp.lt.s32.totalorder %v6236, %v6407
          %vm6750 = vcmp.lt.s32.totalorder %v6237, %v6407
          %vm6751 = vcmp.lt.s32.totalorder %v6238, %v6407
          %vm6752 = vcmp.lt.s32.totalorder %v6239, %v6407
          %vm6753 = vcmp.lt.s32.totalorder %v6240, %v6407
          %vm6754 = vcmp.lt.s32.totalorder %v6241, %v6407
          %vm6755 = vcmp.lt.s32.totalorder %v6242, %v6407
          %vm6756 = vcmp.lt.s32.totalorder %v6243, %v6407
          %vm6757 = vcmp.lt.s32.totalorder %v6244, %v6407
          %vm6758 = vcmp.lt.s32.totalorder %v6245, %v6407
          %vm6759 = vcmp.lt.s32.totalorder %v6246, %v6407
          %vm6760 = vcmp.lt.s32.totalorder %v6247, %v6407
          %vm6761 = vcmp.lt.s32.totalorder %v6248, %v6407
          %vm6762 = vcmp.lt.s32.totalorder %v6249, %v6407
          %vm6763 = vcmp.lt.s32.totalorder %v6250, %v6407
          %vm6764 = vcmp.lt.s32.totalorder %v6251, %v6407
          %vm6765 = vcmp.lt.s32.totalorder %v6252, %v6407
          %vm6766 = vcmp.lt.s32.totalorder %v6253, %v6407
          %vm6767 = vcmp.lt.s32.totalorder %v6254, %v6407
          %vm6768 = vcmp.lt.s32.totalorder %v6255, %v6407
          %vm6769 = vcmp.lt.s32.totalorder %v6256, %v6407
          %vm6770 = vcmp.lt.s32.totalorder %v6257, %v6407
          %vm6771 = vcmp.lt.s32.totalorder %v6258, %v6407
          %vm6772 = vcmp.lt.s32.totalorder %v6259, %v6407
          %vm6773 = vcmp.lt.s32.totalorder %v6260, %v6407
          %vm6774 = vcmp.lt.s32.totalorder %v6261, %v6407
          %vm6775 = vcmp.lt.s32.totalorder %v6262, %v6407
          %vm6776 = vcmp.lt.s32.totalorder %v6263, %v6407
          %vm6777 = vcmp.lt.s32.totalorder %v6264, %v6407
          %vm6778 = vcmp.lt.s32.totalorder %v6265, %v6407
          %vm6779 = vcmp.lt.s32.totalorder %v6266, %v6407
          %vm6780 = vcmp.lt.s32.totalorder %v6267, %v6407
          %vm6781 = vcmp.lt.s32.totalorder %v6268, %v6407
          %vm6782 = vcmp.lt.s32.totalorder %v6269, %v6407
          %vm6783 = vcmp.lt.s32.totalorder %v6270, %v6407
          %vm6784 = vcmp.lt.s32.totalorder %v6271, %v6407
          %vm6785 = vcmp.lt.s32.totalorder %v6272, %v6407
          %vm6786 = vcmp.lt.s32.totalorder %v6273, %v6407
          %vm6787 = vcmp.lt.s32.totalorder %v6274, %v6407
          %vm6788 = vcmp.lt.s32.totalorder %v6275, %v6407
          %vm6789 = vcmp.lt.s32.totalorder %v6276, %v6407
          %vm6790 = vcmp.lt.s32.totalorder %v6277, %v6407
          %vm6791 = vcmp.lt.s32.totalorder %v6278, %v6407
          %vm6792 = vcmp.lt.s32.totalorder %v6279, %v6407
          %vm6793 = vcmp.lt.s32.totalorder %v6280, %v6407
          %vm6794 = vcmp.lt.s32.totalorder %v6281, %v6407
          %vm6795 = vcmp.lt.s32.totalorder %v6282, %v6407
          %vm6796 = vcmp.lt.s32.totalorder %v6283, %v6407
          %vm6797 = vcmp.lt.s32.totalorder %v6284, %v6407
          %vm6798 = vcmp.lt.s32.totalorder %v6285, %v6407
          %vm6799 = vcmp.lt.s32.totalorder %v6286, %v6407
          %vm6800 = vcmp.lt.s32.totalorder %v6287, %v6407
          %vm6801 = vcmp.lt.s32.totalorder %v6288, %v6407
          %vm6802 = vcmp.lt.s32.totalorder %v6289, %v6407
          %vm6803 = vcmp.lt.s32.totalorder %v6290, %v6407
          %vm6804 = vcmp.lt.s32.totalorder %v6291, %v6407
          %vm6805 = vcmp.lt.s32.totalorder %v6292, %v6407
          %vm6806 = vcmp.lt.s32.totalorder %v6293, %v6407
          %vm6807 = vcmp.lt.s32.totalorder %v6294, %v6407
          %vm6808 = vcmp.lt.s32.totalorder %v6295, %v6407
          %vm6809 = vcmp.lt.s32.totalorder %v6296, %v6407
          %vm6810 = vcmp.lt.s32.totalorder %v6297, %v6407
          %vm6811 = vcmp.lt.s32.totalorder %v6298, %v6407
          %vm6812 = vcmp.lt.s32.totalorder %v6299, %v6407
          %vm6813 = vcmp.lt.s32.totalorder %v6300, %v6407
          %vm6814 = vcmp.lt.s32.totalorder %v6301, %v6407
          %vm6815 = vcmp.lt.s32.totalorder %v6302, %v6407
          %vm6816 = vcmp.lt.s32.totalorder %v6303, %v6407
          %vm6817 = vcmp.lt.s32.totalorder %v6304, %v6407
          %vm6818 = vcmp.lt.s32.totalorder %v6305, %v6407
          %vm6819 = vcmp.lt.s32.totalorder %v6306, %v6407
          %vm6820 = vcmp.lt.s32.totalorder %v6307, %v6407
          %vm6821 = vcmp.lt.s32.totalorder %v6308, %v6407
          %vm6822 = vcmp.lt.s32.totalorder %v6309, %v6407
          %vm6823 = vcmp.lt.s32.totalorder %v6310, %v6407
          %vm6824 = vcmp.lt.s32.totalorder %v6311, %v6407
          %vm6825 = vcmp.lt.s32.totalorder %v6312, %v6407
          %vm6826 = vcmp.lt.s32.totalorder %v6313, %v6407
          %vm6827 = vcmp.lt.s32.totalorder %v6314, %v6407
          %vm6828 = vcmp.lt.s32.totalorder %v6315, %v6407
          %vm6829 = vcmp.lt.s32.totalorder %v6316, %v6407
          %vm6830 = vcmp.lt.s32.totalorder %v6317, %v6407
          %vm6831 = vcmp.lt.s32.totalorder %v6318, %v6407
          %vm6832 = vcmp.lt.s32.totalorder %v6319, %v6407
          %vm6833 = vcmp.lt.s32.totalorder %v6320, %v6407
          %vm6834 = vcmp.lt.s32.totalorder %v6321, %v6407
          %vm6835 = vcmp.lt.s32.totalorder %v6322, %v6407
          %vm6836 = vcmp.lt.s32.totalorder %v6323, %v6407
          %vm6837 = vcmp.lt.s32.totalorder %v6324, %v6407
          %vm6838 = vcmp.lt.s32.totalorder %v6325, %v6407
          %vm6839 = vcmp.lt.s32.totalorder %v6326, %v6407
          %vm6840 = vcmp.lt.s32.totalorder %v6327, %v6407
          %vm6841 = vcmp.lt.s32.totalorder %v6328, %v6407
          %vm6842 = vcmp.lt.s32.totalorder %v6329, %v6407
          %vm6843 = vcmp.lt.s32.totalorder %v6330, %v6407
          %vm6844 = vcmp.lt.s32.totalorder %v6331, %v6407
          %vm6845 = vcmp.lt.s32.totalorder %v6332, %v6407
          %vm6846 = vcmp.lt.s32.totalorder %v6333, %v6407
          %vm6847 = vcmp.lt.s32.totalorder %v6334, %v6407
          %vm6848 = vcmp.lt.s32.totalorder %v6335, %v6407
          %vm6849 = vcmp.lt.s32.totalorder %v6336, %v6407
          %vm6850 = vcmp.lt.s32.totalorder %v6337, %v6407
          %vm6851 = vcmp.lt.s32.totalorder %v6338, %v6407
          %vm6852 = vcmp.lt.s32.totalorder %v6339, %v6407
          %vm6853 = vcmp.lt.s32.totalorder %v6340, %v6407
          %vm6854 = vcmp.lt.s32.totalorder %v6341, %v6407
          %vm6855 = vcmp.lt.s32.totalorder %v6342, %v6407
          %vm6856 = vcmp.lt.s32.totalorder %v6343, %v6407
          %vm6857 = vcmp.lt.s32.totalorder %v6344, %v6407
          %vm6858 = vcmp.lt.s32.totalorder %v6345, %v6407
          %vm6859 = vcmp.lt.s32.totalorder %v6346, %v6407
          %vm6860 = vcmp.lt.s32.totalorder %v6347, %v6407
          %vm6861 = vcmp.lt.s32.totalorder %v6348, %v6407
          %vm6862 = vcmp.lt.s32.totalorder %v6349, %v6407
          %vm6863 = vcmp.lt.s32.totalorder %v6350, %v6407
          %vm6864 = vcmp.lt.s32.totalorder %v6351, %v6407
          %vm6865 = vcmp.lt.s32.totalorder %v6352, %v6407
          %vm6866 = vcmp.lt.s32.totalorder %v6353, %v6407
          %vm6867 = vcmp.lt.s32.totalorder %v6354, %v6407
          %vm6868 = vcmp.lt.s32.totalorder %v6355, %v6407
          %vm6869 = vcmp.lt.s32.totalorder %v6356, %v6407
          %vm6870 = vcmp.lt.s32.totalorder %v6357, %v6407
          %vm6871 = vcmp.lt.s32.totalorder %v6358, %v6407
          %vm6872 = vcmp.lt.s32.totalorder %v6359, %v6407
          %vm6873 = vcmp.lt.s32.totalorder %v6360, %v6407
          %vm6874 = vcmp.lt.s32.totalorder %v6361, %v6407
          %vm6875 = vcmp.lt.s32.totalorder %v6362, %v6407
          %vm6876 = vcmp.lt.s32.totalorder %v6363, %v6407
          %vm6877 = vcmp.lt.s32.totalorder %v6364, %v6407
          %vm6878 = vcmp.lt.s32.totalorder %v6365, %v6407
          %vm6879 = vcmp.lt.s32.totalorder %v6366, %v6407
          %vm6880 = vcmp.lt.s32.totalorder %v6367, %v6407
          %vm6881 = vcmp.lt.s32.totalorder %v6368, %v6407
          %vm6882 = vcmp.lt.s32.totalorder %v6369, %v6407
          %vm6883 = vcmp.lt.s32.totalorder %v6370, %v6407
          %vm6884 = vcmp.lt.s32.totalorder %v6371, %v6407
          %vm6885 = vcmp.lt.s32.totalorder %v6372, %v6407
          %vm6886 = vcmp.lt.s32.totalorder %v6373, %v6407
          %vm6887 = vcmp.lt.s32.totalorder %v6374, %v6407
          %vm6888 = vcmp.lt.s32.totalorder %v6375, %v6407
          %vm6889 = vcmp.lt.s32.totalorder %v6376, %v6407
          %vm6890 = vcmp.lt.s32.totalorder %v6377, %v6407
          %vm6891 = vcmp.lt.s32.totalorder %v6378, %v6407
          %vm6892 = vcmp.lt.s32.totalorder %v6379, %v6407
          %vm6893 = vcmp.lt.s32.totalorder %v6380, %v6407
          %vm6894 = vcmp.lt.s32.totalorder %v6381, %v6407
          %vm6895 = vcmp.lt.s32.totalorder %v6382, %v6407
          %vm6896 = vcmp.lt.s32.totalorder %v6383, %v6407
          %vm6897 = vcmp.lt.s32.totalorder %v6384, %v6407
          %vm6898 = vcmp.lt.s32.totalorder %v6385, %v6407
          %vm6899 = vcmp.lt.s32.totalorder %v6386, %v6407
          %vm6900 = vcmp.lt.s32.totalorder %v6387, %v6407
          %vm6901 = vcmp.lt.s32.totalorder %v6388, %v6407
          %vm6902 = vcmp.lt.s32.totalorder %v6389, %v6407
          %vm6903 = vcmp.lt.s32.totalorder %v6390, %v6407
          %vm6904 = vcmp.lt.s32.totalorder %v6391, %v6407
          %vm6905 = vcmp.lt.s32.totalorder %v6392, %v6407
          %vm6906 = vcmp.lt.s32.totalorder %v6393, %v6407
          %vm6907 = vcmp.lt.s32.totalorder %v6394, %v6407
          %vm6908 = vcmp.lt.s32.totalorder %v6395, %v6407
          %vm6909 = vcmp.lt.s32.totalorder %v6396, %v6407
          %vm6910 = vcmp.lt.s32.totalorder %v6397, %v6407
          %vm6911 = vcmp.lt.s32.totalorder %v6398, %v6407
          %vm6912 = vcmp.lt.s32.totalorder %v6399, %v6407
          %vm6913 = vcmp.lt.s32.totalorder %v6400, %v6407
          %vm6914 = vcmp.lt.s32.totalorder %v6401, %v6407
          %vm6915 = vcmp.lt.s32.totalorder %v6402, %v6407
          %vm6916 = vcmp.lt.s32.totalorder %v6403, %v6407
          %vm6917 = vcmp.lt.s32.totalorder %v6404, %v6407
          %vm6918 = vcmp.lt.s32.totalorder %v6405, %v6407
          %vm6919 = vcmp.lt.s32.totalorder %v6406, %v6407
          %v6920 = vsel %vm6408, %v4356, 0.0
          %v6921 = vsel %vm6409, %v4357, 0.0
          %v6922 = vsel %vm6410, %v4358, 0.0
          %v6923 = vsel %vm6411, %v4359, 0.0
          %v6924 = vsel %vm6412, %v4360, 0.0
          %v6925 = vsel %vm6413, %v4361, 0.0
          %v6926 = vsel %vm6414, %v4362, 0.0
          %v6927 = vsel %vm6415, %v4363, 0.0
          %v6928 = vsel %vm6416, %v4364, 0.0
          %v6929 = vsel %vm6417, %v4365, 0.0
          %v6930 = vsel %vm6418, %v4366, 0.0
          %v6931 = vsel %vm6419, %v4367, 0.0
          %v6932 = vsel %vm6420, %v4368, 0.0
          %v6933 = vsel %vm6421, %v4369, 0.0
          %v6934 = vsel %vm6422, %v4370, 0.0
          %v6935 = vsel %vm6423, %v4371, 0.0
          %v6936 = vsel %vm6424, %v4372, 0.0
          %v6937 = vsel %vm6425, %v4373, 0.0
          %v6938 = vsel %vm6426, %v4374, 0.0
          %v6939 = vsel %vm6427, %v4375, 0.0
          %v6940 = vsel %vm6428, %v4376, 0.0
          %v6941 = vsel %vm6429, %v4377, 0.0
          %v6942 = vsel %vm6430, %v4378, 0.0
          %v6943 = vsel %vm6431, %v4379, 0.0
          %v6944 = vsel %vm6432, %v4380, 0.0
          %v6945 = vsel %vm6433, %v4381, 0.0
          %v6946 = vsel %vm6434, %v4382, 0.0
          %v6947 = vsel %vm6435, %v4383, 0.0
          %v6948 = vsel %vm6436, %v4384, 0.0
          %v6949 = vsel %vm6437, %v4385, 0.0
          %v6950 = vsel %vm6438, %v4386, 0.0
          %v6951 = vsel %vm6439, %v4387, 0.0
          %v6952 = vsel %vm6440, %v4388, 0.0
          %v6953 = vsel %vm6441, %v4389, 0.0
          %v6954 = vsel %vm6442, %v4390, 0.0
          %v6955 = vsel %vm6443, %v4391, 0.0
          %v6956 = vsel %vm6444, %v4392, 0.0
          %v6957 = vsel %vm6445, %v4393, 0.0
          %v6958 = vsel %vm6446, %v4394, 0.0
          %v6959 = vsel %vm6447, %v4395, 0.0
          %v6960 = vsel %vm6448, %v4396, 0.0
          %v6961 = vsel %vm6449, %v4397, 0.0
          %v6962 = vsel %vm6450, %v4398, 0.0
          %v6963 = vsel %vm6451, %v4399, 0.0
          %v6964 = vsel %vm6452, %v4400, 0.0
          %v6965 = vsel %vm6453, %v4401, 0.0
          %v6966 = vsel %vm6454, %v4402, 0.0
          %v6967 = vsel %vm6455, %v4403, 0.0
          %v6968 = vsel %vm6456, %v4404, 0.0
          %v6969 = vsel %vm6457, %v4405, 0.0
          %v6970 = vsel %vm6458, %v4406, 0.0
          %v6971 = vsel %vm6459, %v4407, 0.0
          %v6972 = vsel %vm6460, %v4408, 0.0
          %v6973 = vsel %vm6461, %v4409, 0.0
          %v6974 = vsel %vm6462, %v4410, 0.0
          %v6975 = vsel %vm6463, %v4411, 0.0
          %v6976 = vsel %vm6464, %v4412, 0.0
          %v6977 = vsel %vm6465, %v4413, 0.0
          %v6978 = vsel %vm6466, %v4414, 0.0
          %v6979 = vsel %vm6467, %v4415, 0.0
          %v6980 = vsel %vm6468, %v4416, 0.0
          %v6981 = vsel %vm6469, %v4417, 0.0
          %v6982 = vsel %vm6470, %v4418, 0.0
          %v6983 = vsel %vm6471, %v4419, 0.0
          %v6984 = vsel %vm6472, %v4420, 0.0
          %v6985 = vsel %vm6473, %v4421, 0.0
          %v6986 = vsel %vm6474, %v4422, 0.0
          %v6987 = vsel %vm6475, %v4423, 0.0
          %v6988 = vsel %vm6476, %v4424, 0.0
          %v6989 = vsel %vm6477, %v4425, 0.0
          %v6990 = vsel %vm6478, %v4426, 0.0
          %v6991 = vsel %vm6479, %v4427, 0.0
          %v6992 = vsel %vm6480, %v4428, 0.0
          %v6993 = vsel %vm6481, %v4429, 0.0
          %v6994 = vsel %vm6482, %v4430, 0.0
          %v6995 = vsel %vm6483, %v4431, 0.0
          %v6996 = vsel %vm6484, %v4432, 0.0
          %v6997 = vsel %vm6485, %v4433, 0.0
          %v6998 = vsel %vm6486, %v4434, 0.0
          %v6999 = vsel %vm6487, %v4435, 0.0
          %v7000 = vsel %vm6488, %v4436, 0.0
          %v7001 = vsel %vm6489, %v4437, 0.0
          %v7002 = vsel %vm6490, %v4438, 0.0
          %v7003 = vsel %vm6491, %v4439, 0.0
          %v7004 = vsel %vm6492, %v4440, 0.0
          %v7005 = vsel %vm6493, %v4441, 0.0
          %v7006 = vsel %vm6494, %v4442, 0.0
          %v7007 = vsel %vm6495, %v4443, 0.0
          %v7008 = vsel %vm6496, %v4444, 0.0
          %v7009 = vsel %vm6497, %v4445, 0.0
          %v7010 = vsel %vm6498, %v4446, 0.0
          %v7011 = vsel %vm6499, %v4447, 0.0
          %v7012 = vsel %vm6500, %v4448, 0.0
          %v7013 = vsel %vm6501, %v4449, 0.0
          %v7014 = vsel %vm6502, %v4450, 0.0
          %v7015 = vsel %vm6503, %v4451, 0.0
          %v7016 = vsel %vm6504, %v4452, 0.0
          %v7017 = vsel %vm6505, %v4453, 0.0
          %v7018 = vsel %vm6506, %v4454, 0.0
          %v7019 = vsel %vm6507, %v4455, 0.0
          %v7020 = vsel %vm6508, %v4456, 0.0
          %v7021 = vsel %vm6509, %v4457, 0.0
          %v7022 = vsel %vm6510, %v4458, 0.0
          %v7023 = vsel %vm6511, %v4459, 0.0
          %v7024 = vsel %vm6512, %v4460, 0.0
          %v7025 = vsel %vm6513, %v4461, 0.0
          %v7026 = vsel %vm6514, %v4462, 0.0
          %v7027 = vsel %vm6515, %v4463, 0.0
          %v7028 = vsel %vm6516, %v4464, 0.0
          %v7029 = vsel %vm6517, %v4465, 0.0
          %v7030 = vsel %vm6518, %v4466, 0.0
          %v7031 = vsel %vm6519, %v4467, 0.0
          %v7032 = vsel %vm6520, %v4468, 0.0
          %v7033 = vsel %vm6521, %v4469, 0.0
          %v7034 = vsel %vm6522, %v4470, 0.0
          %v7035 = vsel %vm6523, %v4471, 0.0
          %v7036 = vsel %vm6524, %v4472, 0.0
          %v7037 = vsel %vm6525, %v4473, 0.0
          %v7038 = vsel %vm6526, %v4474, 0.0
          %v7039 = vsel %vm6527, %v4475, 0.0
          %v7040 = vsel %vm6528, %v4476, 0.0
          %v7041 = vsel %vm6529, %v4477, 0.0
          %v7042 = vsel %vm6530, %v4478, 0.0
          %v7043 = vsel %vm6531, %v4479, 0.0
          %v7044 = vsel %vm6532, %v4480, 0.0
          %v7045 = vsel %vm6533, %v4481, 0.0
          %v7046 = vsel %vm6534, %v4482, 0.0
          %v7047 = vsel %vm6535, %v4483, 0.0
          %v7048 = vsel %vm6536, %v4484, 0.0
          %v7049 = vsel %vm6537, %v4485, 0.0
          %v7050 = vsel %vm6538, %v4486, 0.0
          %v7051 = vsel %vm6539, %v4487, 0.0
          %v7052 = vsel %vm6540, %v4488, 0.0
          %v7053 = vsel %vm6541, %v4489, 0.0
          %v7054 = vsel %vm6542, %v4490, 0.0
          %v7055 = vsel %vm6543, %v4491, 0.0
          %v7056 = vsel %vm6544, %v4492, 0.0
          %v7057 = vsel %vm6545, %v4493, 0.0
          %v7058 = vsel %vm6546, %v4494, 0.0
          %v7059 = vsel %vm6547, %v4495, 0.0
          %v7060 = vsel %vm6548, %v4496, 0.0
          %v7061 = vsel %vm6549, %v4497, 0.0
          %v7062 = vsel %vm6550, %v4498, 0.0
          %v7063 = vsel %vm6551, %v4499, 0.0
          %v7064 = vsel %vm6552, %v4500, 0.0
          %v7065 = vsel %vm6553, %v4501, 0.0
          %v7066 = vsel %vm6554, %v4502, 0.0
          %v7067 = vsel %vm6555, %v4503, 0.0
          %v7068 = vsel %vm6556, %v4504, 0.0
          %v7069 = vsel %vm6557, %v4505, 0.0
          %v7070 = vsel %vm6558, %v4506, 0.0
          %v7071 = vsel %vm6559, %v4507, 0.0
          %v7072 = vsel %vm6560, %v4508, 0.0
          %v7073 = vsel %vm6561, %v4509, 0.0
          %v7074 = vsel %vm6562, %v4510, 0.0
          %v7075 = vsel %vm6563, %v4511, 0.0
          %v7076 = vsel %vm6564, %v4512, 0.0
          %v7077 = vsel %vm6565, %v4513, 0.0
          %v7078 = vsel %vm6566, %v4514, 0.0
          %v7079 = vsel %vm6567, %v4515, 0.0
          %v7080 = vsel %vm6568, %v4516, 0.0
          %v7081 = vsel %vm6569, %v4517, 0.0
          %v7082 = vsel %vm6570, %v4518, 0.0
          %v7083 = vsel %vm6571, %v4519, 0.0
          %v7084 = vsel %vm6572, %v4520, 0.0
          %v7085 = vsel %vm6573, %v4521, 0.0
          %v7086 = vsel %vm6574, %v4522, 0.0
          %v7087 = vsel %vm6575, %v4523, 0.0
          %v7088 = vsel %vm6576, %v4524, 0.0
          %v7089 = vsel %vm6577, %v4525, 0.0
          %v7090 = vsel %vm6578, %v4526, 0.0
          %v7091 = vsel %vm6579, %v4527, 0.0
          %v7092 = vsel %vm6580, %v4528, 0.0
          %v7093 = vsel %vm6581, %v4529, 0.0
          %v7094 = vsel %vm6582, %v4530, 0.0
          %v7095 = vsel %vm6583, %v4531, 0.0
          %v7096 = vsel %vm6584, %v4532, 0.0
          %v7097 = vsel %vm6585, %v4533, 0.0
          %v7098 = vsel %vm6586, %v4534, 0.0
          %v7099 = vsel %vm6587, %v4535, 0.0
          %v7100 = vsel %vm6588, %v4536, 0.0
          %v7101 = vsel %vm6589, %v4537, 0.0
          %v7102 = vsel %vm6590, %v4538, 0.0
          %v7103 = vsel %vm6591, %v4539, 0.0
          %v7104 = vsel %vm6592, %v4540, 0.0
          %v7105 = vsel %vm6593, %v4541, 0.0
          %v7106 = vsel %vm6594, %v4542, 0.0
          %v7107 = vsel %vm6595, %v4543, 0.0
          %v7108 = vsel %vm6596, %v4544, 0.0
          %v7109 = vsel %vm6597, %v4545, 0.0
          %v7110 = vsel %vm6598, %v4546, 0.0
          %v7111 = vsel %vm6599, %v4547, 0.0
          %v7112 = vsel %vm6600, %v4548, 0.0
          %v7113 = vsel %vm6601, %v4549, 0.0
          %v7114 = vsel %vm6602, %v4550, 0.0
          %v7115 = vsel %vm6603, %v4551, 0.0
          %v7116 = vsel %vm6604, %v4552, 0.0
          %v7117 = vsel %vm6605, %v4553, 0.0
          %v7118 = vsel %vm6606, %v4554, 0.0
          %v7119 = vsel %vm6607, %v4555, 0.0
          %v7120 = vsel %vm6608, %v4556, 0.0
          %v7121 = vsel %vm6609, %v4557, 0.0
          %v7122 = vsel %vm6610, %v4558, 0.0
          %v7123 = vsel %vm6611, %v4559, 0.0
          %v7124 = vsel %vm6612, %v4560, 0.0
          %v7125 = vsel %vm6613, %v4561, 0.0
          %v7126 = vsel %vm6614, %v4562, 0.0
          %v7127 = vsel %vm6615, %v4563, 0.0
          %v7128 = vsel %vm6616, %v4564, 0.0
          %v7129 = vsel %vm6617, %v4565, 0.0
          %v7130 = vsel %vm6618, %v4566, 0.0
          %v7131 = vsel %vm6619, %v4567, 0.0
          %v7132 = vsel %vm6620, %v4568, 0.0
          %v7133 = vsel %vm6621, %v4569, 0.0
          %v7134 = vsel %vm6622, %v4570, 0.0
          %v7135 = vsel %vm6623, %v4571, 0.0
          %v7136 = vsel %vm6624, %v4572, 0.0
          %v7137 = vsel %vm6625, %v4573, 0.0
          %v7138 = vsel %vm6626, %v4574, 0.0
          %v7139 = vsel %vm6627, %v4575, 0.0
          %v7140 = vsel %vm6628, %v4576, 0.0
          %v7141 = vsel %vm6629, %v4577, 0.0
          %v7142 = vsel %vm6630, %v4578, 0.0
          %v7143 = vsel %vm6631, %v4579, 0.0
          %v7144 = vsel %vm6632, %v4580, 0.0
          %v7145 = vsel %vm6633, %v4581, 0.0
          %v7146 = vsel %vm6634, %v4582, 0.0
          %v7147 = vsel %vm6635, %v4583, 0.0
          %v7148 = vsel %vm6636, %v4584, 0.0
          %v7149 = vsel %vm6637, %v4585, 0.0
          %v7150 = vsel %vm6638, %v4586, 0.0
          %v7151 = vsel %vm6639, %v4587, 0.0
          %v7152 = vsel %vm6640, %v4588, 0.0
          %v7153 = vsel %vm6641, %v4589, 0.0
          %v7154 = vsel %vm6642, %v4590, 0.0
          %v7155 = vsel %vm6643, %v4591, 0.0
          %v7156 = vsel %vm6644, %v4592, 0.0
          %v7157 = vsel %vm6645, %v4593, 0.0
          %v7158 = vsel %vm6646, %v4594, 0.0
          %v7159 = vsel %vm6647, %v4595, 0.0
          %v7160 = vsel %vm6648, %v4596, 0.0
          %v7161 = vsel %vm6649, %v4597, 0.0
          %v7162 = vsel %vm6650, %v4598, 0.0
          %v7163 = vsel %vm6651, %v4599, 0.0
          %v7164 = vsel %vm6652, %v4600, 0.0
          %v7165 = vsel %vm6653, %v4601, 0.0
          %v7166 = vsel %vm6654, %v4602, 0.0
          %v7167 = vsel %vm6655, %v4603, 0.0
          %v7168 = vsel %vm6656, %v4604, 0.0
          %v7169 = vsel %vm6657, %v4605, 0.0
          %v7170 = vsel %vm6658, %v4606, 0.0
          %v7171 = vsel %vm6659, %v4607, 0.0
          %v7172 = vsel %vm6660, %v4608, 0.0
          %v7173 = vsel %vm6661, %v4609, 0.0
          %v7174 = vsel %vm6662, %v4610, 0.0
          %v7175 = vsel %vm6663, %v4611, 0.0
          %v7176 = vsel %vm6664, %v4612, 0.0
          %v7177 = vsel %vm6665, %v4613, 0.0
          %v7178 = vsel %vm6666, %v4614, 0.0
          %v7179 = vsel %vm6667, %v4615, 0.0
          %v7180 = vsel %vm6668, %v4616, 0.0
          %v7181 = vsel %vm6669, %v4617, 0.0
          %v7182 = vsel %vm6670, %v4618, 0.0
          %v7183 = vsel %vm6671, %v4619, 0.0
          %v7184 = vsel %vm6672, %v4620, 0.0
          %v7185 = vsel %vm6673, %v4621, 0.0
          %v7186 = vsel %vm6674, %v4622, 0.0
          %v7187 = vsel %vm6675, %v4623, 0.0
          %v7188 = vsel %vm6676, %v4624, 0.0
          %v7189 = vsel %vm6677, %v4625, 0.0
          %v7190 = vsel %vm6678, %v4626, 0.0
          %v7191 = vsel %vm6679, %v4627, 0.0
          %v7192 = vsel %vm6680, %v4628, 0.0
          %v7193 = vsel %vm6681, %v4629, 0.0
          %v7194 = vsel %vm6682, %v4630, 0.0
          %v7195 = vsel %vm6683, %v4631, 0.0
          %v7196 = vsel %vm6684, %v4632, 0.0
          %v7197 = vsel %vm6685, %v4633, 0.0
          %v7198 = vsel %vm6686, %v4634, 0.0
          %v7199 = vsel %vm6687, %v4635, 0.0
          %v7200 = vsel %vm6688, %v4636, 0.0
          %v7201 = vsel %vm6689, %v4637, 0.0
          %v7202 = vsel %vm6690, %v4638, 0.0
          %v7203 = vsel %vm6691, %v4639, 0.0
          %v7204 = vsel %vm6692, %v4640, 0.0
          %v7205 = vsel %vm6693, %v4641, 0.0
          %v7206 = vsel %vm6694, %v4642, 0.0
          %v7207 = vsel %vm6695, %v4643, 0.0
          %v7208 = vsel %vm6696, %v4644, 0.0
          %v7209 = vsel %vm6697, %v4645, 0.0
          %v7210 = vsel %vm6698, %v4646, 0.0
          %v7211 = vsel %vm6699, %v4647, 0.0
          %v7212 = vsel %vm6700, %v4648, 0.0
          %v7213 = vsel %vm6701, %v4649, 0.0
          %v7214 = vsel %vm6702, %v4650, 0.0
          %v7215 = vsel %vm6703, %v4651, 0.0
          %v7216 = vsel %vm6704, %v4652, 0.0
          %v7217 = vsel %vm6705, %v4653, 0.0
          %v7218 = vsel %vm6706, %v4654, 0.0
          %v7219 = vsel %vm6707, %v4655, 0.0
          %v7220 = vsel %vm6708, %v4656, 0.0
          %v7221 = vsel %vm6709, %v4657, 0.0
          %v7222 = vsel %vm6710, %v4658, 0.0
          %v7223 = vsel %vm6711, %v4659, 0.0
          %v7224 = vsel %vm6712, %v4660, 0.0
          %v7225 = vsel %vm6713, %v4661, 0.0
          %v7226 = vsel %vm6714, %v4662, 0.0
          %v7227 = vsel %vm6715, %v4663, 0.0
          %v7228 = vsel %vm6716, %v4664, 0.0
          %v7229 = vsel %vm6717, %v4665, 0.0
          %v7230 = vsel %vm6718, %v4666, 0.0
          %v7231 = vsel %vm6719, %v4667, 0.0
          %v7232 = vsel %vm6720, %v4668, 0.0
          %v7233 = vsel %vm6721, %v4669, 0.0
          %v7234 = vsel %vm6722, %v4670, 0.0
          %v7235 = vsel %vm6723, %v4671, 0.0
          %v7236 = vsel %vm6724, %v4672, 0.0
          %v7237 = vsel %vm6725, %v4673, 0.0
          %v7238 = vsel %vm6726, %v4674, 0.0
          %v7239 = vsel %vm6727, %v4675, 0.0
          %v7240 = vsel %vm6728, %v4676, 0.0
          %v7241 = vsel %vm6729, %v4677, 0.0
          %v7242 = vsel %vm6730, %v4678, 0.0
          %v7243 = vsel %vm6731, %v4679, 0.0
          %v7244 = vsel %vm6732, %v4680, 0.0
          %v7245 = vsel %vm6733, %v4681, 0.0
          %v7246 = vsel %vm6734, %v4682, 0.0
          %v7247 = vsel %vm6735, %v4683, 0.0
          %v7248 = vsel %vm6736, %v4684, 0.0
          %v7249 = vsel %vm6737, %v4685, 0.0
          %v7250 = vsel %vm6738, %v4686, 0.0
          %v7251 = vsel %vm6739, %v4687, 0.0
          %v7252 = vsel %vm6740, %v4688, 0.0
          %v7253 = vsel %vm6741, %v4689, 0.0
          %v7254 = vsel %vm6742, %v4690, 0.0
          %v7255 = vsel %vm6743, %v4691, 0.0
          %v7256 = vsel %vm6744, %v4692, 0.0
          %v7257 = vsel %vm6745, %v4693, 0.0
          %v7258 = vsel %vm6746, %v4694, 0.0
          %v7259 = vsel %vm6747, %v4695, 0.0
          %v7260 = vsel %vm6748, %v4696, 0.0
          %v7261 = vsel %vm6749, %v4697, 0.0
          %v7262 = vsel %vm6750, %v4698, 0.0
          %v7263 = vsel %vm6751, %v4699, 0.0
          %v7264 = vsel %vm6752, %v4700, 0.0
          %v7265 = vsel %vm6753, %v4701, 0.0
          %v7266 = vsel %vm6754, %v4702, 0.0
          %v7267 = vsel %vm6755, %v4703, 0.0
          %v7268 = vsel %vm6756, %v4704, 0.0
          %v7269 = vsel %vm6757, %v4705, 0.0
          %v7270 = vsel %vm6758, %v4706, 0.0
          %v7271 = vsel %vm6759, %v4707, 0.0
          %v7272 = vsel %vm6760, %v4708, 0.0
          %v7273 = vsel %vm6761, %v4709, 0.0
          %v7274 = vsel %vm6762, %v4710, 0.0
          %v7275 = vsel %vm6763, %v4711, 0.0
          %v7276 = vsel %vm6764, %v4712, 0.0
          %v7277 = vsel %vm6765, %v4713, 0.0
          %v7278 = vsel %vm6766, %v4714, 0.0
          %v7279 = vsel %vm6767, %v4715, 0.0
          %v7280 = vsel %vm6768, %v4716, 0.0
          %v7281 = vsel %vm6769, %v4717, 0.0
          %v7282 = vsel %vm6770, %v4718, 0.0
          %v7283 = vsel %vm6771, %v4719, 0.0
          %v7284 = vsel %vm6772, %v4720, 0.0
          %v7285 = vsel %vm6773, %v4721, 0.0
          %v7286 = vsel %vm6774, %v4722, 0.0
          %v7287 = vsel %vm6775, %v4723, 0.0
          %v7288 = vsel %vm6776, %v4724, 0.0
          %v7289 = vsel %vm6777, %v4725, 0.0
          %v7290 = vsel %vm6778, %v4726, 0.0
          %v7291 = vsel %vm6779, %v4727, 0.0
          %v7292 = vsel %vm6780, %v4728, 0.0
          %v7293 = vsel %vm6781, %v4729, 0.0
          %v7294 = vsel %vm6782, %v4730, 0.0
          %v7295 = vsel %vm6783, %v4731, 0.0
          %v7296 = vsel %vm6784, %v4732, 0.0
          %v7297 = vsel %vm6785, %v4733, 0.0
          %v7298 = vsel %vm6786, %v4734, 0.0
          %v7299 = vsel %vm6787, %v4735, 0.0
          %v7300 = vsel %vm6788, %v4736, 0.0
          %v7301 = vsel %vm6789, %v4737, 0.0
          %v7302 = vsel %vm6790, %v4738, 0.0
          %v7303 = vsel %vm6791, %v4739, 0.0
          %v7304 = vsel %vm6792, %v4740, 0.0
          %v7305 = vsel %vm6793, %v4741, 0.0
          %v7306 = vsel %vm6794, %v4742, 0.0
          %v7307 = vsel %vm6795, %v4743, 0.0
          %v7308 = vsel %vm6796, %v4744, 0.0
          %v7309 = vsel %vm6797, %v4745, 0.0
          %v7310 = vsel %vm6798, %v4746, 0.0
          %v7311 = vsel %vm6799, %v4747, 0.0
          %v7312 = vsel %vm6800, %v4748, 0.0
          %v7313 = vsel %vm6801, %v4749, 0.0
          %v7314 = vsel %vm6802, %v4750, 0.0
          %v7315 = vsel %vm6803, %v4751, 0.0
          %v7316 = vsel %vm6804, %v4752, 0.0
          %v7317 = vsel %vm6805, %v4753, 0.0
          %v7318 = vsel %vm6806, %v4754, 0.0
          %v7319 = vsel %vm6807, %v4755, 0.0
          %v7320 = vsel %vm6808, %v4756, 0.0
          %v7321 = vsel %vm6809, %v4757, 0.0
          %v7322 = vsel %vm6810, %v4758, 0.0
          %v7323 = vsel %vm6811, %v4759, 0.0
          %v7324 = vsel %vm6812, %v4760, 0.0
          %v7325 = vsel %vm6813, %v4761, 0.0
          %v7326 = vsel %vm6814, %v4762, 0.0
          %v7327 = vsel %vm6815, %v4763, 0.0
          %v7328 = vsel %vm6816, %v4764, 0.0
          %v7329 = vsel %vm6817, %v4765, 0.0
          %v7330 = vsel %vm6818, %v4766, 0.0
          %v7331 = vsel %vm6819, %v4767, 0.0
          %v7332 = vsel %vm6820, %v4768, 0.0
          %v7333 = vsel %vm6821, %v4769, 0.0
          %v7334 = vsel %vm6822, %v4770, 0.0
          %v7335 = vsel %vm6823, %v4771, 0.0
          %v7336 = vsel %vm6824, %v4772, 0.0
          %v7337 = vsel %vm6825, %v4773, 0.0
          %v7338 = vsel %vm6826, %v4774, 0.0
          %v7339 = vsel %vm6827, %v4775, 0.0
          %v7340 = vsel %vm6828, %v4776, 0.0
          %v7341 = vsel %vm6829, %v4777, 0.0
          %v7342 = vsel %vm6830, %v4778, 0.0
          %v7343 = vsel %vm6831, %v4779, 0.0
          %v7344 = vsel %vm6832, %v4780, 0.0
          %v7345 = vsel %vm6833, %v4781, 0.0
          %v7346 = vsel %vm6834, %v4782, 0.0
          %v7347 = vsel %vm6835, %v4783, 0.0
          %v7348 = vsel %vm6836, %v4784, 0.0
          %v7349 = vsel %vm6837, %v4785, 0.0
          %v7350 = vsel %vm6838, %v4786, 0.0
          %v7351 = vsel %vm6839, %v4787, 0.0
          %v7352 = vsel %vm6840, %v4788, 0.0
          %v7353 = vsel %vm6841, %v4789, 0.0
          %v7354 = vsel %vm6842, %v4790, 0.0
          %v7355 = vsel %vm6843, %v4791, 0.0
          %v7356 = vsel %vm6844, %v4792, 0.0
          %v7357 = vsel %vm6845, %v4793, 0.0
          %v7358 = vsel %vm6846, %v4794, 0.0
          %v7359 = vsel %vm6847, %v4795, 0.0
          %v7360 = vsel %vm6848, %v4796, 0.0
          %v7361 = vsel %vm6849, %v4797, 0.0
          %v7362 = vsel %vm6850, %v4798, 0.0
          %v7363 = vsel %vm6851, %v4799, 0.0
          %v7364 = vsel %vm6852, %v4800, 0.0
          %v7365 = vsel %vm6853, %v4801, 0.0
          %v7366 = vsel %vm6854, %v4802, 0.0
          %v7367 = vsel %vm6855, %v4803, 0.0
          %v7368 = vsel %vm6856, %v4804, 0.0
          %v7369 = vsel %vm6857, %v4805, 0.0
          %v7370 = vsel %vm6858, %v4806, 0.0
          %v7371 = vsel %vm6859, %v4807, 0.0
          %v7372 = vsel %vm6860, %v4808, 0.0
          %v7373 = vsel %vm6861, %v4809, 0.0
          %v7374 = vsel %vm6862, %v4810, 0.0
          %v7375 = vsel %vm6863, %v4811, 0.0
          %v7376 = vsel %vm6864, %v4812, 0.0
          %v7377 = vsel %vm6865, %v4813, 0.0
          %v7378 = vsel %vm6866, %v4814, 0.0
          %v7379 = vsel %vm6867, %v4815, 0.0
          %v7380 = vsel %vm6868, %v4816, 0.0
          %v7381 = vsel %vm6869, %v4817, 0.0
          %v7382 = vsel %vm6870, %v4818, 0.0
          %v7383 = vsel %vm6871, %v4819, 0.0
          %v7384 = vsel %vm6872, %v4820, 0.0
          %v7385 = vsel %vm6873, %v4821, 0.0
          %v7386 = vsel %vm6874, %v4822, 0.0
          %v7387 = vsel %vm6875, %v4823, 0.0
          %v7388 = vsel %vm6876, %v4824, 0.0
          %v7389 = vsel %vm6877, %v4825, 0.0
          %v7390 = vsel %vm6878, %v4826, 0.0
          %v7391 = vsel %vm6879, %v4827, 0.0
          %v7392 = vsel %vm6880, %v4828, 0.0
          %v7393 = vsel %vm6881, %v4829, 0.0
          %v7394 = vsel %vm6882, %v4830, 0.0
          %v7395 = vsel %vm6883, %v4831, 0.0
          %v7396 = vsel %vm6884, %v4832, 0.0
          %v7397 = vsel %vm6885, %v4833, 0.0
          %v7398 = vsel %vm6886, %v4834, 0.0
          %v7399 = vsel %vm6887, %v4835, 0.0
          %v7400 = vsel %vm6888, %v4836, 0.0
          %v7401 = vsel %vm6889, %v4837, 0.0
          %v7402 = vsel %vm6890, %v4838, 0.0
          %v7403 = vsel %vm6891, %v4839, 0.0
          %v7404 = vsel %vm6892, %v4840, 0.0
          %v7405 = vsel %vm6893, %v4841, 0.0
          %v7406 = vsel %vm6894, %v4842, 0.0
          %v7407 = vsel %vm6895, %v4843, 0.0
          %v7408 = vsel %vm6896, %v4844, 0.0
          %v7409 = vsel %vm6897, %v4845, 0.0
          %v7410 = vsel %vm6898, %v4846, 0.0
          %v7411 = vsel %vm6899, %v4847, 0.0
          %v7412 = vsel %vm6900, %v4848, 0.0
          %v7413 = vsel %vm6901, %v4849, 0.0
          %v7414 = vsel %vm6902, %v4850, 0.0
          %v7415 = vsel %vm6903, %v4851, 0.0
          %v7416 = vsel %vm6904, %v4852, 0.0
          %v7417 = vsel %vm6905, %v4853, 0.0
          %v7418 = vsel %vm6906, %v4854, 0.0
          %v7419 = vsel %vm6907, %v4855, 0.0
          %v7420 = vsel %vm6908, %v4856, 0.0
          %v7421 = vsel %vm6909, %v4857, 0.0
          %v7422 = vsel %vm6910, %v4858, 0.0
          %v7423 = vsel %vm6911, %v4859, 0.0
          %v7424 = vsel %vm6912, %v4860, 0.0
          %v7425 = vsel %vm6913, %v4861, 0.0
          %v7426 = vsel %vm6914, %v4862, 0.0
          %v7427 = vsel %vm6915, %v4863, 0.0
          %v7428 = vsel %vm6916, %v4864, 0.0
          %v7429 = vsel %vm6917, %v4865, 0.0
          %v7430 = vsel %vm6918, %v4866, 0.0
          %v7431 = vsel %vm6919, %v4867, 0.0
          %v7432 = vld [vmem:[#allocation7] sm:$0xff]
          %v7433 = vadd.f32 %v6920, %v6921
          %v7434 = vadd.f32 %v7433, %v6922
          %v7435 = vadd.f32 %v7434, %v6923
          %v7436 = vadd.f32 %v7435, %v6924
          %v7437 = vadd.f32 %v7436, %v6925
          %v7438 = vadd.f32 %v7437, %v6926
          %v7439 = vadd.f32 %v7438, %v6927
          %v7440 = vadd.f32 %v7439, %v6928
          %v7441 = vadd.f32 %v7440, %v6929
          %v7442 = vadd.f32 %v7441, %v6930
          %v7443 = vadd.f32 %v7442, %v6931
          %v7444 = vadd.f32 %v7443, %v6932
          %v7445 = vadd.f32 %v7444, %v6933
          %v7446 = vadd.f32 %v7445, %v6934
          %v7447 = vadd.f32 %v7446, %v6935
          %v7448 = vadd.f32 %v7447, %v6936
          %v7449 = vadd.f32 %v7448, %v6937
          %v7450 = vadd.f32 %v7449, %v6938
          %v7451 = vadd.f32 %v7450, %v6939
          %v7452 = vadd.f32 %v7451, %v6940
          %v7453 = vadd.f32 %v7452, %v6941
          %v7454 = vadd.f32 %v7453, %v6942
          %v7455 = vadd.f32 %v7454, %v6943
          %v7456 = vadd.f32 %v7455, %v6944
          %v7457 = vadd.f32 %v7456, %v6945
          %v7458 = vadd.f32 %v7457, %v6946
          %v7459 = vadd.f32 %v7458, %v6947
          %v7460 = vadd.f32 %v7459, %v6948
          %v7461 = vadd.f32 %v7460, %v6949
          %v7462 = vadd.f32 %v7461, %v6950
          %v7463 = vadd.f32 %v7462, %v6951
          %v7464 = vadd.f32 %v7463, %v6952
          %v7465 = vadd.f32 %v7464, %v6953
          %v7466 = vadd.f32 %v7465, %v6954
          %v7467 = vadd.f32 %v7466, %v6955
          %v7468 = vadd.f32 %v7467, %v6956
          %v7469 = vadd.f32 %v7468, %v6957
          %v7470 = vadd.f32 %v7469, %v6958
          %v7471 = vadd.f32 %v7470, %v6959
          %v7472 = vadd.f32 %v7471, %v6960
          %v7473 = vadd.f32 %v7472, %v6961
          %v7474 = vadd.f32 %v7473, %v6962
          %v7475 = vadd.f32 %v7474, %v6963
          %v7476 = vadd.f32 %v7475, %v6964
          %v7477 = vadd.f32 %v7476, %v6965
          %v7478 = vadd.f32 %v7477, %v6966
          %v7479 = vadd.f32 %v7478, %v6967
          %v7480 = vadd.f32 %v7479, %v6968
          %v7481 = vadd.f32 %v7480, %v6969
          %v7482 = vadd.f32 %v7481, %v6970
          %v7483 = vadd.f32 %v7482, %v6971
          %v7484 = vadd.f32 %v7483, %v6972
          %v7485 = vadd.f32 %v7484, %v6973
          %v7486 = vadd.f32 %v7485, %v6974
          %v7487 = vadd.f32 %v7486, %v6975
          %v7488 = vadd.f32 %v7487, %v6976
          %v7489 = vadd.f32 %v7488, %v6977
          %v7490 = vadd.f32 %v7489, %v6978
          %v7491 = vadd.f32 %v7490, %v6979
          %v7492 = vadd.f32 %v7491, %v6980
          %v7493 = vadd.f32 %v7492, %v6981
          %v7494 = vadd.f32 %v7493, %v6982
          %v7495 = vadd.f32 %v7494, %v6983
          %v7496 = vadd.f32 %v7495, %v6984
          %v7497 = vadd.f32 %v7496, %v6985
          %v7498 = vadd.f32 %v7497, %v6986
          %v7499 = vadd.f32 %v7498, %v6987
          %v7500 = vadd.f32 %v7499, %v6988
          %v7501 = vadd.f32 %v7500, %v6989
          %v7502 = vadd.f32 %v7501, %v6990
          %v7503 = vadd.f32 %v7502, %v6991
          %v7504 = vadd.f32 %v7503, %v6992
          %v7505 = vadd.f32 %v7504, %v6993
          %v7506 = vadd.f32 %v7505, %v6994
          %v7507 = vadd.f32 %v7506, %v6995
          %v7508 = vadd.f32 %v7507, %v6996
          %v7509 = vadd.f32 %v7508, %v6997
          %v7510 = vadd.f32 %v7509, %v6998
          %v7511 = vadd.f32 %v7510, %v6999
          %v7512 = vadd.f32 %v7511, %v7000
          %v7513 = vadd.f32 %v7512, %v7001
          %v7514 = vadd.f32 %v7513, %v7002
          %v7515 = vadd.f32 %v7514, %v7003
          %v7516 = vadd.f32 %v7515, %v7004
          %v7517 = vadd.f32 %v7516, %v7005
          %v7518 = vadd.f32 %v7517, %v7006
          %v7519 = vadd.f32 %v7518, %v7007
          %v7520 = vadd.f32 %v7519, %v7008
          %v7521 = vadd.f32 %v7520, %v7009
          %v7522 = vadd.f32 %v7521, %v7010
          %v7523 = vadd.f32 %v7522, %v7011
          %v7524 = vadd.f32 %v7523, %v7012
          %v7525 = vadd.f32 %v7524, %v7013
          %v7526 = vadd.f32 %v7525, %v7014
          %v7527 = vadd.f32 %v7526, %v7015
          %v7528 = vadd.f32 %v7527, %v7016
          %v7529 = vadd.f32 %v7528, %v7017
          %v7530 = vadd.f32 %v7529, %v7018
          %v7531 = vadd.f32 %v7530, %v7019
          %v7532 = vadd.f32 %v7531, %v7020
          %v7533 = vadd.f32 %v7532, %v7021
          %v7534 = vadd.f32 %v7533, %v7022
          %v7535 = vadd.f32 %v7534, %v7023
          %v7536 = vadd.f32 %v7535, %v7024
          %v7537 = vadd.f32 %v7536, %v7025
          %v7538 = vadd.f32 %v7537, %v7026
          %v7539 = vadd.f32 %v7538, %v7027
          %v7540 = vadd.f32 %v7539, %v7028
          %v7541 = vadd.f32 %v7540, %v7029
          %v7542 = vadd.f32 %v7541, %v7030
          %v7543 = vadd.f32 %v7542, %v7031
          %v7544 = vadd.f32 %v7543, %v7032
          %v7545 = vadd.f32 %v7544, %v7033
          %v7546 = vadd.f32 %v7545, %v7034
          %v7547 = vadd.f32 %v7546, %v7035
          %v7548 = vadd.f32 %v7547, %v7036
          %v7549 = vadd.f32 %v7548, %v7037
          %v7550 = vadd.f32 %v7549, %v7038
          %v7551 = vadd.f32 %v7550, %v7039
          %v7552 = vadd.f32 %v7551, %v7040
          %v7553 = vadd.f32 %v7552, %v7041
          %v7554 = vadd.f32 %v7553, %v7042
          %v7555 = vadd.f32 %v7554, %v7043
          %v7556 = vadd.f32 %v7555, %v7044
          %v7557 = vadd.f32 %v7556, %v7045
          %v7558 = vadd.f32 %v7557, %v7046
          %v7559 = vadd.f32 %v7558, %v7047
          %v7560 = vadd.f32 %v7559, %v7048
          %v7561 = vadd.f32 %v7560, %v7049
          %v7562 = vadd.f32 %v7561, %v7050
          %v7563 = vadd.f32 %v7562, %v7051
          %v7564 = vadd.f32 %v7563, %v7052
          %v7565 = vadd.f32 %v7564, %v7053
          %v7566 = vadd.f32 %v7565, %v7054
          %v7567 = vadd.f32 %v7566, %v7055
          %v7568 = vadd.f32 %v7567, %v7056
          %v7569 = vadd.f32 %v7568, %v7057
          %v7570 = vadd.f32 %v7569, %v7058
          %v7571 = vadd.f32 %v7570, %v7059
          %v7572 = vadd.f32 %v7571, %v7060
          %v7573 = vadd.f32 %v7572, %v7061
          %v7574 = vadd.f32 %v7573, %v7062
          %v7575 = vadd.f32 %v7574, %v7063
          %v7576 = vadd.f32 %v7575, %v7064
          %v7577 = vadd.f32 %v7576, %v7065
          %v7578 = vadd.f32 %v7577, %v7066
          %v7579 = vadd.f32 %v7578, %v7067
          %v7580 = vadd.f32 %v7579, %v7068
          %v7581 = vadd.f32 %v7580, %v7069
          %v7582 = vadd.f32 %v7581, %v7070
          %v7583 = vadd.f32 %v7582, %v7071
          %v7584 = vadd.f32 %v7583, %v7072
          %v7585 = vadd.f32 %v7584, %v7073
          %v7586 = vadd.f32 %v7585, %v7074
          %v7587 = vadd.f32 %v7586, %v7075
          %v7588 = vadd.f32 %v7587, %v7076
          %v7589 = vadd.f32 %v7588, %v7077
          %v7590 = vadd.f32 %v7589, %v7078
          %v7591 = vadd.f32 %v7590, %v7079
          %v7592 = vadd.f32 %v7591, %v7080
          %v7593 = vadd.f32 %v7592, %v7081
          %v7594 = vadd.f32 %v7593, %v7082
          %v7595 = vadd.f32 %v7594, %v7083
          %v7596 = vadd.f32 %v7595, %v7084
          %v7597 = vadd.f32 %v7596, %v7085
          %v7598 = vadd.f32 %v7597, %v7086
          %v7599 = vadd.f32 %v7598, %v7087
          %v7600 = vadd.f32 %v7599, %v7088
          %v7601 = vadd.f32 %v7600, %v7089
          %v7602 = vadd.f32 %v7601, %v7090
          %v7603 = vadd.f32 %v7602, %v7091
          %v7604 = vadd.f32 %v7603, %v7092
          %v7605 = vadd.f32 %v7604, %v7093
          %v7606 = vadd.f32 %v7605, %v7094
          %v7607 = vadd.f32 %v7606, %v7095
          %v7608 = vadd.f32 %v7607, %v7096
          %v7609 = vadd.f32 %v7608, %v7097
          %v7610 = vadd.f32 %v7609, %v7098
          %v7611 = vadd.f32 %v7610, %v7099
          %v7612 = vadd.f32 %v7611, %v7100
          %v7613 = vadd.f32 %v7612, %v7101
          %v7614 = vadd.f32 %v7613, %v7102
          %v7615 = vadd.f32 %v7614, %v7103
          %v7616 = vadd.f32 %v7615, %v7104
          %v7617 = vadd.f32 %v7616, %v7105
          %v7618 = vadd.f32 %v7617, %v7106
          %v7619 = vadd.f32 %v7618, %v7107
          %v7620 = vadd.f32 %v7619, %v7108
          %v7621 = vadd.f32 %v7620, %v7109
          %v7622 = vadd.f32 %v7621, %v7110
          %v7623 = vadd.f32 %v7622, %v7111
          %v7624 = vadd.f32 %v7623, %v7112
          %v7625 = vadd.f32 %v7624, %v7113
          %v7626 = vadd.f32 %v7625, %v7114
          %v7627 = vadd.f32 %v7626, %v7115
          %v7628 = vadd.f32 %v7627, %v7116
          %v7629 = vadd.f32 %v7628, %v7117
          %v7630 = vadd.f32 %v7629, %v7118
          %v7631 = vadd.f32 %v7630, %v7119
          %v7632 = vadd.f32 %v7631, %v7120
          %v7633 = vadd.f32 %v7632, %v7121
          %v7634 = vadd.f32 %v7633, %v7122
          %v7635 = vadd.f32 %v7634, %v7123
          %v7636 = vadd.f32 %v7635, %v7124
          %v7637 = vadd.f32 %v7636, %v7125
          %v7638 = vadd.f32 %v7637, %v7126
          %v7639 = vadd.f32 %v7638, %v7127
          %v7640 = vadd.f32 %v7639, %v7128
          %v7641 = vadd.f32 %v7640, %v7129
          %v7642 = vadd.f32 %v7641, %v7130
          %v7643 = vadd.f32 %v7642, %v7131
          %v7644 = vadd.f32 %v7643, %v7132
          %v7645 = vadd.f32 %v7644, %v7133
          %v7646 = vadd.f32 %v7645, %v7134
          %v7647 = vadd.f32 %v7646, %v7135
          %v7648 = vadd.f32 %v7647, %v7136
          %v7649 = vadd.f32 %v7648, %v7137
          %v7650 = vadd.f32 %v7649, %v7138
          %v7651 = vadd.f32 %v7650, %v7139
          %v7652 = vadd.f32 %v7651, %v7140
          %v7653 = vadd.f32 %v7652, %v7141
          %v7654 = vadd.f32 %v7653, %v7142
          %v7655 = vadd.f32 %v7654, %v7143
          %v7656 = vadd.f32 %v7655, %v7144
          %v7657 = vadd.f32 %v7656, %v7145
          %v7658 = vadd.f32 %v7657, %v7146
          %v7659 = vadd.f32 %v7658, %v7147
          %v7660 = vadd.f32 %v7659, %v7148
          %v7661 = vadd.f32 %v7660, %v7149
          %v7662 = vadd.f32 %v7661, %v7150
          %v7663 = vadd.f32 %v7662, %v7151
          %v7664 = vadd.f32 %v7663, %v7152
          %v7665 = vadd.f32 %v7664, %v7153
          %v7666 = vadd.f32 %v7665, %v7154
          %v7667 = vadd.f32 %v7666, %v7155
          %v7668 = vadd.f32 %v7667, %v7156
          %v7669 = vadd.f32 %v7668, %v7157
          %v7670 = vadd.f32 %v7669, %v7158
          %v7671 = vadd.f32 %v7670, %v7159
          %v7672 = vadd.f32 %v7671, %v7160
          %v7673 = vadd.f32 %v7672, %v7161
          %v7674 = vadd.f32 %v7673, %v7162
          %v7675 = vadd.f32 %v7674, %v7163
          %v7676 = vadd.f32 %v7675, %v7164
          %v7677 = vadd.f32 %v7676, %v7165
          %v7678 = vadd.f32 %v7677, %v7166
          %v7679 = vadd.f32 %v7678, %v7167
          %v7680 = vadd.f32 %v7679, %v7168
          %v7681 = vadd.f32 %v7680, %v7169
          %v7682 = vadd.f32 %v7681, %v7170
          %v7683 = vadd.f32 %v7682, %v7171
          %v7684 = vadd.f32 %v7683, %v7172
          %v7685 = vadd.f32 %v7684, %v7173
          %v7686 = vadd.f32 %v7685, %v7174
          %v7687 = vadd.f32 %v7686, %v7175
          %v7688 = vadd.f32 %v7687, %v7176
          %v7689 = vadd.f32 %v7688, %v7177
          %v7690 = vadd.f32 %v7689, %v7178
          %v7691 = vadd.f32 %v7690, %v7179
          %v7692 = vadd.f32 %v7691, %v7180
          %v7693 = vadd.f32 %v7692, %v7181
          %v7694 = vadd.f32 %v7693, %v7182
          %v7695 = vadd.f32 %v7694, %v7183
          %v7696 = vadd.f32 %v7695, %v7184
          %v7697 = vadd.f32 %v7696, %v7185
          %v7698 = vadd.f32 %v7697, %v7186
          %v7699 = vadd.f32 %v7698, %v7187
          %v7700 = vadd.f32 %v7699, %v7188
          %v7701 = vadd.f32 %v7700, %v7189
          %v7702 = vadd.f32 %v7701, %v7190
          %v7703 = vadd.f32 %v7702, %v7191
          %v7704 = vadd.f32 %v7703, %v7192
          %v7705 = vadd.f32 %v7704, %v7193
          %v7706 = vadd.f32 %v7705, %v7194
          %v7707 = vadd.f32 %v7706, %v7195
          %v7708 = vadd.f32 %v7707, %v7196
          %v7709 = vadd.f32 %v7708, %v7197
          %v7710 = vadd.f32 %v7709, %v7198
          %v7711 = vadd.f32 %v7710, %v7199
          %v7712 = vadd.f32 %v7711, %v7200
          %v7713 = vadd.f32 %v7712, %v7201
          %v7714 = vadd.f32 %v7713, %v7202
          %v7715 = vadd.f32 %v7714, %v7203
          %v7716 = vadd.f32 %v7715, %v7204
          %v7717 = vadd.f32 %v7716, %v7205
          %v7718 = vadd.f32 %v7717, %v7206
          %v7719 = vadd.f32 %v7718, %v7207
          %v7720 = vadd.f32 %v7719, %v7208
          %v7721 = vadd.f32 %v7720, %v7209
          %v7722 = vadd.f32 %v7721, %v7210
          %v7723 = vadd.f32 %v7722, %v7211
          %v7724 = vadd.f32 %v7723, %v7212
          %v7725 = vadd.f32 %v7724, %v7213
          %v7726 = vadd.f32 %v7725, %v7214
          %v7727 = vadd.f32 %v7726, %v7215
          %v7728 = vadd.f32 %v7727, %v7216
          %v7729 = vadd.f32 %v7728, %v7217
          %v7730 = vadd.f32 %v7729, %v7218
          %v7731 = vadd.f32 %v7730, %v7219
          %v7732 = vadd.f32 %v7731, %v7220
          %v7733 = vadd.f32 %v7732, %v7221
          %v7734 = vadd.f32 %v7733, %v7222
          %v7735 = vadd.f32 %v7734, %v7223
          %v7736 = vadd.f32 %v7735, %v7224
          %v7737 = vadd.f32 %v7736, %v7225
          %v7738 = vadd.f32 %v7737, %v7226
          %v7739 = vadd.f32 %v7738, %v7227
          %v7740 = vadd.f32 %v7739, %v7228
          %v7741 = vadd.f32 %v7740, %v7229
          %v7742 = vadd.f32 %v7741, %v7230
          %v7743 = vadd.f32 %v7742, %v7231
          %v7744 = vadd.f32 %v7743, %v7232
          %v7745 = vadd.f32 %v7744, %v7233
          %v7746 = vadd.f32 %v7745, %v7234
          %v7747 = vadd.f32 %v7746, %v7235
          %v7748 = vadd.f32 %v7747, %v7236
          %v7749 = vadd.f32 %v7748, %v7237
          %v7750 = vadd.f32 %v7749, %v7238
          %v7751 = vadd.f32 %v7750, %v7239
          %v7752 = vadd.f32 %v7751, %v7240
          %v7753 = vadd.f32 %v7752, %v7241
          %v7754 = vadd.f32 %v7753, %v7242
          %v7755 = vadd.f32 %v7754, %v7243
          %v7756 = vadd.f32 %v7755, %v7244
          %v7757 = vadd.f32 %v7756, %v7245
          %v7758 = vadd.f32 %v7757, %v7246
          %v7759 = vadd.f32 %v7758, %v7247
          %v7760 = vadd.f32 %v7759, %v7248
          %v7761 = vadd.f32 %v7760, %v7249
          %v7762 = vadd.f32 %v7761, %v7250
          %v7763 = vadd.f32 %v7762, %v7251
          %v7764 = vadd.f32 %v7763, %v7252
          %v7765 = vadd.f32 %v7764, %v7253
          %v7766 = vadd.f32 %v7765, %v7254
          %v7767 = vadd.f32 %v7766, %v7255
          %v7768 = vadd.f32 %v7767, %v7256
          %v7769 = vadd.f32 %v7768, %v7257
          %v7770 = vadd.f32 %v7769, %v7258
          %v7771 = vadd.f32 %v7770, %v7259
          %v7772 = vadd.f32 %v7771, %v7260
          %v7773 = vadd.f32 %v7772, %v7261
          %v7774 = vadd.f32 %v7773, %v7262
          %v7775 = vadd.f32 %v7774, %v7263
          %v7776 = vadd.f32 %v7775, %v7264
          %v7777 = vadd.f32 %v7776, %v7265
          %v7778 = vadd.f32 %v7777, %v7266
          %v7779 = vadd.f32 %v7778, %v7267
          %v7780 = vadd.f32 %v7779, %v7268
          %v7781 = vadd.f32 %v7780, %v7269
          %v7782 = vadd.f32 %v7781, %v7270
          %v7783 = vadd.f32 %v7782, %v7271
          %v7784 = vadd.f32 %v7783, %v7272
          %v7785 = vadd.f32 %v7784, %v7273
          %v7786 = vadd.f32 %v7785, %v7274
          %v7787 = vadd.f32 %v7786, %v7275
          %v7788 = vadd.f32 %v7787, %v7276
          %v7789 = vadd.f32 %v7788, %v7277
          %v7790 = vadd.f32 %v7789, %v7278
          %v7791 = vadd.f32 %v7790, %v7279
          %v7792 = vadd.f32 %v7791, %v7280
          %v7793 = vadd.f32 %v7792, %v7281
          %v7794 = vadd.f32 %v7793, %v7282
          %v7795 = vadd.f32 %v7794, %v7283
          %v7796 = vadd.f32 %v7795, %v7284
          %v7797 = vadd.f32 %v7796, %v7285
          %v7798 = vadd.f32 %v7797, %v7286
          %v7799 = vadd.f32 %v7798, %v7287
          %v7800 = vadd.f32 %v7799, %v7288
          %v7801 = vadd.f32 %v7800, %v7289
          %v7802 = vadd.f32 %v7801, %v7290
          %v7803 = vadd.f32 %v7802, %v7291
          %v7804 = vadd.f32 %v7803, %v7292
          %v7805 = vadd.f32 %v7804, %v7293
          %v7806 = vadd.f32 %v7805, %v7294
          %v7807 = vadd.f32 %v7806, %v7295
          %v7808 = vadd.f32 %v7807, %v7296
          %v7809 = vadd.f32 %v7808, %v7297
          %v7810 = vadd.f32 %v7809, %v7298
          %v7811 = vadd.f32 %v7810, %v7299
          %v7812 = vadd.f32 %v7811, %v7300
          %v7813 = vadd.f32 %v7812, %v7301
          %v7814 = vadd.f32 %v7813, %v7302
          %v7815 = vadd.f32 %v7814, %v7303
          %v7816 = vadd.f32 %v7815, %v7304
          %v7817 = vadd.f32 %v7816, %v7305
          %v7818 = vadd.f32 %v7817, %v7306
          %v7819 = vadd.f32 %v7818, %v7307
          %v7820 = vadd.f32 %v7819, %v7308
          %v7821 = vadd.f32 %v7820, %v7309
          %v7822 = vadd.f32 %v7821, %v7310
          %v7823 = vadd.f32 %v7822, %v7311
          %v7824 = vadd.f32 %v7823, %v7312
          %v7825 = vadd.f32 %v7824, %v7313
          %v7826 = vadd.f32 %v7825, %v7314
          %v7827 = vadd.f32 %v7826, %v7315
          %v7828 = vadd.f32 %v7827, %v7316
          %v7829 = vadd.f32 %v7828, %v7317
          %v7830 = vadd.f32 %v7829, %v7318
          %v7831 = vadd.f32 %v7830, %v7319
          %v7832 = vadd.f32 %v7831, %v7320
          %v7833 = vadd.f32 %v7832, %v7321
          %v7834 = vadd.f32 %v7833, %v7322
          %v7835 = vadd.f32 %v7834, %v7323
          %v7836 = vadd.f32 %v7835, %v7324
          %v7837 = vadd.f32 %v7836, %v7325
          %v7838 = vadd.f32 %v7837, %v7326
          %v7839 = vadd.f32 %v7838, %v7327
          %v7840 = vadd.f32 %v7839, %v7328
          %v7841 = vadd.f32 %v7840, %v7329
          %v7842 = vadd.f32 %v7841, %v7330
          %v7843 = vadd.f32 %v7842, %v7331
          %v7844 = vadd.f32 %v7843, %v7332
          %v7845 = vadd.f32 %v7844, %v7333
          %v7846 = vadd.f32 %v7845, %v7334
          %v7847 = vadd.f32 %v7846, %v7335
          %v7848 = vadd.f32 %v7847, %v7336
          %v7849 = vadd.f32 %v7848, %v7337
          %v7850 = vadd.f32 %v7849, %v7338
          %v7851 = vadd.f32 %v7850, %v7339
          %v7852 = vadd.f32 %v7851, %v7340
          %v7853 = vadd.f32 %v7852, %v7341
          %v7854 = vadd.f32 %v7853, %v7342
          %v7855 = vadd.f32 %v7854, %v7343
          %v7856 = vadd.f32 %v7855, %v7344
          %v7857 = vadd.f32 %v7856, %v7345
          %v7858 = vadd.f32 %v7857, %v7346
          %v7859 = vadd.f32 %v7858, %v7347
          %v7860 = vadd.f32 %v7859, %v7348
          %v7861 = vadd.f32 %v7860, %v7349
          %v7862 = vadd.f32 %v7861, %v7350
          %v7863 = vadd.f32 %v7862, %v7351
          %v7864 = vadd.f32 %v7863, %v7352
          %v7865 = vadd.f32 %v7864, %v7353
          %v7866 = vadd.f32 %v7865, %v7354
          %v7867 = vadd.f32 %v7866, %v7355
          %v7868 = vadd.f32 %v7867, %v7356
          %v7869 = vadd.f32 %v7868, %v7357
          %v7870 = vadd.f32 %v7869, %v7358
          %v7871 = vadd.f32 %v7870, %v7359
          %v7872 = vadd.f32 %v7871, %v7360
          %v7873 = vadd.f32 %v7872, %v7361
          %v7874 = vadd.f32 %v7873, %v7362
          %v7875 = vadd.f32 %v7874, %v7363
          %v7876 = vadd.f32 %v7875, %v7364
          %v7877 = vadd.f32 %v7876, %v7365
          %v7878 = vadd.f32 %v7877, %v7366
          %v7879 = vadd.f32 %v7878, %v7367
          %v7880 = vadd.f32 %v7879, %v7368
          %v7881 = vadd.f32 %v7880, %v7369
          %v7882 = vadd.f32 %v7881, %v7370
          %v7883 = vadd.f32 %v7882, %v7371
          %v7884 = vadd.f32 %v7883, %v7372
          %v7885 = vadd.f32 %v7884, %v7373
          %v7886 = vadd.f32 %v7885, %v7374
          %v7887 = vadd.f32 %v7886, %v7375
          %v7888 = vadd.f32 %v7887, %v7376
          %v7889 = vadd.f32 %v7888, %v7377
          %v7890 = vadd.f32 %v7889, %v7378
          %v7891 = vadd.f32 %v7890, %v7379
          %v7892 = vadd.f32 %v7891, %v7380
          %v7893 = vadd.f32 %v7892, %v7381
          %v7894 = vadd.f32 %v7893, %v7382
          %v7895 = vadd.f32 %v7894, %v7383
          %v7896 = vadd.f32 %v7895, %v7384
          %v7897 = vadd.f32 %v7896, %v7385
          %v7898 = vadd.f32 %v7897, %v7386
          %v7899 = vadd.f32 %v7898, %v7387
          %v7900 = vadd.f32 %v7899, %v7388
          %v7901 = vadd.f32 %v7900, %v7389
          %v7902 = vadd.f32 %v7901, %v7390
          %v7903 = vadd.f32 %v7902, %v7391
          %v7904 = vadd.f32 %v7903, %v7392
          %v7905 = vadd.f32 %v7904, %v7393
          %v7906 = vadd.f32 %v7905, %v7394
          %v7907 = vadd.f32 %v7906, %v7395
          %v7908 = vadd.f32 %v7907, %v7396
          %v7909 = vadd.f32 %v7908, %v7397
          %v7910 = vadd.f32 %v7909, %v7398
          %v7911 = vadd.f32 %v7910, %v7399
          %v7912 = vadd.f32 %v7911, %v7400
          %v7913 = vadd.f32 %v7912, %v7401
          %v7914 = vadd.f32 %v7913, %v7402
          %v7915 = vadd.f32 %v7914, %v7403
          %v7916 = vadd.f32 %v7915, %v7404
          %v7917 = vadd.f32 %v7916, %v7405
          %v7918 = vadd.f32 %v7917, %v7406
          %v7919 = vadd.f32 %v7918, %v7407
          %v7920 = vadd.f32 %v7919, %v7408
          %v7921 = vadd.f32 %v7920, %v7409
          %v7922 = vadd.f32 %v7921, %v7410
          %v7923 = vadd.f32 %v7922, %v7411
          %v7924 = vadd.f32 %v7923, %v7412
          %v7925 = vadd.f32 %v7924, %v7413
          %v7926 = vadd.f32 %v7925, %v7414
          %v7927 = vadd.f32 %v7926, %v7415
          %v7928 = vadd.f32 %v7927, %v7416
          %v7929 = vadd.f32 %v7928, %v7417
          %v7930 = vadd.f32 %v7929, %v7418
          %v7931 = vadd.f32 %v7930, %v7419
          %v7932 = vadd.f32 %v7931, %v7420
          %v7933 = vadd.f32 %v7932, %v7421
          %v7934 = vadd.f32 %v7933, %v7422
          %v7935 = vadd.f32 %v7934, %v7423
          %v7936 = vadd.f32 %v7935, %v7424
          %v7937 = vadd.f32 %v7936, %v7425
          %v7938 = vadd.f32 %v7937, %v7426
          %v7939 = vadd.f32 %v7938, %v7427
          %v7940 = vadd.f32 %v7939, %v7428
          %v7941 = vadd.f32 %v7940, %v7429
          %v7942 = vadd.f32 %v7941, %v7430
          %v7943 = vadd.f32 %v7942, %v7431
          %v7944 = vadd.f32 %v7432, %v7943
          %7945 = vst [vmem:[#allocation7] sm:$0xff] %v7944
        $region48: #{tpu_custom_call.1} parent=27 // pred_fallthru
          _
        // Predicated region
        $region49: #{tpu_custom_call.1} parent=27 // pred_check
          %p7946 = pneg %p118
        $region50: #{tpu_custom_call.1} parent=27 // pred_check_branch
          %7948 = sbr.rel (%p7946) target = $region52
        $region51: #{tpu_custom_call.1} parent=27 // pred_region
          %s7950 = ssub.s32 128, 128
          %7951 = vsyncadd [#allocation4], %s7950
          %s7952 = smul.addr %s24, 128
          %s7953 = scalar_lea.hbm %s2, %s7952
          %s7955 = sshll.u32 [#allocation7], 4
          %s7956 = int_to_ptr.vmem [resolvable:$true] %s7955
          %7958 = dma.vmem_to_hbm [thread:$0]  %s7956, 128, %s7953, [#allocation4]
        $region52: #{tpu_custom_call.1} parent=27 // pred_fallthru
          _
        // Predicated region
        $region53: #{tpu_custom_call.1} parent=27 // pred_check
          %p7959 = pneg %p118
        $region54: #{tpu_custom_call.1} parent=27 // pred_check_branch
          %7961 = sbr.rel (%p7959) target = $region56
        $region55: #{tpu_custom_call.1} parent=27 // pred_region
          %7962 = dma.done [#allocation4], 128
        $region56: #{tpu_custom_call.1} parent=27 // pred_fallthru
          _
      $region28: #{tpu_custom_call.1} parent=5 // pred_fallthru
        _
      %p7963 = scmp.le.s32.totalorder 2, %s15
      // Predicated region
      $region57: #{tpu_custom_call.1} parent=5 // pred_check
        %p7964 = pneg %p7963
      $region58: #{tpu_custom_call.1} parent=5 // pred_check_branch
        %7966 = sbr.rel (%p7964) target = $region60
      $region59: #{tpu_custom_call.1} parent=5 // pred_region
        %s7967 = ssub.s32 %s15, 2
      $region60: #{tpu_custom_call.1} parent=5 // pred_fallthru
        _
    $region6: #{tpu_custom_call.1} parent=1 // loop_footer
      %s19 = sadd.s32 1, %s15
    $region7: #{tpu_custom_call.1} parent=1 // loop_footer_branch
      %14 = sbr.rel target = $region3
    $region8: #{tpu_custom_call.1} parent=1 // loop_exit
      _
    %7968 = vsyncpa [#allocation3], 1
    %s7969 = scalar_lea.sflag [#allocation3], 1
    %7970 = vsyncpa %s7969, 1
    %7971 = vsyncpa [#allocation6], 1
    %s7972 = scalar_lea.sflag [#allocation6], 1
    %7973 = vsyncpa %s7972, 1
    %7974 = vsyncpa [#allocation4], 1
    %s7975 = scalar_lea.sflag [#allocation4], 1
    %7976 = vsyncpa %s7975, 1

</llo_original>
